<compile_context>
chip_gen: v7x
topology: tpu7x:2x2x1
jax: 0.10.0
libtpu: 0.0.40
codegen_flags: <defaults>
</compile_context>

<pallas_src>
import functools
import math

import jax
import jax.numpy as jnp
from jax.experimental import pallas as pl
from jax.experimental.pallas import tpu as pltpu

CLASSES = 4
DEC_CH = 32      # decoder / ASPP channels   (smp default: 256)
LOW_CH = 48      # projected low-level chans (smp default: 48)

TM_MAX = 256                     # cap on the M tile (keeps VMEM bounded)
VMEM_LIMIT = 32 * 1024 * 1024    # scoped VMEM budget (safe on v5e/v6e/v7x)


@functools.lru_cache(maxsize=None)
def _num_tensorcores():
    """2 on v7x (2 TCs/chip share 'parallel' grid axes), else 1."""
    try:
        kind = jax.devices()[0].device_kind.lower()
        return 2 if "v7" in kind else 1
    except Exception:
        return 1


# ----------------------------------------------------------------------------
# Pallas kernels
# ----------------------------------------------------------------------------
def _matmul_bias_act_kernel(a_ref, b_ref, bias_ref, o_ref, *, relu):
    """o = act(A @ B + bias): bf16 operands, f32 accumulate/epilogue."""
    out = jnp.dot(a_ref[...], b_ref[...], preferred_element_type=jnp.float32)
    out = out + bias_ref[...]
    if relu:
        out = jnp.maximum(out, 0.0)
    o_ref[...] = out.astype(o_ref.dtype)


def _aspp_fused_kernel(a_ref, wbd_ref, bias1_ref, wproj_ref, add_ref, o_ref):
    """Fused ASPP: block-diagonal branch matmul (lane-dense 128-wide slab)
    -> bias/ReLU -> 1x1 projection matmul -> (+pool-branch term) -> ReLU."""
    t = jnp.dot(a_ref[...], wbd_ref[...], preferred_element_type=jnp.float32)
    t = jnp.maximum(t + bias1_ref[...], 0.0)
    out = jnp.dot(t.astype(jnp.bfloat16), wproj_ref[...],
                  preferred_element_type=jnp.float32)
    out = jnp.maximum(out + add_ref[...], 0.0)
    o_ref[...] = out.astype(o_ref.dtype)


def _upsample_softmax_kernel(x_ref, uh_ref, uwt_ref, o_ref, *, classes):
    """Per-image fused x4 bilinear upsample (two fixed-matrix matmuls per
    channel) + softmax over channels (== nn.Softmax2d)."""
    ups = []
    for c in range(classes):
        t = jnp.dot(uh_ref[...], x_ref[c], preferred_element_type=jnp.float32)
        ups.append(jnp.dot(t, uwt_ref[...], preferred_element_type=jnp.float32))
    m = ups[0]
    for u in ups[1:]:
        m = jnp.maximum(m, u)
    es = [jnp.exp(u - m) for u in ups]
    tot = es[0]
    for e in es[1:]:
        tot = tot + e
    inv = 1.0 / tot
    for c in range(classes):
        o_ref[c] = es[c] * inv


# ----------------------------------------------------------------------------
# Pallas call wrappers
# ----------------------------------------------------------------------------
def _m_tiling(m):
    """Adaptive M tile: full extent up to TM_MAX; >=2 blocks on v7x (2 TCs)."""
    mp8 = max(8, ((m + 7) // 8) * 8)
    if _num_tensorcores() > 1 and mp8 >= 16:
        tm = (((mp8 + 1) // 2) + 7) // 8 * 8
    else:
        tm = mp8
    tm = min(tm, TM_MAX)
    mp = ((mp8 + tm - 1) // tm) * tm
    return tm, mp, mp // tm


def matmul_bias_act(a, b, bias, *, relu, out_dtype):
    """a: (M, K) bf16 patches, b: (K, N) bf16 folded weights, bias: (1, N) f32."""
    m, k = a.shape
    _, n = b.shape
    tm, mp, grid_m = _m_tiling(m)
    if mp != m:
        a = jnp.pad(a, ((0, mp - m), (0, 0)))
    out_bytes = jnp.dtype(out_dtype).itemsize
    # Explicit VMEM budget: double-buffered A/B/bias/out tiles must fit the
    # scoped window (matters when reusing this kernel at real DeepLab sizes,
    # especially on v7x's 64 MiB physical VMEM).
    vmem_needed = 2 * ((tm * k + k * n) * 2 + n * 4 + tm * n * out_bytes)
    assert vmem_needed < VMEM_LIMIT // 2, ("conv tile exceeds VMEM budget",
                                           vmem_needed)
    cost = pl.CostEstimate(
        flops=2 * mp * k * n,
        bytes_accessed=mp * k * 2 + k * n * 2 + n * 4 + mp * n * out_bytes,
        transcendentals=0)
    out = pl.pallas_call(
        functools.partial(_matmul_bias_act_kernel, relu=relu),
        out_shape=jax.ShapeDtypeStruct((mp, n), out_dtype),
        grid_spec=pl.GridSpec(
            grid=(grid_m,),
            in_specs=[
                pl.BlockSpec((tm, k), lambda i: (i, 0)),
                pl.BlockSpec((k, n), lambda i: (0, 0)),
                pl.BlockSpec((1, n), lambda i: (0, 0)),
            ],
            out_specs=pl.BlockSpec((tm, n), lambda i: (i, 0)),
        ),
        compiler_params=pltpu.CompilerParams(
            dimension_semantics=("parallel",),
            vmem_limit_bytes=VMEM_LIMIT),
        cost_estimate=cost,
    )(a, b, bias)
    return out if mp == m else out[:m]


def aspp_fused(a, w_blockdiag, bias1, w_proj_main, pool_add):
    """One-call ASPP: a (M, K1) bf16, w_blockdiag (K1, 4*DEC_CH) bf16,
    bias1 (1, 4*DEC_CH) f32, w_proj_main (4*DEC_CH, DEC_CH) bf16,
    pool_add (M, DEC_CH) f32 (pool branch through the projection, + proj bias).
    """
    m, k1 = a.shape
    n1 = w_blockdiag.shape[1]
    n2 = w_proj_main.shape[1]
    cost = pl.CostEstimate(
        flops=2 * m * k1 * n1 + 2 * m * n1 * n2,
        bytes_accessed=(m * k1 + k1 * n1 + n1 * n2) * 2 + (n1 + m * n2) * 4
                       + m * n2 * 2,
        transcendentals=0)
    return pl.pallas_call(
        _aspp_fused_kernel,
        out_shape=jax.ShapeDtypeStruct((m, n2), jnp.bfloat16),
        compiler_params=pltpu.CompilerParams(vmem_limit_bytes=VMEM_LIMIT),
        cost_estimate=cost,
    )(a, w_blockdiag, bias1, w_proj_main, pool_add)


def _resize_matrix(src, dst, dtype=jnp.float32):
    """Dense 1-D bilinear (half-pixel) interpolation matrix U: resize == U @ x."""
    eye = jnp.eye(src, dtype=jnp.float32)
    return jax.image.resize(eye, (dst, src), method="bilinear").astype(dtype)


def upsample4x_softmax(logits_nchw):
    """Fused x4 bilinear upsample + channel softmax.  NCHW in/out, f32."""
    n, c, h, w = logits_nchw.shape
    ho, wo = 4 * h, 4 * w
    uh = _resize_matrix(h, ho)        # (ho, h)
    uwt = _resize_matrix(w, wo).T     # (w, wo)
    cost = pl.CostEstimate(
        flops=2 * n * c * (ho * h * w + ho * wo * w) + 6 * n * c * ho * wo,
        bytes_accessed=(n * c * h * w + n * c * ho * wo + ho * h + w * wo) * 4,
        transcendentals=n * c * ho * wo)
    return pl.pallas_call(
        functools.partial(_upsample_softmax_kernel, classes=c),
        out_shape=jax.ShapeDtypeStruct((n, c, ho, wo), jnp.float32),
        grid_spec=pl.GridSpec(
            grid=(n,),
            in_specs=[
                pl.BlockSpec((None, c, h, w), lambda i: (i, 0, 0, 0)),
                pl.BlockSpec((ho, h), lambda i: (0, 0)),
                pl.BlockSpec((w, wo), lambda i: (0, 0)),
            ],
            out_specs=pl.BlockSpec((None, c, ho, wo), lambda i: (i, 0, 0, 0)),
        ),
        compiler_params=pltpu.CompilerParams(
            dimension_semantics=("parallel",),
            vmem_limit_bytes=VMEM_LIMIT),
        cost_estimate=cost,
    )(logits_nchw, uh, uwt)


# ----------------------------------------------------------------------------
# Convolution = patch extraction (one XLA op, bf16) + Pallas fused matmul
# ----------------------------------------------------------------------------
def _patches(x, k, stride, padding, dilation):
    """NHWC bf16 -> (N, Hout, Wout, Cin*k*k) patches, (c, i, j) tap ordering."""
    return jax.lax.conv_general_dilated_patches(
        x, filter_shape=(k, k), window_strides=(stride, stride),
        padding=((padding, padding), (padding, padding)),
        rhs_dilation=(dilation, dilation),
        dimension_numbers=("NHWC", "HWIO", "NHWC"))


def conv2d_fused(x, w_col, bias, k, stride=1, padding=0, dilation=1,
                 relu=True, out_dtype=jnp.bfloat16):
    """x: NHWC bf16. w_col: (Cin*k*k, Cout) bf16 (BN folded). bias: (1, Cout) f32."""
    n, h, w, c = x.shape
    if k == 1 and stride == 1:
        hout, wout = h, w
        patches = x.reshape(n * h * w, c)
    else:
        p = _patches(x, k, stride, padding, dilation)
        _, hout, wout, kk = p.shape
        patches = p.reshape(n * hout * wout, kk)
    out = matmul_bias_act(patches, w_col, bias, relu=relu, out_dtype=out_dtype)
    return out.reshape(n, hout, wout, -1)


# ----------------------------------------------------------------------------
# Parameter construction (deterministic, BatchNorm folded into conv,
# weights pre-shaped ONCE: (Cout,Cin,kh,kw) -> (Cin*kh*kw, Cout), bf16)
# ----------------------------------------------------------------------------
def _conv_bn_cols(key, cin, cout, k):
    k1, k2, k3, k4, k5 = jax.random.split(key, 5)
    w = jax.random.normal(k1, (cout, cin, k, k), jnp.float32) / math.sqrt(cin * k * k)
    gamma = 1.0 + 0.1 * jax.random.normal(k2, (cout,), jnp.float32)
    beta = 0.1 * jax.random.normal(k3, (cout,), jnp.float32)
    mean = 0.1 * jax.random.normal(k4, (cout,), jnp.float32)
    var = 1.0 + 0.1 * jnp.abs(jax.random.normal(k5, (cout,), jnp.float32))
    scale = gamma / jnp.sqrt(var + 1e-5)
    bias = beta - mean * scale
    # channel-major (c, i, j) column order to match conv_general_dilated_patches.
    w_col = jnp.transpose(w * scale[:, None, None, None],
                          (1, 2, 3, 0)).reshape(cin * k * k, cout)
    return w_col, bias.reshape(1, cout)


def make_params(key):
    keys = jax.random.split(key, 14)
    p = {}

    def bn_conv(i, cin, cout, k):
        w, b = _conv_bn_cols(keys[i], cin, cout, k)
        return w.astype(jnp.bfloat16), b

    p["enc1"] = bn_conv(0, 3, 16, 3)      # /2
    p["enc2"] = bn_conv(1, 16, 24, 3)     # /4  (low-level)
    p["enc3"] = bn_conv(2, 24, 32, 3)     # /8
    p["enc4"] = bn_conv(3, 32, 64, 3)     # /16 (high-level)

    # --- ASPP: 1x1 + three dilated 3x3 branches packed into ONE block-diagonal
    #     weight (lane-dense 4*DEC_CH = 128-wide branch slab) + projection. ---
    hc = 64
    w0, bb0 = _conv_bn_cols(keys[4], hc, DEC_CH, 1)
    w1, bb1 = _conv_bn_cols(keys[5], hc, DEC_CH, 3)
    w2, bb2 = _conv_bn_cols(keys[6], hc, DEC_CH, 3)
    w3, bb3 = _conv_bn_cols(keys[7], hc, DEC_CH, 3)
    k_parts = [hc, hc * 9, hc * 9, hc * 9]
    offs = [0]
    for kp in k_parts:
        offs.append(offs[-1] + kp)
    wbd = jnp.zeros((offs[-1], 4 * DEC_CH), jnp.float32)
    for idx, wv in enumerate([w0, w1, w2, w3]):
        wbd = wbd.at[offs[idx]:offs[idx + 1],
                     idx * DEC_CH:(idx + 1) * DEC_CH].set(wv)
    p["aspp_wbd"] = wbd.astype(jnp.bfloat16)                       # (1792, 128)
    p["aspp_bias1"] = jnp.concatenate([bb0, bb1, bb2, bb3], axis=1)  # (1, 128) f32

    # pooled branch + projection split (pool path stays f32 / plain jnp)
    p["pool_w"], p["pool_b"] = _conv_bn_cols(keys[8], hc, DEC_CH, 1)
    prw, prb = _conv_bn_cols(keys[9], 5 * DEC_CH, DEC_CH, 1)         # (160, 32)
    p["proj_w_main"] = prw[:4 * DEC_CH].astype(jnp.bfloat16)         # (128, 32)
    p["proj_w_pool"] = prw[4 * DEC_CH:]                              # (32, 32) f32
    p["proj_bias"] = prb                                             # (1, 32) f32

    p["low_proj"] = bn_conv(10, 24, LOW_CH, 1)
    p["dec1"] = bn_conv(11, DEC_CH + LOW_CH, DEC_CH, 3)
    p["dec2"] = bn_conv(12, DEC_CH, DEC_CH, 3)

    hk1, hk2 = jax.random.split(keys[13])
    hw = jax.random.normal(hk1, (CLASSES, DEC_CH, 3, 3), jnp.float32) / math.sqrt(DEC_CH * 9)
    hb = 0.01 * jax.random.normal(hk2, (CLASSES,), jnp.float32)
    p["head"] = (jnp.transpose(hw, (1, 2, 3, 0)).reshape(DEC_CH * 9, CLASSES)
                 .astype(jnp.bfloat16),
                 hb.reshape(1, CLASSES))
    return p


# ----------------------------------------------------------------------------
# DeepLabV3+ forward
# ----------------------------------------------------------------------------
def deeplabv3plus_forward(params, imgs_nchw):
    x = jnp.transpose(imgs_nchw, (0, 2, 3, 1)).astype(jnp.bfloat16)   # NHWC bf16

    # --- encoder (all activations stay bf16) ---
    f1 = conv2d_fused(x, *params["enc1"], k=3, stride=2, padding=1)
    f2 = conv2d_fused(f1, *params["enc2"], k=3, stride=2, padding=1)  # low-level
    f3 = conv2d_fused(f2, *params["enc3"], k=3, stride=2, padding=1)
    f4 = conv2d_fused(f3, *params["enc4"], k=3, stride=2, padding=1)  # high-level
    n, h4, w4, hc = f4.shape
    m_aspp = n * h4 * w4

    # --- ASPP: one fused Pallas call (1x1 + 3 dilated branches + projection) ---
    a_cols = [f4.reshape(m_aspp, hc)]
    for d in (1, 2, 3):
        a_cols.append(_patches(f4, 3, 1, d, d).reshape(m_aspp, hc * 9))
    a = jnp.concatenate(a_cols, axis=1)                               # (M, 1792) bf16

    # pooled branch (GAP + 1x1 conv + ReLU) and its projection contribution:
    # tiny (N x 64), kept in plain jnp per perf review (no micro pallas_calls).
    pooled = jnp.mean(f4.astype(jnp.float32), axis=(1, 2))            # (N, 64)
    pool_act = jax.nn.relu(pooled @ params["pool_w"] + params["pool_b"])
    pool_contrib = pool_act @ params["proj_w_pool"] + params["proj_bias"]
    pool_add = jnp.broadcast_to(pool_contrib[:, None, :],
                                (n, h4 * w4, DEC_CH)).reshape(m_aspp, DEC_CH)

    aspp = aspp_fused(a, params["aspp_wbd"], params["aspp_bias1"],
                      params["proj_w_main"], pool_add)                # (M, 32) bf16
    aspp = aspp.reshape(n, h4, w4, DEC_CH)

    # --- decoder ---
    # x4 bilinear upsample as two fixed-matrix matmuls (no gather lowering).
    u_h = _resize_matrix(h4, 4 * h4, jnp.bfloat16)
    u_w = _resize_matrix(w4, 4 * w4, jnp.bfloat16)
    up = jnp.einsum("yh,nhwc->nywc", u_h, aspp)
    up = jnp.einsum("xw,nywc->nyxc", u_w, up)                         # bf16
    low = conv2d_fused(f2, *params["low_proj"], k=1)
    dec = jnp.concatenate([up, low], axis=-1)
    dec = conv2d_fused(dec, *params["dec1"], k=3, padding=1)
    dec = conv2d_fused(dec, *params["dec2"], k=3, padding=1)

    # --- segmentation head + activation ---
    logits = conv2d_fused(dec, *params["head"], k=3, padding=1,
                          relu=False, out_dtype=jnp.float32)
    logits = jnp.transpose(logits, (0, 3, 1, 2))                      # (N, C, Hd, Wd)
    probs = upsample4x_softmax(logits)                                # fused Pallas call
    return probs                                                      # NCHW f32


# ----------------------------------------------------------------------------
if __name__ == "__main__":
    key = jax.random.PRNGKey(0)
    pkey, xkey = jax.random.split(key)

    params = make_params(pkey)
    imgs = jax.random.normal(xkey, (2, 3, 32, 32), jnp.float32)  # NCHW, like PyTorch

    fwd = jax.jit(functools.partial(deeplabv3plus_forward, params))
    out = fwd(imgs)
    jax.block_until_ready(out)

    assert out.shape == (2, CLASSES, 32, 32), out.shape
    assert bool(jnp.all(jnp.isfinite(out)))
    # softmax over channels -> each pixel sums to 1
    assert bool(jnp.allclose(out.sum(axis=1), 1.0, atol=1e-4))
    print("KERNEL_OK")
</pallas_src>

<mosaic_0001>
module attributes {stable_mosaic.version = 11 : i64} {
  func.func @_matmul_bias_act_kernel(%arg0: i32, %arg1: memref<256x27xbf16, #tpu.memory_space<vmem>>, %arg2: memref<27x16xbf16, #tpu.memory_space<vmem>>, %arg3: memref<1x16xf32, #tpu.memory_space<vmem>>, %arg4: memref<256x16xbf16, #tpu.memory_space<vmem>>) attributes {dimension_semantics = [#tpu.dimension_semantics<parallel>], iteration_bounds = array<i64: 2>, scalar_prefetch = 0 : i64, scratch_operands = 0 : i64, tpu.core_type = #tpu.core_type<tc>, window_params = [{transform_indices = @transform_0, window_bounds = array<i64: 256, 27>}, {pipeline_mode = #tpu.pipeline_mode<synchronous>, transform_indices = @transform_1, window_bounds = array<i64: 27, 16>}, {pipeline_mode = #tpu.pipeline_mode<synchronous>, transform_indices = @transform_2, window_bounds = array<i64: 1, 16>}, {transform_indices = @transform_3, window_bounds = array<i64: 256, 16>}]} {
    %c0 = arith.constant 0 : index
    %c0_0 = arith.constant 0 : index
    %0 = vector.load %arg1[%c0, %c0_0] : memref<256x27xbf16, #tpu.memory_space<vmem>>, vector<256x27xbf16>
    %c0_1 = arith.constant 0 : index
    %c0_2 = arith.constant 0 : index
    %1 = vector.load %arg2[%c0_1, %c0_2] : memref<27x16xbf16, #tpu.memory_space<vmem>>, vector<27x16xbf16>
    %cst = arith.constant dense<0.000000e+00> : vector<256x16xf32>
    %2 = tpu.matmul %0, %1, %cst {dimension_numbers = #tpu.dot_dimension_numbers<[1], [0], [0], [1], [0, 0, 1, 1], [], []>} : vector<256x27xbf16>, vector<27x16xbf16>, vector<256x16xf32> -> vector<256x16xf32>
    %c0_3 = arith.constant 0 : index
    %c0_4 = arith.constant 0 : index
    %3 = vector.load %arg3[%c0_3, %c0_4] : memref<1x16xf32, #tpu.memory_space<vmem>>, vector<1x16xf32>
    %4 = vector.broadcast %3 : vector<1x16xf32> to vector<256x16xf32>
    %5 = arith.addf %2, %4 : vector<256x16xf32>
    %cst_5 = arith.constant 0.000000e+00 : f32
    %6 = vector.broadcast %cst_5 : f32 to vector<256x16xf32>
    %7 = arith.maximumf %5, %6 : vector<256x16xf32>
    %8 = arith.truncf %7 : vector<256x16xf32> to vector<256x16xbf16>
    %c0_6 = arith.constant 0 : index
    %c0_7 = arith.constant 0 : index
    %9 = vector.load %arg4[%c0_6, %c0_7] : memref<256x16xbf16, #tpu.memory_space<vmem>>, vector<256x16xbf16>
    tpu.vector_store %arg4[%c0_6, %c0_7], %8 {strides = array<i32>} : memref<256x16xbf16, #tpu.memory_space<vmem>>, vector<256x16xbf16>,
    return
  }
  func.func @transform_0(%arg0: i32) -> (i32, i32) {
    %c0_i32 = arith.constant 0 : i32
    %c0_i32_0 = arith.constant 0 : i32
    return %arg0, %c0_i32 : i32, i32
  }
  func.func @transform_1(%arg0: i32) -> (i32, i32) {
    %c0_i32 = arith.constant 0 : i32
    %c0_i32_0 = arith.constant 0 : i32
    %c0_i32_1 = arith.constant 0 : i32
    return %c0_i32, %c0_i32_0 : i32, i32
  }
  func.func @transform_2(%arg0: i32) -> (i32, i32) {
    %c0_i32 = arith.constant 0 : i32
    %c0_i32_0 = arith.constant 0 : i32
    %c0_i32_1 = arith.constant 0 : i32
    return %c0_i32, %c0_i32_0 : i32, i32
  }
  func.func @transform_3(%arg0: i32) -> (i32, i32) {
    %c0_i32 = arith.constant 0 : i32
    %c0_i32_0 = arith.constant 0 : i32
    return %arg0, %c0_i32 : i32, i32
  }
}

module attributes {stable_mosaic.version = 11 : i64} {
  func.func @_matmul_bias_act_kernel(%arg0: i32, %arg1: memref<128x144xbf16, #tpu.memory_space<vmem>>, %arg2: memref<144x24xbf16, #tpu.memory_space<vmem>>, %arg3: memref<1x24xf32, #tpu.memory_space<vmem>>, %arg4: memref<128x24xbf16, #tpu.memory_space<vmem>>) attributes {dimension_semantics = [#tpu.dimension_semantics<parallel>], iteration_bounds = array<i64: 1>, scalar_prefetch = 0 : i64, scratch_operands = 0 : i64, tpu.core_type = #tpu.core_type<tc>, window_params = [{transform_indices = @transform_0, window_bounds = array<i64: 128, 144>}, {pipeline_mode = #tpu.pipeline_mode<synchronous>, transform_indices = @transform_1, window_bounds = array<i64: 144, 24>}, {pipeline_mode = #tpu.pipeline_mode<synchronous>, transform_indices = @transform_2, window_bounds = array<i64: 1, 24>}, {transform_indices = @transform_3, window_bounds = array<i64: 128, 24>}]} {
    %c0 = arith.constant 0 : index
    %c0_0 = arith.constant 0 : index
    %0 = vector.load %arg1[%c0, %c0_0] : memref<128x144xbf16, #tpu.memory_space<vmem>>, vector<128x144xbf16>
    %c0_1 = arith.constant 0 : index
    %c0_2 = arith.constant 0 : index
    %1 = vector.load %arg2[%c0_1, %c0_2] : memref<144x24xbf16, #tpu.memory_space<vmem>>, vector<144x24xbf16>
    %cst = arith.constant dense<0.000000e+00> : vector<128x24xf32>
    %2 = tpu.matmul %0, %1, %cst {dimension_numbers = #tpu.dot_dimension_numbers<[1], [0], [0], [1], [0, 0, 1, 1], [], []>} : vector<128x144xbf16>, vector<144x24xbf16>, vector<128x24xf32> -> vector<128x24xf32>
    %c0_3 = arith.constant 0 : index
    %c0_4 = arith.constant 0 : index
    %3 = vector.load %arg3[%c0_3, %c0_4] : memref<1x24xf32, #tpu.memory_space<vmem>>, vector<1x24xf32>
    %4 = vector.broadcast %3 : vector<1x24xf32> to vector<128x24xf32>
    %5 = arith.addf %2, %4 : vector<128x24xf32>
    %cst_5 = arith.constant 0.000000e+00 : f32
    %6 = vector.broadcast %cst_5 : f32 to vector<128x24xf32>
    %7 = arith.maximumf %5, %6 : vector<128x24xf32>
    %8 = arith.truncf %7 : vector<128x24xf32> to vector<128x24xbf16>
    %c0_6 = arith.constant 0 : index
    %c0_7 = arith.constant 0 : index
    %9 = vector.load %arg4[%c0_6, %c0_7] : memref<128x24xbf16, #tpu.memory_space<vmem>>, vector<128x24xbf16>
    tpu.vector_store %arg4[%c0_6, %c0_7], %8 {strides = array<i32>} : memref<128x24xbf16, #tpu.memory_space<vmem>>, vector<128x24xbf16>,
    return
  }
  func.func @transform_0(%arg0: i32) -> (i32, i32) {
    %c0_i32 = arith.constant 0 : i32
    %c0_i32_0 = arith.constant 0 : i32
    return %arg0, %c0_i32 : i32, i32
  }
  func.func @transform_1(%arg0: i32) -> (i32, i32) {
    %c0_i32 = arith.constant 0 : i32
    %c0_i32_0 = arith.constant 0 : i32
    %c0_i32_1 = arith.constant 0 : i32
    return %c0_i32, %c0_i32_0 : i32, i32
  }
  func.func @transform_2(%arg0: i32) -> (i32, i32) {
    %c0_i32 = arith.constant 0 : i32
    %c0_i32_0 = arith.constant 0 : i32
    %c0_i32_1 = arith.constant 0 : i32
    return %c0_i32, %c0_i32_0 : i32, i32
  }
  func.func @transform_3(%arg0: i32) -> (i32, i32) {
    %c0_i32 = arith.constant 0 : i32
    %c0_i32_0 = arith.constant 0 : i32
    return %arg0, %c0_i32 : i32, i32
  }
}

module attributes {stable_mosaic.version = 11 : i64} {
  func.func @_matmul_bias_act_kernel(%arg0: i32, %arg1: memref<32x216xbf16, #tpu.memory_space<vmem>>, %arg2: memref<216x32xbf16, #tpu.memory_space<vmem>>, %arg3: memref<1x32xf32, #tpu.memory_space<vmem>>, %arg4: memref<32x32xbf16, #tpu.memory_space<vmem>>) attributes {dimension_semantics = [#tpu.dimension_semantics<parallel>], iteration_bounds = array<i64: 1>, scalar_prefetch = 0 : i64, scratch_operands = 0 : i64, tpu.core_type = #tpu.core_type<tc>, window_params = [{transform_indices = @transform_0, window_bounds = array<i64: 32, 216>}, {pipeline_mode = #tpu.pipeline_mode<synchronous>, transform_indices = @transform_1, window_bounds = array<i64: 216, 32>}, {pipeline_mode = #tpu.pipeline_mode<synchronous>, transform_indices = @transform_2, window_bounds = array<i64: 1, 32>}, {transform_indices = @transform_3, window_bounds = array<i64: 32, 32>}]} {
    %c0 = arith.constant 0 : index
    %c0_0 = arith.constant 0 : index
    %0 = vector.load %arg1[%c0, %c0_0] : memref<32x216xbf16, #tpu.memory_space<vmem>>, vector<32x216xbf16>
    %c0_1 = arith.constant 0 : index
    %c0_2 = arith.constant 0 : index
    %1 = vector.load %arg2[%c0_1, %c0_2] : memref<216x32xbf16, #tpu.memory_space<vmem>>, vector<216x32xbf16>
    %cst = arith.constant dense<0.000000e+00> : vector<32x32xf32>
    %2 = tpu.matmul %0, %1, %cst {dimension_numbers = #tpu.dot_dimension_numbers<[1], [0], [0], [1], [0, 0, 1, 1], [], []>} : vector<32x216xbf16>, vector<216x32xbf16>, vector<32x32xf32> -> vector<32x32xf32>
    %c0_3 = arith.constant 0 : index
    %c0_4 = arith.constant 0 : index
    %3 = vector.load %arg3[%c0_3, %c0_4] : memref<1x32xf32, #tpu.memory_space<vmem>>, vector<1x32xf32>
    %4 = vector.broadcast %3 : vector<1x32xf32> to vector<32x32xf32>
    %5 = arith.addf %2, %4 : vector<32x32xf32>
    %cst_5 = arith.constant 0.000000e+00 : f32
    %6 = vector.broadcast %cst_5 : f32 to vector<32x32xf32>
    %7 = arith.maximumf %5, %6 : vector<32x32xf32>
    %8 = arith.truncf %7 : vector<32x32xf32> to vector<32x32xbf16>
    %c0_6 = arith.constant 0 : index
    %c0_7 = arith.constant 0 : index
    %9 = vector.load %arg4[%c0_6, %c0_7] : memref<32x32xbf16, #tpu.memory_space<vmem>>, vector<32x32xbf16>
    tpu.vector_store %arg4[%c0_6, %c0_7], %8 {strides = array<i32>} : memref<32x32xbf16, #tpu.memory_space<vmem>>, vector<32x32xbf16>,
    return
  }
  func.func @transform_0(%arg0: i32) -> (i32, i32) {
    %c0_i32 = arith.constant 0 : i32
    %c0_i32_0 = arith.constant 0 : i32
    return %arg0, %c0_i32 : i32, i32
  }
  func.func @transform_1(%arg0: i32) -> (i32, i32) {
    %c0_i32 = arith.constant 0 : i32
    %c0_i32_0 = arith.constant 0 : i32
    %c0_i32_1 = arith.constant 0 : i32
    return %c0_i32, %c0_i32_0 : i32, i32
  }
  func.func @transform_2(%arg0: i32) -> (i32, i32) {
    %c0_i32 = arith.constant 0 : i32
    %c0_i32_0 = arith.constant 0 : i32
    %c0_i32_1 = arith.constant 0 : i32
    return %c0_i32, %c0_i32_0 : i32, i32
  }
  func.func @transform_3(%arg0: i32) -> (i32, i32) {
    %c0_i32 = arith.constant 0 : i32
    %c0_i32_0 = arith.constant 0 : i32
    return %arg0, %c0_i32 : i32, i32
  }
}

module attributes {stable_mosaic.version = 11 : i64} {
  func.func @_matmul_bias_act_kernel(%arg0: i32, %arg1: memref<8x288xbf16, #tpu.memory_space<vmem>>, %arg2: memref<288x64xbf16, #tpu.memory_space<vmem>>, %arg3: memref<1x64xf32, #tpu.memory_space<vmem>>, %arg4: memref<8x64xbf16, #tpu.memory_space<vmem>>) attributes {dimension_semantics = [#tpu.dimension_semantics<parallel>], iteration_bounds = array<i64: 1>, scalar_prefetch = 0 : i64, scratch_operands = 0 : i64, tpu.core_type = #tpu.core_type<tc>, window_params = [{transform_indices = @transform_0, window_bounds = array<i64: 8, 288>}, {pipeline_mode = #tpu.pipeline_mode<synchronous>, transform_indices = @transform_1, window_bounds = array<i64: 288, 64>}, {pipeline_mode = #tpu.pipeline_mode<synchronous>, transform_indices = @transform_2, window_bounds = array<i64: 1, 64>}, {transform_indices = @transform_3, window_bounds = array<i64: 8, 64>}]} {
    %c0 = arith.constant 0 : index
    %c0_0 = arith.constant 0 : index
    %0 = vector.load %arg1[%c0, %c0_0] : memref<8x288xbf16, #tpu.memory_space<vmem>>, vector<8x288xbf16>
    %c0_1 = arith.constant 0 : index
    %c0_2 = arith.constant 0 : index
    %1 = vector.load %arg2[%c0_1, %c0_2] : memref<288x64xbf16, #tpu.memory_space<vmem>>, vector<288x64xbf16>
    %cst = arith.constant dense<0.000000e+00> : vector<8x64xf32>
    %2 = tpu.matmul %0, %1, %cst {dimension_numbers = #tpu.dot_dimension_numbers<[1], [0], [0], [1], [0, 0, 1, 1], [], []>} : vector<8x288xbf16>, vector<288x64xbf16>, vector<8x64xf32> -> vector<8x64xf32>
    %c0_3 = arith.constant 0 : index
    %c0_4 = arith.constant 0 : index
    %3 = vector.load %arg3[%c0_3, %c0_4] : memref<1x64xf32, #tpu.memory_space<vmem>>, vector<1x64xf32>
    %4 = vector.broadcast %3 : vector<1x64xf32> to vector<8x64xf32>
    %5 = arith.addf %2, %4 : vector<8x64xf32>
    %cst_5 = arith.constant 0.000000e+00 : f32
    %6 = vector.broadcast %cst_5 : f32 to vector<8x64xf32>
    %7 = arith.maximumf %5, %6 : vector<8x64xf32>
    %8 = arith.truncf %7 : vector<8x64xf32> to vector<8x64xbf16>
    %c0_6 = arith.constant 0 : index
    %c0_7 = arith.constant 0 : index
    %9 = vector.load %arg4[%c0_6, %c0_7] : memref<8x64xbf16, #tpu.memory_space<vmem>>, vector<8x64xbf16>
    tpu.vector_store %arg4[%c0_6, %c0_7], %8 {strides = array<i32>} : memref<8x64xbf16, #tpu.memory_space<vmem>>, vector<8x64xbf16>,
    return
  }
  func.func @transform_0(%arg0: i32) -> (i32, i32) {
    %c0_i32 = arith.constant 0 : i32
    %c0_i32_0 = arith.constant 0 : i32
    return %arg0, %c0_i32 : i32, i32
  }
  func.func @transform_1(%arg0: i32) -> (i32, i32) {
    %c0_i32 = arith.constant 0 : i32
    %c0_i32_0 = arith.constant 0 : i32
    %c0_i32_1 = arith.constant 0 : i32
    return %c0_i32, %c0_i32_0 : i32, i32
  }
  func.func @transform_2(%arg0: i32) -> (i32, i32) {
    %c0_i32 = arith.constant 0 : i32
    %c0_i32_0 = arith.constant 0 : i32
    %c0_i32_1 = arith.constant 0 : i32
    return %c0_i32, %c0_i32_0 : i32, i32
  }
  func.func @transform_3(%arg0: i32) -> (i32, i32) {
    %c0_i32 = arith.constant 0 : i32
    %c0_i32_0 = arith.constant 0 : i32
    return %arg0, %c0_i32 : i32, i32
  }
}

module attributes {stable_mosaic.version = 11 : i64} {
  func.func @_aspp_fused_kernel(%arg0: memref<8x1792xbf16, #tpu.memory_space<vmem>>, %arg1: memref<1792x128xbf16, #tpu.memory_space<vmem>>, %arg2: memref<1x128xf32, #tpu.memory_space<vmem>>, %arg3: memref<128x32xbf16, #tpu.memory_space<vmem>>, %arg4: memref<8x32xf32, #tpu.memory_space<vmem>>, %arg5: memref<8x32xbf16, #tpu.memory_space<vmem>>) attributes {dimension_semantics = [], scalar_prefetch = 0 : i64, scratch_operands = 0 : i64, tpu.core_type = #tpu.core_type<tc>} {
    %c0 = arith.constant 0 : index
    %c0_0 = arith.constant 0 : index
    %0 = vector.load %arg0[%c0, %c0_0] : memref<8x1792xbf16, #tpu.memory_space<vmem>>, vector<8x1792xbf16>
    %c0_1 = arith.constant 0 : index
    %c0_2 = arith.constant 0 : index
    %1 = vector.load %arg1[%c0_1, %c0_2] : memref<1792x128xbf16, #tpu.memory_space<vmem>>, vector<1792x128xbf16>
    %cst = arith.constant dense<0.000000e+00> : vector<8x128xf32>
    %2 = tpu.matmul %0, %1, %cst {dimension_numbers = #tpu.dot_dimension_numbers<[1], [0], [0], [1], [0, 0, 1, 1], [], []>} : vector<8x1792xbf16>, vector<1792x128xbf16>, vector<8x128xf32> -> vector<8x128xf32>
    %c0_3 = arith.constant 0 : index
    %c0_4 = arith.constant 0 : index
    %3 = vector.load %arg2[%c0_3, %c0_4] : memref<1x128xf32, #tpu.memory_space<vmem>>, vector<1x128xf32>
    %4 = vector.broadcast %3 : vector<1x128xf32> to vector<8x128xf32>
    %5 = arith.addf %2, %4 : vector<8x128xf32>
    %cst_5 = arith.constant 0.000000e+00 : f32
    %6 = vector.broadcast %cst_5 : f32 to vector<8x128xf32>
    %7 = arith.maximumf %5, %6 : vector<8x128xf32>
    %8 = arith.truncf %7 : vector<8x128xf32> to vector<8x128xbf16>
    %c0_6 = arith.constant 0 : index
    %c0_7 = arith.constant 0 : index
    %9 = vector.load %arg3[%c0_6, %c0_7] : memref<128x32xbf16, #tpu.memory_space<vmem>>, vector<128x32xbf16>
    %cst_8 = arith.constant dense<0.000000e+00> : vector<8x32xf32>
    %10 = tpu.matmul %8, %9, %cst_8 {dimension_numbers = #tpu.dot_dimension_numbers<[1], [0], [0], [1], [0, 0, 1, 1], [], []>} : vector<8x128xbf16>, vector<128x32xbf16>, vector<8x32xf32> -> vector<8x32xf32>
    %c0_9 = arith.constant 0 : index
    %c0_10 = arith.constant 0 : index
    %11 = vector.load %arg4[%c0_9, %c0_10] : memref<8x32xf32, #tpu.memory_space<vmem>>, vector<8x32xf32>
    %12 = arith.addf %10, %11 : vector<8x32xf32>
    %cst_11 = arith.constant 0.000000e+00 : f32
    %13 = vector.broadcast %cst_11 : f32 to vector<8x32xf32>
    %14 = arith.maximumf %12, %13 : vector<8x32xf32>
    %15 = arith.truncf %14 : vector<8x32xf32> to vector<8x32xbf16>
    %c0_12 = arith.constant 0 : index
    %c0_13 = arith.constant 0 : index
    %16 = vector.load %arg5[%c0_12, %c0_13] : memref<8x32xbf16, #tpu.memory_space<vmem>>, vector<8x32xbf16>
    tpu.vector_store %arg5[%c0_12, %c0_13], %15 {strides = array<i32>} : memref<8x32xbf16, #tpu.memory_space<vmem>>, vector<8x32xbf16>,
    return
  }
}

module attributes {stable_mosaic.version = 11 : i64} {
  func.func @_matmul_bias_act_kernel(%arg0: i32, %arg1: memref<128x24xbf16, #tpu.memory_space<vmem>>, %arg2: memref<24x48xbf16, #tpu.memory_space<vmem>>, %arg3: memref<1x48xf32, #tpu.memory_space<vmem>>, %arg4: memref<128x48xbf16, #tpu.memory_space<vmem>>) attributes {dimension_semantics = [#tpu.dimension_semantics<parallel>], iteration_bounds = array<i64: 1>, scalar_prefetch = 0 : i64, scratch_operands = 0 : i64, tpu.core_type = #tpu.core_type<tc>, window_params = [{transform_indices = @transform_0, window_bounds = array<i64: 128, 24>}, {pipeline_mode = #tpu.pipeline_mode<synchronous>, transform_indices = @transform_1, window_bounds = array<i64: 24, 48>}, {pipeline_mode = #tpu.pipeline_mode<synchronous>, transform_indices = @transform_2, window_bounds = array<i64: 1, 48>}, {transform_indices = @transform_3, window_bounds = array<i64: 128, 48>}]} {
    %c0 = arith.constant 0 : index
    %c0_0 = arith.constant 0 : index
    %0 = vector.load %arg1[%c0, %c0_0] : memref<128x24xbf16, #tpu.memory_space<vmem>>, vector<128x24xbf16>
    %c0_1 = arith.constant 0 : index
    %c0_2 = arith.constant 0 : index
    %1 = vector.load %arg2[%c0_1, %c0_2] : memref<24x48xbf16, #tpu.memory_space<vmem>>, vector<24x48xbf16>
    %cst = arith.constant dense<0.000000e+00> : vector<128x48xf32>
    %2 = tpu.matmul %0, %1, %cst {dimension_numbers = #tpu.dot_dimension_numbers<[1], [0], [0], [1], [0, 0, 1, 1], [], []>} : vector<128x24xbf16>, vector<24x48xbf16>, vector<128x48xf32> -> vector<128x48xf32>
    %c0_3 = arith.constant 0 : index
    %c0_4 = arith.constant 0 : index
    %3 = vector.load %arg3[%c0_3, %c0_4] : memref<1x48xf32, #tpu.memory_space<vmem>>, vector<1x48xf32>
    %4 = vector.broadcast %3 : vector<1x48xf32> to vector<128x48xf32>
    %5 = arith.addf %2, %4 : vector<128x48xf32>
    %cst_5 = arith.constant 0.000000e+00 : f32
    %6 = vector.broadcast %cst_5 : f32 to vector<128x48xf32>
    %7 = arith.maximumf %5, %6 : vector<128x48xf32>
    %8 = arith.truncf %7 : vector<128x48xf32> to vector<128x48xbf16>
    %c0_6 = arith.constant 0 : index
    %c0_7 = arith.constant 0 : index
    %9 = vector.load %arg4[%c0_6, %c0_7] : memref<128x48xbf16, #tpu.memory_space<vmem>>, vector<128x48xbf16>
    tpu.vector_store %arg4[%c0_6, %c0_7], %8 {strides = array<i32>} : memref<128x48xbf16, #tpu.memory_space<vmem>>, vector<128x48xbf16>,
    return
  }
  func.func @transform_0(%arg0: i32) -> (i32, i32) {
    %c0_i32 = arith.constant 0 : i32
    %c0_i32_0 = arith.constant 0 : i32
    return %arg0, %c0_i32 : i32, i32
  }
  func.func @transform_1(%arg0: i32) -> (i32, i32) {
    %c0_i32 = arith.constant 0 : i32
    %c0_i32_0 = arith.constant 0 : i32
    %c0_i32_1 = arith.constant 0 : i32
    return %c0_i32, %c0_i32_0 : i32, i32
  }
  func.func @transform_2(%arg0: i32) -> (i32, i32) {
    %c0_i32 = arith.constant 0 : i32
    %c0_i32_0 = arith.constant 0 : i32
    %c0_i32_1 = arith.constant 0 : i32
    return %c0_i32, %c0_i32_0 : i32, i32
  }
  func.func @transform_3(%arg0: i32) -> (i32, i32) {
    %c0_i32 = arith.constant 0 : i32
    %c0_i32_0 = arith.constant 0 : i32
    return %arg0, %c0_i32 : i32, i32
  }
}

module attributes {stable_mosaic.version = 11 : i64} {
  func.func @_matmul_bias_act_kernel(%arg0: i32, %arg1: memref<128x720xbf16, #tpu.memory_space<vmem>>, %arg2: memref<720x32xbf16, #tpu.memory_space<vmem>>, %arg3: memref<1x32xf32, #tpu.memory_space<vmem>>, %arg4: memref<128x32xbf16, #tpu.memory_space<vmem>>) attributes {dimension_semantics = [#tpu.dimension_semantics<parallel>], iteration_bounds = array<i64: 1>, scalar_prefetch = 0 : i64, scratch_operands = 0 : i64, tpu.core_type = #tpu.core_type<tc>, window_params = [{transform_indices = @transform_0, window_bounds = array<i64: 128, 720>}, {pipeline_mode = #tpu.pipeline_mode<synchronous>, transform_indices = @transform_1, window_bounds = array<i64: 720, 32>}, {pipeline_mode = #tpu.pipeline_mode<synchronous>, transform_indices = @transform_2, window_bounds = array<i64: 1, 32>}, {transform_indices = @transform_3, window_bounds = array<i64: 128, 32>}]} {
    %c0 = arith.constant 0 : index
    %c0_0 = arith.constant 0 : index
    %0 = vector.load %arg1[%c0, %c0_0] : memref<128x720xbf16, #tpu.memory_space<vmem>>, vector<128x720xbf16>
    %c0_1 = arith.constant 0 : index
    %c0_2 = arith.constant 0 : index
    %1 = vector.load %arg2[%c0_1, %c0_2] : memref<720x32xbf16, #tpu.memory_space<vmem>>, vector<720x32xbf16>
    %cst = arith.constant dense<0.000000e+00> : vector<128x32xf32>
    %2 = tpu.matmul %0, %1, %cst {dimension_numbers = #tpu.dot_dimension_numbers<[1], [0], [0], [1], [0, 0, 1, 1], [], []>} : vector<128x720xbf16>, vector<720x32xbf16>, vector<128x32xf32> -> vector<128x32xf32>
    %c0_3 = arith.constant 0 : index
    %c0_4 = arith.constant 0 : index
    %3 = vector.load %arg3[%c0_3, %c0_4] : memref<1x32xf32, #tpu.memory_space<vmem>>, vector<1x32xf32>
    %4 = vector.broadcast %3 : vector<1x32xf32> to vector<128x32xf32>
    %5 = arith.addf %2, %4 : vector<128x32xf32>
    %cst_5 = arith.constant 0.000000e+00 : f32
    %6 = vector.broadcast %cst_5 : f32 to vector<128x32xf32>
    %7 = arith.maximumf %5, %6 : vector<128x32xf32>
    %8 = arith.truncf %7 : vector<128x32xf32> to vector<128x32xbf16>
    %c0_6 = arith.constant 0 : index
    %c0_7 = arith.constant 0 : index
    %9 = vector.load %arg4[%c0_6, %c0_7] : memref<128x32xbf16, #tpu.memory_space<vmem>>, vector<128x32xbf16>
    tpu.vector_store %arg4[%c0_6, %c0_7], %8 {strides = array<i32>} : memref<128x32xbf16, #tpu.memory_space<vmem>>, vector<128x32xbf16>,
    return
  }
  func.func @transform_0(%arg0: i32) -> (i32, i32) {
    %c0_i32 = arith.constant 0 : i32
    %c0_i32_0 = arith.constant 0 : i32
    return %arg0, %c0_i32 : i32, i32
  }
  func.func @transform_1(%arg0: i32) -> (i32, i32) {
    %c0_i32 = arith.constant 0 : i32
    %c0_i32_0 = arith.constant 0 : i32
    %c0_i32_1 = arith.constant 0 : i32
    return %c0_i32, %c0_i32_0 : i32, i32
  }
  func.func @transform_2(%arg0: i32) -> (i32, i32) {
    %c0_i32 = arith.constant 0 : i32
    %c0_i32_0 = arith.constant 0 : i32
    %c0_i32_1 = arith.constant 0 : i32
    return %c0_i32, %c0_i32_0 : i32, i32
  }
  func.func @transform_3(%arg0: i32) -> (i32, i32) {
    %c0_i32 = arith.constant 0 : i32
    %c0_i32_0 = arith.constant 0 : i32
    return %arg0, %c0_i32 : i32, i32
  }
}

module attributes {stable_mosaic.version = 11 : i64} {
  func.func @_matmul_bias_act_kernel(%arg0: i32, %arg1: memref<128x288xbf16, #tpu.memory_space<vmem>>, %arg2: memref<288x32xbf16, #tpu.memory_space<vmem>>, %arg3: memref<1x32xf32, #tpu.memory_space<vmem>>, %arg4: memref<128x32xbf16, #tpu.memory_space<vmem>>) attributes {dimension_semantics = [#tpu.dimension_semantics<parallel>], iteration_bounds = array<i64: 1>, scalar_prefetch = 0 : i64, scratch_operands = 0 : i64, tpu.core_type = #tpu.core_type<tc>, window_params = [{transform_indices = @transform_0, window_bounds = array<i64: 128, 288>}, {pipeline_mode = #tpu.pipeline_mode<synchronous>, transform_indices = @transform_1, window_bounds = array<i64: 288, 32>}, {pipeline_mode = #tpu.pipeline_mode<synchronous>, transform_indices = @transform_2, window_bounds = array<i64: 1, 32>}, {transform_indices = @transform_3, window_bounds = array<i64: 128, 32>}]} {
    %c0 = arith.constant 0 : index
    %c0_0 = arith.constant 0 : index
    %0 = vector.load %arg1[%c0, %c0_0] : memref<128x288xbf16, #tpu.memory_space<vmem>>, vector<128x288xbf16>
    %c0_1 = arith.constant 0 : index
    %c0_2 = arith.constant 0 : index
    %1 = vector.load %arg2[%c0_1, %c0_2] : memref<288x32xbf16, #tpu.memory_space<vmem>>, vector<288x32xbf16>
    %cst = arith.constant dense<0.000000e+00> : vector<128x32xf32>
    %2 = tpu.matmul %0, %1, %cst {dimension_numbers = #tpu.dot_dimension_numbers<[1], [0], [0], [1], [0, 0, 1, 1], [], []>} : vector<128x288xbf16>, vector<288x32xbf16>, vector<128x32xf32> -> vector<128x32xf32>
    %c0_3 = arith.constant 0 : index
    %c0_4 = arith.constant 0 : index
    %3 = vector.load %arg3[%c0_3, %c0_4] : memref<1x32xf32, #tpu.memory_space<vmem>>, vector<1x32xf32>
    %4 = vector.broadcast %3 : vector<1x32xf32> to vector<128x32xf32>
    %5 = arith.addf %2, %4 : vector<128x32xf32>
    %cst_5 = arith.constant 0.000000e+00 : f32
    %6 = vector.broadcast %cst_5 : f32 to vector<128x32xf32>
    %7 = arith.maximumf %5, %6 : vector<128x32xf32>
    %8 = arith.truncf %7 : vector<128x32xf32> to vector<128x32xbf16>
    %c0_6 = arith.constant 0 : index
    %c0_7 = arith.constant 0 : index
    %9 = vector.load %arg4[%c0_6, %c0_7] : memref<128x32xbf16, #tpu.memory_space<vmem>>, vector<128x32xbf16>
    tpu.vector_store %arg4[%c0_6, %c0_7], %8 {strides = array<i32>} : memref<128x32xbf16, #tpu.memory_space<vmem>>, vector<128x32xbf16>,
    return
  }
  func.func @transform_0(%arg0: i32) -> (i32, i32) {
    %c0_i32 = arith.constant 0 : i32
    %c0_i32_0 = arith.constant 0 : i32
    return %arg0, %c0_i32 : i32, i32
  }
  func.func @transform_1(%arg0: i32) -> (i32, i32) {
    %c0_i32 = arith.constant 0 : i32
    %c0_i32_0 = arith.constant 0 : i32
    %c0_i32_1 = arith.constant 0 : i32
    return %c0_i32, %c0_i32_0 : i32, i32
  }
  func.func @transform_2(%arg0: i32) -> (i32, i32) {
    %c0_i32 = arith.constant 0 : i32
    %c0_i32_0 = arith.constant 0 : i32
    %c0_i32_1 = arith.constant 0 : i32
    return %c0_i32, %c0_i32_0 : i32, i32
  }
  func.func @transform_3(%arg0: i32) -> (i32, i32) {
    %c0_i32 = arith.constant 0 : i32
    %c0_i32_0 = arith.constant 0 : i32
    return %arg0, %c0_i32 : i32, i32
  }
}

module attributes {stable_mosaic.version = 11 : i64} {
  func.func @_matmul_bias_act_kernel(%arg0: i32, %arg1: memref<128x288xbf16, #tpu.memory_space<vmem>>, %arg2: memref<288x4xbf16, #tpu.memory_space<vmem>>, %arg3: memref<1x4xf32, #tpu.memory_space<vmem>>, %arg4: memref<128x4xf32, #tpu.memory_space<vmem>>) attributes {dimension_semantics = [#tpu.dimension_semantics<parallel>], iteration_bounds = array<i64: 1>, scalar_prefetch = 0 : i64, scratch_operands = 0 : i64, tpu.core_type = #tpu.core_type<tc>, window_params = [{transform_indices = @transform_0, window_bounds = array<i64: 128, 288>}, {pipeline_mode = #tpu.pipeline_mode<synchronous>, transform_indices = @transform_1, window_bounds = array<i64: 288, 4>}, {pipeline_mode = #tpu.pipeline_mode<synchronous>, transform_indices = @transform_2, window_bounds = array<i64: 1, 4>}, {transform_indices = @transform_3, window_bounds = array<i64: 128, 4>}]} {
    %c0 = arith.constant 0 : index
    %c0_0 = arith.constant 0 : index
    %0 = vector.load %arg1[%c0, %c0_0] : memref<128x288xbf16, #tpu.memory_space<vmem>>, vector<128x288xbf16>
    %c0_1 = arith.constant 0 : index
    %c0_2 = arith.constant 0 : index
    %1 = vector.load %arg2[%c0_1, %c0_2] : memref<288x4xbf16, #tpu.memory_space<vmem>>, vector<288x4xbf16>
    %cst = arith.constant dense<0.000000e+00> : vector<128x4xf32>
    %2 = tpu.matmul %0, %1, %cst {dimension_numbers = #tpu.dot_dimension_numbers<[1], [0], [0], [1], [0, 0, 1, 1], [], []>} : vector<128x288xbf16>, vector<288x4xbf16>, vector<128x4xf32> -> vector<128x4xf32>
    %c0_3 = arith.constant 0 : index
    %c0_4 = arith.constant 0 : index
    %3 = vector.load %arg3[%c0_3, %c0_4] : memref<1x4xf32, #tpu.memory_space<vmem>>, vector<1x4xf32>
    %4 = vector.broadcast %3 : vector<1x4xf32> to vector<128x4xf32>
    %5 = arith.addf %2, %4 : vector<128x4xf32>
    %c0_5 = arith.constant 0 : index
    %c0_6 = arith.constant 0 : index
    %6 = vector.load %arg4[%c0_5, %c0_6] : memref<128x4xf32, #tpu.memory_space<vmem>>, vector<128x4xf32>
    tpu.vector_store %arg4[%c0_5, %c0_6], %5 {strides = array<i32>} : memref<128x4xf32, #tpu.memory_space<vmem>>, vector<128x4xf32>,
    return
  }
  func.func @transform_0(%arg0: i32) -> (i32, i32) {
    %c0_i32 = arith.constant 0 : i32
    %c0_i32_0 = arith.constant 0 : i32
    return %arg0, %c0_i32 : i32, i32
  }
  func.func @transform_1(%arg0: i32) -> (i32, i32) {
    %c0_i32 = arith.constant 0 : i32
    %c0_i32_0 = arith.constant 0 : i32
    %c0_i32_1 = arith.constant 0 : i32
    return %c0_i32, %c0_i32_0 : i32, i32
  }
  func.func @transform_2(%arg0: i32) -> (i32, i32) {
    %c0_i32 = arith.constant 0 : i32
    %c0_i32_0 = arith.constant 0 : i32
    %c0_i32_1 = arith.constant 0 : i32
    return %c0_i32, %c0_i32_0 : i32, i32
  }
  func.func @transform_3(%arg0: i32) -> (i32, i32) {
    %c0_i32 = arith.constant 0 : i32
    %c0_i32_0 = arith.constant 0 : i32
    return %arg0, %c0_i32 : i32, i32
  }
}

module attributes {stable_mosaic.version = 11 : i64} {
  func.func @_upsample_softmax_kernel(%arg0: i32, %arg1: memref<1x4x8x8xf32, #tpu.memory_space<vmem>>, %arg2: memref<32x8xf32, #tpu.memory_space<vmem>>, %arg3: memref<8x32xf32, #tpu.memory_space<vmem>>, %arg4: memref<1x4x32x32xf32, #tpu.memory_space<vmem>>) attributes {dimension_semantics = [#tpu.dimension_semantics<parallel>], iteration_bounds = array<i64: 2>, scalar_prefetch = 0 : i64, scratch_operands = 0 : i64, tpu.core_type = #tpu.core_type<tc>, window_params = [{transform_indices = @transform_0, window_bounds = array<i64: 1, 4, 8, 8>}, {pipeline_mode = #tpu.pipeline_mode<synchronous>, transform_indices = @transform_1, window_bounds = array<i64: 32, 8>}, {pipeline_mode = #tpu.pipeline_mode<synchronous>, transform_indices = @transform_2, window_bounds = array<i64: 8, 32>}, {transform_indices = @transform_3, window_bounds = array<i64: 1, 4, 32, 32>}]} {
    %c0 = arith.constant 0 : index
    %c0_0 = arith.constant 0 : index
    %0 = vector.load %arg2[%c0, %c0_0] : memref<32x8xf32, #tpu.memory_space<vmem>>, vector<32x8xf32>
    %c0_1 = arith.constant 0 : index
    %c0_2 = arith.constant 0 : index
    %c0_3 = arith.constant 0 : index
    %c0_4 = arith.constant 0 : index
    %1 = vector.load %arg1[%c0_1, %c0_2, %c0_3, %c0_4] : memref<1x4x8x8xf32, #tpu.memory_space<vmem>>, vector<1x1x8x8xf32>
    %2 = vector.shape_cast %1 : vector<1x1x8x8xf32> to vector<8x8xf32>
    %cst = arith.constant dense<0.000000e+00> : vector<32x8xf32>
    %3 = tpu.matmul %0, %2, %cst {dimension_numbers = #tpu.dot_dimension_numbers<[1], [0], [0], [1], [0, 0, 1, 1], [], []>} : vector<32x8xf32>, vector<8x8xf32>, vector<32x8xf32> -> vector<32x8xf32>
    %c0_5 = arith.constant 0 : index
    %c0_6 = arith.constant 0 : index
    %4 = vector.load %arg3[%c0_5, %c0_6] : memref<8x32xf32, #tpu.memory_space<vmem>>, vector<8x32xf32>
    %cst_7 = arith.constant dense<0.000000e+00> : vector<32x32xf32>
    %5 = tpu.matmul %3, %4, %cst_7 {dimension_numbers = #tpu.dot_dimension_numbers<[1], [0], [0], [1], [0, 0, 1, 1], [], []>} : vector<32x8xf32>, vector<8x32xf32>, vector<32x32xf32> -> vector<32x32xf32>
    %c0_8 = arith.constant 0 : index
    %c0_9 = arith.constant 0 : index
    %6 = vector.load %arg2[%c0_8, %c0_9] : memref<32x8xf32, #tpu.memory_space<vmem>>, vector<32x8xf32>
    %c0_10 = arith.constant 0 : index
    %c1 = arith.constant 1 : index
    %c0_11 = arith.constant 0 : index
    %c0_12 = arith.constant 0 : index
    %7 = vector.load %arg1[%c0_10, %c1, %c0_11, %c0_12] : memref<1x4x8x8xf32, #tpu.memory_space<vmem>>, vector<1x1x8x8xf32>
    %8 = vector.shape_cast %7 : vector<1x1x8x8xf32> to vector<8x8xf32>
    %cst_13 = arith.constant dense<0.000000e+00> : vector<32x8xf32>
    %9 = tpu.matmul %6, %8, %cst_13 {dimension_numbers = #tpu.dot_dimension_numbers<[1], [0], [0], [1], [0, 0, 1, 1], [], []>} : vector<32x8xf32>, vector<8x8xf32>, vector<32x8xf32> -> vector<32x8xf32>
    %c0_14 = arith.constant 0 : index
    %c0_15 = arith.constant 0 : index
    %10 = vector.load %arg3[%c0_14, %c0_15] : memref<8x32xf32, #tpu.memory_space<vmem>>, vector<8x32xf32>
    %cst_16 = arith.constant dense<0.000000e+00> : vector<32x32xf32>
    %11 = tpu.matmul %9, %10, %cst_16 {dimension_numbers = #tpu.dot_dimension_numbers<[1], [0], [0], [1], [0, 0, 1, 1], [], []>} : vector<32x8xf32>, vector<8x32xf32>, vector<32x32xf32> -> vector<32x32xf32>
    %c0_17 = arith.constant 0 : index
    %c0_18 = arith.constant 0 : index
    %12 = vector.load %arg2[%c0_17, %c0_18] : memref<32x8xf32, #tpu.memory_space<vmem>>, vector<32x8xf32>
    %c0_19 = arith.constant 0 : index
    %c2 = arith.constant 2 : index
    %c0_20 = arith.constant 0 : index
    %c0_21 = arith.constant 0 : index
    %13 = vector.load %arg1[%c0_19, %c2, %c0_20, %c0_21] : memref<1x4x8x8xf32, #tpu.memory_space<vmem>>, vector<1x1x8x8xf32>
    %14 = vector.shape_cast %13 : vector<1x1x8x8xf32> to vector<8x8xf32>
    %cst_22 = arith.constant dense<0.000000e+00> : vector<32x8xf32>
    %15 = tpu.matmul %12, %14, %cst_22 {dimension_numbers = #tpu.dot_dimension_numbers<[1], [0], [0], [1], [0, 0, 1, 1], [], []>} : vector<32x8xf32>, vector<8x8xf32>, vector<32x8xf32> -> vector<32x8xf32>
    %c0_23 = arith.constant 0 : index
    %c0_24 = arith.constant 0 : index
    %16 = vector.load %arg3[%c0_23, %c0_24] : memref<8x32xf32, #tpu.memory_space<vmem>>, vector<8x32xf32>
    %cst_25 = arith.constant dense<0.000000e+00> : vector<32x32xf32>
    %17 = tpu.matmul %15, %16, %cst_25 {dimension_numbers = #tpu.dot_dimension_numbers<[1], [0], [0], [1], [0, 0, 1, 1], [], []>} : vector<32x8xf32>, vector<8x32xf32>, vector<32x32xf32> -> vector<32x32xf32>
    %c0_26 = arith.constant 0 : index
    %c0_27 = arith.constant 0 : index
    %18 = vector.load %arg2[%c0_26, %c0_27] : memref<32x8xf32, #tpu.memory_space<vmem>>, vector<32x8xf32>
    %c0_28 = arith.constant 0 : index
    %c3 = arith.constant 3 : index
    %c0_29 = arith.constant 0 : index
    %c0_30 = arith.constant 0 : index
    %19 = vector.load %arg1[%c0_28, %c3, %c0_29, %c0_30] : memref<1x4x8x8xf32, #tpu.memory_space<vmem>>, vector<1x1x8x8xf32>
    %20 = vector.shape_cast %19 : vector<1x1x8x8xf32> to vector<8x8xf32>
    %cst_31 = arith.constant dense<0.000000e+00> : vector<32x8xf32>
    %21 = tpu.matmul %18, %20, %cst_31 {dimension_numbers = #tpu.dot_dimension_numbers<[1], [0], [0], [1], [0, 0, 1, 1], [], []>} : vector<32x8xf32>, vector<8x8xf32>, vector<32x8xf32> -> vector<32x8xf32>
    %c0_32 = arith.constant 0 : index
    %c0_33 = arith.constant 0 : index
    %22 = vector.load %arg3[%c0_32, %c0_33] : memref<8x32xf32, #tpu.memory_space<vmem>>, vector<8x32xf32>
    %cst_34 = arith.constant dense<0.000000e+00> : vector<32x32xf32>
    %23 = tpu.matmul %21, %22, %cst_34 {dimension_numbers = #tpu.dot_dimension_numbers<[1], [0], [0], [1], [0, 0, 1, 1], [], []>} : vector<32x8xf32>, vector<8x32xf32>, vector<32x32xf32> -> vector<32x32xf32>
    %24 = arith.maximumf %5, %11 : vector<32x32xf32>
    %25 = arith.maximumf %24, %17 : vector<32x32xf32>
    %26 = arith.maximumf %25, %23 : vector<32x32xf32>
    %27 = arith.subf %5, %26 : vector<32x32xf32>
    %28 = math.exp %27 : vector<32x32xf32>
    %29 = arith.subf %11, %26 : vector<32x32xf32>
    %30 = math.exp %29 : vector<32x32xf32>
    %31 = arith.subf %17, %26 : vector<32x32xf32>
    %32 = math.exp %31 : vector<32x32xf32>
    %33 = arith.subf %23, %26 : vector<32x32xf32>
    %34 = math.exp %33 : vector<32x32xf32>
    %35 = arith.addf %28, %30 : vector<32x32xf32>
    %36 = arith.addf %35, %32 : vector<32x32xf32>
    %37 = arith.addf %36, %34 : vector<32x32xf32>
    %cst_35 = arith.constant 1.000000e+00 : f32
    %38 = vector.broadcast %cst_35 : f32 to vector<32x32xf32>
    %39 = arith.divf %38, %37 : vector<32x32xf32>
    %40 = arith.mulf %28, %39 : vector<32x32xf32>
    %c0_36 = arith.constant 0 : index
    %c0_37 = arith.constant 0 : index
    %c0_38 = arith.constant 0 : index
    %c0_39 = arith.constant 0 : index
    %41 = vector.load %arg4[%c0_36, %c0_37, %c0_38, %c0_39] : memref<1x4x32x32xf32, #tpu.memory_space<vmem>>, vector<1x1x32x32xf32>
    %42 = vector.shape_cast %41 : vector<1x1x32x32xf32> to vector<32x32xf32>
    %43 = vector.shape_cast %40 : vector<32x32xf32> to vector<1x1x32x32xf32>
    tpu.vector_store %arg4[%c0_36, %c0_37, %c0_38, %c0_39], %43 {strides = array<i32>} : memref<1x4x32x32xf32, #tpu.memory_space<vmem>>, vector<1x1x32x32xf32>,
    %44 = arith.mulf %30, %39 : vector<32x32xf32>
    %c0_40 = arith.constant 0 : index
    %c1_41 = arith.constant 1 : index
    %c0_42 = arith.constant 0 : index
    %c0_43 = arith.constant 0 : index
    %45 = vector.load %arg4[%c0_40, %c1_41, %c0_42, %c0_43] : memref<1x4x32x32xf32, #tpu.memory_space<vmem>>, vector<1x1x32x32xf32>
    %46 = vector.shape_cast %45 : vector<1x1x32x32xf32> to vector<32x32xf32>
    %47 = vector.shape_cast %44 : vector<32x32xf32> to vector<1x1x32x32xf32>
    tpu.vector_store %arg4[%c0_40, %c1_41, %c0_42, %c0_43], %47 {strides = array<i32>} : memref<1x4x32x32xf32, #tpu.memory_space<vmem>>, vector<1x1x32x32xf32>,
    %48 = arith.mulf %32, %39 : vector<32x32xf32>
    %c0_44 = arith.constant 0 : index
    %c2_45 = arith.constant 2 : index
    %c0_46 = arith.constant 0 : index
    %c0_47 = arith.constant 0 : index
    %49 = vector.load %arg4[%c0_44, %c2_45, %c0_46, %c0_47] : memref<1x4x32x32xf32, #tpu.memory_space<vmem>>, vector<1x1x32x32xf32>
    %50 = vector.shape_cast %49 : vector<1x1x32x32xf32> to vector<32x32xf32>
    %51 = vector.shape_cast %48 : vector<32x32xf32> to vector<1x1x32x32xf32>
    tpu.vector_store %arg4[%c0_44, %c2_45, %c0_46, %c0_47], %51 {strides = array<i32>} : memref<1x4x32x32xf32, #tpu.memory_space<vmem>>, vector<1x1x32x32xf32>,
    %52 = arith.mulf %34, %39 : vector<32x32xf32>
    %c0_48 = arith.constant 0 : index
    %c3_49 = arith.constant 3 : index
    %c0_50 = arith.constant 0 : index
    %c0_51 = arith.constant 0 : index
    %53 = vector.load %arg4[%c0_48, %c3_49, %c0_50, %c0_51] : memref<1x4x32x32xf32, #tpu.memory_space<vmem>>, vector<1x1x32x32xf32>
    %54 = vector.shape_cast %53 : vector<1x1x32x32xf32> to vector<32x32xf32>
    %55 = vector.shape_cast %52 : vector<32x32xf32> to vector<1x1x32x32xf32>
    tpu.vector_store %arg4[%c0_48, %c3_49, %c0_50, %c0_51], %55 {strides = array<i32>} : memref<1x4x32x32xf32, #tpu.memory_space<vmem>>, vector<1x1x32x32xf32>,
    return
  }
  func.func @transform_0(%arg0: i32) -> (i32, i32, i32, i32) {
    %c0_i32 = arith.constant 0 : i32
    %c0_i32_0 = arith.constant 0 : i32
    %c0_i32_1 = arith.constant 0 : i32
    %c0_i32_2 = arith.constant 0 : i32
    return %arg0, %c0_i32, %c0_i32_0, %c0_i32_1 : i32, i32, i32, i32
  }
  func.func @transform_1(%arg0: i32) -> (i32, i32) {
    %c0_i32 = arith.constant 0 : i32
    %c0_i32_0 = arith.constant 0 : i32
    %c0_i32_1 = arith.constant 0 : i32
    return %c0_i32, %c0_i32_0 : i32, i32
  }
  func.func @transform_2(%arg0: i32) -> (i32, i32) {
    %c0_i32 = arith.constant 0 : i32
    %c0_i32_0 = arith.constant 0 : i32
    %c0_i32_1 = arith.constant 0 : i32
    return %c0_i32, %c0_i32_0 : i32, i32
  }
  func.func @transform_3(%arg0: i32) -> (i32, i32, i32, i32) {
    %c0_i32 = arith.constant 0 : i32
    %c0_i32_0 = arith.constant 0 : i32
    %c0_i32_1 = arith.constant 0 : i32
    %c0_i32_2 = arith.constant 0 : i32
    return %arg0, %c0_i32, %c0_i32_0, %c0_i32_1 : i32, i32, i32, i32
  }
}

</mosaic_0001>

<llo_original>
// kernel: deeplabv3plus_forward.10
$region0: #{deeplabv3plus_forward.10}
  #allocation0 [shape = 'u32[]', space=smem, size = 0x4, offset = 0x4, fixed_abs, tag = 'smem constant byte address 0x4 - core index']
  #allocation1 [shape = 'u32[144,128]{1,0:T(1,128)}', space=vmem, size = 0x12000, scoped, tag = 'internal scratch']
  %s0 = inlined_call_operand.vmem [shape: bf16[512,27], index: 0, kind: input, shape index: {}]
  %s1 = inlined_call_operand.vmem [shape: bf16[27,16], index: 1, kind: input, shape index: {}]
  %s2 = inlined_call_operand.vmem [shape: f32[1,16], index: 2, kind: input, shape index: {}]
  %s3 = inlined_call_operand.vmem [shape: bf16[512,16], index: 3, kind: output, shape index: {}]
  %s4 = sld [smem:[#allocation0]]
  $region45: #{deeplabv3plus_forward.10} parent=0
    _
  %s6 = ssub.s32 1, %s4
  %s7 = scalar_select 0, %s6, %s4
  loop: start=0, step=1, limit=4
  $region2: #{deeplabv3plus_forward.10} parent=0 // loop_pre_header
    _
  $region3: #{deeplabv3plus_forward.10} parent=0 // loop_header
    %s9 = sphi 0, %s13
    %p10 = scmp.ge.s32.totalorder %s9, 4
    %s19 = sphi 0, %s21
    %s22 = sphi 0, %s19
    %s23 = sphi 0, %s22
    %s39 = sphi 0, %s23
    %s43 = sphi 0, %s43
    %s45 = sphi 0, %s43
    %s46 = sphi 0, %s45
    %s60 = sphi 0, %s46
    %s64 = sphi 0, %s64
    %s66 = sphi 0, %s64
    %s67 = sphi 0, %s66
    %s81 = sphi 0, %s67
    %s87 = sphi 0, %s89
    %s90 = sphi 0, %s87
    %s91 = sphi 0, %s90
    %s107 = sphi 0, %s91
  $region4: #{deeplabv3plus_forward.10} parent=0 // loop_header_branch
    %12 = sbr.rel (%p10) target = $region8
  $region5: #{deeplabv3plus_forward.10} parent=0 // loop_body
    %s14 = ssub.s32 %s9, 1
    %s15 = ssub.s32 %s9, 2
    %s16 = sadd.s32 %s9, 1
    %s17 = ssub.s32 %s9, %s16
    %p18 = scmp.eq.s32.totalorder %s17, 0
    %s20 = sadd.s32 %s19, 1
    %s21 = scalar_select %p18, %s19, %s20
    %p24 = pneg %p18
    %p25 = scmp.eq.s32.totalorder %s9, 1
    %p26 = por %p24, %p25
    %p27 = scmp.ne.s32.totalorder %s19, %s22
    %p28 = scmp.eq.s32.totalorder %s9, 0
    %p29 = por %p27, %p28
    %p30 = scmp.ne.s32.totalorder %s19, %s22
    %p31 = scmp.eq.s32.totalorder %s14, 1
    %p32 = por %p30, %p31
    %p33 = scmp.ne.s32.totalorder %s22, %s23
    %p34 = scmp.eq.s32.totalorder %s14, 0
    %p35 = por %p33, %p34
    %p36 = scmp.ne.s32.totalorder %s22, %s23
    %p37 = scmp.eq.s32.totalorder %s15, 1
    %p38 = por %p36, %p37
    %p40 = scmp.ne.s32.totalorder %s23, %s39
    %p41 = scmp.eq.s32.totalorder %s15, 0
    %p42 = por %p40, %p41
    %s44 = sadd.s32 %s43, 1
    %p47 = scmp.eq.s32.totalorder %s9, 1
    %p48 = scmp.ne.s32.totalorder %s43, %s45
    %p49 = scmp.eq.s32.totalorder %s9, 0
    %p50 = por %p48, %p49
    %p51 = scmp.ne.s32.totalorder %s43, %s45
    %p52 = scmp.eq.s32.totalorder %s14, 1
    %p53 = por %p51, %p52
    %p54 = scmp.ne.s32.totalorder %s45, %s46
    %p55 = scmp.eq.s32.totalorder %s14, 0
    %p56 = por %p54, %p55
    %p57 = scmp.ne.s32.totalorder %s45, %s46
    %p58 = scmp.eq.s32.totalorder %s15, 1
    %p59 = por %p57, %p58
    %p61 = scmp.ne.s32.totalorder %s46, %s60
    %p62 = scmp.eq.s32.totalorder %s15, 0
    %p63 = por %p61, %p62
    %s65 = sadd.s32 %s64, 1
    %p68 = scmp.eq.s32.totalorder %s9, 1
    %p69 = scmp.ne.s32.totalorder %s64, %s66
    %p70 = scmp.eq.s32.totalorder %s9, 0
    %p71 = por %p69, %p70
    %p72 = scmp.ne.s32.totalorder %s64, %s66
    %p73 = scmp.eq.s32.totalorder %s14, 1
    %p74 = por %p72, %p73
    %p75 = scmp.ne.s32.totalorder %s66, %s67
    %p76 = scmp.eq.s32.totalorder %s14, 0
    %p77 = por %p75, %p76
    %p78 = scmp.ne.s32.totalorder %s66, %s67
    %p79 = scmp.eq.s32.totalorder %s15, 1
    %p80 = por %p78, %p79
    %p82 = scmp.ne.s32.totalorder %s67, %s81
    %p83 = scmp.eq.s32.totalorder %s15, 0
    %p84 = por %p82, %p83
    %s85 = ssub.s32 %s9, %s16
    %p86 = scmp.eq.s32.totalorder %s85, 0
    %s88 = sadd.s32 %s87, 1
    %s89 = scalar_select %p86, %s87, %s88
    %p92 = pneg %p86
    %p93 = scmp.eq.s32.totalorder %s9, 1
    %p94 = por %p92, %p93
    %p95 = scmp.ne.s32.totalorder %s87, %s90
    %p96 = scmp.eq.s32.totalorder %s9, 0
    %p97 = por %p95, %p96
    %p98 = scmp.ne.s32.totalorder %s87, %s90
    %p99 = scmp.eq.s32.totalorder %s14, 1
    %p100 = por %p98, %p99
    %p101 = scmp.ne.s32.totalorder %s90, %s91
    %p102 = scmp.eq.s32.totalorder %s14, 0
    %p103 = por %p101, %p102
    %p104 = scmp.ne.s32.totalorder %s90, %s91
    %p105 = scmp.eq.s32.totalorder %s15, 1
    %p106 = por %p104, %p105
    %p108 = scmp.ne.s32.totalorder %s91, %s107
    %p109 = scmp.eq.s32.totalorder %s15, 0
    %p110 = por %p108, %p109
    %p111 = scmp.le.s32.totalorder 1, %s9
    %p112 = scmp.lt.s32.totalorder %s9, 3
    %p113 = pnand %p111, %p112
    %p114 = pneg %p113
    // Predicated region
    $region9: #{deeplabv3plus_forward.10} parent=5 // pred_check
      _
    $region10: #{deeplabv3plus_forward.10} parent=5 // pred_check_branch
      %116 = sbr.rel (%p113) target = $region12
    $region11: #{deeplabv3plus_forward.10} parent=5 // pred_region
      %s117 = ssub.s32 %s9, 1
      // Predicated region
      $region13: #{deeplabv3plus_forward.10} parent=11 // pred_check
        %p118 = pneg %p56
      $region14: #{deeplabv3plus_forward.10} parent=11 // pred_check_branch
        %120 = sbr.rel (%p118) target = $region16
      $region15: #{deeplabv3plus_forward.10} parent=11 // pred_region
        _
      $region16: #{deeplabv3plus_forward.10} parent=11 // pred_fallthru
        _
      // Predicated region
      $region17: #{deeplabv3plus_forward.10} parent=11 // pred_check
        %p121 = pneg %p77
      $region18: #{deeplabv3plus_forward.10} parent=11 // pred_check_branch
        %123 = sbr.rel (%p121) target = $region20
      $region19: #{deeplabv3plus_forward.10} parent=11 // pred_region
        _
      $region20: #{deeplabv3plus_forward.10} parent=11 // pred_fallthru
        _
    $region12: #{deeplabv3plus_forward.10} parent=5 // pred_fallthru
      _
    %p124 = scmp.lt.s32.totalorder %s9, 2
    // Predicated region
    $region21: #{deeplabv3plus_forward.10} parent=5 // pred_check
      %p125 = pneg %p124
    $region22: #{deeplabv3plus_forward.10} parent=5 // pred_check_branch
      %127 = sbr.rel (%p125) target = $region24
    $region23: #{deeplabv3plus_forward.10} parent=5 // pred_region
      // Predicated region
      $region25: #{deeplabv3plus_forward.10} parent=23 // pred_check
        %p128 = pneg %p29
      $region26: #{deeplabv3plus_forward.10} parent=23 // pred_check_branch
        %130 = sbr.rel (%p128) target = $region28
      $region27: #{deeplabv3plus_forward.10} parent=23 // pred_region
        %s131 = smul.u32 32, %s9
        %p132 = scmp.lt.s32.totalorder %s131, 63
        %s133 = scalar_select %p132, %s131, 63
        %s134 = smul.addr %s133, 4
        %s135 = scalar_lea.vmem %s0, %s134
        %s136 = smul.u32 32, %s9
      $region28: #{deeplabv3plus_forward.10} parent=23 // pred_fallthru
        _
    $region24: #{deeplabv3plus_forward.10} parent=5 // pred_fallthru
      _
    %p137 = scmp.le.s32.totalorder 1, %s9
    %p138 = scmp.lt.s32.totalorder %s9, 3
    %p139 = pnand %p137, %p138
    %p140 = pneg %p139
    // Predicated region
    $region29: #{deeplabv3plus_forward.10} parent=5 // pred_check
      _
    $region30: #{deeplabv3plus_forward.10} parent=5 // pred_check_branch
      %142 = sbr.rel (%p139) target = $region32
    $region31: #{deeplabv3plus_forward.10} parent=5 // pred_region
      %s143 = ssub.s32 %s9, 1
      %s144 = smul.u32 32, %s14
      %p145 = scmp.lt.s32.totalorder %s144, 63
      %s146 = scalar_select %p145, %s144, 63
      %s147 = smul.addr %s146, 4
      %s148 = scalar_lea.vmem %s0, %s147
      %p149 = pneg %p35
      %p150 = pneg %p32
      %p151 = pneg %p56
      %p152 = pneg %p53
      %p153 = pneg %p77
      %p154 = pneg %p74
      %p155 = pneg %p103
      %p156 = pneg %p100
      %s157 = smul.u32 32, %s14
      %p158 = scmp.lt.s32.totalorder %s157, 63
      %s159 = scalar_select %p158, %s157, 63
      %s160 = smul.addr %s159, 4
      %s161 = scalar_lea.vmem %s3, %s160
      %s162 = smul.u32 32, %s14
      %p163 = scmp.lt.s32.totalorder %s162, 63
      %s164 = scalar_select %p163, %s162, 63
      %s165 = smul.addr %s164, 4
      %s166 = scalar_lea.vmem %s0, %s165
      %s167 = smul.u32 32, %s14
      %s168 = smul.u32 32, %s14
      %p169 = scmp.lt.s32.totalorder %s168, 63
      %s170 = scalar_select %p169, %s168, 63
      %s171 = smul.addr %s170, 4
      %s172 = scalar_lea.vmem %s3, %s171
      %s173 = smul.u32 32, %s14
      %v175 = vld [vmem:[%s166] sm:$0xf]
      %v176 = vld [vmem:[%s166 + $0x4] sm:$0xf]
      %v177 = vld [vmem:[%s166 + $0x8] sm:$0xf]
      %v178 = vld [vmem:[%s166 + $0xc] sm:$0xf]
      %v179 = vld [vmem:[%s166 + $0x10] sm:$0xf]
      %v180 = vld [vmem:[%s166 + $0x14] sm:$0xf]
      %v181 = vld [vmem:[%s166 + $0x18] sm:$0xf]
      %v182 = vld [vmem:[%s166 + $0x1c] sm:$0xf]
      %v183 = vld [vmem:[%s166 + $0x20] sm:$0xf]
      %v184 = vld [vmem:[%s166 + $0x24] sm:$0xf]
      %v185 = vld [vmem:[%s166 + $0x28] sm:$0xf]
      %v186 = vld [vmem:[%s166 + $0x2c] sm:$0xf]
      %v187 = vld [vmem:[%s166 + $0x30] sm:$0xf]
      %v188 = vld [vmem:[%s166 + $0x34] sm:$0xf]
      %v189 = vld [vmem:[%s166 + $0x38] sm:$0xf]
      %v190 = vld [vmem:[%s166 + $0x3c] sm:$0xf]
      %v191 = vld [vmem:[%s166 + $0x40] sm:$0xf]
      %v192 = vld [vmem:[%s166 + $0x44] sm:$0xf]
      %v193 = vld [vmem:[%s166 + $0x48] sm:$0xf]
      %v194 = vld [vmem:[%s166 + $0x4c] sm:$0xf]
      %v195 = vld [vmem:[%s166 + $0x50] sm:$0xf]
      %v196 = vld [vmem:[%s166 + $0x54] sm:$0xf]
      %v197 = vld [vmem:[%s166 + $0x58] sm:$0xf]
      %v198 = vld [vmem:[%s166 + $0x5c] sm:$0xf]
      %v199 = vld [vmem:[%s166 + $0x60] sm:$0xf]
      %v200 = vld [vmem:[%s166 + $0x64] sm:$0xf]
      %v201 = vld [vmem:[%s166 + $0x68] sm:$0xf]
      %v202 = vld [vmem:[%s166 + $0x6c] sm:$0xf]
      %v203 = vld [vmem:[%s166 + $0x70] sm:$0xf]
      %v204 = vld [vmem:[%s166 + $0x74] sm:$0xf]
      %v205 = vld [vmem:[%s166 + $0x78] sm:$0xf]
      %v206 = vld [vmem:[%s166 + $0x7c] sm:$0xf]
      %v207 = vld [vmem:[%s1] sm:$0xf]
      %v208 = vld [vmem:[%s1 + $0x4] sm:$0xf]
      %v209 = vld [vmem:[%s1 + $0x8] sm:$0xf]
      %v210 = vld [vmem:[%s1 + $0xc] sm:$0x3]
      %v211 = vld [vmem:[%s2] sm:$0x1]
      %v213 = vlaneseq
      %v214 = vshrl.u32 %v213, 7
      %v215 = vsub.s32 0, %v214
      %v216 = vrot.slane %v211, %v215
      %v250 = vunpack.c.l.b16 %v175
      %v251 = vunpack.c.l.b16 %v176
      %v252 = vunpack.c.l.b16 %v177
      %v253 = vunpack.c.l.b16 %v178
      %v254 = vunpack.c.l.b16 %v179
      %v255 = vunpack.c.l.b16 %v180
      %v256 = vunpack.c.l.b16 %v181
      %v257 = vunpack.c.l.b16 %v182
      %v258 = vunpack.c.l.b16 %v183
      %v259 = vunpack.c.l.b16 %v184
      %v260 = vunpack.c.l.b16 %v185
      %v261 = vunpack.c.l.b16 %v186
      %v262 = vunpack.c.l.b16 %v187
      %v263 = vunpack.c.l.b16 %v188
      %v264 = vunpack.c.l.b16 %v189
      %v265 = vunpack.c.l.b16 %v190
      %v266 = vunpack.c.l.b16 %v191
      %v267 = vunpack.c.l.b16 %v192
      %v268 = vunpack.c.l.b16 %v193
      %v269 = vunpack.c.l.b16 %v194
      %v270 = vunpack.c.l.b16 %v195
      %v271 = vunpack.c.l.b16 %v196
      %v272 = vunpack.c.l.b16 %v197
      %v273 = vunpack.c.l.b16 %v198
      %v274 = vunpack.c.l.b16 %v199
      %v275 = vunpack.c.l.b16 %v200
      %v276 = vunpack.c.l.b16 %v201
      %v277 = vunpack.c.l.b16 %v202
      %v278 = vunpack.c.l.b16 %v203
      %v279 = vunpack.c.l.b16 %v204
      %v280 = vunpack.c.l.b16 %v205
      %v281 = vunpack.c.l.b16 %v206
      %v282 = vpack.c.b16 %v251, %v250
      %v283 = vpack.c.b16 %v253, %v252
      %v284 = vpack.c.b16 %v255, %v254
      %v285 = vpack.c.b16 %v257, %v256
      %v286 = vpack.c.b16 %v259, %v258
      %v287 = vpack.c.b16 %v261, %v260
      %v288 = vpack.c.b16 %v263, %v262
      %v289 = vpack.c.b16 %v265, %v264
      %v290 = vpack.c.b16 %v267, %v266
      %v291 = vpack.c.b16 %v269, %v268
      %v292 = vpack.c.b16 %v271, %v270
      %v293 = vpack.c.b16 %v273, %v272
      %v294 = vpack.c.b16 %v275, %v274
      %v295 = vpack.c.b16 %v277, %v276
      %v296 = vpack.c.b16 %v279, %v278
      %v297 = vpack.c.b16 %v281, %v280
      %v302 = vunpack.c.l.b16 %v207
      %v303 = vunpack.c.l.b16 %v208
      %v304 = vunpack.c.l.b16 %v209
      %v305 = vunpack.c.l.b16 %v210
      %v306 = vpack.c.b16 %v303, %v302
      %v307 = vpack.c.b16 %v305, %v304
      %vm309 = vcmask 220160
      %v311 = vsel %vm309, %v282, 0
      %v314 = vsel %vm309, %v283, 0
      %v317 = vsel %vm309, %v284, 0
      %v320 = vsel %vm309, %v285, 0
      %v323 = vsel %vm309, %v286, 0
      %v326 = vsel %vm309, %v287, 0
      %v329 = vsel %vm309, %v288, 0
      %v332 = vsel %vm309, %v289, 0
      %v335 = vsel %vm309, %v290, 0
      %v338 = vsel %vm309, %v291, 0
      %v341 = vsel %vm309, %v292, 0
      %v344 = vsel %vm309, %v293, 0
      %v347 = vsel %vm309, %v294, 0
      %v350 = vsel %vm309, %v295, 0
      %v353 = vsel %vm309, %v296, 0
      %v356 = vsel %vm309, %v297, 0
      %vm358 = vcmask 1044480
      %vm359 = vcmask 1045504
      %v360 = vsel %vm358, 4294967295, 65535
      %v361 = vsel %vm359, %v360, 0
      %v363 = vand.u32 %v307, %v361
      %365 = vmatprep.subr.bf16.mxu0 0
      %366 = vmatpush1.bf16.msra.mxu0 %v306
      %367 = vmatprep.subr.bf16.mxu0 0
      %368 = vmatpush1.bf16.msra.mxu0 %v363
      %369 = vmatprep.subr.bf16.mxu0 0
      %370 = vmatpush1.bf16.msra.mxu0 0
      %371 = vmatprep.subr.bf16.mxu0 0
      %372 = vmatpush1.bf16.msra.mxu0 0
      %373 = vmatprep.subr.bf16.mxu0 0
      %374 = vmatpush1.bf16.msra.mxu0 0
      %375 = vmatprep.subr.bf16.mxu0 0
      %376 = vmatpush1.bf16.msra.mxu0 0
      %377 = vmatprep.subr.bf16.mxu0 0
      %378 = vmatpush1.bf16.msra.mxu0 0
      %379 = vmatprep.subr.bf16.mxu0 0
      %380 = vmatpush1.bf16.msra.mxu0 0
      %381 = vmatprep.subr.bf16.mxu0 0
      %382 = vmatpush1.bf16.msra.mxu0 0
      %383 = vmatprep.subr.bf16.mxu0 0
      %384 = vmatpush1.bf16.msra.mxu0 0
      %385 = vmatprep.subr.bf16.mxu0 0
      %386 = vmatpush1.bf16.msra.mxu0 0
      %387 = vmatprep.subr.bf16.mxu0 0
      %388 = vmatpush1.bf16.msra.mxu0 0
      %389 = vmatprep.subr.bf16.mxu0 0
      %390 = vmatpush1.bf16.msra.mxu0 0
      %391 = vmatprep.subr.bf16.mxu0 0
      %392 = vmatpush1.bf16.msra.mxu0 0
      %393 = vmatprep.subr.bf16.mxu0 0
      %394 = vmatpush1.bf16.msra.mxu0 0
      %395 = vmatprep.subr.bf16.mxu0 0
      %396 = vmatpush1.bf16.msra.mxu0 0
      %397 = vmatprep.mubr.bf16.mxu0 0
      %398 = vmatmul.mubr.bf16.gmra.mrb[0].mxu0 %v311
      %v399 = vpop.f32.mrb[0].mxu0
      %v400 = vadd.f32 %v216, %v399
      %v401 = vpop.f32.mrb[0].mxu0
      %v402 = vpop.f32.mrb[0].mxu0
      %v403 = vadd.f32 %v216, %v402
      %v404 = vpop.f32.mrb[0].mxu0
      %405 = vmatprep.mubr.bf16.mxu0 0
      %406 = vmatmul.mubr.bf16.gmra.mrb[0].mxu0 %v314
      %v407 = vpop.f32.mrb[0].mxu0
      %v408 = vadd.f32 %v216, %v407
      %v409 = vpop.f32.mrb[0].mxu0
      %v410 = vpop.f32.mrb[0].mxu0
      %v411 = vadd.f32 %v216, %v410
      %v412 = vpop.f32.mrb[0].mxu0
      %413 = vmatprep.mubr.bf16.mxu0 0
      %414 = vmatmul.mubr.bf16.gmra.mrb[0].mxu0 %v317
      %v415 = vpop.f32.mrb[0].mxu0
      %v416 = vadd.f32 %v216, %v415
      %v417 = vpop.f32.mrb[0].mxu0
      %v418 = vpop.f32.mrb[0].mxu0
      %v419 = vadd.f32 %v216, %v418
      %v420 = vpop.f32.mrb[0].mxu0
      %421 = vmatprep.mubr.bf16.mxu0 0
      %422 = vmatmul.mubr.bf16.gmra.mrb[0].mxu0 %v320
      %v423 = vpop.f32.mrb[0].mxu0
      %v424 = vadd.f32 %v216, %v423
      %v425 = vpop.f32.mrb[0].mxu0
      %v426 = vpop.f32.mrb[0].mxu0
      %v427 = vadd.f32 %v216, %v426
      %v428 = vpop.f32.mrb[0].mxu0
      %429 = vmatprep.mubr.bf16.mxu0 0
      %430 = vmatmul.mubr.bf16.gmra.mrb[0].mxu0 %v323
      %v431 = vpop.f32.mrb[0].mxu0
      %v432 = vadd.f32 %v216, %v431
      %v433 = vpop.f32.mrb[0].mxu0
      %v434 = vpop.f32.mrb[0].mxu0
      %v435 = vadd.f32 %v216, %v434
      %v436 = vpop.f32.mrb[0].mxu0
      %437 = vmatprep.mubr.bf16.mxu0 0
      %438 = vmatmul.mubr.bf16.gmra.mrb[0].mxu0 %v326
      %v439 = vpop.f32.mrb[0].mxu0
      %v440 = vadd.f32 %v216, %v439
      %v441 = vpop.f32.mrb[0].mxu0
      %v442 = vpop.f32.mrb[0].mxu0
      %v443 = vadd.f32 %v216, %v442
      %v444 = vpop.f32.mrb[0].mxu0
      %445 = vmatprep.mubr.bf16.mxu0 0
      %446 = vmatmul.mubr.bf16.gmra.mrb[0].mxu0 %v329
      %v447 = vpop.f32.mrb[0].mxu0
      %v448 = vadd.f32 %v216, %v447
      %v449 = vpop.f32.mrb[0].mxu0
      %v450 = vpop.f32.mrb[0].mxu0
      %v451 = vadd.f32 %v216, %v450
      %v452 = vpop.f32.mrb[0].mxu0
      %453 = vmatprep.mubr.bf16.mxu0 0
      %454 = vmatmul.mubr.bf16.gmra.mrb[0].mxu0 %v332
      %v455 = vpop.f32.mrb[0].mxu0
      %v456 = vadd.f32 %v216, %v455
      %v457 = vpop.f32.mrb[0].mxu0
      %v458 = vpop.f32.mrb[0].mxu0
      %v459 = vadd.f32 %v216, %v458
      %v460 = vpop.f32.mrb[0].mxu0
      %461 = vmatprep.mubr.bf16.mxu0 0
      %462 = vmatmul.mubr.bf16.gmra.mrb[0].mxu0 %v335
      %v463 = vpop.f32.mrb[0].mxu0
      %v464 = vadd.f32 %v216, %v463
      %v465 = vpop.f32.mrb[0].mxu0
      %v466 = vpop.f32.mrb[0].mxu0
      %v467 = vadd.f32 %v216, %v466
      %v468 = vpop.f32.mrb[0].mxu0
      %469 = vmatprep.mubr.bf16.mxu0 0
      %470 = vmatmul.mubr.bf16.gmra.mrb[0].mxu0 %v338
      %v471 = vpop.f32.mrb[0].mxu0
      %v472 = vadd.f32 %v216, %v471
      %v473 = vpop.f32.mrb[0].mxu0
      %v474 = vpop.f32.mrb[0].mxu0
      %v475 = vadd.f32 %v216, %v474
      %v476 = vpop.f32.mrb[0].mxu0
      %477 = vmatprep.mubr.bf16.mxu0 0
      %478 = vmatmul.mubr.bf16.gmra.mrb[0].mxu0 %v341
      %v479 = vpop.f32.mrb[0].mxu0
      %v480 = vadd.f32 %v216, %v479
      %v481 = vpop.f32.mrb[0].mxu0
      %v482 = vpop.f32.mrb[0].mxu0
      %v483 = vadd.f32 %v216, %v482
      %v484 = vpop.f32.mrb[0].mxu0
      %485 = vmatprep.mubr.bf16.mxu0 0
      %486 = vmatmul.mubr.bf16.gmra.mrb[0].mxu0 %v344
      %v487 = vpop.f32.mrb[0].mxu0
      %v488 = vadd.f32 %v216, %v487
      %v489 = vpop.f32.mrb[0].mxu0
      %v490 = vpop.f32.mrb[0].mxu0
      %v491 = vadd.f32 %v216, %v490
      %v492 = vpop.f32.mrb[0].mxu0
      %493 = vmatprep.mubr.bf16.mxu0 0
      %494 = vmatmul.mubr.bf16.gmra.mrb[0].mxu0 %v347
      %v495 = vpop.f32.mrb[0].mxu0
      %v496 = vadd.f32 %v216, %v495
      %v497 = vpop.f32.mrb[0].mxu0
      %v498 = vpop.f32.mrb[0].mxu0
      %v499 = vadd.f32 %v216, %v498
      %v500 = vpop.f32.mrb[0].mxu0
      %501 = vmatprep.mubr.bf16.mxu0 0
      %502 = vmatmul.mubr.bf16.gmra.mrb[0].mxu0 %v350
      %v503 = vpop.f32.mrb[0].mxu0
      %v504 = vadd.f32 %v216, %v503
      %v505 = vpop.f32.mrb[0].mxu0
      %v506 = vpop.f32.mrb[0].mxu0
      %v507 = vadd.f32 %v216, %v506
      %v508 = vpop.f32.mrb[0].mxu0
      %509 = vmatprep.mubr.bf16.mxu0 0
      %510 = vmatmul.mubr.bf16.gmra.mrb[0].mxu0 %v353
      %v511 = vpop.f32.mrb[0].mxu0
      %v512 = vadd.f32 %v216, %v511
      %v513 = vpop.f32.mrb[0].mxu0
      %v514 = vpop.f32.mrb[0].mxu0
      %v515 = vadd.f32 %v216, %v514
      %v516 = vpop.f32.mrb[0].mxu0
      %517 = vmatprep.mubr.bf16.mxu0 0
      %518 = vmatmul.mubr.bf16.gmra.mrb[0].mxu0 %v356
      %v519 = vpop.f32.mrb[0].mxu0
      %v520 = vadd.f32 %v216, %v519
      %v521 = vpop.f32.mrb[0].mxu0
      %v522 = vpop.f32.mrb[0].mxu0
      %v523 = vadd.f32 %v216, %v522
      %v524 = vpop.f32.mrb[0].mxu0
      %525 = vdwg.mxu0
      %v526 = vmax.f32 %v400, 0.0
      %v527 = vmax.f32 %v403, 0.0
      %v528 = vmax.f32 %v408, 0.0
      %v529 = vmax.f32 %v411, 0.0
      %v530 = vmax.f32 %v416, 0.0
      %v531 = vmax.f32 %v419, 0.0
      %v532 = vmax.f32 %v424, 0.0
      %v533 = vmax.f32 %v427, 0.0
      %v534 = vmax.f32 %v432, 0.0
      %v535 = vmax.f32 %v435, 0.0
      %v536 = vmax.f32 %v440, 0.0
      %v537 = vmax.f32 %v443, 0.0
      %v538 = vmax.f32 %v448, 0.0
      %v539 = vmax.f32 %v451, 0.0
      %v540 = vmax.f32 %v456, 0.0
      %v541 = vmax.f32 %v459, 0.0
      %v542 = vmax.f32 %v464, 0.0
      %v543 = vmax.f32 %v467, 0.0
      %v544 = vmax.f32 %v472, 0.0
      %v545 = vmax.f32 %v475, 0.0
      %v546 = vmax.f32 %v480, 0.0
      %v547 = vmax.f32 %v483, 0.0
      %v548 = vmax.f32 %v488, 0.0
      %v549 = vmax.f32 %v491, 0.0
      %v550 = vmax.f32 %v496, 0.0
      %v551 = vmax.f32 %v499, 0.0
      %v552 = vmax.f32 %v504, 0.0
      %v553 = vmax.f32 %v507, 0.0
      %v554 = vmax.f32 %v512, 0.0
      %v555 = vmax.f32 %v515, 0.0
      %v556 = vmax.f32 %v520, 0.0
      %v557 = vmax.f32 %v523, 0.0
      %v558 = vpack.c.bf16 %v527, %v526
      %v559 = vpack.c.bf16 %v529, %v528
      %v560 = vpack.c.bf16 %v531, %v530
      %v561 = vpack.c.bf16 %v533, %v532
      %v562 = vpack.c.bf16 %v535, %v534
      %v563 = vpack.c.bf16 %v537, %v536
      %v564 = vpack.c.bf16 %v539, %v538
      %v565 = vpack.c.bf16 %v541, %v540
      %v566 = vpack.c.bf16 %v543, %v542
      %v567 = vpack.c.bf16 %v545, %v544
      %v568 = vpack.c.bf16 %v547, %v546
      %v569 = vpack.c.bf16 %v549, %v548
      %v570 = vpack.c.bf16 %v551, %v550
      %v571 = vpack.c.bf16 %v553, %v552
      %v572 = vpack.c.bf16 %v555, %v554
      %v573 = vpack.c.bf16 %v557, %v556
      %v590 = vunpack.c.l.b16 %v558
      %v591 = vunpack.c.h.b16 %v558
      %v592 = vunpack.c.l.b16 %v559
      %v593 = vunpack.c.h.b16 %v559
      %v594 = vunpack.c.l.b16 %v560
      %v595 = vunpack.c.h.b16 %v560
      %v596 = vunpack.c.l.b16 %v561
      %v597 = vunpack.c.h.b16 %v561
      %v598 = vunpack.c.l.b16 %v562
      %v599 = vunpack.c.h.b16 %v562
      %v600 = vunpack.c.l.b16 %v563
      %v601 = vunpack.c.h.b16 %v563
      %v602 = vunpack.c.l.b16 %v564
      %v603 = vunpack.c.h.b16 %v564
      %v604 = vunpack.c.l.b16 %v565
      %v605 = vunpack.c.h.b16 %v565
      %v606 = vunpack.c.l.b16 %v566
      %v607 = vunpack.c.h.b16 %v566
      %v608 = vunpack.c.l.b16 %v567
      %v609 = vunpack.c.h.b16 %v567
      %v610 = vunpack.c.l.b16 %v568
      %v611 = vunpack.c.h.b16 %v568
      %v612 = vunpack.c.l.b16 %v569
      %v613 = vunpack.c.h.b16 %v569
      %v614 = vunpack.c.l.b16 %v570
      %v615 = vunpack.c.h.b16 %v570
      %v616 = vunpack.c.l.b16 %v571
      %v617 = vunpack.c.h.b16 %v571
      %v618 = vunpack.c.l.b16 %v572
      %v619 = vunpack.c.h.b16 %v572
      %v620 = vunpack.c.l.b16 %v573
      %v621 = vunpack.c.h.b16 %v573
      %v622 = vpack.c.b16 %v590, %v590
      %v623 = vpack.c.b16 %v591, %v591
      %v624 = vpack.c.b16 %v592, %v592
      %v625 = vpack.c.b16 %v593, %v593
      %v626 = vpack.c.b16 %v594, %v594
      %v627 = vpack.c.b16 %v595, %v595
      %v628 = vpack.c.b16 %v596, %v596
      %v629 = vpack.c.b16 %v597, %v597
      %v630 = vpack.c.b16 %v598, %v598
      %v631 = vpack.c.b16 %v599, %v599
      %v632 = vpack.c.b16 %v600, %v600
      %v633 = vpack.c.b16 %v601, %v601
      %v634 = vpack.c.b16 %v602, %v602
      %v635 = vpack.c.b16 %v603, %v603
      %v636 = vpack.c.b16 %v604, %v604
      %v637 = vpack.c.b16 %v605, %v605
      %v638 = vpack.c.b16 %v606, %v606
      %v639 = vpack.c.b16 %v607, %v607
      %v640 = vpack.c.b16 %v608, %v608
      %v641 = vpack.c.b16 %v609, %v609
      %v642 = vpack.c.b16 %v610, %v610
      %v643 = vpack.c.b16 %v611, %v611
      %v644 = vpack.c.b16 %v612, %v612
      %v645 = vpack.c.b16 %v613, %v613
      %v646 = vpack.c.b16 %v614, %v614
      %v647 = vpack.c.b16 %v615, %v615
      %v648 = vpack.c.b16 %v616, %v616
      %v649 = vpack.c.b16 %v617, %v617
      %v650 = vpack.c.b16 %v618, %v618
      %v651 = vpack.c.b16 %v619, %v619
      %v652 = vpack.c.b16 %v620, %v620
      %v653 = vpack.c.b16 %v621, %v621
      %vm686 = vcmask 125952
      %687 = vst.msk [vmem:[%s172] sm:$0xf] %vm686, %v622
      %688 = vst.msk [vmem:[%s172 + $0x4] sm:$0xf] %vm686, %v623
      %689 = vst.msk [vmem:[%s172 + $0x8] sm:$0xf] %vm686, %v624
      %690 = vst.msk [vmem:[%s172 + $0xc] sm:$0xf] %vm686, %v625
      %691 = vst.msk [vmem:[%s172 + $0x10] sm:$0xf] %vm686, %v626
      %692 = vst.msk [vmem:[%s172 + $0x14] sm:$0xf] %vm686, %v627
      %693 = vst.msk [vmem:[%s172 + $0x18] sm:$0xf] %vm686, %v628
      %694 = vst.msk [vmem:[%s172 + $0x1c] sm:$0xf] %vm686, %v629
      %695 = vst.msk [vmem:[%s172 + $0x20] sm:$0xf] %vm686, %v630
      %696 = vst.msk [vmem:[%s172 + $0x24] sm:$0xf] %vm686, %v631
      %697 = vst.msk [vmem:[%s172 + $0x28] sm:$0xf] %vm686, %v632
      %698 = vst.msk [vmem:[%s172 + $0x2c] sm:$0xf] %vm686, %v633
      %699 = vst.msk [vmem:[%s172 + $0x30] sm:$0xf] %vm686, %v634
      %700 = vst.msk [vmem:[%s172 + $0x34] sm:$0xf] %vm686, %v635
      %701 = vst.msk [vmem:[%s172 + $0x38] sm:$0xf] %vm686, %v636
      %702 = vst.msk [vmem:[%s172 + $0x3c] sm:$0xf] %vm686, %v637
      %703 = vst.msk [vmem:[%s172 + $0x40] sm:$0xf] %vm686, %v638
      %704 = vst.msk [vmem:[%s172 + $0x44] sm:$0xf] %vm686, %v639
      %705 = vst.msk [vmem:[%s172 + $0x48] sm:$0xf] %vm686, %v640
      %706 = vst.msk [vmem:[%s172 + $0x4c] sm:$0xf] %vm686, %v641
      %707 = vst.msk [vmem:[%s172 + $0x50] sm:$0xf] %vm686, %v642
      %708 = vst.msk [vmem:[%s172 + $0x54] sm:$0xf] %vm686, %v643
      %709 = vst.msk [vmem:[%s172 + $0x58] sm:$0xf] %vm686, %v644
      %710 = vst.msk [vmem:[%s172 + $0x5c] sm:$0xf] %vm686, %v645
      %711 = vst.msk [vmem:[%s172 + $0x60] sm:$0xf] %vm686, %v646
      %712 = vst.msk [vmem:[%s172 + $0x64] sm:$0xf] %vm686, %v647
      %713 = vst.msk [vmem:[%s172 + $0x68] sm:$0xf] %vm686, %v648
      %714 = vst.msk [vmem:[%s172 + $0x6c] sm:$0xf] %vm686, %v649
      %715 = vst.msk [vmem:[%s172 + $0x70] sm:$0xf] %vm686, %v650
      %716 = vst.msk [vmem:[%s172 + $0x74] sm:$0xf] %vm686, %v651
      %717 = vst.msk [vmem:[%s172 + $0x78] sm:$0xf] %vm686, %v652
      %718 = vst.msk [vmem:[%s172 + $0x7c] sm:$0xf] %vm686, %v653
      %s719 = smul.u32 32, %s14
      %p720 = scmp.lt.s32.totalorder %s719, 63
      %s721 = scalar_select %p720, %s719, 63
      %s722 = smul.addr %s721, 4
      %s723 = scalar_lea.vmem %s3, %s722
      // Predicated region
      $region33: #{deeplabv3plus_forward.10} parent=31 // pred_check
        %p724 = pneg %p100
      $region34: #{deeplabv3plus_forward.10} parent=31 // pred_check_branch
        %726 = sbr.rel (%p724) target = $region36
      $region35: #{deeplabv3plus_forward.10} parent=31 // pred_region
        %s727 = smul.u32 32, %s14
      $region36: #{deeplabv3plus_forward.10} parent=31 // pred_fallthru
        _
    $region32: #{deeplabv3plus_forward.10} parent=5 // pred_fallthru
      _
    %p728 = scmp.le.s32.totalorder 2, %s9
    // Predicated region
    $region37: #{deeplabv3plus_forward.10} parent=5 // pred_check
      %p729 = pneg %p728
    $region38: #{deeplabv3plus_forward.10} parent=5 // pred_check_branch
      %731 = sbr.rel (%p729) target = $region40
    $region39: #{deeplabv3plus_forward.10} parent=5 // pred_region
      %s732 = ssub.s32 %s9, 2
      // Predicated region
      $region41: #{deeplabv3plus_forward.10} parent=39 // pred_check
        %p733 = pneg %p106
      $region42: #{deeplabv3plus_forward.10} parent=39 // pred_check_branch
        %735 = sbr.rel (%p733) target = $region44
      $region43: #{deeplabv3plus_forward.10} parent=39 // pred_region
        %s736 = smul.u32 32, %s15
        %p737 = scmp.lt.s32.totalorder %s736, 63
        %s738 = scalar_select %p737, %s736, 63
        %s739 = smul.addr %s738, 4
        %s740 = scalar_lea.vmem %s3, %s739
      $region44: #{deeplabv3plus_forward.10} parent=39 // pred_fallthru
        _
    $region40: #{deeplabv3plus_forward.10} parent=5 // pred_fallthru
      _
  $region6: #{deeplabv3plus_forward.10} parent=0 // loop_footer
    %s13 = sadd.s32 1, %s9
  $region7: #{deeplabv3plus_forward.10} parent=0 // loop_footer_branch
    %8 = sbr.rel target = $region3
  $region8: #{deeplabv3plus_forward.10} parent=0 // loop_exit
    _

// kernel: deeplabv3plus_forward.11
$region0: #{deeplabv3plus_forward.11}
  #allocation0 [shape = 'u32[]', space=smem, size = 0x4, offset = 0x4, fixed_abs, tag = 'smem constant byte address 0x4 - core index']
  #allocation1 [shape = 'u32[144,128]{1,0:T(1,128)}', space=vmem, size = 0x12000, scoped, tag = 'internal scratch']
  %s0 = inlined_call_operand.vmem [shape: bf16[128,144], index: 0, kind: input, shape index: {}]
  %s1 = inlined_call_operand.vmem [shape: bf16[144,24], index: 1, kind: input, shape index: {}]
  %s2 = inlined_call_operand.vmem [shape: f32[1,24], index: 2, kind: input, shape index: {}]
  %s3 = inlined_call_operand.vmem [shape: bf16[128,24], index: 3, kind: output, shape index: {}]
  %s4 = sld [smem:[#allocation0]]
  $region22: #{deeplabv3plus_forward.11} parent=0
    _
  %s6 = ssub.s32 1, %s4
  %s7 = scalar_select 0, %s6, %s4
  // Predicated region
  $region2: #{deeplabv3plus_forward.11} parent=0 // pred_check
    _
  $region3: #{deeplabv3plus_forward.11} parent=0 // pred_check_branch
    %9 = sbr.rel (0) target = $region5
  $region4: #{deeplabv3plus_forward.11} parent=0 // pred_region
    _
  $region5: #{deeplabv3plus_forward.11} parent=0 // pred_fallthru
    _
  // Predicated region
  $region6: #{deeplabv3plus_forward.11} parent=0 // pred_check
    _
  $region7: #{deeplabv3plus_forward.11} parent=0 // pred_check_branch
    %11 = sbr.rel (0) target = $region9
  $region8: #{deeplabv3plus_forward.11} parent=0 // pred_region
    _
  $region9: #{deeplabv3plus_forward.11} parent=0 // pred_fallthru
    _
  // Predicated region
  $region10: #{deeplabv3plus_forward.11} parent=0 // pred_check
    _
  $region11: #{deeplabv3plus_forward.11} parent=0 // pred_check_branch
    %13 = sbr.rel (0) target = $region13
  $region12: #{deeplabv3plus_forward.11} parent=0 // pred_region
    _
  $region13: #{deeplabv3plus_forward.11} parent=0 // pred_fallthru
    _
  %v15 = vld [vmem:[%s0] sm:$0xff]
  %v16 = vld [vmem:[%s0 + $0x8] sm:$0xff]
  %v17 = vld [vmem:[%s0 + $0x10] sm:$0xff]
  %v18 = vld [vmem:[%s0 + $0x18] sm:$0xff]
  %v19 = vld [vmem:[%s0 + $0x20] sm:$0xff]
  %v20 = vld [vmem:[%s0 + $0x28] sm:$0xff]
  %v21 = vld [vmem:[%s0 + $0x30] sm:$0xff]
  %v22 = vld [vmem:[%s0 + $0x38] sm:$0xff]
  %v23 = vld [vmem:[%s0 + $0x40] sm:$0xff]
  %v24 = vld [vmem:[%s0 + $0x48] sm:$0xff]
  %v25 = vld [vmem:[%s0 + $0x50] sm:$0xff]
  %v26 = vld [vmem:[%s0 + $0x58] sm:$0xff]
  %v27 = vld [vmem:[%s0 + $0x60] sm:$0xff]
  %v28 = vld [vmem:[%s0 + $0x68] sm:$0xff]
  %v29 = vld [vmem:[%s0 + $0x70] sm:$0xff]
  %v30 = vld [vmem:[%s0 + $0x78] sm:$0xff]
  %v31 = vld [vmem:[%s1] sm:$0xf]
  %v32 = vld [vmem:[%s1 + $0x4] sm:$0xf]
  %v33 = vld [vmem:[%s1 + $0x8] sm:$0xf]
  %v34 = vld [vmem:[%s1 + $0xc] sm:$0xf]
  %v35 = vld [vmem:[%s1 + $0x10] sm:$0xf]
  %v36 = vld [vmem:[%s1 + $0x14] sm:$0xf]
  %v37 = vld [vmem:[%s1 + $0x18] sm:$0xf]
  %v38 = vld [vmem:[%s1 + $0x1c] sm:$0xf]
  %v39 = vld [vmem:[%s1 + $0x20] sm:$0xf]
  %v40 = vld [vmem:[%s1 + $0x24] sm:$0xf]
  %v41 = vld [vmem:[%s1 + $0x28] sm:$0xf]
  %v42 = vld [vmem:[%s1 + $0x2c] sm:$0xf]
  %v43 = vld [vmem:[%s1 + $0x30] sm:$0xf]
  %v44 = vld [vmem:[%s1 + $0x34] sm:$0xf]
  %v45 = vld [vmem:[%s1 + $0x38] sm:$0xf]
  %v46 = vld [vmem:[%s1 + $0x3c] sm:$0xf]
  %v47 = vld [vmem:[%s1 + $0x40] sm:$0xf]
  %v48 = vld [vmem:[%s1 + $0x44] sm:$0xf]
  %v49 = vld [vmem:[%s2] sm:$0x1]
  %v51 = vlaneseq
  %v52 = vshrl.u32 %v51, 7
  %v53 = vsub.s32 0, %v52
  %v54 = vrot.slane %v49, %v53
  %v72 = vunpack.c.l.b16 %v15
  %v73 = vunpack.c.h.b16 %v15
  %v74 = vunpack.c.l.b16 %v16
  %v75 = vunpack.c.h.b16 %v16
  %v76 = vunpack.c.l.b16 %v17
  %v77 = vunpack.c.h.b16 %v17
  %v78 = vunpack.c.l.b16 %v18
  %v79 = vunpack.c.h.b16 %v18
  %v80 = vunpack.c.l.b16 %v19
  %v81 = vunpack.c.h.b16 %v19
  %v82 = vunpack.c.l.b16 %v20
  %v83 = vunpack.c.h.b16 %v20
  %v84 = vunpack.c.l.b16 %v21
  %v85 = vunpack.c.h.b16 %v21
  %v86 = vunpack.c.l.b16 %v22
  %v87 = vunpack.c.h.b16 %v22
  %v88 = vunpack.c.l.b16 %v23
  %v89 = vunpack.c.h.b16 %v23
  %v90 = vunpack.c.l.b16 %v24
  %v91 = vunpack.c.h.b16 %v24
  %v92 = vunpack.c.l.b16 %v25
  %v93 = vunpack.c.h.b16 %v25
  %v94 = vunpack.c.l.b16 %v26
  %v95 = vunpack.c.h.b16 %v26
  %v96 = vunpack.c.l.b16 %v27
  %v97 = vunpack.c.h.b16 %v27
  %v98 = vunpack.c.l.b16 %v28
  %v99 = vunpack.c.h.b16 %v28
  %v100 = vunpack.c.l.b16 %v29
  %v101 = vunpack.c.h.b16 %v29
  %v102 = vunpack.c.l.b16 %v30
  %v103 = vunpack.c.h.b16 %v30
  %v104 = vpack.c.b16 %v74, %v72
  %v105 = vpack.c.b16 %v75, %v73
  %v106 = vpack.c.b16 %v78, %v76
  %v107 = vpack.c.b16 %v79, %v77
  %v108 = vpack.c.b16 %v82, %v80
  %v109 = vpack.c.b16 %v83, %v81
  %v110 = vpack.c.b16 %v86, %v84
  %v111 = vpack.c.b16 %v87, %v85
  %v112 = vpack.c.b16 %v90, %v88
  %v113 = vpack.c.b16 %v91, %v89
  %v114 = vpack.c.b16 %v94, %v92
  %v115 = vpack.c.b16 %v95, %v93
  %v116 = vpack.c.b16 %v98, %v96
  %v117 = vpack.c.b16 %v99, %v97
  %v118 = vpack.c.b16 %v102, %v100
  %v119 = vpack.c.b16 %v103, %v101
  %v146 = vunpack.c.l.b16 %v31
  %v147 = vunpack.c.l.b16 %v32
  %v148 = vunpack.c.l.b16 %v33
  %v149 = vunpack.c.l.b16 %v34
  %v150 = vunpack.c.l.b16 %v35
  %v151 = vunpack.c.l.b16 %v36
  %v152 = vunpack.c.l.b16 %v37
  %v153 = vunpack.c.l.b16 %v38
  %v154 = vunpack.c.l.b16 %v39
  %v155 = vunpack.c.l.b16 %v40
  %v156 = vunpack.c.l.b16 %v41
  %v157 = vunpack.c.l.b16 %v42
  %v158 = vunpack.c.l.b16 %v43
  %v159 = vunpack.c.l.b16 %v44
  %v160 = vunpack.c.l.b16 %v45
  %v161 = vunpack.c.l.b16 %v46
  %v162 = vunpack.c.l.b16 %v47
  %v163 = vunpack.c.l.b16 %v48
  %v164 = vpack.c.b16 %v147, %v146
  %v165 = vpack.c.b16 %v149, %v148
  %v166 = vpack.c.b16 %v151, %v150
  %v167 = vpack.c.b16 %v153, %v152
  %v168 = vpack.c.b16 %v155, %v154
  %v169 = vpack.c.b16 %v157, %v156
  %v170 = vpack.c.b16 %v159, %v158
  %v171 = vpack.c.b16 %v161, %v160
  %v172 = vpack.c.b16 %v163, %v162
  %vm182 = vcmask 130048
  %v184 = vsel %vm182, %v105, 0
  %v187 = vsel %vm182, %v107, 0
  %v190 = vsel %vm182, %v109, 0
  %v193 = vsel %vm182, %v111, 0
  %v196 = vsel %vm182, %v113, 0
  %v199 = vsel %vm182, %v115, 0
  %v202 = vsel %vm182, %v117, 0
  %v205 = vsel %vm182, %v119, 0
  %207 = vmatprep.subr.bf16.mxu0 0
  %208 = vmatpush1.bf16.msra.mxu0 %v164
  %209 = vmatprep.subr.bf16.mxu0 0
  %210 = vmatpush1.bf16.msra.mxu0 %v165
  %211 = vmatprep.subr.bf16.mxu0 0
  %212 = vmatpush1.bf16.msra.mxu0 %v166
  %213 = vmatprep.subr.bf16.mxu0 0
  %214 = vmatpush1.bf16.msra.mxu0 %v167
  %215 = vmatprep.subr.bf16.mxu0 0
  %216 = vmatpush1.bf16.msra.mxu0 %v168
  %217 = vmatprep.subr.bf16.mxu0 0
  %218 = vmatpush1.bf16.msra.mxu0 %v169
  %219 = vmatprep.subr.bf16.mxu0 0
  %220 = vmatpush1.bf16.msra.mxu0 %v170
  %221 = vmatprep.subr.bf16.mxu0 0
  %222 = vmatpush1.bf16.msra.mxu0 %v171
  %223 = vmatprep.subr.bf16.mxu0 0
  %224 = vmatpush1.bf16.msra.mxu0 %v172
  %225 = vmatprep.subr.bf16.mxu0 0
  %226 = vmatpush1.bf16.msra.mxu0 0
  %227 = vmatprep.subr.bf16.mxu0 0
  %228 = vmatpush1.bf16.msra.mxu0 0
  %229 = vmatprep.subr.bf16.mxu0 0
  %230 = vmatpush1.bf16.msra.mxu0 0
  %231 = vmatprep.subr.bf16.mxu0 0
  %232 = vmatpush1.bf16.msra.mxu0 0
  %233 = vmatprep.subr.bf16.mxu0 0
  %234 = vmatpush1.bf16.msra.mxu0 0
  %235 = vmatprep.subr.bf16.mxu0 0
  %236 = vmatpush1.bf16.msra.mxu0 0
  %237 = vmatprep.subr.bf16.mxu0 0
  %238 = vmatpush1.bf16.msra.mxu0 0
  %239 = vmatprep.mubr.bf16.mxu0 %v184
  %240 = vmatmul.mubr.bf16.gmra.mrb[0].mxu0 %v104
  %v241 = vpop.f32.mrb[0].mxu0
  %v242 = vadd.f32 %v54, %v241
  %v243 = vpop.f32.mrb[0].mxu0
  %v244 = vpop.f32.mrb[0].mxu0
  %v245 = vadd.f32 %v54, %v244
  %v246 = vpop.f32.mrb[0].mxu0
  %247 = vmatprep.mubr.bf16.mxu0 %v187
  %248 = vmatmul.mubr.bf16.gmra.mrb[0].mxu0 %v106
  %v249 = vpop.f32.mrb[0].mxu0
  %v250 = vadd.f32 %v54, %v249
  %v251 = vpop.f32.mrb[0].mxu0
  %v252 = vpop.f32.mrb[0].mxu0
  %v253 = vadd.f32 %v54, %v252
  %v254 = vpop.f32.mrb[0].mxu0
  %255 = vmatprep.mubr.bf16.mxu0 %v190
  %256 = vmatmul.mubr.bf16.gmra.mrb[0].mxu0 %v108
  %v257 = vpop.f32.mrb[0].mxu0
  %v258 = vadd.f32 %v54, %v257
  %v259 = vpop.f32.mrb[0].mxu0
  %v260 = vpop.f32.mrb[0].mxu0
  %v261 = vadd.f32 %v54, %v260
  %v262 = vpop.f32.mrb[0].mxu0
  %263 = vmatprep.mubr.bf16.mxu0 %v193
  %264 = vmatmul.mubr.bf16.gmra.mrb[0].mxu0 %v110
  %v265 = vpop.f32.mrb[0].mxu0
  %v266 = vadd.f32 %v54, %v265
  %v267 = vpop.f32.mrb[0].mxu0
  %v268 = vpop.f32.mrb[0].mxu0
  %v269 = vadd.f32 %v54, %v268
  %v270 = vpop.f32.mrb[0].mxu0
  %271 = vmatprep.mubr.bf16.mxu0 %v196
  %272 = vmatmul.mubr.bf16.gmra.mrb[0].mxu0 %v112
  %v273 = vpop.f32.mrb[0].mxu0
  %v274 = vadd.f32 %v54, %v273
  %v275 = vpop.f32.mrb[0].mxu0
  %v276 = vpop.f32.mrb[0].mxu0
  %v277 = vadd.f32 %v54, %v276
  %v278 = vpop.f32.mrb[0].mxu0
  %279 = vmatprep.mubr.bf16.mxu0 %v199
  %280 = vmatmul.mubr.bf16.gmra.mrb[0].mxu0 %v114
  %v281 = vpop.f32.mrb[0].mxu0
  %v282 = vadd.f32 %v54, %v281
  %v283 = vpop.f32.mrb[0].mxu0
  %v284 = vpop.f32.mrb[0].mxu0
  %v285 = vadd.f32 %v54, %v284
  %v286 = vpop.f32.mrb[0].mxu0
  %287 = vmatprep.mubr.bf16.mxu0 %v202
  %288 = vmatmul.mubr.bf16.gmra.mrb[0].mxu0 %v116
  %v289 = vpop.f32.mrb[0].mxu0
  %v290 = vadd.f32 %v54, %v289
  %v291 = vpop.f32.mrb[0].mxu0
  %v292 = vpop.f32.mrb[0].mxu0
  %v293 = vadd.f32 %v54, %v292
  %v294 = vpop.f32.mrb[0].mxu0
  %295 = vmatprep.mubr.bf16.mxu0 %v205
  %296 = vmatmul.mubr.bf16.gmra.mrb[0].mxu0 %v118
  %v297 = vpop.f32.mrb[0].mxu0
  %v298 = vadd.f32 %v54, %v297
  %v299 = vpop.f32.mrb[0].mxu0
  %v300 = vpop.f32.mrb[0].mxu0
  %v301 = vadd.f32 %v54, %v300
  %v302 = vpop.f32.mrb[0].mxu0
  %303 = vdwg.mxu0
  %v304 = vmax.f32 %v242, 0.0
  %v305 = vmax.f32 %v245, 0.0
  %v306 = vmax.f32 %v250, 0.0
  %v307 = vmax.f32 %v253, 0.0
  %v308 = vmax.f32 %v258, 0.0
  %v309 = vmax.f32 %v261, 0.0
  %v310 = vmax.f32 %v266, 0.0
  %v311 = vmax.f32 %v269, 0.0
  %v312 = vmax.f32 %v274, 0.0
  %v313 = vmax.f32 %v277, 0.0
  %v314 = vmax.f32 %v282, 0.0
  %v315 = vmax.f32 %v285, 0.0
  %v316 = vmax.f32 %v290, 0.0
  %v317 = vmax.f32 %v293, 0.0
  %v318 = vmax.f32 %v298, 0.0
  %v319 = vmax.f32 %v301, 0.0
  %v320 = vpack.c.bf16 %v305, %v304
  %v321 = vpack.c.bf16 %v307, %v306
  %v322 = vpack.c.bf16 %v309, %v308
  %v323 = vpack.c.bf16 %v311, %v310
  %v324 = vpack.c.bf16 %v313, %v312
  %v325 = vpack.c.bf16 %v315, %v314
  %v326 = vpack.c.bf16 %v317, %v316
  %v327 = vpack.c.bf16 %v319, %v318
  %v336 = vunpack.c.l.b16 %v320
  %v337 = vunpack.c.h.b16 %v320
  %v338 = vunpack.c.l.b16 %v321
  %v339 = vunpack.c.h.b16 %v321
  %v340 = vunpack.c.l.b16 %v322
  %v341 = vunpack.c.h.b16 %v322
  %v342 = vunpack.c.l.b16 %v323
  %v343 = vunpack.c.h.b16 %v323
  %v344 = vunpack.c.l.b16 %v324
  %v345 = vunpack.c.h.b16 %v324
  %v346 = vunpack.c.l.b16 %v325
  %v347 = vunpack.c.h.b16 %v325
  %v348 = vunpack.c.l.b16 %v326
  %v349 = vunpack.c.h.b16 %v326
  %v350 = vunpack.c.l.b16 %v327
  %v351 = vunpack.c.h.b16 %v327
  %v352 = vpack.c.b16 %v336, %v336
  %v353 = vpack.c.b16 %v337, %v337
  %v354 = vpack.c.b16 %v338, %v338
  %v355 = vpack.c.b16 %v339, %v339
  %v356 = vpack.c.b16 %v340, %v340
  %v357 = vpack.c.b16 %v341, %v341
  %v358 = vpack.c.b16 %v342, %v342
  %v359 = vpack.c.b16 %v343, %v343
  %v360 = vpack.c.b16 %v344, %v344
  %v361 = vpack.c.b16 %v345, %v345
  %v362 = vpack.c.b16 %v346, %v346
  %v363 = vpack.c.b16 %v347, %v347
  %v364 = vpack.c.b16 %v348, %v348
  %v365 = vpack.c.b16 %v349, %v349
  %v366 = vpack.c.b16 %v350, %v350
  %v367 = vpack.c.b16 %v351, %v351
  %vm384 = vcmask 191488
  %385 = vst.msk [vmem:[%s3] sm:$0xf] %vm384, %v352
  %386 = vst.msk [vmem:[%s3 + $0x4] sm:$0xf] %vm384, %v353
  %387 = vst.msk [vmem:[%s3 + $0x8] sm:$0xf] %vm384, %v354
  %388 = vst.msk [vmem:[%s3 + $0xc] sm:$0xf] %vm384, %v355
  %389 = vst.msk [vmem:[%s3 + $0x10] sm:$0xf] %vm384, %v356
  %390 = vst.msk [vmem:[%s3 + $0x14] sm:$0xf] %vm384, %v357
  %391 = vst.msk [vmem:[%s3 + $0x18] sm:$0xf] %vm384, %v358
  %392 = vst.msk [vmem:[%s3 + $0x1c] sm:$0xf] %vm384, %v359
  %393 = vst.msk [vmem:[%s3 + $0x20] sm:$0xf] %vm384, %v360
  %394 = vst.msk [vmem:[%s3 + $0x24] sm:$0xf] %vm384, %v361
  %395 = vst.msk [vmem:[%s3 + $0x28] sm:$0xf] %vm384, %v362
  %396 = vst.msk [vmem:[%s3 + $0x2c] sm:$0xf] %vm384, %v363
  %397 = vst.msk [vmem:[%s3 + $0x30] sm:$0xf] %vm384, %v364
  %398 = vst.msk [vmem:[%s3 + $0x34] sm:$0xf] %vm384, %v365
  %399 = vst.msk [vmem:[%s3 + $0x38] sm:$0xf] %vm384, %v366
  %400 = vst.msk [vmem:[%s3 + $0x3c] sm:$0xf] %vm384, %v367
  // Predicated region
  $region14: #{deeplabv3plus_forward.11} parent=0 // pred_check
    _
  $region15: #{deeplabv3plus_forward.11} parent=0 // pred_check_branch
    %402 = sbr.rel (0) target = $region17
  $region16: #{deeplabv3plus_forward.11} parent=0 // pred_region
    _
  $region17: #{deeplabv3plus_forward.11} parent=0 // pred_fallthru
    _
  // Predicated region
  $region18: #{deeplabv3plus_forward.11} parent=0 // pred_check
    _
  $region19: #{deeplabv3plus_forward.11} parent=0 // pred_check_branch
    %404 = sbr.rel (0) target = $region21
  $region20: #{deeplabv3plus_forward.11} parent=0 // pred_region
    _
  $region21: #{deeplabv3plus_forward.11} parent=0 // pred_fallthru
    _

// kernel: deeplabv3plus_forward.12
$region0: #{deeplabv3plus_forward.12}
  #allocation0 [shape = 'u32[]', space=smem, size = 0x4, offset = 0x4, fixed_abs, tag = 'smem constant byte address 0x4 - core index']
  #allocation1 [shape = 'u32[144,128]{1,0:T(1,128)}', space=vmem, size = 0x12000, scoped, tag = 'internal scratch']
  %s0 = inlined_call_operand.vmem [shape: bf16[32,216], index: 0, kind: input, shape index: {}]
  %s1 = inlined_call_operand.vmem [shape: bf16[216,32], index: 1, kind: input, shape index: {}]
  %s2 = inlined_call_operand.vmem [shape: f32[1,32], index: 2, kind: input, shape index: {}]
  %s3 = inlined_call_operand.vmem [shape: bf16[32,32], index: 3, kind: output, shape index: {}]
  %s4 = sld [smem:[#allocation0]]
  $region22: #{deeplabv3plus_forward.12} parent=0
    _
  %s6 = ssub.s32 1, %s4
  %s7 = scalar_select 0, %s6, %s4
  // Predicated region
  $region2: #{deeplabv3plus_forward.12} parent=0 // pred_check
    _
  $region3: #{deeplabv3plus_forward.12} parent=0 // pred_check_branch
    %9 = sbr.rel (0) target = $region5
  $region4: #{deeplabv3plus_forward.12} parent=0 // pred_region
    _
  $region5: #{deeplabv3plus_forward.12} parent=0 // pred_fallthru
    _
  // Predicated region
  $region6: #{deeplabv3plus_forward.12} parent=0 // pred_check
    _
  $region7: #{deeplabv3plus_forward.12} parent=0 // pred_check_branch
    %11 = sbr.rel (0) target = $region9
  $region8: #{deeplabv3plus_forward.12} parent=0 // pred_region
    _
  $region9: #{deeplabv3plus_forward.12} parent=0 // pred_fallthru
    _
  // Predicated region
  $region10: #{deeplabv3plus_forward.12} parent=0 // pred_check
    _
  $region11: #{deeplabv3plus_forward.12} parent=0 // pred_check_branch
    %13 = sbr.rel (0) target = $region13
  $region12: #{deeplabv3plus_forward.12} parent=0 // pred_region
    _
  $region13: #{deeplabv3plus_forward.12} parent=0 // pred_fallthru
    _
  %v15 = vld [vmem:[%s0] sm:$0xff]
  %v16 = vld [vmem:[%s0 + $0x8] sm:$0xff]
  %v17 = vld [vmem:[%s0 + $0x10] sm:$0xff]
  %v18 = vld [vmem:[%s0 + $0x18] sm:$0xff]
  %v19 = vld [vmem:[%s1] sm:$0xf]
  %v20 = vld [vmem:[%s1 + $0x4] sm:$0xf]
  %v21 = vld [vmem:[%s1 + $0x8] sm:$0xf]
  %v22 = vld [vmem:[%s1 + $0xc] sm:$0xf]
  %v23 = vld [vmem:[%s1 + $0x10] sm:$0xf]
  %v24 = vld [vmem:[%s1 + $0x14] sm:$0xf]
  %v25 = vld [vmem:[%s1 + $0x18] sm:$0xf]
  %v26 = vld [vmem:[%s1 + $0x1c] sm:$0xf]
  %v27 = vld [vmem:[%s1 + $0x20] sm:$0xf]
  %v28 = vld [vmem:[%s1 + $0x24] sm:$0xf]
  %v29 = vld [vmem:[%s1 + $0x28] sm:$0xf]
  %v30 = vld [vmem:[%s1 + $0x2c] sm:$0xf]
  %v31 = vld [vmem:[%s1 + $0x30] sm:$0xf]
  %v32 = vld [vmem:[%s1 + $0x34] sm:$0xf]
  %v33 = vld [vmem:[%s1 + $0x38] sm:$0xf]
  %v34 = vld [vmem:[%s1 + $0x3c] sm:$0xf]
  %v35 = vld [vmem:[%s1 + $0x40] sm:$0xf]
  %v36 = vld [vmem:[%s1 + $0x44] sm:$0xf]
  %v37 = vld [vmem:[%s1 + $0x48] sm:$0xf]
  %v38 = vld [vmem:[%s1 + $0x4c] sm:$0xf]
  %v39 = vld [vmem:[%s1 + $0x50] sm:$0xf]
  %v40 = vld [vmem:[%s1 + $0x54] sm:$0xf]
  %v41 = vld [vmem:[%s1 + $0x58] sm:$0xf]
  %v42 = vld [vmem:[%s1 + $0x5c] sm:$0xf]
  %v43 = vld [vmem:[%s1 + $0x60] sm:$0xf]
  %v44 = vld [vmem:[%s1 + $0x64] sm:$0xf]
  %v45 = vld [vmem:[%s1 + $0x68] sm:$0xf]
  %v46 = vld [vmem:[%s2] sm:$0x1]
  %v48 = vlaneseq
  %v49 = vshrl.u32 %v48, 7
  %v50 = vsub.s32 0, %v49
  %v51 = vrot.slane %v46, %v50
  %v57 = vunpack.c.l.b16 %v15
  %v58 = vunpack.c.h.b16 %v15
  %v59 = vunpack.c.l.b16 %v16
  %v60 = vunpack.c.h.b16 %v16
  %v61 = vunpack.c.l.b16 %v17
  %v62 = vunpack.c.h.b16 %v17
  %v63 = vunpack.c.l.b16 %v18
  %v64 = vunpack.c.h.b16 %v18
  %v65 = vpack.c.b16 %v59, %v57
  %v66 = vpack.c.b16 %v60, %v58
  %v67 = vpack.c.b16 %v63, %v61
  %v68 = vpack.c.b16 %v64, %v62
  %v98 = vunpack.c.l.b16 %v19
  %v99 = vunpack.c.l.b16 %v20
  %v100 = vunpack.c.l.b16 %v21
  %v101 = vunpack.c.l.b16 %v22
  %v102 = vunpack.c.l.b16 %v23
  %v103 = vunpack.c.l.b16 %v24
  %v104 = vunpack.c.l.b16 %v25
  %v105 = vunpack.c.l.b16 %v26
  %v106 = vunpack.c.l.b16 %v27
  %v107 = vunpack.c.l.b16 %v28
  %v108 = vunpack.c.l.b16 %v29
  %v109 = vunpack.c.l.b16 %v30
  %v110 = vunpack.c.l.b16 %v31
  %v111 = vunpack.c.l.b16 %v32
  %v112 = vunpack.c.l.b16 %v33
  %v113 = vunpack.c.l.b16 %v34
  %v114 = vunpack.c.l.b16 %v35
  %v115 = vunpack.c.l.b16 %v36
  %v116 = vunpack.c.l.b16 %v37
  %v117 = vunpack.c.l.b16 %v38
  %v118 = vunpack.c.l.b16 %v39
  %v119 = vunpack.c.l.b16 %v40
  %v120 = vunpack.c.l.b16 %v41
  %v121 = vunpack.c.l.b16 %v42
  %v122 = vunpack.c.l.b16 %v43
  %v123 = vunpack.c.l.b16 %v44
  %v124 = vunpack.c.l.b16 %v45
  %v125 = vpack.c.b16 %v99, %v98
  %v126 = vpack.c.b16 %v101, %v100
  %v127 = vpack.c.b16 %v103, %v102
  %v128 = vpack.c.b16 %v105, %v104
  %v129 = vpack.c.b16 %v107, %v106
  %v130 = vpack.c.b16 %v109, %v108
  %v131 = vpack.c.b16 %v111, %v110
  %v132 = vpack.c.b16 %v113, %v112
  %v133 = vpack.c.b16 %v115, %v114
  %v134 = vpack.c.b16 %v117, %v116
  %v135 = vpack.c.b16 %v119, %v118
  %v136 = vpack.c.b16 %v121, %v120
  %v137 = vpack.c.b16 %v123, %v122
  %v138 = vpack.c.b16 %v124, %v124
  %vm152 = vcmask 719872
  %v154 = vsel %vm152, %v66, 0
  %v157 = vsel %vm152, %v68, 0
  %vm159 = vcmask 1043456
  %v161 = vsel %vm159, %v138, 0
  %163 = vmatprep.subr.bf16.mxu0 0
  %164 = vmatpush1.bf16.msra.mxu0 %v125
  %165 = vmatprep.subr.bf16.mxu0 0
  %166 = vmatpush1.bf16.msra.mxu0 %v126
  %167 = vmatprep.subr.bf16.mxu0 0
  %168 = vmatpush1.bf16.msra.mxu0 %v127
  %169 = vmatprep.subr.bf16.mxu0 0
  %170 = vmatpush1.bf16.msra.mxu0 %v128
  %171 = vmatprep.subr.bf16.mxu0 0
  %172 = vmatpush1.bf16.msra.mxu0 %v129
  %173 = vmatprep.subr.bf16.mxu0 0
  %174 = vmatpush1.bf16.msra.mxu0 %v130
  %175 = vmatprep.subr.bf16.mxu0 0
  %176 = vmatpush1.bf16.msra.mxu0 %v131
  %177 = vmatprep.subr.bf16.mxu0 0
  %178 = vmatpush1.bf16.msra.mxu0 %v132
  %179 = vmatprep.subr.bf16.mxu0 0
  %180 = vmatpush1.bf16.msra.mxu0 %v133
  %181 = vmatprep.subr.bf16.mxu0 0
  %182 = vmatpush1.bf16.msra.mxu0 %v134
  %183 = vmatprep.subr.bf16.mxu0 0
  %184 = vmatpush1.bf16.msra.mxu0 %v135
  %185 = vmatprep.subr.bf16.mxu0 0
  %186 = vmatpush1.bf16.msra.mxu0 %v136
  %187 = vmatprep.subr.bf16.mxu0 0
  %188 = vmatpush1.bf16.msra.mxu0 %v137
  %189 = vmatprep.subr.bf16.mxu0 0
  %190 = vmatpush1.bf16.msra.mxu0 %v161
  %191 = vmatprep.subr.bf16.mxu0 0
  %192 = vmatpush1.bf16.msra.mxu0 0
  %193 = vmatprep.subr.bf16.mxu0 0
  %194 = vmatpush1.bf16.msra.mxu0 0
  %195 = vmatprep.mubr.bf16.mxu0 %v154
  %196 = vmatmul.mubr.bf16.gmra.mrb[0].mxu0 %v65
  %v197 = vpop.f32.mrb[0].mxu0
  %v198 = vadd.f32 %v51, %v197
  %v199 = vpop.f32.mrb[0].mxu0
  %v200 = vpop.f32.mrb[0].mxu0
  %v201 = vadd.f32 %v51, %v200
  %v202 = vpop.f32.mrb[0].mxu0
  %203 = vmatprep.mubr.bf16.mxu0 %v157
  %204 = vmatmul.mubr.bf16.gmra.mrb[0].mxu0 %v67
  %v205 = vpop.f32.mrb[0].mxu0
  %v206 = vadd.f32 %v51, %v205
  %v207 = vpop.f32.mrb[0].mxu0
  %v208 = vpop.f32.mrb[0].mxu0
  %v209 = vadd.f32 %v51, %v208
  %v210 = vpop.f32.mrb[0].mxu0
  %211 = vdwg.mxu0
  %v212 = vmax.f32 %v198, 0.0
  %v213 = vmax.f32 %v201, 0.0
  %v214 = vmax.f32 %v206, 0.0
  %v215 = vmax.f32 %v209, 0.0
  %v216 = vpack.c.bf16 %v213, %v212
  %v217 = vpack.c.bf16 %v215, %v214
  %v220 = vunpack.c.l.b16 %v216
  %v221 = vunpack.c.h.b16 %v216
  %v222 = vunpack.c.l.b16 %v217
  %v223 = vunpack.c.h.b16 %v217
  %v224 = vpack.c.b16 %v220, %v220
  %v225 = vpack.c.b16 %v221, %v221
  %v226 = vpack.c.b16 %v222, %v222
  %v227 = vpack.c.b16 %v223, %v223
  %vm232 = vcmask 257024
  %233 = vst.msk [vmem:[%s3] sm:$0xf] %vm232, %v224
  %234 = vst.msk [vmem:[%s3 + $0x4] sm:$0xf] %vm232, %v225
  %235 = vst.msk [vmem:[%s3 + $0x8] sm:$0xf] %vm232, %v226
  %236 = vst.msk [vmem:[%s3 + $0xc] sm:$0xf] %vm232, %v227
  // Predicated region
  $region14: #{deeplabv3plus_forward.12} parent=0 // pred_check
    _
  $region15: #{deeplabv3plus_forward.12} parent=0 // pred_check_branch
    %238 = sbr.rel (0) target = $region17
  $region16: #{deeplabv3plus_forward.12} parent=0 // pred_region
    _
  $region17: #{deeplabv3plus_forward.12} parent=0 // pred_fallthru
    _
  // Predicated region
  $region18: #{deeplabv3plus_forward.12} parent=0 // pred_check
    _
  $region19: #{deeplabv3plus_forward.12} parent=0 // pred_check_branch
    %240 = sbr.rel (0) target = $region21
  $region20: #{deeplabv3plus_forward.12} parent=0 // pred_region
    _
  $region21: #{deeplabv3plus_forward.12} parent=0 // pred_fallthru
    _

// kernel: deeplabv3plus_forward.13
$region0: #{deeplabv3plus_forward.13}
  #allocation0 [shape = 'u32[]', space=smem, size = 0x4, offset = 0x4, fixed_abs, tag = 'smem constant byte address 0x4 - core index']
  #allocation1 [shape = 'u32[144,128]{1,0:T(1,128)}', space=vmem, size = 0x12000, scoped, tag = 'internal scratch']
  %s0 = inlined_call_operand.vmem [shape: bf16[8,288], index: 0, kind: input, shape index: {}]
  %s1 = inlined_call_operand.vmem [shape: bf16[288,64], index: 1, kind: input, shape index: {}]
  %s2 = inlined_call_operand.vmem [shape: f32[1,64], index: 2, kind: input, shape index: {}]
  %s3 = inlined_call_operand.vmem [shape: bf16[8,64], index: 3, kind: output, shape index: {}]
  %s4 = sld [smem:[#allocation0]]
  $region22: #{deeplabv3plus_forward.13} parent=0
    _
  %s6 = ssub.s32 1, %s4
  %s7 = scalar_select 0, %s6, %s4
  // Predicated region
  $region2: #{deeplabv3plus_forward.13} parent=0 // pred_check
    _
  $region3: #{deeplabv3plus_forward.13} parent=0 // pred_check_branch
    %9 = sbr.rel (0) target = $region5
  $region4: #{deeplabv3plus_forward.13} parent=0 // pred_region
    _
  $region5: #{deeplabv3plus_forward.13} parent=0 // pred_fallthru
    _
  // Predicated region
  $region6: #{deeplabv3plus_forward.13} parent=0 // pred_check
    _
  $region7: #{deeplabv3plus_forward.13} parent=0 // pred_check_branch
    %11 = sbr.rel (0) target = $region9
  $region8: #{deeplabv3plus_forward.13} parent=0 // pred_region
    _
  $region9: #{deeplabv3plus_forward.13} parent=0 // pred_fallthru
    _
  // Predicated region
  $region10: #{deeplabv3plus_forward.13} parent=0 // pred_check
    _
  $region11: #{deeplabv3plus_forward.13} parent=0 // pred_check_branch
    %13 = sbr.rel (0) target = $region13
  $region12: #{deeplabv3plus_forward.13} parent=0 // pred_region
    _
  $region13: #{deeplabv3plus_forward.13} parent=0 // pred_fallthru
    _
  %v15 = vld [vmem:[%s0] sm:$0xff]
  %v16 = vld [vmem:[%s0 + $0x8] sm:$0xf]
  %v17 = vld [vmem:[%s1] sm:$0xf]
  %v18 = vld [vmem:[%s1 + $0x4] sm:$0xf]
  %v19 = vld [vmem:[%s1 + $0x8] sm:$0xf]
  %v20 = vld [vmem:[%s1 + $0xc] sm:$0xf]
  %v21 = vld [vmem:[%s1 + $0x10] sm:$0xf]
  %v22 = vld [vmem:[%s1 + $0x14] sm:$0xf]
  %v23 = vld [vmem:[%s1 + $0x18] sm:$0xf]
  %v24 = vld [vmem:[%s1 + $0x1c] sm:$0xf]
  %v25 = vld [vmem:[%s1 + $0x20] sm:$0xf]
  %v26 = vld [vmem:[%s1 + $0x24] sm:$0xf]
  %v27 = vld [vmem:[%s1 + $0x28] sm:$0xf]
  %v28 = vld [vmem:[%s1 + $0x2c] sm:$0xf]
  %v29 = vld [vmem:[%s1 + $0x30] sm:$0xf]
  %v30 = vld [vmem:[%s1 + $0x34] sm:$0xf]
  %v31 = vld [vmem:[%s1 + $0x38] sm:$0xf]
  %v32 = vld [vmem:[%s1 + $0x3c] sm:$0xf]
  %v33 = vld [vmem:[%s1 + $0x40] sm:$0xf]
  %v34 = vld [vmem:[%s1 + $0x44] sm:$0xf]
  %v35 = vld [vmem:[%s1 + $0x48] sm:$0xf]
  %v36 = vld [vmem:[%s1 + $0x4c] sm:$0xf]
  %v37 = vld [vmem:[%s1 + $0x50] sm:$0xf]
  %v38 = vld [vmem:[%s1 + $0x54] sm:$0xf]
  %v39 = vld [vmem:[%s1 + $0x58] sm:$0xf]
  %v40 = vld [vmem:[%s1 + $0x5c] sm:$0xf]
  %v41 = vld [vmem:[%s1 + $0x60] sm:$0xf]
  %v42 = vld [vmem:[%s1 + $0x64] sm:$0xf]
  %v43 = vld [vmem:[%s1 + $0x68] sm:$0xf]
  %v44 = vld [vmem:[%s1 + $0x6c] sm:$0xf]
  %v45 = vld [vmem:[%s1 + $0x70] sm:$0xf]
  %v46 = vld [vmem:[%s1 + $0x74] sm:$0xf]
  %v47 = vld [vmem:[%s1 + $0x78] sm:$0xf]
  %v48 = vld [vmem:[%s1 + $0x7c] sm:$0xf]
  %v49 = vld [vmem:[%s1 + $0x80] sm:$0xf]
  %v50 = vld [vmem:[%s1 + $0x84] sm:$0xf]
  %v51 = vld [vmem:[%s1 + $0x88] sm:$0xf]
  %v52 = vld [vmem:[%s1 + $0x8c] sm:$0xf]
  %v53 = vld [vmem:[%s2] sm:$0x1]
  %v55 = vlaneseq
  %v56 = vshrl.u32 %v55, 7
  %v57 = vsub.s32 0, %v56
  %v58 = vrot.slane %v53, %v57
  %v62 = vunpack.c.l.b16 %v15
  %v63 = vunpack.c.h.b16 %v15
  %v64 = vunpack.c.l.b16 %v16
  %v65 = vpack.c.b16 %v62, %v62
  %v66 = vpack.c.b16 %v63, %v63
  %v67 = vpack.c.b16 %v64, %v64
  %v106 = vunpack.c.l.b16 %v17
  %v107 = vunpack.c.l.b16 %v18
  %v108 = vunpack.c.l.b16 %v19
  %v109 = vunpack.c.l.b16 %v20
  %v110 = vunpack.c.l.b16 %v21
  %v111 = vunpack.c.l.b16 %v22
  %v112 = vunpack.c.l.b16 %v23
  %v113 = vunpack.c.l.b16 %v24
  %v114 = vunpack.c.l.b16 %v25
  %v115 = vunpack.c.l.b16 %v26
  %v116 = vunpack.c.l.b16 %v27
  %v117 = vunpack.c.l.b16 %v28
  %v118 = vunpack.c.l.b16 %v29
  %v119 = vunpack.c.l.b16 %v30
  %v120 = vunpack.c.l.b16 %v31
  %v121 = vunpack.c.l.b16 %v32
  %v122 = vunpack.c.l.b16 %v33
  %v123 = vunpack.c.l.b16 %v34
  %v124 = vunpack.c.l.b16 %v35
  %v125 = vunpack.c.l.b16 %v36
  %v126 = vunpack.c.l.b16 %v37
  %v127 = vunpack.c.l.b16 %v38
  %v128 = vunpack.c.l.b16 %v39
  %v129 = vunpack.c.l.b16 %v40
  %v130 = vunpack.c.l.b16 %v41
  %v131 = vunpack.c.l.b16 %v42
  %v132 = vunpack.c.l.b16 %v43
  %v133 = vunpack.c.l.b16 %v44
  %v134 = vunpack.c.l.b16 %v45
  %v135 = vunpack.c.l.b16 %v46
  %v136 = vunpack.c.l.b16 %v47
  %v137 = vunpack.c.l.b16 %v48
  %v138 = vunpack.c.l.b16 %v49
  %v139 = vunpack.c.l.b16 %v50
  %v140 = vunpack.c.l.b16 %v51
  %v141 = vunpack.c.l.b16 %v52
  %v142 = vpack.c.b16 %v107, %v106
  %v143 = vpack.c.b16 %v109, %v108
  %v144 = vpack.c.b16 %v111, %v110
  %v145 = vpack.c.b16 %v113, %v112
  %v146 = vpack.c.b16 %v115, %v114
  %v147 = vpack.c.b16 %v117, %v116
  %v148 = vpack.c.b16 %v119, %v118
  %v149 = vpack.c.b16 %v121, %v120
  %v150 = vpack.c.b16 %v123, %v122
  %v151 = vpack.c.b16 %v125, %v124
  %v152 = vpack.c.b16 %v127, %v126
  %v153 = vpack.c.b16 %v129, %v128
  %v154 = vpack.c.b16 %v131, %v130
  %v155 = vpack.c.b16 %v133, %v132
  %v156 = vpack.c.b16 %v135, %v134
  %v157 = vpack.c.b16 %v137, %v136
  %v158 = vpack.c.b16 %v139, %v138
  %v159 = vpack.c.b16 %v141, %v140
  %vm178 = vcmask 261120
  %v180 = vsel %vm178, %v67, 0
  %182 = vmatprep.subr.bf16.mxu0 0
  %183 = vmatpush1.bf16.msra.mxu0 %v142
  %184 = vmatprep.subr.bf16.mxu0 0
  %185 = vmatpush1.bf16.msra.mxu0 %v143
  %186 = vmatprep.subr.bf16.mxu0 0
  %187 = vmatpush1.bf16.msra.mxu0 %v144
  %188 = vmatprep.subr.bf16.mxu0 0
  %189 = vmatpush1.bf16.msra.mxu0 %v145
  %190 = vmatprep.subr.bf16.mxu0 0
  %191 = vmatpush1.bf16.msra.mxu0 %v146
  %192 = vmatprep.subr.bf16.mxu0 0
  %193 = vmatpush1.bf16.msra.mxu0 %v147
  %194 = vmatprep.subr.bf16.mxu0 0
  %195 = vmatpush1.bf16.msra.mxu0 %v148
  %196 = vmatprep.subr.bf16.mxu0 0
  %197 = vmatpush1.bf16.msra.mxu0 %v149
  %198 = vmatprep.subr.bf16.mxu0 0
  %199 = vmatpush1.bf16.msra.mxu0 %v150
  %200 = vmatprep.subr.bf16.mxu0 0
  %201 = vmatpush1.bf16.msra.mxu0 %v151
  %202 = vmatprep.subr.bf16.mxu0 0
  %203 = vmatpush1.bf16.msra.mxu0 %v152
  %204 = vmatprep.subr.bf16.mxu0 0
  %205 = vmatpush1.bf16.msra.mxu0 %v153
  %206 = vmatprep.subr.bf16.mxu0 0
  %207 = vmatpush1.bf16.msra.mxu0 %v154
  %208 = vmatprep.subr.bf16.mxu0 0
  %209 = vmatpush1.bf16.msra.mxu0 %v155
  %210 = vmatprep.subr.bf16.mxu0 0
  %211 = vmatpush1.bf16.msra.mxu0 %v156
  %212 = vmatprep.subr.bf16.mxu0 0
  %213 = vmatpush1.bf16.msra.mxu0 %v157
  %214 = vmatprep.mubr.bf16.mxu0 %v66
  %215 = vmatmul.mubr.bf16.gmra.mrb[0].mxu0 %v65
  %v216 = vpop.f32.mrb[0].mxu0
  %v217 = vadd.f32 %v58, %v216
  %v218 = vpop.f32.mrb[0].mxu0
  %v219 = vpop.f32.mrb[0].mxu0
  %v220 = vpop.f32.mrb[0].mxu0
  %221 = vdwg.mxu0
  %222 = vmatprep.subr.bf16.mxu0 0
  %223 = vmatpush1.bf16.msra.mxu0 %v158
  %224 = vmatprep.subr.bf16.mxu0 0
  %225 = vmatpush1.bf16.msra.mxu0 %v159
  %226 = vmatprep.subr.bf16.mxu0 0
  %227 = vmatpush1.bf16.msra.mxu0 0
  %228 = vmatprep.subr.bf16.mxu0 0
  %229 = vmatpush1.bf16.msra.mxu0 0
  %230 = vmatprep.subr.bf16.mxu0 0
  %231 = vmatpush1.bf16.msra.mxu0 0
  %232 = vmatprep.subr.bf16.mxu0 0
  %233 = vmatpush1.bf16.msra.mxu0 0
  %234 = vmatprep.subr.bf16.mxu0 0
  %235 = vmatpush1.bf16.msra.mxu0 0
  %236 = vmatprep.subr.bf16.mxu0 0
  %237 = vmatpush1.bf16.msra.mxu0 0
  %238 = vmatprep.subr.bf16.mxu0 0
  %239 = vmatpush1.bf16.msra.mxu0 0
  %240 = vmatprep.subr.bf16.mxu0 0
  %241 = vmatpush1.bf16.msra.mxu0 0
  %242 = vmatprep.subr.bf16.mxu0 0
  %243 = vmatpush1.bf16.msra.mxu0 0
  %244 = vmatprep.subr.bf16.mxu0 0
  %245 = vmatpush1.bf16.msra.mxu0 0
  %246 = vmatprep.subr.bf16.mxu0 0
  %247 = vmatpush1.bf16.msra.mxu0 0
  %248 = vmatprep.subr.bf16.mxu0 0
  %249 = vmatpush1.bf16.msra.mxu0 0
  %250 = vmatprep.subr.bf16.mxu0 0
  %251 = vmatpush1.bf16.msra.mxu0 0
  %252 = vmatprep.subr.bf16.mxu0 0
  %253 = vmatpush1.bf16.msra.mxu0 0
  %254 = vmatprep.mubr.bf16.mxu0 0
  %255 = vmatmul.mubr.bf16.gmra.mrb[0].mxu0 %v180
  %v256 = vpop.f32.mrb[0].mxu0
  %v257 = vadd.f32 %v217, %v256
  %v258 = vpop.f32.mrb[0].mxu0
  %v259 = vpop.f32.mrb[0].mxu0
  %v260 = vpop.f32.mrb[0].mxu0
  %261 = vdwg.mxu0
  %v262 = vmax.f32 %v257, 0.0
  %v263 = vpack.c.bf16 %v262, %v262
  %vm264 = vcmask 519168
  %265 = vst.msk [vmem:[%s3] sm:$0xf] %vm264, %v263
  // Predicated region
  $region14: #{deeplabv3plus_forward.13} parent=0 // pred_check
    _
  $region15: #{deeplabv3plus_forward.13} parent=0 // pred_check_branch
    %267 = sbr.rel (0) target = $region17
  $region16: #{deeplabv3plus_forward.13} parent=0 // pred_region
    _
  $region17: #{deeplabv3plus_forward.13} parent=0 // pred_fallthru
    _
  // Predicated region
  $region18: #{deeplabv3plus_forward.13} parent=0 // pred_check
    _
  $region19: #{deeplabv3plus_forward.13} parent=0 // pred_check_branch
    %269 = sbr.rel (0) target = $region21
  $region20: #{deeplabv3plus_forward.13} parent=0 // pred_region
    _
  $region21: #{deeplabv3plus_forward.13} parent=0 // pred_fallthru
    _

// kernel: reverse
$region0: #{reverse}
  #allocation0 [shape = 's32[1]{0}', space=sflag, size = 0x4, scoped, tag = 'scoped memory for reverse']
  %s0 = inlined_call_operand.vmem [shape: bf16[3,3,64,576], index: 0, kind: input, shape index: {}]
  %s1 = inlined_call_operand.vmem [shape: bf16[3,3,64,576], index: 1, kind: output, shape index: {}]
  %s2 = scalar_lea.vmem %s0, 1280
  %v3 = vld [vmem:[%s2] sm:$0xf]
  %v4 = vunpack.c.l.bf16 %v3
  %v5 = vunpack.c.h.bf16 %v3
  %s6 = scalar_lea.vmem %s0, 800
  %v7 = vld [vmem:[%s6] sm:$0xf]
  %v8 = vunpack.c.l.bf16 %v7
  %v9 = vunpack.c.h.bf16 %v7
  %s10 = scalar_lea.vmem %s1, 480
  %s11 = scalar_lea.vmem %s0, 320
  %v12 = vld [vmem:[%s11] sm:$0xf]
  %v13 = vunpack.c.l.bf16 %v12
  %v14 = vunpack.c.h.bf16 %v12
  %s15 = scalar_lea.vmem %s1, 960
  %s16 = scalar_lea.vmem %s0, 1120
  %v17 = vld [vmem:[%s16] sm:$0xf]
  %v18 = vunpack.c.l.bf16 %v17
  %v19 = vunpack.c.h.bf16 %v17
  %s20 = scalar_lea.vmem %s1, 160
  %s21 = scalar_lea.vmem %s0, 640
  %v22 = vld [vmem:[%s21] sm:$0xf]
  %v23 = vunpack.c.l.bf16 %v22
  %v24 = vunpack.c.h.bf16 %v22
  %s25 = scalar_lea.vmem %s1, 640
  %s26 = scalar_lea.vmem %s0, 160
  %v27 = vld [vmem:[%s26] sm:$0xf]
  %v28 = vunpack.c.l.bf16 %v27
  %v29 = vunpack.c.h.bf16 %v27
  %s30 = scalar_lea.vmem %s1, 1120
  %s31 = scalar_lea.vmem %s0, 960
  %v32 = vld [vmem:[%s31] sm:$0xf]
  %v33 = vunpack.c.l.bf16 %v32
  %v34 = vunpack.c.h.bf16 %v32
  %s35 = scalar_lea.vmem %s1, 320
  %s36 = scalar_lea.vmem %s0, 480
  %v37 = vld [vmem:[%s36] sm:$0xf]
  %v38 = vunpack.c.l.bf16 %v37
  %v39 = vunpack.c.h.bf16 %v37
  %s40 = scalar_lea.vmem %s1, 800
  %v41 = vld [vmem:[%s0] sm:$0xf]
  %v42 = vunpack.c.l.bf16 %v41
  %v43 = vunpack.c.h.bf16 %v41
  %s44 = scalar_lea.vmem %s1, 1280
  %s45 = scalar_lea.vmem %s0, 1300
  %v46 = vld [vmem:[%s45] sm:$0xf]
  %v47 = vunpack.c.l.bf16 %v46
  %v48 = vunpack.c.h.bf16 %v46
  %s49 = scalar_lea.vmem %s1, 20
  %s50 = scalar_lea.vmem %s0, 820
  %v51 = vld [vmem:[%s50] sm:$0xf]
  %v52 = vunpack.c.l.bf16 %v51
  %v53 = vunpack.c.h.bf16 %v51
  %s54 = scalar_lea.vmem %s1, 500
  %s55 = scalar_lea.vmem %s0, 340
  %v56 = vld [vmem:[%s55] sm:$0xf]
  %v57 = vunpack.c.l.bf16 %v56
  %v58 = vunpack.c.h.bf16 %v56
  %s59 = scalar_lea.vmem %s1, 980
  %s60 = scalar_lea.vmem %s0, 1140
  %v61 = vld [vmem:[%s60] sm:$0xf]
  %v62 = vunpack.c.l.bf16 %v61
  %v63 = vunpack.c.h.bf16 %v61
  %s64 = scalar_lea.vmem %s1, 180
  %s65 = scalar_lea.vmem %s0, 660
  %v66 = vld [vmem:[%s65] sm:$0xf]
  %v67 = vunpack.c.l.bf16 %v66
  %v68 = vunpack.c.h.bf16 %v66
  %s69 = scalar_lea.vmem %s1, 660
  %s70 = scalar_lea.vmem %s0, 180
  %v71 = vld [vmem:[%s70] sm:$0xf]
  %v72 = vunpack.c.l.bf16 %v71
  %v73 = vunpack.c.h.bf16 %v71
  %s74 = scalar_lea.vmem %s1, 1140
  %s75 = scalar_lea.vmem %s0, 980
  %v76 = vld [vmem:[%s75] sm:$0xf]
  %v77 = vunpack.c.l.bf16 %v76
  %v78 = vunpack.c.h.bf16 %v76
  %s79 = scalar_lea.vmem %s1, 340
  %s80 = scalar_lea.vmem %s0, 500
  %v81 = vld [vmem:[%s80] sm:$0xf]
  %v82 = vunpack.c.l.bf16 %v81
  %v83 = vunpack.c.h.bf16 %v81
  %s84 = scalar_lea.vmem %s1, 820
  %s85 = scalar_lea.vmem %s0, 20
  %v86 = vld [vmem:[%s85] sm:$0xf]
  %v87 = vunpack.c.l.bf16 %v86
  %v88 = vunpack.c.h.bf16 %v86
  %s89 = scalar_lea.vmem %s1, 1300
  %s90 = scalar_lea.vmem %s0, 1320
  %v91 = vld [vmem:[%s90] sm:$0xf]
  %v92 = vunpack.c.l.bf16 %v91
  %v93 = vunpack.c.h.bf16 %v91
  %s94 = scalar_lea.vmem %s1, 40
  %s95 = scalar_lea.vmem %s0, 840
  %v96 = vld [vmem:[%s95] sm:$0xf]
  %v97 = vunpack.c.l.bf16 %v96
  %v98 = vunpack.c.h.bf16 %v96
  %s99 = scalar_lea.vmem %s1, 520
  %s100 = scalar_lea.vmem %s0, 360
  %v101 = vld [vmem:[%s100] sm:$0xf]
  %v102 = vunpack.c.l.bf16 %v101
  %v103 = vunpack.c.h.bf16 %v101
  %s104 = scalar_lea.vmem %s1, 1000
  %s105 = scalar_lea.vmem %s0, 1160
  %v106 = vld [vmem:[%s105] sm:$0xf]
  %v107 = vunpack.c.l.bf16 %v106
  %v108 = vunpack.c.h.bf16 %v106
  %s109 = scalar_lea.vmem %s1, 200
  %s110 = scalar_lea.vmem %s0, 680
  %v111 = vld [vmem:[%s110] sm:$0xf]
  %v112 = vunpack.c.l.bf16 %v111
  %v113 = vunpack.c.h.bf16 %v111
  %s114 = scalar_lea.vmem %s1, 680
  %s115 = scalar_lea.vmem %s0, 200
  %v116 = vld [vmem:[%s115] sm:$0xf]
  %v117 = vunpack.c.l.bf16 %v116
  %v118 = vunpack.c.h.bf16 %v116
  %s119 = scalar_lea.vmem %s1, 1160
  %s120 = scalar_lea.vmem %s0, 1000
  %v121 = vld [vmem:[%s120] sm:$0xf]
  %v122 = vunpack.c.l.bf16 %v121
  %v123 = vunpack.c.h.bf16 %v121
  %s124 = scalar_lea.vmem %s1, 360
  %s125 = scalar_lea.vmem %s0, 520
  %v126 = vld [vmem:[%s125] sm:$0xf]
  %v127 = vunpack.c.l.bf16 %v126
  %v128 = vunpack.c.h.bf16 %v126
  %s129 = scalar_lea.vmem %s1, 840
  %s130 = scalar_lea.vmem %s0, 40
  %v131 = vld [vmem:[%s130] sm:$0xf]
  %v132 = vunpack.c.l.bf16 %v131
  %v133 = vunpack.c.h.bf16 %v131
  %s134 = scalar_lea.vmem %s1, 1320
  %s135 = scalar_lea.vmem %s0, 1340
  %v136 = vld [vmem:[%s135] sm:$0xf]
  %v137 = vunpack.c.l.bf16 %v136
  %v138 = vunpack.c.h.bf16 %v136
  %s139 = scalar_lea.vmem %s1, 60
  %s140 = scalar_lea.vmem %s0, 860
  %v141 = vld [vmem:[%s140] sm:$0xf]
  %v142 = vunpack.c.l.bf16 %v141
  %v143 = vunpack.c.h.bf16 %v141
  %s144 = scalar_lea.vmem %s1, 540
  %s145 = scalar_lea.vmem %s0, 380
  %v146 = vld [vmem:[%s145] sm:$0xf]
  %v147 = vunpack.c.l.bf16 %v146
  %v148 = vunpack.c.h.bf16 %v146
  %s149 = scalar_lea.vmem %s1, 1020
  %s150 = scalar_lea.vmem %s0, 1180
  %v151 = vld [vmem:[%s150] sm:$0xf]
  %v152 = vunpack.c.l.bf16 %v151
  %v153 = vunpack.c.h.bf16 %v151
  %s154 = scalar_lea.vmem %s1, 220
  %s155 = scalar_lea.vmem %s0, 700
  %v156 = vld [vmem:[%s155] sm:$0xf]
  %v157 = vunpack.c.l.bf16 %v156
  %v158 = vunpack.c.h.bf16 %v156
  %s159 = scalar_lea.vmem %s1, 700
  %s160 = scalar_lea.vmem %s0, 220
  %v161 = vld [vmem:[%s160] sm:$0xf]
  %v162 = vunpack.c.l.bf16 %v161
  %v163 = vunpack.c.h.bf16 %v161
  %s164 = scalar_lea.vmem %s1, 1180
  %s165 = scalar_lea.vmem %s0, 1020
  %v166 = vld [vmem:[%s165] sm:$0xf]
  %v167 = vunpack.c.l.bf16 %v166
  %v168 = vunpack.c.h.bf16 %v166
  %s169 = scalar_lea.vmem %s1, 380
  %s170 = scalar_lea.vmem %s0, 540
  %v171 = vld [vmem:[%s170] sm:$0xf]
  %v172 = vunpack.c.l.bf16 %v171
  %v173 = vunpack.c.h.bf16 %v171
  %s174 = scalar_lea.vmem %s1, 860
  %s175 = scalar_lea.vmem %s0, 60
  %v176 = vld [vmem:[%s175] sm:$0xf]
  %v177 = vunpack.c.l.bf16 %v176
  %v178 = vunpack.c.h.bf16 %v176
  %s179 = scalar_lea.vmem %s1, 1340
  %s180 = scalar_lea.vmem %s0, 1360
  %v181 = vld [vmem:[%s180] sm:$0xf]
  %v182 = vunpack.c.l.bf16 %v181
  %v183 = vunpack.c.h.bf16 %v181
  %s184 = scalar_lea.vmem %s1, 80
  %s185 = scalar_lea.vmem %s0, 880
  %v186 = vld [vmem:[%s185] sm:$0xf]
  %v187 = vunpack.c.l.bf16 %v186
  %v188 = vunpack.c.h.bf16 %v186
  %s189 = scalar_lea.vmem %s1, 560
  %s190 = scalar_lea.vmem %s0, 400
  %v191 = vld [vmem:[%s190] sm:$0xf]
  %v192 = vunpack.c.l.bf16 %v191
  %v193 = vunpack.c.h.bf16 %v191
  %s194 = scalar_lea.vmem %s1, 1040
  %s195 = scalar_lea.vmem %s0, 1200
  %v196 = vld [vmem:[%s195] sm:$0xf]
  %v197 = vunpack.c.l.bf16 %v196
  %v198 = vunpack.c.h.bf16 %v196
  %s199 = scalar_lea.vmem %s1, 240
  %s200 = scalar_lea.vmem %s0, 720
  %v201 = vld [vmem:[%s200] sm:$0xf]
  %v202 = vunpack.c.l.bf16 %v201
  %v203 = vunpack.c.h.bf16 %v201
  %s204 = scalar_lea.vmem %s1, 720
  %s205 = scalar_lea.vmem %s0, 240
  %v206 = vld [vmem:[%s205] sm:$0xf]
  %v207 = vunpack.c.l.bf16 %v206
  %v208 = vunpack.c.h.bf16 %v206
  %s209 = scalar_lea.vmem %s1, 1200
  %s210 = scalar_lea.vmem %s0, 1040
  %v211 = vld [vmem:[%s210] sm:$0xf]
  %v212 = vunpack.c.l.bf16 %v211
  %v213 = vunpack.c.h.bf16 %v211
  %s214 = scalar_lea.vmem %s1, 400
  %s215 = scalar_lea.vmem %s0, 560
  %v216 = vld [vmem:[%s215] sm:$0xf]
  %v217 = vunpack.c.l.bf16 %v216
  %v218 = vunpack.c.h.bf16 %v216
  %s219 = scalar_lea.vmem %s1, 880
  %s220 = scalar_lea.vmem %s0, 80
  %v221 = vld [vmem:[%s220] sm:$0xf]
  %v222 = vunpack.c.l.bf16 %v221
  %v223 = vunpack.c.h.bf16 %v221
  %s224 = scalar_lea.vmem %s1, 1360
  %s225 = scalar_lea.vmem %s0, 1380
  %v226 = vld [vmem:[%s225] sm:$0xf]
  %v227 = vunpack.c.l.bf16 %v226
  %v228 = vunpack.c.h.bf16 %v226
  %s229 = scalar_lea.vmem %s1, 100
  %s230 = scalar_lea.vmem %s0, 900
  %v231 = vld [vmem:[%s230] sm:$0xf]
  %v232 = vunpack.c.l.bf16 %v231
  %v233 = vunpack.c.h.bf16 %v231
  %s234 = scalar_lea.vmem %s1, 580
  %s235 = scalar_lea.vmem %s0, 420
  %v236 = vld [vmem:[%s235] sm:$0xf]
  %v237 = vunpack.c.l.bf16 %v236
  %v238 = vunpack.c.h.bf16 %v236
  %s239 = scalar_lea.vmem %s1, 1060
  %s240 = scalar_lea.vmem %s0, 1220
  %v241 = vld [vmem:[%s240] sm:$0xf]
  %v242 = vunpack.c.l.bf16 %v241
  %v243 = vunpack.c.h.bf16 %v241
  %s244 = scalar_lea.vmem %s1, 260
  %s245 = scalar_lea.vmem %s0, 740
  %v246 = vld [vmem:[%s245] sm:$0xf]
  %v247 = vunpack.c.l.bf16 %v246
  %v248 = vunpack.c.h.bf16 %v246
  %s249 = scalar_lea.vmem %s1, 740
  %s250 = scalar_lea.vmem %s0, 260
  %v251 = vld [vmem:[%s250] sm:$0xf]
  %v252 = vunpack.c.l.bf16 %v251
  %v253 = vunpack.c.h.bf16 %v251
  %s254 = scalar_lea.vmem %s1, 1220
  %s255 = scalar_lea.vmem %s0, 1060
  %v256 = vld [vmem:[%s255] sm:$0xf]
  %v257 = vunpack.c.l.bf16 %v256
  %v258 = vunpack.c.h.bf16 %v256
  %s259 = scalar_lea.vmem %s1, 420
  %s260 = scalar_lea.vmem %s0, 580
  %v261 = vld [vmem:[%s260] sm:$0xf]
  %v262 = vunpack.c.l.bf16 %v261
  %v263 = vunpack.c.h.bf16 %v261
  %s264 = scalar_lea.vmem %s1, 900
  %s265 = scalar_lea.vmem %s0, 100
  %v266 = vld [vmem:[%s265] sm:$0xf]
  %v267 = vunpack.c.l.bf16 %v266
  %v268 = vunpack.c.h.bf16 %v266
  %s269 = scalar_lea.vmem %s1, 1380
  %s270 = scalar_lea.vmem %s0, 1400
  %v271 = vld [vmem:[%s270] sm:$0xf]
  %v272 = vunpack.c.l.bf16 %v271
  %v273 = vunpack.c.h.bf16 %v271
  %s274 = scalar_lea.vmem %s1, 120
  %s275 = scalar_lea.vmem %s0, 920
  %v276 = vld [vmem:[%s275] sm:$0xf]
  %v277 = vunpack.c.l.bf16 %v276
  %v278 = vunpack.c.h.bf16 %v276
  %s279 = scalar_lea.vmem %s1, 600
  %s280 = scalar_lea.vmem %s0, 440
  %v281 = vld [vmem:[%s280] sm:$0xf]
  %v282 = vunpack.c.l.bf16 %v281
  %v283 = vunpack.c.h.bf16 %v281
  %s284 = scalar_lea.vmem %s1, 1080
  %s285 = scalar_lea.vmem %s0, 1240
  %v286 = vld [vmem:[%s285] sm:$0xf]
  %v287 = vunpack.c.l.bf16 %v286
  %v288 = vunpack.c.h.bf16 %v286
  %s289 = scalar_lea.vmem %s1, 280
  %s290 = scalar_lea.vmem %s0, 760
  %v291 = vld [vmem:[%s290] sm:$0xf]
  %v292 = vunpack.c.l.bf16 %v291
  %v293 = vunpack.c.h.bf16 %v291
  %s294 = scalar_lea.vmem %s1, 760
  %s295 = scalar_lea.vmem %s0, 280
  %v296 = vld [vmem:[%s295] sm:$0xf]
  %v297 = vunpack.c.l.bf16 %v296
  %v298 = vunpack.c.h.bf16 %v296
  %s299 = scalar_lea.vmem %s1, 1240
  %s300 = scalar_lea.vmem %s0, 1080
  %v301 = vld [vmem:[%s300] sm:$0xf]
  %v302 = vunpack.c.l.bf16 %v301
  %v303 = vunpack.c.h.bf16 %v301
  %s304 = scalar_lea.vmem %s1, 440
  %s305 = scalar_lea.vmem %s0, 600
  %v306 = vld [vmem:[%s305] sm:$0xf]
  %v307 = vunpack.c.l.bf16 %v306
  %v308 = vunpack.c.h.bf16 %v306
  %s309 = scalar_lea.vmem %s1, 920
  %s310 = scalar_lea.vmem %s0, 120
  %v311 = vld [vmem:[%s310] sm:$0xf]
  %v312 = vunpack.c.l.bf16 %v311
  %v313 = vunpack.c.h.bf16 %v311
  %s314 = scalar_lea.vmem %s1, 1400
  %s315 = scalar_lea.vmem %s0, 1420
  %v316 = vld [vmem:[%s315] sm:$0xf]
  %v317 = vunpack.c.l.bf16 %v316
  %v318 = vunpack.c.h.bf16 %v316
  %s319 = scalar_lea.vmem %s1, 140
  %s320 = scalar_lea.vmem %s0, 940
  %v321 = vld [vmem:[%s320] sm:$0xf]
  %v322 = vunpack.c.l.bf16 %v321
  %v323 = vunpack.c.h.bf16 %v321
  %s324 = scalar_lea.vmem %s1, 620
  %s325 = scalar_lea.vmem %s0, 460
  %v326 = vld [vmem:[%s325] sm:$0xf]
  %v327 = vunpack.c.l.bf16 %v326
  %v328 = vunpack.c.h.bf16 %v326
  %s329 = scalar_lea.vmem %s1, 1100
  %s330 = scalar_lea.vmem %s0, 1260
  %v331 = vld [vmem:[%s330] sm:$0xf]
  %v332 = vunpack.c.l.bf16 %v331
  %v333 = vunpack.c.h.bf16 %v331
  %s334 = scalar_lea.vmem %s1, 300
  %s335 = scalar_lea.vmem %s0, 780
  %v336 = vld [vmem:[%s335] sm:$0xf]
  %v337 = vunpack.c.l.bf16 %v336
  %v338 = vunpack.c.h.bf16 %v336
  %s339 = scalar_lea.vmem %s1, 780
  %s340 = scalar_lea.vmem %s0, 300
  %v341 = vld [vmem:[%s340] sm:$0xf]
  %v342 = vunpack.c.l.bf16 %v341
  %v343 = vunpack.c.h.bf16 %v341
  %s344 = scalar_lea.vmem %s1, 1260
  %s345 = scalar_lea.vmem %s0, 1100
  %v346 = vld [vmem:[%s345] sm:$0xf]
  %v347 = vunpack.c.l.bf16 %v346
  %v348 = vunpack.c.h.bf16 %v346
  %s349 = scalar_lea.vmem %s1, 460
  %s350 = scalar_lea.vmem %s0, 620
  %v351 = vld [vmem:[%s350] sm:$0xf]
  %v352 = vunpack.c.l.bf16 %v351
  %v353 = vunpack.c.h.bf16 %v351
  %s354 = scalar_lea.vmem %s1, 940
  %s355 = scalar_lea.vmem %s0, 140
  %v356 = vld [vmem:[%s355] sm:$0xf]
  %v357 = vunpack.c.l.bf16 %v356
  %v358 = vunpack.c.h.bf16 %v356
  %s359 = scalar_lea.vmem %s1, 1420
  %s360 = scalar_lea.vmem %s0, 1284
  %v361 = vld [vmem:[%s360] sm:$0xf]
  %v362 = vunpack.c.l.bf16 %v361
  %v363 = vunpack.c.h.bf16 %v361
  %s364 = scalar_lea.vmem %s1, 4
  %s366 = ssub.s32 0, 4
  %s367 = scalar_lea.vmem %s364, %s366
  %v368 = vpack.c.bf16 %v362, %v4
  %369 = vst [vmem:[%s367] sm:$0xff] %v368
  %s370 = scalar_lea.vmem %s0, 804
  %v371 = vld [vmem:[%s370] sm:$0xf]
  %v372 = vunpack.c.l.bf16 %v371
  %v373 = vunpack.c.h.bf16 %v371
  %s374 = scalar_lea.vmem %s1, 484
  %s376 = ssub.s32 0, 4
  %s377 = scalar_lea.vmem %s374, %s376
  %v378 = vpack.c.bf16 %v372, %v8
  %379 = vst [vmem:[%s377] sm:$0xff] %v378
  %s380 = scalar_lea.vmem %s0, 324
  %v381 = vld [vmem:[%s380] sm:$0xf]
  %v382 = vunpack.c.l.bf16 %v381
  %v383 = vunpack.c.h.bf16 %v381
  %s384 = scalar_lea.vmem %s1, 964
  %s386 = ssub.s32 0, 4
  %s387 = scalar_lea.vmem %s384, %s386
  %v388 = vpack.c.bf16 %v382, %v13
  %389 = vst [vmem:[%s387] sm:$0xff] %v388
  %s390 = scalar_lea.vmem %s0, 1124
  %v391 = vld [vmem:[%s390] sm:$0xf]
  %v392 = vunpack.c.l.bf16 %v391
  %v393 = vunpack.c.h.bf16 %v391
  %s394 = scalar_lea.vmem %s1, 164
  %s396 = ssub.s32 0, 4
  %s397 = scalar_lea.vmem %s394, %s396
  %v398 = vpack.c.bf16 %v392, %v18
  %399 = vst [vmem:[%s397] sm:$0xff] %v398
  %s400 = scalar_lea.vmem %s0, 644
  %v401 = vld [vmem:[%s400] sm:$0xf]
  %v402 = vunpack.c.l.bf16 %v401
  %v403 = vunpack.c.h.bf16 %v401
  %s404 = scalar_lea.vmem %s1, 644
  %s406 = ssub.s32 0, 4
  %s407 = scalar_lea.vmem %s404, %s406
  %v408 = vpack.c.bf16 %v402, %v23
  %409 = vst [vmem:[%s407] sm:$0xff] %v408
  %s410 = scalar_lea.vmem %s0, 164
  %v411 = vld [vmem:[%s410] sm:$0xf]
  %v412 = vunpack.c.l.bf16 %v411
  %v413 = vunpack.c.h.bf16 %v411
  %s414 = scalar_lea.vmem %s1, 1124
  %s416 = ssub.s32 0, 4
  %s417 = scalar_lea.vmem %s414, %s416
  %v418 = vpack.c.bf16 %v412, %v28
  %419 = vst [vmem:[%s417] sm:$0xff] %v418
  %s420 = scalar_lea.vmem %s0, 964
  %v421 = vld [vmem:[%s420] sm:$0xf]
  %v422 = vunpack.c.l.bf16 %v421
  %v423 = vunpack.c.h.bf16 %v421
  %s424 = scalar_lea.vmem %s1, 324
  %s426 = ssub.s32 0, 4
  %s427 = scalar_lea.vmem %s424, %s426
  %v428 = vpack.c.bf16 %v422, %v33
  %429 = vst [vmem:[%s427] sm:$0xff] %v428
  %s430 = scalar_lea.vmem %s0, 484
  %v431 = vld [vmem:[%s430] sm:$0xf]
  %v432 = vunpack.c.l.bf16 %v431
  %v433 = vunpack.c.h.bf16 %v431
  %s434 = scalar_lea.vmem %s1, 804
  %s436 = ssub.s32 0, 4
  %s437 = scalar_lea.vmem %s434, %s436
  %v438 = vpack.c.bf16 %v432, %v38
  %439 = vst [vmem:[%s437] sm:$0xff] %v438
  %s440 = scalar_lea.vmem %s0, 4
  %v441 = vld [vmem:[%s440] sm:$0xf]
  %v442 = vunpack.c.l.bf16 %v441
  %v443 = vunpack.c.h.bf16 %v441
  %s444 = scalar_lea.vmem %s1, 1284
  %s446 = ssub.s32 0, 4
  %s447 = scalar_lea.vmem %s444, %s446
  %v448 = vpack.c.bf16 %v442, %v42
  %449 = vst [vmem:[%s447] sm:$0xff] %v448
  %s450 = scalar_lea.vmem %s0, 1304
  %v451 = vld [vmem:[%s450] sm:$0xf]
  %v452 = vunpack.c.l.bf16 %v451
  %v453 = vunpack.c.h.bf16 %v451
  %s454 = scalar_lea.vmem %s1, 24
  %s456 = ssub.s32 0, 4
  %s457 = scalar_lea.vmem %s454, %s456
  %v458 = vpack.c.bf16 %v452, %v47
  %459 = vst [vmem:[%s457] sm:$0xff] %v458
  %s460 = scalar_lea.vmem %s0, 824
  %v461 = vld [vmem:[%s460] sm:$0xf]
  %v462 = vunpack.c.l.bf16 %v461
  %v463 = vunpack.c.h.bf16 %v461
  %s464 = scalar_lea.vmem %s1, 504
  %s466 = ssub.s32 0, 4
  %s467 = scalar_lea.vmem %s464, %s466
  %v468 = vpack.c.bf16 %v462, %v52
  %469 = vst [vmem:[%s467] sm:$0xff] %v468
  %s470 = scalar_lea.vmem %s0, 344
  %v471 = vld [vmem:[%s470] sm:$0xf]
  %v472 = vunpack.c.l.bf16 %v471
  %v473 = vunpack.c.h.bf16 %v471
  %s474 = scalar_lea.vmem %s1, 984
  %s476 = ssub.s32 0, 4
  %s477 = scalar_lea.vmem %s474, %s476
  %v478 = vpack.c.bf16 %v472, %v57
  %479 = vst [vmem:[%s477] sm:$0xff] %v478
  %s480 = scalar_lea.vmem %s0, 1144
  %v481 = vld [vmem:[%s480] sm:$0xf]
  %v482 = vunpack.c.l.bf16 %v481
  %v483 = vunpack.c.h.bf16 %v481
  %s484 = scalar_lea.vmem %s1, 184
  %s486 = ssub.s32 0, 4
  %s487 = scalar_lea.vmem %s484, %s486
  %v488 = vpack.c.bf16 %v482, %v62
  %489 = vst [vmem:[%s487] sm:$0xff] %v488
  %s490 = scalar_lea.vmem %s0, 664
  %v491 = vld [vmem:[%s490] sm:$0xf]
  %v492 = vunpack.c.l.bf16 %v491
  %v493 = vunpack.c.h.bf16 %v491
  %s494 = scalar_lea.vmem %s1, 664
  %s496 = ssub.s32 0, 4
  %s497 = scalar_lea.vmem %s494, %s496
  %v498 = vpack.c.bf16 %v492, %v67
  %499 = vst [vmem:[%s497] sm:$0xff] %v498
  %s500 = scalar_lea.vmem %s0, 184
  %v501 = vld [vmem:[%s500] sm:$0xf]
  %v502 = vunpack.c.l.bf16 %v501
  %v503 = vunpack.c.h.bf16 %v501
  %s504 = scalar_lea.vmem %s1, 1144
  %s506 = ssub.s32 0, 4
  %s507 = scalar_lea.vmem %s504, %s506
  %v508 = vpack.c.bf16 %v502, %v72
  %509 = vst [vmem:[%s507] sm:$0xff] %v508
  %s510 = scalar_lea.vmem %s0, 984
  %v511 = vld [vmem:[%s510] sm:$0xf]
  %v512 = vunpack.c.l.bf16 %v511
  %v513 = vunpack.c.h.bf16 %v511
  %s514 = scalar_lea.vmem %s1, 344
  %s516 = ssub.s32 0, 4
  %s517 = scalar_lea.vmem %s514, %s516
  %v518 = vpack.c.bf16 %v512, %v77
  %519 = vst [vmem:[%s517] sm:$0xff] %v518
  %s520 = scalar_lea.vmem %s0, 504
  %v521 = vld [vmem:[%s520] sm:$0xf]
  %v522 = vunpack.c.l.bf16 %v521
  %v523 = vunpack.c.h.bf16 %v521
  %s524 = scalar_lea.vmem %s1, 824
  %s526 = ssub.s32 0, 4
  %s527 = scalar_lea.vmem %s524, %s526
  %v528 = vpack.c.bf16 %v522, %v82
  %529 = vst [vmem:[%s527] sm:$0xff] %v528
  %s530 = scalar_lea.vmem %s0, 24
  %v531 = vld [vmem:[%s530] sm:$0xf]
  %v532 = vunpack.c.l.bf16 %v531
  %v533 = vunpack.c.h.bf16 %v531
  %s534 = scalar_lea.vmem %s1, 1304
  %s536 = ssub.s32 0, 4
  %s537 = scalar_lea.vmem %s534, %s536
  %v538 = vpack.c.bf16 %v532, %v87
  %539 = vst [vmem:[%s537] sm:$0xff] %v538
  %s540 = scalar_lea.vmem %s0, 1324
  %v541 = vld [vmem:[%s540] sm:$0xf]
  %v542 = vunpack.c.l.bf16 %v541
  %v543 = vunpack.c.h.bf16 %v541
  %s544 = scalar_lea.vmem %s1, 44
  %s546 = ssub.s32 0, 4
  %s547 = scalar_lea.vmem %s544, %s546
  %v548 = vpack.c.bf16 %v542, %v92
  %549 = vst [vmem:[%s547] sm:$0xff] %v548
  %s550 = scalar_lea.vmem %s0, 844
  %v551 = vld [vmem:[%s550] sm:$0xf]
  %v552 = vunpack.c.l.bf16 %v551
  %v553 = vunpack.c.h.bf16 %v551
  %s554 = scalar_lea.vmem %s1, 524
  %s556 = ssub.s32 0, 4
  %s557 = scalar_lea.vmem %s554, %s556
  %v558 = vpack.c.bf16 %v552, %v97
  %559 = vst [vmem:[%s557] sm:$0xff] %v558
  %s560 = scalar_lea.vmem %s0, 364
  %v561 = vld [vmem:[%s560] sm:$0xf]
  %v562 = vunpack.c.l.bf16 %v561
  %v563 = vunpack.c.h.bf16 %v561
  %s564 = scalar_lea.vmem %s1, 1004
  %s566 = ssub.s32 0, 4
  %s567 = scalar_lea.vmem %s564, %s566
  %v568 = vpack.c.bf16 %v562, %v102
  %569 = vst [vmem:[%s567] sm:$0xff] %v568
  %s570 = scalar_lea.vmem %s0, 1164
  %v571 = vld [vmem:[%s570] sm:$0xf]
  %v572 = vunpack.c.l.bf16 %v571
  %v573 = vunpack.c.h.bf16 %v571
  %s574 = scalar_lea.vmem %s1, 204
  %s576 = ssub.s32 0, 4
  %s577 = scalar_lea.vmem %s574, %s576
  %v578 = vpack.c.bf16 %v572, %v107
  %579 = vst [vmem:[%s577] sm:$0xff] %v578
  %s580 = scalar_lea.vmem %s0, 684
  %v581 = vld [vmem:[%s580] sm:$0xf]
  %v582 = vunpack.c.l.bf16 %v581
  %v583 = vunpack.c.h.bf16 %v581
  %s584 = scalar_lea.vmem %s1, 684
  %s586 = ssub.s32 0, 4
  %s587 = scalar_lea.vmem %s584, %s586
  %v588 = vpack.c.bf16 %v582, %v112
  %589 = vst [vmem:[%s587] sm:$0xff] %v588
  %s590 = scalar_lea.vmem %s0, 204
  %v591 = vld [vmem:[%s590] sm:$0xf]
  %v592 = vunpack.c.l.bf16 %v591
  %v593 = vunpack.c.h.bf16 %v591
  %s594 = scalar_lea.vmem %s1, 1164
  %s596 = ssub.s32 0, 4
  %s597 = scalar_lea.vmem %s594, %s596
  %v598 = vpack.c.bf16 %v592, %v117
  %599 = vst [vmem:[%s597] sm:$0xff] %v598
  %s600 = scalar_lea.vmem %s0, 1004
  %v601 = vld [vmem:[%s600] sm:$0xf]
  %v602 = vunpack.c.l.bf16 %v601
  %v603 = vunpack.c.h.bf16 %v601
  %s604 = scalar_lea.vmem %s1, 364
  %s606 = ssub.s32 0, 4
  %s607 = scalar_lea.vmem %s604, %s606
  %v608 = vpack.c.bf16 %v602, %v122
  %609 = vst [vmem:[%s607] sm:$0xff] %v608
  %s610 = scalar_lea.vmem %s0, 524
  %v611 = vld [vmem:[%s610] sm:$0xf]
  %v612 = vunpack.c.l.bf16 %v611
  %v613 = vunpack.c.h.bf16 %v611
  %s614 = scalar_lea.vmem %s1, 844
  %s616 = ssub.s32 0, 4
  %s617 = scalar_lea.vmem %s614, %s616
  %v618 = vpack.c.bf16 %v612, %v127
  %619 = vst [vmem:[%s617] sm:$0xff] %v618
  %s620 = scalar_lea.vmem %s0, 44
  %v621 = vld [vmem:[%s620] sm:$0xf]
  %v622 = vunpack.c.l.bf16 %v621
  %v623 = vunpack.c.h.bf16 %v621
  %s624 = scalar_lea.vmem %s1, 1324
  %s626 = ssub.s32 0, 4
  %s627 = scalar_lea.vmem %s624, %s626
  %v628 = vpack.c.bf16 %v622, %v132
  %629 = vst [vmem:[%s627] sm:$0xff] %v628
  %s630 = scalar_lea.vmem %s0, 1344
  %v631 = vld [vmem:[%s630] sm:$0xf]
  %v632 = vunpack.c.l.bf16 %v631
  %v633 = vunpack.c.h.bf16 %v631
  %s634 = scalar_lea.vmem %s1, 64
  %s636 = ssub.s32 0, 4
  %s637 = scalar_lea.vmem %s634, %s636
  %v638 = vpack.c.bf16 %v632, %v137
  %639 = vst [vmem:[%s637] sm:$0xff] %v638
  %s640 = scalar_lea.vmem %s0, 864
  %v641 = vld [vmem:[%s640] sm:$0xf]
  %v642 = vunpack.c.l.bf16 %v641
  %v643 = vunpack.c.h.bf16 %v641
  %s644 = scalar_lea.vmem %s1, 544
  %s646 = ssub.s32 0, 4
  %s647 = scalar_lea.vmem %s644, %s646
  %v648 = vpack.c.bf16 %v642, %v142
  %649 = vst [vmem:[%s647] sm:$0xff] %v648
  %s650 = scalar_lea.vmem %s0, 384
  %v651 = vld [vmem:[%s650] sm:$0xf]
  %v652 = vunpack.c.l.bf16 %v651
  %v653 = vunpack.c.h.bf16 %v651
  %s654 = scalar_lea.vmem %s1, 1024
  %s656 = ssub.s32 0, 4
  %s657 = scalar_lea.vmem %s654, %s656
  %v658 = vpack.c.bf16 %v652, %v147
  %659 = vst [vmem:[%s657] sm:$0xff] %v658
  %s660 = scalar_lea.vmem %s0, 1184
  %v661 = vld [vmem:[%s660] sm:$0xf]
  %v662 = vunpack.c.l.bf16 %v661
  %v663 = vunpack.c.h.bf16 %v661
  %s664 = scalar_lea.vmem %s1, 224
  %s666 = ssub.s32 0, 4
  %s667 = scalar_lea.vmem %s664, %s666
  %v668 = vpack.c.bf16 %v662, %v152
  %669 = vst [vmem:[%s667] sm:$0xff] %v668
  %s670 = scalar_lea.vmem %s0, 704
  %v671 = vld [vmem:[%s670] sm:$0xf]
  %v672 = vunpack.c.l.bf16 %v671
  %v673 = vunpack.c.h.bf16 %v671
  %s674 = scalar_lea.vmem %s1, 704
  %s676 = ssub.s32 0, 4
  %s677 = scalar_lea.vmem %s674, %s676
  %v678 = vpack.c.bf16 %v672, %v157
  %679 = vst [vmem:[%s677] sm:$0xff] %v678
  %s680 = scalar_lea.vmem %s0, 224
  %v681 = vld [vmem:[%s680] sm:$0xf]
  %v682 = vunpack.c.l.bf16 %v681
  %v683 = vunpack.c.h.bf16 %v681
  %s684 = scalar_lea.vmem %s1, 1184
  %s686 = ssub.s32 0, 4
  %s687 = scalar_lea.vmem %s684, %s686
  %v688 = vpack.c.bf16 %v682, %v162
  %689 = vst [vmem:[%s687] sm:$0xff] %v688
  %s690 = scalar_lea.vmem %s0, 1024
  %v691 = vld [vmem:[%s690] sm:$0xf]
  %v692 = vunpack.c.l.bf16 %v691
  %v693 = vunpack.c.h.bf16 %v691
  %s694 = scalar_lea.vmem %s1, 384
  %s696 = ssub.s32 0, 4
  %s697 = scalar_lea.vmem %s694, %s696
  %v698 = vpack.c.bf16 %v692, %v167
  %699 = vst [vmem:[%s697] sm:$0xff] %v698
  %s700 = scalar_lea.vmem %s0, 544
  %v701 = vld [vmem:[%s700] sm:$0xf]
  %v702 = vunpack.c.l.bf16 %v701
  %v703 = vunpack.c.h.bf16 %v701
  %s704 = scalar_lea.vmem %s1, 864
  %s706 = ssub.s32 0, 4
  %s707 = scalar_lea.vmem %s704, %s706
  %v708 = vpack.c.bf16 %v702, %v172
  %709 = vst [vmem:[%s707] sm:$0xff] %v708
  %s710 = scalar_lea.vmem %s0, 64
  %v711 = vld [vmem:[%s710] sm:$0xf]
  %v712 = vunpack.c.l.bf16 %v711
  %v713 = vunpack.c.h.bf16 %v711
  %s714 = scalar_lea.vmem %s1, 1344
  %s716 = ssub.s32 0, 4
  %s717 = scalar_lea.vmem %s714, %s716
  %v718 = vpack.c.bf16 %v712, %v177
  %719 = vst [vmem:[%s717] sm:$0xff] %v718
  %s720 = scalar_lea.vmem %s0, 1364
  %v721 = vld [vmem:[%s720] sm:$0xf]
  %v722 = vunpack.c.l.bf16 %v721
  %v723 = vunpack.c.h.bf16 %v721
  %s724 = scalar_lea.vmem %s1, 84
  %s726 = ssub.s32 0, 4
  %s727 = scalar_lea.vmem %s724, %s726
  %v728 = vpack.c.bf16 %v722, %v182
  %729 = vst [vmem:[%s727] sm:$0xff] %v728
  %s730 = scalar_lea.vmem %s0, 884
  %v731 = vld [vmem:[%s730] sm:$0xf]
  %v732 = vunpack.c.l.bf16 %v731
  %v733 = vunpack.c.h.bf16 %v731
  %s734 = scalar_lea.vmem %s1, 564
  %s736 = ssub.s32 0, 4
  %s737 = scalar_lea.vmem %s734, %s736
  %v738 = vpack.c.bf16 %v732, %v187
  %739 = vst [vmem:[%s737] sm:$0xff] %v738
  %s740 = scalar_lea.vmem %s0, 404
  %v741 = vld [vmem:[%s740] sm:$0xf]
  %v742 = vunpack.c.l.bf16 %v741
  %v743 = vunpack.c.h.bf16 %v741
  %s744 = scalar_lea.vmem %s1, 1044
  %s746 = ssub.s32 0, 4
  %s747 = scalar_lea.vmem %s744, %s746
  %v748 = vpack.c.bf16 %v742, %v192
  %749 = vst [vmem:[%s747] sm:$0xff] %v748
  %s750 = scalar_lea.vmem %s0, 1204
  %v751 = vld [vmem:[%s750] sm:$0xf]
  %v752 = vunpack.c.l.bf16 %v751
  %v753 = vunpack.c.h.bf16 %v751
  %s754 = scalar_lea.vmem %s1, 244
  %s756 = ssub.s32 0, 4
  %s757 = scalar_lea.vmem %s754, %s756
  %v758 = vpack.c.bf16 %v752, %v197
  %759 = vst [vmem:[%s757] sm:$0xff] %v758
  %s760 = scalar_lea.vmem %s0, 724
  %v761 = vld [vmem:[%s760] sm:$0xf]
  %v762 = vunpack.c.l.bf16 %v761
  %v763 = vunpack.c.h.bf16 %v761
  %s764 = scalar_lea.vmem %s1, 724
  %s766 = ssub.s32 0, 4
  %s767 = scalar_lea.vmem %s764, %s766
  %v768 = vpack.c.bf16 %v762, %v202
  %769 = vst [vmem:[%s767] sm:$0xff] %v768
  %s770 = scalar_lea.vmem %s0, 244
  %v771 = vld [vmem:[%s770] sm:$0xf]
  %v772 = vunpack.c.l.bf16 %v771
  %v773 = vunpack.c.h.bf16 %v771
  %s774 = scalar_lea.vmem %s1, 1204
  %s776 = ssub.s32 0, 4
  %s777 = scalar_lea.vmem %s774, %s776
  %v778 = vpack.c.bf16 %v772, %v207
  %779 = vst [vmem:[%s777] sm:$0xff] %v778
  %s780 = scalar_lea.vmem %s0, 1044
  %v781 = vld [vmem:[%s780] sm:$0xf]
  %v782 = vunpack.c.l.bf16 %v781
  %v783 = vunpack.c.h.bf16 %v781
  %s784 = scalar_lea.vmem %s1, 404
  %s786 = ssub.s32 0, 4
  %s787 = scalar_lea.vmem %s784, %s786
  %v788 = vpack.c.bf16 %v782, %v212
  %789 = vst [vmem:[%s787] sm:$0xff] %v788
  %s790 = scalar_lea.vmem %s0, 564
  %v791 = vld [vmem:[%s790] sm:$0xf]
  %v792 = vunpack.c.l.bf16 %v791
  %v793 = vunpack.c.h.bf16 %v791
  %s794 = scalar_lea.vmem %s1, 884
  %s796 = ssub.s32 0, 4
  %s797 = scalar_lea.vmem %s794, %s796
  %v798 = vpack.c.bf16 %v792, %v217
  %799 = vst [vmem:[%s797] sm:$0xff] %v798
  %s800 = scalar_lea.vmem %s0, 84
  %v801 = vld [vmem:[%s800] sm:$0xf]
  %v802 = vunpack.c.l.bf16 %v801
  %v803 = vunpack.c.h.bf16 %v801
  %s804 = scalar_lea.vmem %s1, 1364
  %s806 = ssub.s32 0, 4
  %s807 = scalar_lea.vmem %s804, %s806
  %v808 = vpack.c.bf16 %v802, %v222
  %809 = vst [vmem:[%s807] sm:$0xff] %v808
  %s810 = scalar_lea.vmem %s0, 1384
  %v811 = vld [vmem:[%s810] sm:$0xf]
  %v812 = vunpack.c.l.bf16 %v811
  %v813 = vunpack.c.h.bf16 %v811
  %s814 = scalar_lea.vmem %s1, 104
  %s816 = ssub.s32 0, 4
  %s817 = scalar_lea.vmem %s814, %s816
  %v818 = vpack.c.bf16 %v812, %v227
  %819 = vst [vmem:[%s817] sm:$0xff] %v818
  %s820 = scalar_lea.vmem %s0, 904
  %v821 = vld [vmem:[%s820] sm:$0xf]
  %v822 = vunpack.c.l.bf16 %v821
  %v823 = vunpack.c.h.bf16 %v821
  %s824 = scalar_lea.vmem %s1, 584
  %s826 = ssub.s32 0, 4
  %s827 = scalar_lea.vmem %s824, %s826
  %v828 = vpack.c.bf16 %v822, %v232
  %829 = vst [vmem:[%s827] sm:$0xff] %v828
  %s830 = scalar_lea.vmem %s0, 424
  %v831 = vld [vmem:[%s830] sm:$0xf]
  %v832 = vunpack.c.l.bf16 %v831
  %v833 = vunpack.c.h.bf16 %v831
  %s834 = scalar_lea.vmem %s1, 1064
  %s836 = ssub.s32 0, 4
  %s837 = scalar_lea.vmem %s834, %s836
  %v838 = vpack.c.bf16 %v832, %v237
  %839 = vst [vmem:[%s837] sm:$0xff] %v838
  %s840 = scalar_lea.vmem %s0, 1224
  %v841 = vld [vmem:[%s840] sm:$0xf]
  %v842 = vunpack.c.l.bf16 %v841
  %v843 = vunpack.c.h.bf16 %v841
  %s844 = scalar_lea.vmem %s1, 264
  %s846 = ssub.s32 0, 4
  %s847 = scalar_lea.vmem %s844, %s846
  %v848 = vpack.c.bf16 %v842, %v242
  %849 = vst [vmem:[%s847] sm:$0xff] %v848
  %s850 = scalar_lea.vmem %s0, 744
  %v851 = vld [vmem:[%s850] sm:$0xf]
  %v852 = vunpack.c.l.bf16 %v851
  %v853 = vunpack.c.h.bf16 %v851
  %s854 = scalar_lea.vmem %s1, 744
  %s856 = ssub.s32 0, 4
  %s857 = scalar_lea.vmem %s854, %s856
  %v858 = vpack.c.bf16 %v852, %v247
  %859 = vst [vmem:[%s857] sm:$0xff] %v858
  %s860 = scalar_lea.vmem %s0, 264
  %v861 = vld [vmem:[%s860] sm:$0xf]
  %v862 = vunpack.c.l.bf16 %v861
  %v863 = vunpack.c.h.bf16 %v861
  %s864 = scalar_lea.vmem %s1, 1224
  %s866 = ssub.s32 0, 4
  %s867 = scalar_lea.vmem %s864, %s866
  %v868 = vpack.c.bf16 %v862, %v252
  %869 = vst [vmem:[%s867] sm:$0xff] %v868
  %s870 = scalar_lea.vmem %s0, 1064
  %v871 = vld [vmem:[%s870] sm:$0xf]
  %v872 = vunpack.c.l.bf16 %v871
  %v873 = vunpack.c.h.bf16 %v871
  %s874 = scalar_lea.vmem %s1, 424
  %s876 = ssub.s32 0, 4
  %s877 = scalar_lea.vmem %s874, %s876
  %v878 = vpack.c.bf16 %v872, %v257
  %879 = vst [vmem:[%s877] sm:$0xff] %v878
  %s880 = scalar_lea.vmem %s0, 584
  %v881 = vld [vmem:[%s880] sm:$0xf]
  %v882 = vunpack.c.l.bf16 %v881
  %v883 = vunpack.c.h.bf16 %v881
  %s884 = scalar_lea.vmem %s1, 904
  %s886 = ssub.s32 0, 4
  %s887 = scalar_lea.vmem %s884, %s886
  %v888 = vpack.c.bf16 %v882, %v262
  %889 = vst [vmem:[%s887] sm:$0xff] %v888
  %s890 = scalar_lea.vmem %s0, 104
  %v891 = vld [vmem:[%s890] sm:$0xf]
  %v892 = vunpack.c.l.bf16 %v891
  %v893 = vunpack.c.h.bf16 %v891
  %s894 = scalar_lea.vmem %s1, 1384
  %s896 = ssub.s32 0, 4
  %s897 = scalar_lea.vmem %s894, %s896
  %v898 = vpack.c.bf16 %v892, %v267
  %899 = vst [vmem:[%s897] sm:$0xff] %v898
  %s900 = scalar_lea.vmem %s0, 1404
  %v901 = vld [vmem:[%s900] sm:$0xf]
  %v902 = vunpack.c.l.bf16 %v901
  %v903 = vunpack.c.h.bf16 %v901
  %s904 = scalar_lea.vmem %s1, 124
  %s906 = ssub.s32 0, 4
  %s907 = scalar_lea.vmem %s904, %s906
  %v908 = vpack.c.bf16 %v902, %v272
  %909 = vst [vmem:[%s907] sm:$0xff] %v908
  %s910 = scalar_lea.vmem %s0, 924
  %v911 = vld [vmem:[%s910] sm:$0xf]
  %v912 = vunpack.c.l.bf16 %v911
  %v913 = vunpack.c.h.bf16 %v911
  %s914 = scalar_lea.vmem %s1, 604
  %s916 = ssub.s32 0, 4
  %s917 = scalar_lea.vmem %s914, %s916
  %v918 = vpack.c.bf16 %v912, %v277
  %919 = vst [vmem:[%s917] sm:$0xff] %v918
  %s920 = scalar_lea.vmem %s0, 444
  %v921 = vld [vmem:[%s920] sm:$0xf]
  %v922 = vunpack.c.l.bf16 %v921
  %v923 = vunpack.c.h.bf16 %v921
  %s924 = scalar_lea.vmem %s1, 1084
  %s926 = ssub.s32 0, 4
  %s927 = scalar_lea.vmem %s924, %s926
  %v928 = vpack.c.bf16 %v922, %v282
  %929 = vst [vmem:[%s927] sm:$0xff] %v928
  %s930 = scalar_lea.vmem %s0, 1244
  %v931 = vld [vmem:[%s930] sm:$0xf]
  %v932 = vunpack.c.l.bf16 %v931
  %v933 = vunpack.c.h.bf16 %v931
  %s934 = scalar_lea.vmem %s1, 284
  %s936 = ssub.s32 0, 4
  %s937 = scalar_lea.vmem %s934, %s936
  %v938 = vpack.c.bf16 %v932, %v287
  %939 = vst [vmem:[%s937] sm:$0xff] %v938
  %s940 = scalar_lea.vmem %s0, 764
  %v941 = vld [vmem:[%s940] sm:$0xf]
  %v942 = vunpack.c.l.bf16 %v941
  %v943 = vunpack.c.h.bf16 %v941
  %s944 = scalar_lea.vmem %s1, 764
  %s946 = ssub.s32 0, 4
  %s947 = scalar_lea.vmem %s944, %s946
  %v948 = vpack.c.bf16 %v942, %v292
  %949 = vst [vmem:[%s947] sm:$0xff] %v948
  %s950 = scalar_lea.vmem %s0, 284
  %v951 = vld [vmem:[%s950] sm:$0xf]
  %v952 = vunpack.c.l.bf16 %v951
  %v953 = vunpack.c.h.bf16 %v951
  %s954 = scalar_lea.vmem %s1, 1244
  %s956 = ssub.s32 0, 4
  %s957 = scalar_lea.vmem %s954, %s956
  %v958 = vpack.c.bf16 %v952, %v297
  %959 = vst [vmem:[%s957] sm:$0xff] %v958
  %s960 = scalar_lea.vmem %s0, 1084
  %v961 = vld [vmem:[%s960] sm:$0xf]
  %v962 = vunpack.c.l.bf16 %v961
  %v963 = vunpack.c.h.bf16 %v961
  %s964 = scalar_lea.vmem %s1, 444
  %s966 = ssub.s32 0, 4
  %s967 = scalar_lea.vmem %s964, %s966
  %v968 = vpack.c.bf16 %v962, %v302
  %969 = vst [vmem:[%s967] sm:$0xff] %v968
  %s970 = scalar_lea.vmem %s0, 604
  %v971 = vld [vmem:[%s970] sm:$0xf]
  %v972 = vunpack.c.l.bf16 %v971
  %v973 = vunpack.c.h.bf16 %v971
  %s974 = scalar_lea.vmem %s1, 924
  %s976 = ssub.s32 0, 4
  %s977 = scalar_lea.vmem %s974, %s976
  %v978 = vpack.c.bf16 %v972, %v307
  %979 = vst [vmem:[%s977] sm:$0xff] %v978
  %s980 = scalar_lea.vmem %s0, 124
  %v981 = vld [vmem:[%s980] sm:$0xf]
  %v982 = vunpack.c.l.bf16 %v981
  %v983 = vunpack.c.h.bf16 %v981
  %s984 = scalar_lea.vmem %s1, 1404
  %s986 = ssub.s32 0, 4
  %s987 = scalar_lea.vmem %s984, %s986
  %v988 = vpack.c.bf16 %v982, %v312
  %989 = vst [vmem:[%s987] sm:$0xff] %v988
  %s990 = scalar_lea.vmem %s0, 1424
  %v991 = vld [vmem:[%s990] sm:$0xf]
  %v992 = vunpack.c.l.bf16 %v991
  %v993 = vunpack.c.h.bf16 %v991
  %s994 = scalar_lea.vmem %s1, 144
  %s996 = ssub.s32 0, 4
  %s997 = scalar_lea.vmem %s994, %s996
  %v998 = vpack.c.bf16 %v992, %v317
  %999 = vst [vmem:[%s997] sm:$0xff] %v998
  %s1000 = scalar_lea.vmem %s0, 944
  %v1001 = vld [vmem:[%s1000] sm:$0xf]
  %v1002 = vunpack.c.l.bf16 %v1001
  %v1003 = vunpack.c.h.bf16 %v1001
  %s1004 = scalar_lea.vmem %s1, 624
  %s1006 = ssub.s32 0, 4
  %s1007 = scalar_lea.vmem %s1004, %s1006
  %v1008 = vpack.c.bf16 %v1002, %v322
  %1009 = vst [vmem:[%s1007] sm:$0xff] %v1008
  %s1010 = scalar_lea.vmem %s0, 464
  %v1011 = vld [vmem:[%s1010] sm:$0xf]
  %v1012 = vunpack.c.l.bf16 %v1011
  %v1013 = vunpack.c.h.bf16 %v1011
  %s1014 = scalar_lea.vmem %s1, 1104
  %s1016 = ssub.s32 0, 4
  %s1017 = scalar_lea.vmem %s1014, %s1016
  %v1018 = vpack.c.bf16 %v1012, %v327
  %1019 = vst [vmem:[%s1017] sm:$0xff] %v1018
  %s1020 = scalar_lea.vmem %s0, 1264
  %v1021 = vld [vmem:[%s1020] sm:$0xf]
  %v1022 = vunpack.c.l.bf16 %v1021
  %v1023 = vunpack.c.h.bf16 %v1021
  %s1024 = scalar_lea.vmem %s1, 304
  %s1026 = ssub.s32 0, 4
  %s1027 = scalar_lea.vmem %s1024, %s1026
  %v1028 = vpack.c.bf16 %v1022, %v332
  %1029 = vst [vmem:[%s1027] sm:$0xff] %v1028
  %s1030 = scalar_lea.vmem %s0, 784
  %v1031 = vld [vmem:[%s1030] sm:$0xf]
  %v1032 = vunpack.c.l.bf16 %v1031
  %v1033 = vunpack.c.h.bf16 %v1031
  %s1034 = scalar_lea.vmem %s1, 784
  %s1036 = ssub.s32 0, 4
  %s1037 = scalar_lea.vmem %s1034, %s1036
  %v1038 = vpack.c.bf16 %v1032, %v337
  %1039 = vst [vmem:[%s1037] sm:$0xff] %v1038
  %s1040 = scalar_lea.vmem %s0, 304
  %v1041 = vld [vmem:[%s1040] sm:$0xf]
  %v1042 = vunpack.c.l.bf16 %v1041
  %v1043 = vunpack.c.h.bf16 %v1041
  %s1044 = scalar_lea.vmem %s1, 1264
  %s1046 = ssub.s32 0, 4
  %s1047 = scalar_lea.vmem %s1044, %s1046
  %v1048 = vpack.c.bf16 %v1042, %v342
  %1049 = vst [vmem:[%s1047] sm:$0xff] %v1048
  %s1050 = scalar_lea.vmem %s0, 1104
  %v1051 = vld [vmem:[%s1050] sm:$0xf]
  %v1052 = vunpack.c.l.bf16 %v1051
  %v1053 = vunpack.c.h.bf16 %v1051
  %s1054 = scalar_lea.vmem %s1, 464
  %s1056 = ssub.s32 0, 4
  %s1057 = scalar_lea.vmem %s1054, %s1056
  %v1058 = vpack.c.bf16 %v1052, %v347
  %1059 = vst [vmem:[%s1057] sm:$0xff] %v1058
  %s1060 = scalar_lea.vmem %s0, 624
  %v1061 = vld [vmem:[%s1060] sm:$0xf]
  %v1062 = vunpack.c.l.bf16 %v1061
  %v1063 = vunpack.c.h.bf16 %v1061
  %s1064 = scalar_lea.vmem %s1, 944
  %s1066 = ssub.s32 0, 4
  %s1067 = scalar_lea.vmem %s1064, %s1066
  %v1068 = vpack.c.bf16 %v1062, %v352
  %1069 = vst [vmem:[%s1067] sm:$0xff] %v1068
  %s1070 = scalar_lea.vmem %s0, 144
  %v1071 = vld [vmem:[%s1070] sm:$0xf]
  %v1072 = vunpack.c.l.bf16 %v1071
  %v1073 = vunpack.c.h.bf16 %v1071
  %s1074 = scalar_lea.vmem %s1, 1424
  %s1076 = ssub.s32 0, 4
  %s1077 = scalar_lea.vmem %s1074, %s1076
  %v1078 = vpack.c.bf16 %v1072, %v357
  %1079 = vst [vmem:[%s1077] sm:$0xff] %v1078
  %s1080 = scalar_lea.vmem %s0, 1288
  %v1081 = vld [vmem:[%s1080] sm:$0xf]
  %v1082 = vunpack.c.l.bf16 %v1081
  %v1083 = vunpack.c.h.bf16 %v1081
  %s1084 = scalar_lea.vmem %s1, 8
  %s1085 = scalar_lea.vmem %s0, 808
  %v1086 = vld [vmem:[%s1085] sm:$0xf]
  %v1087 = vunpack.c.l.bf16 %v1086
  %v1088 = vunpack.c.h.bf16 %v1086
  %s1089 = scalar_lea.vmem %s1, 488
  %s1090 = scalar_lea.vmem %s0, 328
  %v1091 = vld [vmem:[%s1090] sm:$0xf]
  %v1092 = vunpack.c.l.bf16 %v1091
  %v1093 = vunpack.c.h.bf16 %v1091
  %s1094 = scalar_lea.vmem %s1, 968
  %s1095 = scalar_lea.vmem %s0, 1128
  %v1096 = vld [vmem:[%s1095] sm:$0xf]
  %v1097 = vunpack.c.l.bf16 %v1096
  %v1098 = vunpack.c.h.bf16 %v1096
  %s1099 = scalar_lea.vmem %s1, 168
  %s1100 = scalar_lea.vmem %s0, 648
  %v1101 = vld [vmem:[%s1100] sm:$0xf]
  %v1102 = vunpack.c.l.bf16 %v1101
  %v1103 = vunpack.c.h.bf16 %v1101
  %s1104 = scalar_lea.vmem %s1, 648
  %s1105 = scalar_lea.vmem %s0, 168
  %v1106 = vld [vmem:[%s1105] sm:$0xf]
  %v1107 = vunpack.c.l.bf16 %v1106
  %v1108 = vunpack.c.h.bf16 %v1106
  %s1109 = scalar_lea.vmem %s1, 1128
  %s1110 = scalar_lea.vmem %s0, 968
  %v1111 = vld [vmem:[%s1110] sm:$0xf]
  %v1112 = vunpack.c.l.bf16 %v1111
  %v1113 = vunpack.c.h.bf16 %v1111
  %s1114 = scalar_lea.vmem %s1, 328
  %s1115 = scalar_lea.vmem %s0, 488
  %v1116 = vld [vmem:[%s1115] sm:$0xf]
  %v1117 = vunpack.c.l.bf16 %v1116
  %v1118 = vunpack.c.h.bf16 %v1116
  %s1119 = scalar_lea.vmem %s1, 808
  %s1120 = scalar_lea.vmem %s0, 8
  %v1121 = vld [vmem:[%s1120] sm:$0xf]
  %v1122 = vunpack.c.l.bf16 %v1121
  %v1123 = vunpack.c.h.bf16 %v1121
  %s1124 = scalar_lea.vmem %s1, 1288
  %s1125 = scalar_lea.vmem %s0, 1308
  %v1126 = vld [vmem:[%s1125] sm:$0xf]
  %v1127 = vunpack.c.l.bf16 %v1126
  %v1128 = vunpack.c.h.bf16 %v1126
  %s1129 = scalar_lea.vmem %s1, 28
  %s1130 = scalar_lea.vmem %s0, 828
  %v1131 = vld [vmem:[%s1130] sm:$0xf]
  %v1132 = vunpack.c.l.bf16 %v1131
  %v1133 = vunpack.c.h.bf16 %v1131
  %s1134 = scalar_lea.vmem %s1, 508
  %s1135 = scalar_lea.vmem %s0, 348
  %v1136 = vld [vmem:[%s1135] sm:$0xf]
  %v1137 = vunpack.c.l.bf16 %v1136
  %v1138 = vunpack.c.h.bf16 %v1136
  %s1139 = scalar_lea.vmem %s1, 988
  %s1140 = scalar_lea.vmem %s0, 1148
  %v1141 = vld [vmem:[%s1140] sm:$0xf]
  %v1142 = vunpack.c.l.bf16 %v1141
  %v1143 = vunpack.c.h.bf16 %v1141
  %s1144 = scalar_lea.vmem %s1, 188
  %s1145 = scalar_lea.vmem %s0, 668
  %v1146 = vld [vmem:[%s1145] sm:$0xf]
  %v1147 = vunpack.c.l.bf16 %v1146
  %v1148 = vunpack.c.h.bf16 %v1146
  %s1149 = scalar_lea.vmem %s1, 668
  %s1150 = scalar_lea.vmem %s0, 188
  %v1151 = vld [vmem:[%s1150] sm:$0xf]
  %v1152 = vunpack.c.l.bf16 %v1151
  %v1153 = vunpack.c.h.bf16 %v1151
  %s1154 = scalar_lea.vmem %s1, 1148
  %s1155 = scalar_lea.vmem %s0, 988
  %v1156 = vld [vmem:[%s1155] sm:$0xf]
  %v1157 = vunpack.c.l.bf16 %v1156
  %v1158 = vunpack.c.h.bf16 %v1156
  %s1159 = scalar_lea.vmem %s1, 348
  %s1160 = scalar_lea.vmem %s0, 508
  %v1161 = vld [vmem:[%s1160] sm:$0xf]
  %v1162 = vunpack.c.l.bf16 %v1161
  %v1163 = vunpack.c.h.bf16 %v1161
  %s1164 = scalar_lea.vmem %s1, 828
  %s1165 = scalar_lea.vmem %s0, 28
  %v1166 = vld [vmem:[%s1165] sm:$0xf]
  %v1167 = vunpack.c.l.bf16 %v1166
  %v1168 = vunpack.c.h.bf16 %v1166
  %s1169 = scalar_lea.vmem %s1, 1308
  %s1170 = scalar_lea.vmem %s0, 1328
  %v1171 = vld [vmem:[%s1170] sm:$0xf]
  %v1172 = vunpack.c.l.bf16 %v1171
  %v1173 = vunpack.c.h.bf16 %v1171
  %s1174 = scalar_lea.vmem %s1, 48
  %s1175 = scalar_lea.vmem %s0, 848
  %v1176 = vld [vmem:[%s1175] sm:$0xf]
  %v1177 = vunpack.c.l.bf16 %v1176
  %v1178 = vunpack.c.h.bf16 %v1176
  %s1179 = scalar_lea.vmem %s1, 528
  %s1180 = scalar_lea.vmem %s0, 368
  %v1181 = vld [vmem:[%s1180] sm:$0xf]
  %v1182 = vunpack.c.l.bf16 %v1181
  %v1183 = vunpack.c.h.bf16 %v1181
  %s1184 = scalar_lea.vmem %s1, 1008
  %s1185 = scalar_lea.vmem %s0, 1168
  %v1186 = vld [vmem:[%s1185] sm:$0xf]
  %v1187 = vunpack.c.l.bf16 %v1186
  %v1188 = vunpack.c.h.bf16 %v1186
  %s1189 = scalar_lea.vmem %s1, 208
  %s1190 = scalar_lea.vmem %s0, 688
  %v1191 = vld [vmem:[%s1190] sm:$0xf]
  %v1192 = vunpack.c.l.bf16 %v1191
  %v1193 = vunpack.c.h.bf16 %v1191
  %s1194 = scalar_lea.vmem %s1, 688
  %s1195 = scalar_lea.vmem %s0, 208
  %v1196 = vld [vmem:[%s1195] sm:$0xf]
  %v1197 = vunpack.c.l.bf16 %v1196
  %v1198 = vunpack.c.h.bf16 %v1196
  %s1199 = scalar_lea.vmem %s1, 1168
  %s1200 = scalar_lea.vmem %s0, 1008
  %v1201 = vld [vmem:[%s1200] sm:$0xf]
  %v1202 = vunpack.c.l.bf16 %v1201
  %v1203 = vunpack.c.h.bf16 %v1201
  %s1204 = scalar_lea.vmem %s1, 368
  %s1205 = scalar_lea.vmem %s0, 528
  %v1206 = vld [vmem:[%s1205] sm:$0xf]
  %v1207 = vunpack.c.l.bf16 %v1206
  %v1208 = vunpack.c.h.bf16 %v1206
  %s1209 = scalar_lea.vmem %s1, 848
  %s1210 = scalar_lea.vmem %s0, 48
  %v1211 = vld [vmem:[%s1210] sm:$0xf]
  %v1212 = vunpack.c.l.bf16 %v1211
  %v1213 = vunpack.c.h.bf16 %v1211
  %s1214 = scalar_lea.vmem %s1, 1328
  %s1215 = scalar_lea.vmem %s0, 1348
  %v1216 = vld [vmem:[%s1215] sm:$0xf]
  %v1217 = vunpack.c.l.bf16 %v1216
  %v1218 = vunpack.c.h.bf16 %v1216
  %s1219 = scalar_lea.vmem %s1, 68
  %s1220 = scalar_lea.vmem %s0, 868
  %v1221 = vld [vmem:[%s1220] sm:$0xf]
  %v1222 = vunpack.c.l.bf16 %v1221
  %v1223 = vunpack.c.h.bf16 %v1221
  %s1224 = scalar_lea.vmem %s1, 548
  %s1225 = scalar_lea.vmem %s0, 388
  %v1226 = vld [vmem:[%s1225] sm:$0xf]
  %v1227 = vunpack.c.l.bf16 %v1226
  %v1228 = vunpack.c.h.bf16 %v1226
  %s1229 = scalar_lea.vmem %s1, 1028
  %s1230 = scalar_lea.vmem %s0, 1188
  %v1231 = vld [vmem:[%s1230] sm:$0xf]
  %v1232 = vunpack.c.l.bf16 %v1231
  %v1233 = vunpack.c.h.bf16 %v1231
  %s1234 = scalar_lea.vmem %s1, 228
  %s1235 = scalar_lea.vmem %s0, 708
  %v1236 = vld [vmem:[%s1235] sm:$0xf]
  %v1237 = vunpack.c.l.bf16 %v1236
  %v1238 = vunpack.c.h.bf16 %v1236
  %s1239 = scalar_lea.vmem %s1, 708
  %s1240 = scalar_lea.vmem %s0, 228
  %v1241 = vld [vmem:[%s1240] sm:$0xf]
  %v1242 = vunpack.c.l.bf16 %v1241
  %v1243 = vunpack.c.h.bf16 %v1241
  %s1244 = scalar_lea.vmem %s1, 1188
  %s1245 = scalar_lea.vmem %s0, 1028
  %v1246 = vld [vmem:[%s1245] sm:$0xf]
  %v1247 = vunpack.c.l.bf16 %v1246
  %v1248 = vunpack.c.h.bf16 %v1246
  %s1249 = scalar_lea.vmem %s1, 388
  %s1250 = scalar_lea.vmem %s0, 548
  %v1251 = vld [vmem:[%s1250] sm:$0xf]
  %v1252 = vunpack.c.l.bf16 %v1251
  %v1253 = vunpack.c.h.bf16 %v1251
  %s1254 = scalar_lea.vmem %s1, 868
  %s1255 = scalar_lea.vmem %s0, 68
  %v1256 = vld [vmem:[%s1255] sm:$0xf]
  %v1257 = vunpack.c.l.bf16 %v1256
  %v1258 = vunpack.c.h.bf16 %v1256
  %s1259 = scalar_lea.vmem %s1, 1348
  %s1260 = scalar_lea.vmem %s0, 1368
  %v1261 = vld [vmem:[%s1260] sm:$0xf]
  %v1262 = vunpack.c.l.bf16 %v1261
  %v1263 = vunpack.c.h.bf16 %v1261
  %s1264 = scalar_lea.vmem %s1, 88
  %s1265 = scalar_lea.vmem %s0, 888
  %v1266 = vld [vmem:[%s1265] sm:$0xf]
  %v1267 = vunpack.c.l.bf16 %v1266
  %v1268 = vunpack.c.h.bf16 %v1266
  %s1269 = scalar_lea.vmem %s1, 568
  %s1270 = scalar_lea.vmem %s0, 408
  %v1271 = vld [vmem:[%s1270] sm:$0xf]
  %v1272 = vunpack.c.l.bf16 %v1271
  %v1273 = vunpack.c.h.bf16 %v1271
  %s1274 = scalar_lea.vmem %s1, 1048
  %s1275 = scalar_lea.vmem %s0, 1208
  %v1276 = vld [vmem:[%s1275] sm:$0xf]
  %v1277 = vunpack.c.l.bf16 %v1276
  %v1278 = vunpack.c.h.bf16 %v1276
  %s1279 = scalar_lea.vmem %s1, 248
  %s1280 = scalar_lea.vmem %s0, 728
  %v1281 = vld [vmem:[%s1280] sm:$0xf]
  %v1282 = vunpack.c.l.bf16 %v1281
  %v1283 = vunpack.c.h.bf16 %v1281
  %s1284 = scalar_lea.vmem %s1, 728
  %s1285 = scalar_lea.vmem %s0, 248
  %v1286 = vld [vmem:[%s1285] sm:$0xf]
  %v1287 = vunpack.c.l.bf16 %v1286
  %v1288 = vunpack.c.h.bf16 %v1286
  %s1289 = scalar_lea.vmem %s1, 1208
  %s1290 = scalar_lea.vmem %s0, 1048
  %v1291 = vld [vmem:[%s1290] sm:$0xf]
  %v1292 = vunpack.c.l.bf16 %v1291
  %v1293 = vunpack.c.h.bf16 %v1291
  %s1294 = scalar_lea.vmem %s1, 408
  %s1295 = scalar_lea.vmem %s0, 568
  %v1296 = vld [vmem:[%s1295] sm:$0xf]
  %v1297 = vunpack.c.l.bf16 %v1296
  %v1298 = vunpack.c.h.bf16 %v1296
  %s1299 = scalar_lea.vmem %s1, 888
  %s1300 = scalar_lea.vmem %s0, 88
  %v1301 = vld [vmem:[%s1300] sm:$0xf]
  %v1302 = vunpack.c.l.bf16 %v1301
  %v1303 = vunpack.c.h.bf16 %v1301
  %s1304 = scalar_lea.vmem %s1, 1368
  %s1305 = scalar_lea.vmem %s0, 1388
  %v1306 = vld [vmem:[%s1305] sm:$0xf]
  %v1307 = vunpack.c.l.bf16 %v1306
  %v1308 = vunpack.c.h.bf16 %v1306
  %s1309 = scalar_lea.vmem %s1, 108
  %s1310 = scalar_lea.vmem %s0, 908
  %v1311 = vld [vmem:[%s1310] sm:$0xf]
  %v1312 = vunpack.c.l.bf16 %v1311
  %v1313 = vunpack.c.h.bf16 %v1311
  %s1314 = scalar_lea.vmem %s1, 588
  %s1315 = scalar_lea.vmem %s0, 428
  %v1316 = vld [vmem:[%s1315] sm:$0xf]
  %v1317 = vunpack.c.l.bf16 %v1316
  %v1318 = vunpack.c.h.bf16 %v1316
  %s1319 = scalar_lea.vmem %s1, 1068
  %s1320 = scalar_lea.vmem %s0, 1228
  %v1321 = vld [vmem:[%s1320] sm:$0xf]
  %v1322 = vunpack.c.l.bf16 %v1321
  %v1323 = vunpack.c.h.bf16 %v1321
  %s1324 = scalar_lea.vmem %s1, 268
  %s1325 = scalar_lea.vmem %s0, 748
  %v1326 = vld [vmem:[%s1325] sm:$0xf]
  %v1327 = vunpack.c.l.bf16 %v1326
  %v1328 = vunpack.c.h.bf16 %v1326
  %s1329 = scalar_lea.vmem %s1, 748
  %s1330 = scalar_lea.vmem %s0, 268
  %v1331 = vld [vmem:[%s1330] sm:$0xf]
  %v1332 = vunpack.c.l.bf16 %v1331
  %v1333 = vunpack.c.h.bf16 %v1331
  %s1334 = scalar_lea.vmem %s1, 1228
  %s1335 = scalar_lea.vmem %s0, 1068
  %v1336 = vld [vmem:[%s1335] sm:$0xf]
  %v1337 = vunpack.c.l.bf16 %v1336
  %v1338 = vunpack.c.h.bf16 %v1336
  %s1339 = scalar_lea.vmem %s1, 428
  %s1340 = scalar_lea.vmem %s0, 588
  %v1341 = vld [vmem:[%s1340] sm:$0xf]
  %v1342 = vunpack.c.l.bf16 %v1341
  %v1343 = vunpack.c.h.bf16 %v1341
  %s1344 = scalar_lea.vmem %s1, 908
  %s1345 = scalar_lea.vmem %s0, 108
  %v1346 = vld [vmem:[%s1345] sm:$0xf]
  %v1347 = vunpack.c.l.bf16 %v1346
  %v1348 = vunpack.c.h.bf16 %v1346
  %s1349 = scalar_lea.vmem %s1, 1388
  %s1350 = scalar_lea.vmem %s0, 1408
  %v1351 = vld [vmem:[%s1350] sm:$0xf]
  %v1352 = vunpack.c.l.bf16 %v1351
  %v1353 = vunpack.c.h.bf16 %v1351
  %s1354 = scalar_lea.vmem %s1, 128
  %s1355 = scalar_lea.vmem %s0, 928
  %v1356 = vld [vmem:[%s1355] sm:$0xf]
  %v1357 = vunpack.c.l.bf16 %v1356
  %v1358 = vunpack.c.h.bf16 %v1356
  %s1359 = scalar_lea.vmem %s1, 608
  %s1360 = scalar_lea.vmem %s0, 448
  %v1361 = vld [vmem:[%s1360] sm:$0xf]
  %v1362 = vunpack.c.l.bf16 %v1361
  %v1363 = vunpack.c.h.bf16 %v1361
  %s1364 = scalar_lea.vmem %s1, 1088
  %s1365 = scalar_lea.vmem %s0, 1248
  %v1366 = vld [vmem:[%s1365] sm:$0xf]
  %v1367 = vunpack.c.l.bf16 %v1366
  %v1368 = vunpack.c.h.bf16 %v1366
  %s1369 = scalar_lea.vmem %s1, 288
  %s1370 = scalar_lea.vmem %s0, 768
  %v1371 = vld [vmem:[%s1370] sm:$0xf]
  %v1372 = vunpack.c.l.bf16 %v1371
  %v1373 = vunpack.c.h.bf16 %v1371
  %s1374 = scalar_lea.vmem %s1, 768
  %s1375 = scalar_lea.vmem %s0, 288
  %v1376 = vld [vmem:[%s1375] sm:$0xf]
  %v1377 = vunpack.c.l.bf16 %v1376
  %v1378 = vunpack.c.h.bf16 %v1376
  %s1379 = scalar_lea.vmem %s1, 1248
  %s1380 = scalar_lea.vmem %s0, 1088
  %v1381 = vld [vmem:[%s1380] sm:$0xf]
  %v1382 = vunpack.c.l.bf16 %v1381
  %v1383 = vunpack.c.h.bf16 %v1381
  %s1384 = scalar_lea.vmem %s1, 448
  %s1385 = scalar_lea.vmem %s0, 608
  %v1386 = vld [vmem:[%s1385] sm:$0xf]
  %v1387 = vunpack.c.l.bf16 %v1386
  %v1388 = vunpack.c.h.bf16 %v1386
  %s1389 = scalar_lea.vmem %s1, 928
  %s1390 = scalar_lea.vmem %s0, 128
  %v1391 = vld [vmem:[%s1390] sm:$0xf]
  %v1392 = vunpack.c.l.bf16 %v1391
  %v1393 = vunpack.c.h.bf16 %v1391
  %s1394 = scalar_lea.vmem %s1, 1408
  %s1395 = scalar_lea.vmem %s0, 1428
  %v1396 = vld [vmem:[%s1395] sm:$0xf]
  %v1397 = vunpack.c.l.bf16 %v1396
  %v1398 = vunpack.c.h.bf16 %v1396
  %s1399 = scalar_lea.vmem %s1, 148
  %s1400 = scalar_lea.vmem %s0, 948
  %v1401 = vld [vmem:[%s1400] sm:$0xf]
  %v1402 = vunpack.c.l.bf16 %v1401
  %v1403 = vunpack.c.h.bf16 %v1401
  %s1404 = scalar_lea.vmem %s1, 628
  %s1405 = scalar_lea.vmem %s0, 468
  %v1406 = vld [vmem:[%s1405] sm:$0xf]
  %v1407 = vunpack.c.l.bf16 %v1406
  %v1408 = vunpack.c.h.bf16 %v1406
  %s1409 = scalar_lea.vmem %s1, 1108
  %s1410 = scalar_lea.vmem %s0, 1268
  %v1411 = vld [vmem:[%s1410] sm:$0xf]
  %v1412 = vunpack.c.l.bf16 %v1411
  %v1413 = vunpack.c.h.bf16 %v1411
  %s1414 = scalar_lea.vmem %s1, 308
  %s1415 = scalar_lea.vmem %s0, 788
  %v1416 = vld [vmem:[%s1415] sm:$0xf]
  %v1417 = vunpack.c.l.bf16 %v1416
  %v1418 = vunpack.c.h.bf16 %v1416
  %s1419 = scalar_lea.vmem %s1, 788
  %s1420 = scalar_lea.vmem %s0, 308
  %v1421 = vld [vmem:[%s1420] sm:$0xf]
  %v1422 = vunpack.c.l.bf16 %v1421
  %v1423 = vunpack.c.h.bf16 %v1421
  %s1424 = scalar_lea.vmem %s1, 1268
  %s1425 = scalar_lea.vmem %s0, 1108
  %v1426 = vld [vmem:[%s1425] sm:$0xf]
  %v1427 = vunpack.c.l.bf16 %v1426
  %v1428 = vunpack.c.h.bf16 %v1426
  %s1429 = scalar_lea.vmem %s1, 468
  %s1430 = scalar_lea.vmem %s0, 628
  %v1431 = vld [vmem:[%s1430] sm:$0xf]
  %v1432 = vunpack.c.l.bf16 %v1431
  %v1433 = vunpack.c.h.bf16 %v1431
  %s1434 = scalar_lea.vmem %s1, 948
  %s1435 = scalar_lea.vmem %s0, 148
  %v1436 = vld [vmem:[%s1435] sm:$0xf]
  %v1437 = vunpack.c.l.bf16 %v1436
  %v1438 = vunpack.c.h.bf16 %v1436
  %s1439 = scalar_lea.vmem %s1, 1428
  %s1440 = scalar_lea.vmem %s0, 1292
  %v1441 = vld [vmem:[%s1440] sm:$0xf]
  %v1442 = vunpack.c.l.bf16 %v1441
  %v1443 = vunpack.c.h.bf16 %v1441
  %s1444 = scalar_lea.vmem %s1, 12
  %s1446 = ssub.s32 0, 4
  %s1447 = scalar_lea.vmem %s1444, %s1446
  %v1448 = vpack.c.bf16 %v1442, %v1082
  %1449 = vst [vmem:[%s1447] sm:$0xff] %v1448
  %s1450 = scalar_lea.vmem %s0, 812
  %v1451 = vld [vmem:[%s1450] sm:$0xf]
  %v1452 = vunpack.c.l.bf16 %v1451
  %v1453 = vunpack.c.h.bf16 %v1451
  %s1454 = scalar_lea.vmem %s1, 492
  %s1456 = ssub.s32 0, 4
  %s1457 = scalar_lea.vmem %s1454, %s1456
  %v1458 = vpack.c.bf16 %v1452, %v1087
  %1459 = vst [vmem:[%s1457] sm:$0xff] %v1458
  %s1460 = scalar_lea.vmem %s0, 332
  %v1461 = vld [vmem:[%s1460] sm:$0xf]
  %v1462 = vunpack.c.l.bf16 %v1461
  %v1463 = vunpack.c.h.bf16 %v1461
  %s1464 = scalar_lea.vmem %s1, 972
  %s1466 = ssub.s32 0, 4
  %s1467 = scalar_lea.vmem %s1464, %s1466
  %v1468 = vpack.c.bf16 %v1462, %v1092
  %1469 = vst [vmem:[%s1467] sm:$0xff] %v1468
  %s1470 = scalar_lea.vmem %s0, 1132
  %v1471 = vld [vmem:[%s1470] sm:$0xf]
  %v1472 = vunpack.c.l.bf16 %v1471
  %v1473 = vunpack.c.h.bf16 %v1471
  %s1474 = scalar_lea.vmem %s1, 172
  %s1476 = ssub.s32 0, 4
  %s1477 = scalar_lea.vmem %s1474, %s1476
  %v1478 = vpack.c.bf16 %v1472, %v1097
  %1479 = vst [vmem:[%s1477] sm:$0xff] %v1478
  %s1480 = scalar_lea.vmem %s0, 652
  %v1481 = vld [vmem:[%s1480] sm:$0xf]
  %v1482 = vunpack.c.l.bf16 %v1481
  %v1483 = vunpack.c.h.bf16 %v1481
  %s1484 = scalar_lea.vmem %s1, 652
  %s1486 = ssub.s32 0, 4
  %s1487 = scalar_lea.vmem %s1484, %s1486
  %v1488 = vpack.c.bf16 %v1482, %v1102
  %1489 = vst [vmem:[%s1487] sm:$0xff] %v1488
  %s1490 = scalar_lea.vmem %s0, 172
  %v1491 = vld [vmem:[%s1490] sm:$0xf]
  %v1492 = vunpack.c.l.bf16 %v1491
  %v1493 = vunpack.c.h.bf16 %v1491
  %s1494 = scalar_lea.vmem %s1, 1132
  %s1496 = ssub.s32 0, 4
  %s1497 = scalar_lea.vmem %s1494, %s1496
  %v1498 = vpack.c.bf16 %v1492, %v1107
  %1499 = vst [vmem:[%s1497] sm:$0xff] %v1498
  %s1500 = scalar_lea.vmem %s0, 972
  %v1501 = vld [vmem:[%s1500] sm:$0xf]
  %v1502 = vunpack.c.l.bf16 %v1501
  %v1503 = vunpack.c.h.bf16 %v1501
  %s1504 = scalar_lea.vmem %s1, 332
  %s1506 = ssub.s32 0, 4
  %s1507 = scalar_lea.vmem %s1504, %s1506
  %v1508 = vpack.c.bf16 %v1502, %v1112
  %1509 = vst [vmem:[%s1507] sm:$0xff] %v1508
  %s1510 = scalar_lea.vmem %s0, 492
  %v1511 = vld [vmem:[%s1510] sm:$0xf]
  %v1512 = vunpack.c.l.bf16 %v1511
  %v1513 = vunpack.c.h.bf16 %v1511
  %s1514 = scalar_lea.vmem %s1, 812
  %s1516 = ssub.s32 0, 4
  %s1517 = scalar_lea.vmem %s1514, %s1516
  %v1518 = vpack.c.bf16 %v1512, %v1117
  %1519 = vst [vmem:[%s1517] sm:$0xff] %v1518
  %s1520 = scalar_lea.vmem %s0, 12
  %v1521 = vld [vmem:[%s1520] sm:$0xf]
  %v1522 = vunpack.c.l.bf16 %v1521
  %v1523 = vunpack.c.h.bf16 %v1521
  %s1524 = scalar_lea.vmem %s1, 1292
  %s1526 = ssub.s32 0, 4
  %s1527 = scalar_lea.vmem %s1524, %s1526
  %v1528 = vpack.c.bf16 %v1522, %v1122
  %1529 = vst [vmem:[%s1527] sm:$0xff] %v1528
  %s1530 = scalar_lea.vmem %s0, 1312
  %v1531 = vld [vmem:[%s1530] sm:$0xf]
  %v1532 = vunpack.c.l.bf16 %v1531
  %v1533 = vunpack.c.h.bf16 %v1531
  %s1534 = scalar_lea.vmem %s1, 32
  %s1536 = ssub.s32 0, 4
  %s1537 = scalar_lea.vmem %s1534, %s1536
  %v1538 = vpack.c.bf16 %v1532, %v1127
  %1539 = vst [vmem:[%s1537] sm:$0xff] %v1538
  %s1540 = scalar_lea.vmem %s0, 832
  %v1541 = vld [vmem:[%s1540] sm:$0xf]
  %v1542 = vunpack.c.l.bf16 %v1541
  %v1543 = vunpack.c.h.bf16 %v1541
  %s1544 = scalar_lea.vmem %s1, 512
  %s1546 = ssub.s32 0, 4
  %s1547 = scalar_lea.vmem %s1544, %s1546
  %v1548 = vpack.c.bf16 %v1542, %v1132
  %1549 = vst [vmem:[%s1547] sm:$0xff] %v1548
  %s1550 = scalar_lea.vmem %s0, 352
  %v1551 = vld [vmem:[%s1550] sm:$0xf]
  %v1552 = vunpack.c.l.bf16 %v1551
  %v1553 = vunpack.c.h.bf16 %v1551
  %s1554 = scalar_lea.vmem %s1, 992
  %s1556 = ssub.s32 0, 4
  %s1557 = scalar_lea.vmem %s1554, %s1556
  %v1558 = vpack.c.bf16 %v1552, %v1137
  %1559 = vst [vmem:[%s1557] sm:$0xff] %v1558
  %s1560 = scalar_lea.vmem %s0, 1152
  %v1561 = vld [vmem:[%s1560] sm:$0xf]
  %v1562 = vunpack.c.l.bf16 %v1561
  %v1563 = vunpack.c.h.bf16 %v1561
  %s1564 = scalar_lea.vmem %s1, 192
  %s1566 = ssub.s32 0, 4
  %s1567 = scalar_lea.vmem %s1564, %s1566
  %v1568 = vpack.c.bf16 %v1562, %v1142
  %1569 = vst [vmem:[%s1567] sm:$0xff] %v1568
  %s1570 = scalar_lea.vmem %s0, 672
  %v1571 = vld [vmem:[%s1570] sm:$0xf]
  %v1572 = vunpack.c.l.bf16 %v1571
  %v1573 = vunpack.c.h.bf16 %v1571
  %s1574 = scalar_lea.vmem %s1, 672
  %s1576 = ssub.s32 0, 4
  %s1577 = scalar_lea.vmem %s1574, %s1576
  %v1578 = vpack.c.bf16 %v1572, %v1147
  %1579 = vst [vmem:[%s1577] sm:$0xff] %v1578
  %s1580 = scalar_lea.vmem %s0, 192
  %v1581 = vld [vmem:[%s1580] sm:$0xf]
  %v1582 = vunpack.c.l.bf16 %v1581
  %v1583 = vunpack.c.h.bf16 %v1581
  %s1584 = scalar_lea.vmem %s1, 1152
  %s1586 = ssub.s32 0, 4
  %s1587 = scalar_lea.vmem %s1584, %s1586
  %v1588 = vpack.c.bf16 %v1582, %v1152
  %1589 = vst [vmem:[%s1587] sm:$0xff] %v1588
  %s1590 = scalar_lea.vmem %s0, 992
  %v1591 = vld [vmem:[%s1590] sm:$0xf]
  %v1592 = vunpack.c.l.bf16 %v1591
  %v1593 = vunpack.c.h.bf16 %v1591
  %s1594 = scalar_lea.vmem %s1, 352
  %s1596 = ssub.s32 0, 4
  %s1597 = scalar_lea.vmem %s1594, %s1596
  %v1598 = vpack.c.bf16 %v1592, %v1157
  %1599 = vst [vmem:[%s1597] sm:$0xff] %v1598
  %s1600 = scalar_lea.vmem %s0, 512
  %v1601 = vld [vmem:[%s1600] sm:$0xf]
  %v1602 = vunpack.c.l.bf16 %v1601
  %v1603 = vunpack.c.h.bf16 %v1601
  %s1604 = scalar_lea.vmem %s1, 832
  %s1606 = ssub.s32 0, 4
  %s1607 = scalar_lea.vmem %s1604, %s1606
  %v1608 = vpack.c.bf16 %v1602, %v1162
  %1609 = vst [vmem:[%s1607] sm:$0xff] %v1608
  %s1610 = scalar_lea.vmem %s0, 32
  %v1611 = vld [vmem:[%s1610] sm:$0xf]
  %v1612 = vunpack.c.l.bf16 %v1611
  %v1613 = vunpack.c.h.bf16 %v1611
  %s1614 = scalar_lea.vmem %s1, 1312
  %s1616 = ssub.s32 0, 4
  %s1617 = scalar_lea.vmem %s1614, %s1616
  %v1618 = vpack.c.bf16 %v1612, %v1167
  %1619 = vst [vmem:[%s1617] sm:$0xff] %v1618
  %s1620 = scalar_lea.vmem %s0, 1332
  %v1621 = vld [vmem:[%s1620] sm:$0xf]
  %v1622 = vunpack.c.l.bf16 %v1621
  %v1623 = vunpack.c.h.bf16 %v1621
  %s1624 = scalar_lea.vmem %s1, 52
  %s1626 = ssub.s32 0, 4
  %s1627 = scalar_lea.vmem %s1624, %s1626
  %v1628 = vpack.c.bf16 %v1622, %v1172
  %1629 = vst [vmem:[%s1627] sm:$0xff] %v1628
  %s1630 = scalar_lea.vmem %s0, 852
  %v1631 = vld [vmem:[%s1630] sm:$0xf]
  %v1632 = vunpack.c.l.bf16 %v1631
  %v1633 = vunpack.c.h.bf16 %v1631
  %s1634 = scalar_lea.vmem %s1, 532
  %s1636 = ssub.s32 0, 4
  %s1637 = scalar_lea.vmem %s1634, %s1636
  %v1638 = vpack.c.bf16 %v1632, %v1177
  %1639 = vst [vmem:[%s1637] sm:$0xff] %v1638
  %s1640 = scalar_lea.vmem %s0, 372
  %v1641 = vld [vmem:[%s1640] sm:$0xf]
  %v1642 = vunpack.c.l.bf16 %v1641
  %v1643 = vunpack.c.h.bf16 %v1641
  %s1644 = scalar_lea.vmem %s1, 1012
  %s1646 = ssub.s32 0, 4
  %s1647 = scalar_lea.vmem %s1644, %s1646
  %v1648 = vpack.c.bf16 %v1642, %v1182
  %1649 = vst [vmem:[%s1647] sm:$0xff] %v1648
  %s1650 = scalar_lea.vmem %s0, 1172
  %v1651 = vld [vmem:[%s1650] sm:$0xf]
  %v1652 = vunpack.c.l.bf16 %v1651
  %v1653 = vunpack.c.h.bf16 %v1651
  %s1654 = scalar_lea.vmem %s1, 212
  %s1656 = ssub.s32 0, 4
  %s1657 = scalar_lea.vmem %s1654, %s1656
  %v1658 = vpack.c.bf16 %v1652, %v1187
  %1659 = vst [vmem:[%s1657] sm:$0xff] %v1658
  %s1660 = scalar_lea.vmem %s0, 692
  %v1661 = vld [vmem:[%s1660] sm:$0xf]
  %v1662 = vunpack.c.l.bf16 %v1661
  %v1663 = vunpack.c.h.bf16 %v1661
  %s1664 = scalar_lea.vmem %s1, 692
  %s1666 = ssub.s32 0, 4
  %s1667 = scalar_lea.vmem %s1664, %s1666
  %v1668 = vpack.c.bf16 %v1662, %v1192
  %1669 = vst [vmem:[%s1667] sm:$0xff] %v1668
  %s1670 = scalar_lea.vmem %s0, 212
  %v1671 = vld [vmem:[%s1670] sm:$0xf]
  %v1672 = vunpack.c.l.bf16 %v1671
  %v1673 = vunpack.c.h.bf16 %v1671
  %s1674 = scalar_lea.vmem %s1, 1172
  %s1676 = ssub.s32 0, 4
  %s1677 = scalar_lea.vmem %s1674, %s1676
  %v1678 = vpack.c.bf16 %v1672, %v1197
  %1679 = vst [vmem:[%s1677] sm:$0xff] %v1678
  %s1680 = scalar_lea.vmem %s0, 1012
  %v1681 = vld [vmem:[%s1680] sm:$0xf]
  %v1682 = vunpack.c.l.bf16 %v1681
  %v1683 = vunpack.c.h.bf16 %v1681
  %s1684 = scalar_lea.vmem %s1, 372
  %s1686 = ssub.s32 0, 4
  %s1687 = scalar_lea.vmem %s1684, %s1686
  %v1688 = vpack.c.bf16 %v1682, %v1202
  %1689 = vst [vmem:[%s1687] sm:$0xff] %v1688
  %s1690 = scalar_lea.vmem %s0, 532
  %v1691 = vld [vmem:[%s1690] sm:$0xf]
  %v1692 = vunpack.c.l.bf16 %v1691
  %v1693 = vunpack.c.h.bf16 %v1691
  %s1694 = scalar_lea.vmem %s1, 852
  %s1696 = ssub.s32 0, 4
  %s1697 = scalar_lea.vmem %s1694, %s1696
  %v1698 = vpack.c.bf16 %v1692, %v1207
  %1699 = vst [vmem:[%s1697] sm:$0xff] %v1698
  %s1700 = scalar_lea.vmem %s0, 52
  %v1701 = vld [vmem:[%s1700] sm:$0xf]
  %v1702 = vunpack.c.l.bf16 %v1701
  %v1703 = vunpack.c.h.bf16 %v1701
  %s1704 = scalar_lea.vmem %s1, 1332
  %s1706 = ssub.s32 0, 4
  %s1707 = scalar_lea.vmem %s1704, %s1706
  %v1708 = vpack.c.bf16 %v1702, %v1212
  %1709 = vst [vmem:[%s1707] sm:$0xff] %v1708
  %s1710 = scalar_lea.vmem %s0, 1352
  %v1711 = vld [vmem:[%s1710] sm:$0xf]
  %v1712 = vunpack.c.l.bf16 %v1711
  %v1713 = vunpack.c.h.bf16 %v1711
  %s1714 = scalar_lea.vmem %s1, 72
  %s1716 = ssub.s32 0, 4
  %s1717 = scalar_lea.vmem %s1714, %s1716
  %v1718 = vpack.c.bf16 %v1712, %v1217
  %1719 = vst [vmem:[%s1717] sm:$0xff] %v1718
  %s1720 = scalar_lea.vmem %s0, 872
  %v1721 = vld [vmem:[%s1720] sm:$0xf]
  %v1722 = vunpack.c.l.bf16 %v1721
  %v1723 = vunpack.c.h.bf16 %v1721
  %s1724 = scalar_lea.vmem %s1, 552
  %s1726 = ssub.s32 0, 4
  %s1727 = scalar_lea.vmem %s1724, %s1726
  %v1728 = vpack.c.bf16 %v1722, %v1222
  %1729 = vst [vmem:[%s1727] sm:$0xff] %v1728
  %s1730 = scalar_lea.vmem %s0, 392
  %v1731 = vld [vmem:[%s1730] sm:$0xf]
  %v1732 = vunpack.c.l.bf16 %v1731
  %v1733 = vunpack.c.h.bf16 %v1731
  %s1734 = scalar_lea.vmem %s1, 1032
  %s1736 = ssub.s32 0, 4
  %s1737 = scalar_lea.vmem %s1734, %s1736
  %v1738 = vpack.c.bf16 %v1732, %v1227
  %1739 = vst [vmem:[%s1737] sm:$0xff] %v1738
  %s1740 = scalar_lea.vmem %s0, 1192
  %v1741 = vld [vmem:[%s1740] sm:$0xf]
  %v1742 = vunpack.c.l.bf16 %v1741
  %v1743 = vunpack.c.h.bf16 %v1741
  %s1744 = scalar_lea.vmem %s1, 232
  %s1746 = ssub.s32 0, 4
  %s1747 = scalar_lea.vmem %s1744, %s1746
  %v1748 = vpack.c.bf16 %v1742, %v1232
  %1749 = vst [vmem:[%s1747] sm:$0xff] %v1748
  %s1750 = scalar_lea.vmem %s0, 712
  %v1751 = vld [vmem:[%s1750] sm:$0xf]
  %v1752 = vunpack.c.l.bf16 %v1751
  %v1753 = vunpack.c.h.bf16 %v1751
  %s1754 = scalar_lea.vmem %s1, 712
  %s1756 = ssub.s32 0, 4
  %s1757 = scalar_lea.vmem %s1754, %s1756
  %v1758 = vpack.c.bf16 %v1752, %v1237
  %1759 = vst [vmem:[%s1757] sm:$0xff] %v1758
  %s1760 = scalar_lea.vmem %s0, 232
  %v1761 = vld [vmem:[%s1760] sm:$0xf]
  %v1762 = vunpack.c.l.bf16 %v1761
  %v1763 = vunpack.c.h.bf16 %v1761
  %s1764 = scalar_lea.vmem %s1, 1192
  %s1766 = ssub.s32 0, 4
  %s1767 = scalar_lea.vmem %s1764, %s1766
  %v1768 = vpack.c.bf16 %v1762, %v1242
  %1769 = vst [vmem:[%s1767] sm:$0xff] %v1768
  %s1770 = scalar_lea.vmem %s0, 1032
  %v1771 = vld [vmem:[%s1770] sm:$0xf]
  %v1772 = vunpack.c.l.bf16 %v1771
  %v1773 = vunpack.c.h.bf16 %v1771
  %s1774 = scalar_lea.vmem %s1, 392
  %s1776 = ssub.s32 0, 4
  %s1777 = scalar_lea.vmem %s1774, %s1776
  %v1778 = vpack.c.bf16 %v1772, %v1247
  %1779 = vst [vmem:[%s1777] sm:$0xff] %v1778
  %s1780 = scalar_lea.vmem %s0, 552
  %v1781 = vld [vmem:[%s1780] sm:$0xf]
  %v1782 = vunpack.c.l.bf16 %v1781
  %v1783 = vunpack.c.h.bf16 %v1781
  %s1784 = scalar_lea.vmem %s1, 872
  %s1786 = ssub.s32 0, 4
  %s1787 = scalar_lea.vmem %s1784, %s1786
  %v1788 = vpack.c.bf16 %v1782, %v1252
  %1789 = vst [vmem:[%s1787] sm:$0xff] %v1788
  %s1790 = scalar_lea.vmem %s0, 72
  %v1791 = vld [vmem:[%s1790] sm:$0xf]
  %v1792 = vunpack.c.l.bf16 %v1791
  %v1793 = vunpack.c.h.bf16 %v1791
  %s1794 = scalar_lea.vmem %s1, 1352
  %s1796 = ssub.s32 0, 4
  %s1797 = scalar_lea.vmem %s1794, %s1796
  %v1798 = vpack.c.bf16 %v1792, %v1257
  %1799 = vst [vmem:[%s1797] sm:$0xff] %v1798
  %s1800 = scalar_lea.vmem %s0, 1372
  %v1801 = vld [vmem:[%s1800] sm:$0xf]
  %v1802 = vunpack.c.l.bf16 %v1801
  %v1803 = vunpack.c.h.bf16 %v1801
  %s1804 = scalar_lea.vmem %s1, 92
  %s1806 = ssub.s32 0, 4
  %s1807 = scalar_lea.vmem %s1804, %s1806
  %v1808 = vpack.c.bf16 %v1802, %v1262
  %1809 = vst [vmem:[%s1807] sm:$0xff] %v1808
  %s1810 = scalar_lea.vmem %s0, 892
  %v1811 = vld [vmem:[%s1810] sm:$0xf]
  %v1812 = vunpack.c.l.bf16 %v1811
  %v1813 = vunpack.c.h.bf16 %v1811
  %s1814 = scalar_lea.vmem %s1, 572
  %s1816 = ssub.s32 0, 4
  %s1817 = scalar_lea.vmem %s1814, %s1816
  %v1818 = vpack.c.bf16 %v1812, %v1267
  %1819 = vst [vmem:[%s1817] sm:$0xff] %v1818
  %s1820 = scalar_lea.vmem %s0, 412
  %v1821 = vld [vmem:[%s1820] sm:$0xf]
  %v1822 = vunpack.c.l.bf16 %v1821
  %v1823 = vunpack.c.h.bf16 %v1821
  %s1824 = scalar_lea.vmem %s1, 1052
  %s1826 = ssub.s32 0, 4
  %s1827 = scalar_lea.vmem %s1824, %s1826
  %v1828 = vpack.c.bf16 %v1822, %v1272
  %1829 = vst [vmem:[%s1827] sm:$0xff] %v1828
  %s1830 = scalar_lea.vmem %s0, 1212
  %v1831 = vld [vmem:[%s1830] sm:$0xf]
  %v1832 = vunpack.c.l.bf16 %v1831
  %v1833 = vunpack.c.h.bf16 %v1831
  %s1834 = scalar_lea.vmem %s1, 252
  %s1836 = ssub.s32 0, 4
  %s1837 = scalar_lea.vmem %s1834, %s1836
  %v1838 = vpack.c.bf16 %v1832, %v1277
  %1839 = vst [vmem:[%s1837] sm:$0xff] %v1838
  %s1840 = scalar_lea.vmem %s0, 732
  %v1841 = vld [vmem:[%s1840] sm:$0xf]
  %v1842 = vunpack.c.l.bf16 %v1841
  %v1843 = vunpack.c.h.bf16 %v1841
  %s1844 = scalar_lea.vmem %s1, 732
  %s1846 = ssub.s32 0, 4
  %s1847 = scalar_lea.vmem %s1844, %s1846
  %v1848 = vpack.c.bf16 %v1842, %v1282
  %1849 = vst [vmem:[%s1847] sm:$0xff] %v1848
  %s1850 = scalar_lea.vmem %s0, 252
  %v1851 = vld [vmem:[%s1850] sm:$0xf]
  %v1852 = vunpack.c.l.bf16 %v1851
  %v1853 = vunpack.c.h.bf16 %v1851
  %s1854 = scalar_lea.vmem %s1, 1212
  %s1856 = ssub.s32 0, 4
  %s1857 = scalar_lea.vmem %s1854, %s1856
  %v1858 = vpack.c.bf16 %v1852, %v1287
  %1859 = vst [vmem:[%s1857] sm:$0xff] %v1858
  %s1860 = scalar_lea.vmem %s0, 1052
  %v1861 = vld [vmem:[%s1860] sm:$0xf]
  %v1862 = vunpack.c.l.bf16 %v1861
  %v1863 = vunpack.c.h.bf16 %v1861
  %s1864 = scalar_lea.vmem %s1, 412
  %s1866 = ssub.s32 0, 4
  %s1867 = scalar_lea.vmem %s1864, %s1866
  %v1868 = vpack.c.bf16 %v1862, %v1292
  %1869 = vst [vmem:[%s1867] sm:$0xff] %v1868
  %s1870 = scalar_lea.vmem %s0, 572
  %v1871 = vld [vmem:[%s1870] sm:$0xf]
  %v1872 = vunpack.c.l.bf16 %v1871
  %v1873 = vunpack.c.h.bf16 %v1871
  %s1874 = scalar_lea.vmem %s1, 892
  %s1876 = ssub.s32 0, 4
  %s1877 = scalar_lea.vmem %s1874, %s1876
  %v1878 = vpack.c.bf16 %v1872, %v1297
  %1879 = vst [vmem:[%s1877] sm:$0xff] %v1878
  %s1880 = scalar_lea.vmem %s0, 92
  %v1881 = vld [vmem:[%s1880] sm:$0xf]
  %v1882 = vunpack.c.l.bf16 %v1881
  %v1883 = vunpack.c.h.bf16 %v1881
  %s1884 = scalar_lea.vmem %s1, 1372
  %s1886 = ssub.s32 0, 4
  %s1887 = scalar_lea.vmem %s1884, %s1886
  %v1888 = vpack.c.bf16 %v1882, %v1302
  %1889 = vst [vmem:[%s1887] sm:$0xff] %v1888
  %s1890 = scalar_lea.vmem %s0, 1392
  %v1891 = vld [vmem:[%s1890] sm:$0xf]
  %v1892 = vunpack.c.l.bf16 %v1891
  %v1893 = vunpack.c.h.bf16 %v1891
  %s1894 = scalar_lea.vmem %s1, 112
  %s1896 = ssub.s32 0, 4
  %s1897 = scalar_lea.vmem %s1894, %s1896
  %v1898 = vpack.c.bf16 %v1892, %v1307
  %1899 = vst [vmem:[%s1897] sm:$0xff] %v1898
  %s1900 = scalar_lea.vmem %s0, 912
  %v1901 = vld [vmem:[%s1900] sm:$0xf]
  %v1902 = vunpack.c.l.bf16 %v1901
  %v1903 = vunpack.c.h.bf16 %v1901
  %s1904 = scalar_lea.vmem %s1, 592
  %s1906 = ssub.s32 0, 4
  %s1907 = scalar_lea.vmem %s1904, %s1906
  %v1908 = vpack.c.bf16 %v1902, %v1312
  %1909 = vst [vmem:[%s1907] sm:$0xff] %v1908
  %s1910 = scalar_lea.vmem %s0, 432
  %v1911 = vld [vmem:[%s1910] sm:$0xf]
  %v1912 = vunpack.c.l.bf16 %v1911
  %v1913 = vunpack.c.h.bf16 %v1911
  %s1914 = scalar_lea.vmem %s1, 1072
  %s1916 = ssub.s32 0, 4
  %s1917 = scalar_lea.vmem %s1914, %s1916
  %v1918 = vpack.c.bf16 %v1912, %v1317
  %1919 = vst [vmem:[%s1917] sm:$0xff] %v1918
  %s1920 = scalar_lea.vmem %s0, 1232
  %v1921 = vld [vmem:[%s1920] sm:$0xf]
  %v1922 = vunpack.c.l.bf16 %v1921
  %v1923 = vunpack.c.h.bf16 %v1921
  %s1924 = scalar_lea.vmem %s1, 272
  %s1926 = ssub.s32 0, 4
  %s1927 = scalar_lea.vmem %s1924, %s1926
  %v1928 = vpack.c.bf16 %v1922, %v1322
  %1929 = vst [vmem:[%s1927] sm:$0xff] %v1928
  %s1930 = scalar_lea.vmem %s0, 752
  %v1931 = vld [vmem:[%s1930] sm:$0xf]
  %v1932 = vunpack.c.l.bf16 %v1931
  %v1933 = vunpack.c.h.bf16 %v1931
  %s1934 = scalar_lea.vmem %s1, 752
  %s1936 = ssub.s32 0, 4
  %s1937 = scalar_lea.vmem %s1934, %s1936
  %v1938 = vpack.c.bf16 %v1932, %v1327
  %1939 = vst [vmem:[%s1937] sm:$0xff] %v1938
  %s1940 = scalar_lea.vmem %s0, 272
  %v1941 = vld [vmem:[%s1940] sm:$0xf]
  %v1942 = vunpack.c.l.bf16 %v1941
  %v1943 = vunpack.c.h.bf16 %v1941
  %s1944 = scalar_lea.vmem %s1, 1232
  %s1946 = ssub.s32 0, 4
  %s1947 = scalar_lea.vmem %s1944, %s1946
  %v1948 = vpack.c.bf16 %v1942, %v1332
  %1949 = vst [vmem:[%s1947] sm:$0xff] %v1948
  %s1950 = scalar_lea.vmem %s0, 1072
  %v1951 = vld [vmem:[%s1950] sm:$0xf]
  %v1952 = vunpack.c.l.bf16 %v1951
  %v1953 = vunpack.c.h.bf16 %v1951
  %s1954 = scalar_lea.vmem %s1, 432
  %s1956 = ssub.s32 0, 4
  %s1957 = scalar_lea.vmem %s1954, %s1956
  %v1958 = vpack.c.bf16 %v1952, %v1337
  %1959 = vst [vmem:[%s1957] sm:$0xff] %v1958
  %s1960 = scalar_lea.vmem %s0, 592
  %v1961 = vld [vmem:[%s1960] sm:$0xf]
  %v1962 = vunpack.c.l.bf16 %v1961
  %v1963 = vunpack.c.h.bf16 %v1961
  %s1964 = scalar_lea.vmem %s1, 912
  %s1966 = ssub.s32 0, 4
  %s1967 = scalar_lea.vmem %s1964, %s1966
  %v1968 = vpack.c.bf16 %v1962, %v1342
  %1969 = vst [vmem:[%s1967] sm:$0xff] %v1968
  %s1970 = scalar_lea.vmem %s0, 112
  %v1971 = vld [vmem:[%s1970] sm:$0xf]
  %v1972 = vunpack.c.l.bf16 %v1971
  %v1973 = vunpack.c.h.bf16 %v1971
  %s1974 = scalar_lea.vmem %s1, 1392
  %s1976 = ssub.s32 0, 4
  %s1977 = scalar_lea.vmem %s1974, %s1976
  %v1978 = vpack.c.bf16 %v1972, %v1347
  %1979 = vst [vmem:[%s1977] sm:$0xff] %v1978
  %s1980 = scalar_lea.vmem %s0, 1412
  %v1981 = vld [vmem:[%s1980] sm:$0xf]
  %v1982 = vunpack.c.l.bf16 %v1981
  %v1983 = vunpack.c.h.bf16 %v1981
  %s1984 = scalar_lea.vmem %s1, 132
  %s1986 = ssub.s32 0, 4
  %s1987 = scalar_lea.vmem %s1984, %s1986
  %v1988 = vpack.c.bf16 %v1982, %v1352
  %1989 = vst [vmem:[%s1987] sm:$0xff] %v1988
  %s1990 = scalar_lea.vmem %s0, 932
  %v1991 = vld [vmem:[%s1990] sm:$0xf]
  %v1992 = vunpack.c.l.bf16 %v1991
  %v1993 = vunpack.c.h.bf16 %v1991
  %s1994 = scalar_lea.vmem %s1, 612
  %s1996 = ssub.s32 0, 4
  %s1997 = scalar_lea.vmem %s1994, %s1996
  %v1998 = vpack.c.bf16 %v1992, %v1357
  %1999 = vst [vmem:[%s1997] sm:$0xff] %v1998
  %s2000 = scalar_lea.vmem %s0, 452
  %v2001 = vld [vmem:[%s2000] sm:$0xf]
  %v2002 = vunpack.c.l.bf16 %v2001
  %v2003 = vunpack.c.h.bf16 %v2001
  %s2004 = scalar_lea.vmem %s1, 1092
  %s2006 = ssub.s32 0, 4
  %s2007 = scalar_lea.vmem %s2004, %s2006
  %v2008 = vpack.c.bf16 %v2002, %v1362
  %2009 = vst [vmem:[%s2007] sm:$0xff] %v2008
  %s2010 = scalar_lea.vmem %s0, 1252
  %v2011 = vld [vmem:[%s2010] sm:$0xf]
  %v2012 = vunpack.c.l.bf16 %v2011
  %v2013 = vunpack.c.h.bf16 %v2011
  %s2014 = scalar_lea.vmem %s1, 292
  %s2016 = ssub.s32 0, 4
  %s2017 = scalar_lea.vmem %s2014, %s2016
  %v2018 = vpack.c.bf16 %v2012, %v1367
  %2019 = vst [vmem:[%s2017] sm:$0xff] %v2018
  %s2020 = scalar_lea.vmem %s0, 772
  %v2021 = vld [vmem:[%s2020] sm:$0xf]
  %v2022 = vunpack.c.l.bf16 %v2021
  %v2023 = vunpack.c.h.bf16 %v2021
  %s2024 = scalar_lea.vmem %s1, 772
  %s2026 = ssub.s32 0, 4
  %s2027 = scalar_lea.vmem %s2024, %s2026
  %v2028 = vpack.c.bf16 %v2022, %v1372
  %2029 = vst [vmem:[%s2027] sm:$0xff] %v2028
  %s2030 = scalar_lea.vmem %s0, 292
  %v2031 = vld [vmem:[%s2030] sm:$0xf]
  %v2032 = vunpack.c.l.bf16 %v2031
  %v2033 = vunpack.c.h.bf16 %v2031
  %s2034 = scalar_lea.vmem %s1, 1252
  %s2036 = ssub.s32 0, 4
  %s2037 = scalar_lea.vmem %s2034, %s2036
  %v2038 = vpack.c.bf16 %v2032, %v1377
  %2039 = vst [vmem:[%s2037] sm:$0xff] %v2038
  %s2040 = scalar_lea.vmem %s0, 1092
  %v2041 = vld [vmem:[%s2040] sm:$0xf]
  %v2042 = vunpack.c.l.bf16 %v2041
  %v2043 = vunpack.c.h.bf16 %v2041
  %s2044 = scalar_lea.vmem %s1, 452
  %s2046 = ssub.s32 0, 4
  %s2047 = scalar_lea.vmem %s2044, %s2046
  %v2048 = vpack.c.bf16 %v2042, %v1382
  %2049 = vst [vmem:[%s2047] sm:$0xff] %v2048
  %s2050 = scalar_lea.vmem %s0, 612
  %v2051 = vld [vmem:[%s2050] sm:$0xf]
  %v2052 = vunpack.c.l.bf16 %v2051
  %v2053 = vunpack.c.h.bf16 %v2051
  %s2054 = scalar_lea.vmem %s1, 932
  %s2056 = ssub.s32 0, 4
  %s2057 = scalar_lea.vmem %s2054, %s2056
  %v2058 = vpack.c.bf16 %v2052, %v1387
  %2059 = vst [vmem:[%s2057] sm:$0xff] %v2058
  %s2060 = scalar_lea.vmem %s0, 132
  %v2061 = vld [vmem:[%s2060] sm:$0xf]
  %v2062 = vunpack.c.l.bf16 %v2061
  %v2063 = vunpack.c.h.bf16 %v2061
  %s2064 = scalar_lea.vmem %s1, 1412
  %s2066 = ssub.s32 0, 4
  %s2067 = scalar_lea.vmem %s2064, %s2066
  %v2068 = vpack.c.bf16 %v2062, %v1392
  %2069 = vst [vmem:[%s2067] sm:$0xff] %v2068
  %s2070 = scalar_lea.vmem %s0, 1432
  %v2071 = vld [vmem:[%s2070] sm:$0xf]
  %v2072 = vunpack.c.l.bf16 %v2071
  %v2073 = vunpack.c.h.bf16 %v2071
  %s2074 = scalar_lea.vmem %s1, 152
  %s2076 = ssub.s32 0, 4
  %s2077 = scalar_lea.vmem %s2074, %s2076
  %v2078 = vpack.c.bf16 %v2072, %v1397
  %2079 = vst [vmem:[%s2077] sm:$0xff] %v2078
  %s2080 = scalar_lea.vmem %s0, 952
  %v2081 = vld [vmem:[%s2080] sm:$0xf]
  %v2082 = vunpack.c.l.bf16 %v2081
  %v2083 = vunpack.c.h.bf16 %v2081
  %s2084 = scalar_lea.vmem %s1, 632
  %s2086 = ssub.s32 0, 4
  %s2087 = scalar_lea.vmem %s2084, %s2086
  %v2088 = vpack.c.bf16 %v2082, %v1402
  %2089 = vst [vmem:[%s2087] sm:$0xff] %v2088
  %s2090 = scalar_lea.vmem %s0, 472
  %v2091 = vld [vmem:[%s2090] sm:$0xf]
  %v2092 = vunpack.c.l.bf16 %v2091
  %v2093 = vunpack.c.h.bf16 %v2091
  %s2094 = scalar_lea.vmem %s1, 1112
  %s2096 = ssub.s32 0, 4
  %s2097 = scalar_lea.vmem %s2094, %s2096
  %v2098 = vpack.c.bf16 %v2092, %v1407
  %2099 = vst [vmem:[%s2097] sm:$0xff] %v2098
  %s2100 = scalar_lea.vmem %s0, 1272
  %v2101 = vld [vmem:[%s2100] sm:$0xf]
  %v2102 = vunpack.c.l.bf16 %v2101
  %v2103 = vunpack.c.h.bf16 %v2101
  %s2104 = scalar_lea.vmem %s1, 312
  %s2106 = ssub.s32 0, 4
  %s2107 = scalar_lea.vmem %s2104, %s2106
  %v2108 = vpack.c.bf16 %v2102, %v1412
  %2109 = vst [vmem:[%s2107] sm:$0xff] %v2108
  %s2110 = scalar_lea.vmem %s0, 792
  %v2111 = vld [vmem:[%s2110] sm:$0xf]
  %v2112 = vunpack.c.l.bf16 %v2111
  %v2113 = vunpack.c.h.bf16 %v2111
  %s2114 = scalar_lea.vmem %s1, 792
  %s2116 = ssub.s32 0, 4
  %s2117 = scalar_lea.vmem %s2114, %s2116
  %v2118 = vpack.c.bf16 %v2112, %v1417
  %2119 = vst [vmem:[%s2117] sm:$0xff] %v2118
  %s2120 = scalar_lea.vmem %s0, 312
  %v2121 = vld [vmem:[%s2120] sm:$0xf]
  %v2122 = vunpack.c.l.bf16 %v2121
  %v2123 = vunpack.c.h.bf16 %v2121
  %s2124 = scalar_lea.vmem %s1, 1272
  %s2126 = ssub.s32 0, 4
  %s2127 = scalar_lea.vmem %s2124, %s2126
  %v2128 = vpack.c.bf16 %v2122, %v1422
  %2129 = vst [vmem:[%s2127] sm:$0xff] %v2128
  %s2130 = scalar_lea.vmem %s0, 1112
  %v2131 = vld [vmem:[%s2130] sm:$0xf]
  %v2132 = vunpack.c.l.bf16 %v2131
  %v2133 = vunpack.c.h.bf16 %v2131
  %s2134 = scalar_lea.vmem %s1, 472
  %s2136 = ssub.s32 0, 4
  %s2137 = scalar_lea.vmem %s2134, %s2136
  %v2138 = vpack.c.bf16 %v2132, %v1427
  %2139 = vst [vmem:[%s2137] sm:$0xff] %v2138
  %s2140 = scalar_lea.vmem %s0, 632
  %v2141 = vld [vmem:[%s2140] sm:$0xf]
  %v2142 = vunpack.c.l.bf16 %v2141
  %v2143 = vunpack.c.h.bf16 %v2141
  %s2144 = scalar_lea.vmem %s1, 952
  %s2146 = ssub.s32 0, 4
  %s2147 = scalar_lea.vmem %s2144, %s2146
  %v2148 = vpack.c.bf16 %v2142, %v1432
  %2149 = vst [vmem:[%s2147] sm:$0xff] %v2148
  %s2150 = scalar_lea.vmem %s0, 152
  %v2151 = vld [vmem:[%s2150] sm:$0xf]
  %v2152 = vunpack.c.l.bf16 %v2151
  %v2153 = vunpack.c.h.bf16 %v2151
  %s2154 = scalar_lea.vmem %s1, 1432
  %s2156 = ssub.s32 0, 4
  %s2157 = scalar_lea.vmem %s2154, %s2156
  %v2158 = vpack.c.bf16 %v2152, %v1437
  %2159 = vst [vmem:[%s2157] sm:$0xff] %v2158
  %s2160 = scalar_lea.vmem %s0, 1296
  %v2161 = vld [vmem:[%s2160] sm:$0xf]
  %v2162 = vunpack.c.l.bf16 %v2161
  %v2163 = vunpack.c.h.bf16 %v2161
  %s2164 = scalar_lea.vmem %s1, 16
  %v2165 = vpack.c.bf16 0.0, %v2162
  %2166 = vst [vmem:[%s2164] sm:$0xf] %v2165
  %s2167 = scalar_lea.vmem %s0, 816
  %v2168 = vld [vmem:[%s2167] sm:$0xf]
  %v2169 = vunpack.c.l.bf16 %v2168
  %v2170 = vunpack.c.h.bf16 %v2168
  %s2171 = scalar_lea.vmem %s1, 496
  %v2172 = vpack.c.bf16 0.0, %v2169
  %2173 = vst [vmem:[%s2171] sm:$0xf] %v2172
  %s2174 = scalar_lea.vmem %s0, 336
  %v2175 = vld [vmem:[%s2174] sm:$0xf]
  %v2176 = vunpack.c.l.bf16 %v2175
  %v2177 = vunpack.c.h.bf16 %v2175
  %s2178 = scalar_lea.vmem %s1, 976
  %v2179 = vpack.c.bf16 0.0, %v2176
  %2180 = vst [vmem:[%s2178] sm:$0xf] %v2179
  %s2181 = scalar_lea.vmem %s0, 1136
  %v2182 = vld [vmem:[%s2181] sm:$0xf]
  %v2183 = vunpack.c.l.bf16 %v2182
  %v2184 = vunpack.c.h.bf16 %v2182
  %s2185 = scalar_lea.vmem %s1, 176
  %v2186 = vpack.c.bf16 0.0, %v2183
  %2187 = vst [vmem:[%s2185] sm:$0xf] %v2186
  %s2188 = scalar_lea.vmem %s0, 656
  %v2189 = vld [vmem:[%s2188] sm:$0xf]
  %v2190 = vunpack.c.l.bf16 %v2189
  %v2191 = vunpack.c.h.bf16 %v2189
  %s2192 = scalar_lea.vmem %s1, 656
  %v2193 = vpack.c.bf16 0.0, %v2190
  %2194 = vst [vmem:[%s2192] sm:$0xf] %v2193
  %s2195 = scalar_lea.vmem %s0, 176
  %v2196 = vld [vmem:[%s2195] sm:$0xf]
  %v2197 = vunpack.c.l.bf16 %v2196
  %v2198 = vunpack.c.h.bf16 %v2196
  %s2199 = scalar_lea.vmem %s1, 1136
  %v2200 = vpack.c.bf16 0.0, %v2197
  %2201 = vst [vmem:[%s2199] sm:$0xf] %v2200
  %s2202 = scalar_lea.vmem %s0, 976
  %v2203 = vld [vmem:[%s2202] sm:$0xf]
  %v2204 = vunpack.c.l.bf16 %v2203
  %v2205 = vunpack.c.h.bf16 %v2203
  %s2206 = scalar_lea.vmem %s1, 336
  %v2207 = vpack.c.bf16 0.0, %v2204
  %2208 = vst [vmem:[%s2206] sm:$0xf] %v2207
  %s2209 = scalar_lea.vmem %s0, 496
  %v2210 = vld [vmem:[%s2209] sm:$0xf]
  %v2211 = vunpack.c.l.bf16 %v2210
  %v2212 = vunpack.c.h.bf16 %v2210
  %s2213 = scalar_lea.vmem %s1, 816
  %v2214 = vpack.c.bf16 0.0, %v2211
  %2215 = vst [vmem:[%s2213] sm:$0xf] %v2214
  %s2216 = scalar_lea.vmem %s0, 16
  %v2217 = vld [vmem:[%s2216] sm:$0xf]
  %v2218 = vunpack.c.l.bf16 %v2217
  %v2219 = vunpack.c.h.bf16 %v2217
  %s2220 = scalar_lea.vmem %s1, 1296
  %v2221 = vpack.c.bf16 0.0, %v2218
  %2222 = vst [vmem:[%s2220] sm:$0xf] %v2221
  %s2223 = scalar_lea.vmem %s0, 1316
  %v2224 = vld [vmem:[%s2223] sm:$0xf]
  %v2225 = vunpack.c.l.bf16 %v2224
  %v2226 = vunpack.c.h.bf16 %v2224
  %s2227 = scalar_lea.vmem %s1, 36
  %v2228 = vpack.c.bf16 0.0, %v2225
  %2229 = vst [vmem:[%s2227] sm:$0xf] %v2228
  %s2230 = scalar_lea.vmem %s0, 836
  %v2231 = vld [vmem:[%s2230] sm:$0xf]
  %v2232 = vunpack.c.l.bf16 %v2231
  %v2233 = vunpack.c.h.bf16 %v2231
  %s2234 = scalar_lea.vmem %s1, 516
  %v2235 = vpack.c.bf16 0.0, %v2232
  %2236 = vst [vmem:[%s2234] sm:$0xf] %v2235
  %s2237 = scalar_lea.vmem %s0, 356
  %v2238 = vld [vmem:[%s2237] sm:$0xf]
  %v2239 = vunpack.c.l.bf16 %v2238
  %v2240 = vunpack.c.h.bf16 %v2238
  %s2241 = scalar_lea.vmem %s1, 996
  %v2242 = vpack.c.bf16 0.0, %v2239
  %2243 = vst [vmem:[%s2241] sm:$0xf] %v2242
  %s2244 = scalar_lea.vmem %s0, 1156
  %v2245 = vld [vmem:[%s2244] sm:$0xf]
  %v2246 = vunpack.c.l.bf16 %v2245
  %v2247 = vunpack.c.h.bf16 %v2245
  %s2248 = scalar_lea.vmem %s1, 196
  %v2249 = vpack.c.bf16 0.0, %v2246
  %2250 = vst [vmem:[%s2248] sm:$0xf] %v2249
  %s2251 = scalar_lea.vmem %s0, 676
  %v2252 = vld [vmem:[%s2251] sm:$0xf]
  %v2253 = vunpack.c.l.bf16 %v2252
  %v2254 = vunpack.c.h.bf16 %v2252
  %s2255 = scalar_lea.vmem %s1, 676
  %v2256 = vpack.c.bf16 0.0, %v2253
  %2257 = vst [vmem:[%s2255] sm:$0xf] %v2256
  %s2258 = scalar_lea.vmem %s0, 196
  %v2259 = vld [vmem:[%s2258] sm:$0xf]
  %v2260 = vunpack.c.l.bf16 %v2259
  %v2261 = vunpack.c.h.bf16 %v2259
  %s2262 = scalar_lea.vmem %s1, 1156
  %v2263 = vpack.c.bf16 0.0, %v2260
  %2264 = vst [vmem:[%s2262] sm:$0xf] %v2263
  %s2265 = scalar_lea.vmem %s0, 996
  %v2266 = vld [vmem:[%s2265] sm:$0xf]
  %v2267 = vunpack.c.l.bf16 %v2266
  %v2268 = vunpack.c.h.bf16 %v2266
  %s2269 = scalar_lea.vmem %s1, 356
  %v2270 = vpack.c.bf16 0.0, %v2267
  %2271 = vst [vmem:[%s2269] sm:$0xf] %v2270
  %s2272 = scalar_lea.vmem %s0, 516
  %v2273 = vld [vmem:[%s2272] sm:$0xf]
  %v2274 = vunpack.c.l.bf16 %v2273
  %v2275 = vunpack.c.h.bf16 %v2273
  %s2276 = scalar_lea.vmem %s1, 836
  %v2277 = vpack.c.bf16 0.0, %v2274
  %2278 = vst [vmem:[%s2276] sm:$0xf] %v2277
  %s2279 = scalar_lea.vmem %s0, 36
  %v2280 = vld [vmem:[%s2279] sm:$0xf]
  %v2281 = vunpack.c.l.bf16 %v2280
  %v2282 = vunpack.c.h.bf16 %v2280
  %s2283 = scalar_lea.vmem %s1, 1316
  %v2284 = vpack.c.bf16 0.0, %v2281
  %2285 = vst [vmem:[%s2283] sm:$0xf] %v2284
  %s2286 = scalar_lea.vmem %s0, 1336
  %v2287 = vld [vmem:[%s2286] sm:$0xf]
  %v2288 = vunpack.c.l.bf16 %v2287
  %v2289 = vunpack.c.h.bf16 %v2287
  %s2290 = scalar_lea.vmem %s1, 56
  %v2291 = vpack.c.bf16 0.0, %v2288
  %2292 = vst [vmem:[%s2290] sm:$0xf] %v2291
  %s2293 = scalar_lea.vmem %s0, 856
  %v2294 = vld [vmem:[%s2293] sm:$0xf]
  %v2295 = vunpack.c.l.bf16 %v2294
  %v2296 = vunpack.c.h.bf16 %v2294
  %s2297 = scalar_lea.vmem %s1, 536
  %v2298 = vpack.c.bf16 0.0, %v2295
  %2299 = vst [vmem:[%s2297] sm:$0xf] %v2298
  %s2300 = scalar_lea.vmem %s0, 376
  %v2301 = vld [vmem:[%s2300] sm:$0xf]
  %v2302 = vunpack.c.l.bf16 %v2301
  %v2303 = vunpack.c.h.bf16 %v2301
  %s2304 = scalar_lea.vmem %s1, 1016
  %v2305 = vpack.c.bf16 0.0, %v2302
  %2306 = vst [vmem:[%s2304] sm:$0xf] %v2305
  %s2307 = scalar_lea.vmem %s0, 1176
  %v2308 = vld [vmem:[%s2307] sm:$0xf]
  %v2309 = vunpack.c.l.bf16 %v2308
  %v2310 = vunpack.c.h.bf16 %v2308
  %s2311 = scalar_lea.vmem %s1, 216
  %v2312 = vpack.c.bf16 0.0, %v2309
  %2313 = vst [vmem:[%s2311] sm:$0xf] %v2312
  %s2314 = scalar_lea.vmem %s0, 696
  %v2315 = vld [vmem:[%s2314] sm:$0xf]
  %v2316 = vunpack.c.l.bf16 %v2315
  %v2317 = vunpack.c.h.bf16 %v2315
  %s2318 = scalar_lea.vmem %s1, 696
  %v2319 = vpack.c.bf16 0.0, %v2316
  %2320 = vst [vmem:[%s2318] sm:$0xf] %v2319
  %s2321 = scalar_lea.vmem %s0, 216
  %v2322 = vld [vmem:[%s2321] sm:$0xf]
  %v2323 = vunpack.c.l.bf16 %v2322
  %v2324 = vunpack.c.h.bf16 %v2322
  %s2325 = scalar_lea.vmem %s1, 1176
  %v2326 = vpack.c.bf16 0.0, %v2323
  %2327 = vst [vmem:[%s2325] sm:$0xf] %v2326
  %s2328 = scalar_lea.vmem %s0, 1016
  %v2329 = vld [vmem:[%s2328] sm:$0xf]
  %v2330 = vunpack.c.l.bf16 %v2329
  %v2331 = vunpack.c.h.bf16 %v2329
  %s2332 = scalar_lea.vmem %s1, 376
  %v2333 = vpack.c.bf16 0.0, %v2330
  %2334 = vst [vmem:[%s2332] sm:$0xf] %v2333
  %s2335 = scalar_lea.vmem %s0, 536
  %v2336 = vld [vmem:[%s2335] sm:$0xf]
  %v2337 = vunpack.c.l.bf16 %v2336
  %v2338 = vunpack.c.h.bf16 %v2336
  %s2339 = scalar_lea.vmem %s1, 856
  %v2340 = vpack.c.bf16 0.0, %v2337
  %2341 = vst [vmem:[%s2339] sm:$0xf] %v2340
  %s2342 = scalar_lea.vmem %s0, 56
  %v2343 = vld [vmem:[%s2342] sm:$0xf]
  %v2344 = vunpack.c.l.bf16 %v2343
  %v2345 = vunpack.c.h.bf16 %v2343
  %s2346 = scalar_lea.vmem %s1, 1336
  %v2347 = vpack.c.bf16 0.0, %v2344
  %2348 = vst [vmem:[%s2346] sm:$0xf] %v2347
  %s2349 = scalar_lea.vmem %s0, 1356
  %v2350 = vld [vmem:[%s2349] sm:$0xf]
  %v2351 = vunpack.c.l.bf16 %v2350
  %v2352 = vunpack.c.h.bf16 %v2350
  %s2353 = scalar_lea.vmem %s1, 76
  %v2354 = vpack.c.bf16 0.0, %v2351
  %2355 = vst [vmem:[%s2353] sm:$0xf] %v2354
  %s2356 = scalar_lea.vmem %s0, 876
  %v2357 = vld [vmem:[%s2356] sm:$0xf]
  %v2358 = vunpack.c.l.bf16 %v2357
  %v2359 = vunpack.c.h.bf16 %v2357
  %s2360 = scalar_lea.vmem %s1, 556
  %v2361 = vpack.c.bf16 0.0, %v2358
  %2362 = vst [vmem:[%s2360] sm:$0xf] %v2361
  %s2363 = scalar_lea.vmem %s0, 396
  %v2364 = vld [vmem:[%s2363] sm:$0xf]
  %v2365 = vunpack.c.l.bf16 %v2364
  %v2366 = vunpack.c.h.bf16 %v2364
  %s2367 = scalar_lea.vmem %s1, 1036
  %v2368 = vpack.c.bf16 0.0, %v2365
  %2369 = vst [vmem:[%s2367] sm:$0xf] %v2368
  %s2370 = scalar_lea.vmem %s0, 1196
  %v2371 = vld [vmem:[%s2370] sm:$0xf]
  %v2372 = vunpack.c.l.bf16 %v2371
  %v2373 = vunpack.c.h.bf16 %v2371
  %s2374 = scalar_lea.vmem %s1, 236
  %v2375 = vpack.c.bf16 0.0, %v2372
  %2376 = vst [vmem:[%s2374] sm:$0xf] %v2375
  %s2377 = scalar_lea.vmem %s0, 716
  %v2378 = vld [vmem:[%s2377] sm:$0xf]
  %v2379 = vunpack.c.l.bf16 %v2378
  %v2380 = vunpack.c.h.bf16 %v2378
  %s2381 = scalar_lea.vmem %s1, 716
  %v2382 = vpack.c.bf16 0.0, %v2379
  %2383 = vst [vmem:[%s2381] sm:$0xf] %v2382
  %s2384 = scalar_lea.vmem %s0, 236
  %v2385 = vld [vmem:[%s2384] sm:$0xf]
  %v2386 = vunpack.c.l.bf16 %v2385
  %v2387 = vunpack.c.h.bf16 %v2385
  %s2388 = scalar_lea.vmem %s1, 1196
  %v2389 = vpack.c.bf16 0.0, %v2386
  %2390 = vst [vmem:[%s2388] sm:$0xf] %v2389
  %s2391 = scalar_lea.vmem %s0, 1036
  %v2392 = vld [vmem:[%s2391] sm:$0xf]
  %v2393 = vunpack.c.l.bf16 %v2392
  %v2394 = vunpack.c.h.bf16 %v2392
  %s2395 = scalar_lea.vmem %s1, 396
  %v2396 = vpack.c.bf16 0.0, %v2393
  %2397 = vst [vmem:[%s2395] sm:$0xf] %v2396
  %s2398 = scalar_lea.vmem %s0, 556
  %v2399 = vld [vmem:[%s2398] sm:$0xf]
  %v2400 = vunpack.c.l.bf16 %v2399
  %v2401 = vunpack.c.h.bf16 %v2399
  %s2402 = scalar_lea.vmem %s1, 876
  %v2403 = vpack.c.bf16 0.0, %v2400
  %2404 = vst [vmem:[%s2402] sm:$0xf] %v2403
  %s2405 = scalar_lea.vmem %s0, 76
  %v2406 = vld [vmem:[%s2405] sm:$0xf]
  %v2407 = vunpack.c.l.bf16 %v2406
  %v2408 = vunpack.c.h.bf16 %v2406
  %s2409 = scalar_lea.vmem %s1, 1356
  %v2410 = vpack.c.bf16 0.0, %v2407
  %2411 = vst [vmem:[%s2409] sm:$0xf] %v2410
  %s2412 = scalar_lea.vmem %s0, 1376
  %v2413 = vld [vmem:[%s2412] sm:$0xf]
  %v2414 = vunpack.c.l.bf16 %v2413
  %v2415 = vunpack.c.h.bf16 %v2413
  %s2416 = scalar_lea.vmem %s1, 96
  %v2417 = vpack.c.bf16 0.0, %v2414
  %2418 = vst [vmem:[%s2416] sm:$0xf] %v2417
  %s2419 = scalar_lea.vmem %s0, 896
  %v2420 = vld [vmem:[%s2419] sm:$0xf]
  %v2421 = vunpack.c.l.bf16 %v2420
  %v2422 = vunpack.c.h.bf16 %v2420
  %s2423 = scalar_lea.vmem %s1, 576
  %v2424 = vpack.c.bf16 0.0, %v2421
  %2425 = vst [vmem:[%s2423] sm:$0xf] %v2424
  %s2426 = scalar_lea.vmem %s0, 416
  %v2427 = vld [vmem:[%s2426] sm:$0xf]
  %v2428 = vunpack.c.l.bf16 %v2427
  %v2429 = vunpack.c.h.bf16 %v2427
  %s2430 = scalar_lea.vmem %s1, 1056
  %v2431 = vpack.c.bf16 0.0, %v2428
  %2432 = vst [vmem:[%s2430] sm:$0xf] %v2431
  %s2433 = scalar_lea.vmem %s0, 1216
  %v2434 = vld [vmem:[%s2433] sm:$0xf]
  %v2435 = vunpack.c.l.bf16 %v2434
  %v2436 = vunpack.c.h.bf16 %v2434
  %s2437 = scalar_lea.vmem %s1, 256
  %v2438 = vpack.c.bf16 0.0, %v2435
  %2439 = vst [vmem:[%s2437] sm:$0xf] %v2438
  %s2440 = scalar_lea.vmem %s0, 736
  %v2441 = vld [vmem:[%s2440] sm:$0xf]
  %v2442 = vunpack.c.l.bf16 %v2441
  %v2443 = vunpack.c.h.bf16 %v2441
  %s2444 = scalar_lea.vmem %s1, 736
  %v2445 = vpack.c.bf16 0.0, %v2442
  %2446 = vst [vmem:[%s2444] sm:$0xf] %v2445
  %s2447 = scalar_lea.vmem %s0, 256
  %v2448 = vld [vmem:[%s2447] sm:$0xf]
  %v2449 = vunpack.c.l.bf16 %v2448
  %v2450 = vunpack.c.h.bf16 %v2448
  %s2451 = scalar_lea.vmem %s1, 1216
  %v2452 = vpack.c.bf16 0.0, %v2449
  %2453 = vst [vmem:[%s2451] sm:$0xf] %v2452
  %s2454 = scalar_lea.vmem %s0, 1056
  %v2455 = vld [vmem:[%s2454] sm:$0xf]
  %v2456 = vunpack.c.l.bf16 %v2455
  %v2457 = vunpack.c.h.bf16 %v2455
  %s2458 = scalar_lea.vmem %s1, 416
  %v2459 = vpack.c.bf16 0.0, %v2456
  %2460 = vst [vmem:[%s2458] sm:$0xf] %v2459
  %s2461 = scalar_lea.vmem %s0, 576
  %v2462 = vld [vmem:[%s2461] sm:$0xf]
  %v2463 = vunpack.c.l.bf16 %v2462
  %v2464 = vunpack.c.h.bf16 %v2462
  %s2465 = scalar_lea.vmem %s1, 896
  %v2466 = vpack.c.bf16 0.0, %v2463
  %2467 = vst [vmem:[%s2465] sm:$0xf] %v2466
  %s2468 = scalar_lea.vmem %s0, 96
  %v2469 = vld [vmem:[%s2468] sm:$0xf]
  %v2470 = vunpack.c.l.bf16 %v2469
  %v2471 = vunpack.c.h.bf16 %v2469
  %s2472 = scalar_lea.vmem %s1, 1376
  %v2473 = vpack.c.bf16 0.0, %v2470
  %2474 = vst [vmem:[%s2472] sm:$0xf] %v2473
  %s2475 = scalar_lea.vmem %s0, 1396
  %v2476 = vld [vmem:[%s2475] sm:$0xf]
  %v2477 = vunpack.c.l.bf16 %v2476
  %v2478 = vunpack.c.h.bf16 %v2476
  %s2479 = scalar_lea.vmem %s1, 116
  %v2480 = vpack.c.bf16 0.0, %v2477
  %2481 = vst [vmem:[%s2479] sm:$0xf] %v2480
  %s2482 = scalar_lea.vmem %s0, 916
  %v2483 = vld [vmem:[%s2482] sm:$0xf]
  %v2484 = vunpack.c.l.bf16 %v2483
  %v2485 = vunpack.c.h.bf16 %v2483
  %s2486 = scalar_lea.vmem %s1, 596
  %v2487 = vpack.c.bf16 0.0, %v2484
  %2488 = vst [vmem:[%s2486] sm:$0xf] %v2487
  %s2489 = scalar_lea.vmem %s0, 436
  %v2490 = vld [vmem:[%s2489] sm:$0xf]
  %v2491 = vunpack.c.l.bf16 %v2490
  %v2492 = vunpack.c.h.bf16 %v2490
  %s2493 = scalar_lea.vmem %s1, 1076
  %v2494 = vpack.c.bf16 0.0, %v2491
  %2495 = vst [vmem:[%s2493] sm:$0xf] %v2494
  %s2496 = scalar_lea.vmem %s0, 1236
  %v2497 = vld [vmem:[%s2496] sm:$0xf]
  %v2498 = vunpack.c.l.bf16 %v2497
  %v2499 = vunpack.c.h.bf16 %v2497
  %s2500 = scalar_lea.vmem %s1, 276
  %v2501 = vpack.c.bf16 0.0, %v2498
  %2502 = vst [vmem:[%s2500] sm:$0xf] %v2501
  %s2503 = scalar_lea.vmem %s0, 756
  %v2504 = vld [vmem:[%s2503] sm:$0xf]
  %v2505 = vunpack.c.l.bf16 %v2504
  %v2506 = vunpack.c.h.bf16 %v2504
  %s2507 = scalar_lea.vmem %s1, 756
  %v2508 = vpack.c.bf16 0.0, %v2505
  %2509 = vst [vmem:[%s2507] sm:$0xf] %v2508
  %s2510 = scalar_lea.vmem %s0, 276
  %v2511 = vld [vmem:[%s2510] sm:$0xf]
  %v2512 = vunpack.c.l.bf16 %v2511
  %v2513 = vunpack.c.h.bf16 %v2511
  %s2514 = scalar_lea.vmem %s1, 1236
  %v2515 = vpack.c.bf16 0.0, %v2512
  %2516 = vst [vmem:[%s2514] sm:$0xf] %v2515
  %s2517 = scalar_lea.vmem %s0, 1076
  %v2518 = vld [vmem:[%s2517] sm:$0xf]
  %v2519 = vunpack.c.l.bf16 %v2518
  %v2520 = vunpack.c.h.bf16 %v2518
  %s2521 = scalar_lea.vmem %s1, 436
  %v2522 = vpack.c.bf16 0.0, %v2519
  %2523 = vst [vmem:[%s2521] sm:$0xf] %v2522
  %s2524 = scalar_lea.vmem %s0, 596
  %v2525 = vld [vmem:[%s2524] sm:$0xf]
  %v2526 = vunpack.c.l.bf16 %v2525
  %v2527 = vunpack.c.h.bf16 %v2525
  %s2528 = scalar_lea.vmem %s1, 916
  %v2529 = vpack.c.bf16 0.0, %v2526
  %2530 = vst [vmem:[%s2528] sm:$0xf] %v2529
  %s2531 = scalar_lea.vmem %s0, 116
  %v2532 = vld [vmem:[%s2531] sm:$0xf]
  %v2533 = vunpack.c.l.bf16 %v2532
  %v2534 = vunpack.c.h.bf16 %v2532
  %s2535 = scalar_lea.vmem %s1, 1396
  %v2536 = vpack.c.bf16 0.0, %v2533
  %2537 = vst [vmem:[%s2535] sm:$0xf] %v2536
  %s2538 = scalar_lea.vmem %s0, 1416
  %v2539 = vld [vmem:[%s2538] sm:$0xf]
  %v2540 = vunpack.c.l.bf16 %v2539
  %v2541 = vunpack.c.h.bf16 %v2539
  %s2542 = scalar_lea.vmem %s1, 136
  %v2543 = vpack.c.bf16 0.0, %v2540
  %2544 = vst [vmem:[%s2542] sm:$0xf] %v2543
  %s2545 = scalar_lea.vmem %s0, 936
  %v2546 = vld [vmem:[%s2545] sm:$0xf]
  %v2547 = vunpack.c.l.bf16 %v2546
  %v2548 = vunpack.c.h.bf16 %v2546
  %s2549 = scalar_lea.vmem %s1, 616
  %v2550 = vpack.c.bf16 0.0, %v2547
  %2551 = vst [vmem:[%s2549] sm:$0xf] %v2550
  %s2552 = scalar_lea.vmem %s0, 456
  %v2553 = vld [vmem:[%s2552] sm:$0xf]
  %v2554 = vunpack.c.l.bf16 %v2553
  %v2555 = vunpack.c.h.bf16 %v2553
  %s2556 = scalar_lea.vmem %s1, 1096
  %v2557 = vpack.c.bf16 0.0, %v2554
  %2558 = vst [vmem:[%s2556] sm:$0xf] %v2557
  %s2559 = scalar_lea.vmem %s0, 1256
  %v2560 = vld [vmem:[%s2559] sm:$0xf]
  %v2561 = vunpack.c.l.bf16 %v2560
  %v2562 = vunpack.c.h.bf16 %v2560
  %s2563 = scalar_lea.vmem %s1, 296
  %v2564 = vpack.c.bf16 0.0, %v2561
  %2565 = vst [vmem:[%s2563] sm:$0xf] %v2564
  %s2566 = scalar_lea.vmem %s0, 776
  %v2567 = vld [vmem:[%s2566] sm:$0xf]
  %v2568 = vunpack.c.l.bf16 %v2567
  %v2569 = vunpack.c.h.bf16 %v2567
  %s2570 = scalar_lea.vmem %s1, 776
  %v2571 = vpack.c.bf16 0.0, %v2568
  %2572 = vst [vmem:[%s2570] sm:$0xf] %v2571
  %s2573 = scalar_lea.vmem %s0, 296
  %v2574 = vld [vmem:[%s2573] sm:$0xf]
  %v2575 = vunpack.c.l.bf16 %v2574
  %v2576 = vunpack.c.h.bf16 %v2574
  %s2577 = scalar_lea.vmem %s1, 1256
  %v2578 = vpack.c.bf16 0.0, %v2575
  %2579 = vst [vmem:[%s2577] sm:$0xf] %v2578
  %s2580 = scalar_lea.vmem %s0, 1096
  %v2581 = vld [vmem:[%s2580] sm:$0xf]
  %v2582 = vunpack.c.l.bf16 %v2581
  %v2583 = vunpack.c.h.bf16 %v2581
  %s2584 = scalar_lea.vmem %s1, 456
  %v2585 = vpack.c.bf16 0.0, %v2582
  %2586 = vst [vmem:[%s2584] sm:$0xf] %v2585
  %s2587 = scalar_lea.vmem %s0, 616
  %v2588 = vld [vmem:[%s2587] sm:$0xf]
  %v2589 = vunpack.c.l.bf16 %v2588
  %v2590 = vunpack.c.h.bf16 %v2588
  %s2591 = scalar_lea.vmem %s1, 936
  %v2592 = vpack.c.bf16 0.0, %v2589
  %2593 = vst [vmem:[%s2591] sm:$0xf] %v2592
  %s2594 = scalar_lea.vmem %s0, 136
  %v2595 = vld [vmem:[%s2594] sm:$0xf]
  %v2596 = vunpack.c.l.bf16 %v2595
  %v2597 = vunpack.c.h.bf16 %v2595
  %s2598 = scalar_lea.vmem %s1, 1416
  %v2599 = vpack.c.bf16 0.0, %v2596
  %2600 = vst [vmem:[%s2598] sm:$0xf] %v2599
  %s2601 = scalar_lea.vmem %s0, 1436
  %v2602 = vld [vmem:[%s2601] sm:$0xf]
  %v2603 = vunpack.c.l.bf16 %v2602
  %v2604 = vunpack.c.h.bf16 %v2602
  %s2605 = scalar_lea.vmem %s1, 156
  %v2606 = vpack.c.bf16 0.0, %v2603
  %2607 = vst [vmem:[%s2605] sm:$0xf] %v2606
  %s2608 = scalar_lea.vmem %s0, 956
  %v2609 = vld [vmem:[%s2608] sm:$0xf]
  %v2610 = vunpack.c.l.bf16 %v2609
  %v2611 = vunpack.c.h.bf16 %v2609
  %s2612 = scalar_lea.vmem %s1, 636
  %v2613 = vpack.c.bf16 0.0, %v2610
  %2614 = vst [vmem:[%s2612] sm:$0xf] %v2613
  %s2615 = scalar_lea.vmem %s0, 476
  %v2616 = vld [vmem:[%s2615] sm:$0xf]
  %v2617 = vunpack.c.l.bf16 %v2616
  %v2618 = vunpack.c.h.bf16 %v2616
  %s2619 = scalar_lea.vmem %s1, 1116
  %v2620 = vpack.c.bf16 0.0, %v2617
  %2621 = vst [vmem:[%s2619] sm:$0xf] %v2620
  %s2622 = scalar_lea.vmem %s0, 1276
  %v2623 = vld [vmem:[%s2622] sm:$0xf]
  %v2624 = vunpack.c.l.bf16 %v2623
  %v2625 = vunpack.c.h.bf16 %v2623
  %s2626 = scalar_lea.vmem %s1, 316
  %v2627 = vpack.c.bf16 0.0, %v2624
  %2628 = vst [vmem:[%s2626] sm:$0xf] %v2627
  %s2629 = scalar_lea.vmem %s0, 796
  %v2630 = vld [vmem:[%s2629] sm:$0xf]
  %v2631 = vunpack.c.l.bf16 %v2630
  %v2632 = vunpack.c.h.bf16 %v2630
  %s2633 = scalar_lea.vmem %s1, 796
  %v2634 = vpack.c.bf16 0.0, %v2631
  %2635 = vst [vmem:[%s2633] sm:$0xf] %v2634
  %s2636 = scalar_lea.vmem %s0, 316
  %v2637 = vld [vmem:[%s2636] sm:$0xf]
  %v2638 = vunpack.c.l.bf16 %v2637
  %v2639 = vunpack.c.h.bf16 %v2637
  %s2640 = scalar_lea.vmem %s1, 1276
  %v2641 = vpack.c.bf16 0.0, %v2638
  %2642 = vst [vmem:[%s2640] sm:$0xf] %v2641
  %s2643 = scalar_lea.vmem %s0, 1116
  %v2644 = vld [vmem:[%s2643] sm:$0xf]
  %v2645 = vunpack.c.l.bf16 %v2644
  %v2646 = vunpack.c.h.bf16 %v2644
  %s2647 = scalar_lea.vmem %s1, 476
  %v2648 = vpack.c.bf16 0.0, %v2645
  %2649 = vst [vmem:[%s2647] sm:$0xf] %v2648
  %s2650 = scalar_lea.vmem %s0, 636
  %v2651 = vld [vmem:[%s2650] sm:$0xf]
  %v2652 = vunpack.c.l.bf16 %v2651
  %v2653 = vunpack.c.h.bf16 %v2651
  %s2654 = scalar_lea.vmem %s1, 956
  %v2655 = vpack.c.bf16 0.0, %v2652
  %2656 = vst [vmem:[%s2654] sm:$0xf] %v2655
  %s2657 = scalar_lea.vmem %s0, 156
  %v2658 = vld [vmem:[%s2657] sm:$0xf]
  %v2659 = vunpack.c.l.bf16 %v2658
  %v2660 = vunpack.c.h.bf16 %v2658
  %s2661 = scalar_lea.vmem %s1, 1436
  %v2662 = vpack.c.bf16 0.0, %v2659
  %2663 = vst [vmem:[%s2661] sm:$0xf] %v2662

// kernel: deeplabv3plus_forward.15
$region0: #{deeplabv3plus_forward.15}
  #allocation0 [shape = 'u32[]', space=smem, size = 0x4, offset = 0x4, fixed_abs, tag = 'smem constant byte address 0x4 - core index']
  #allocation1 [shape = 'u32[144,128]{1,0:T(1,128)}', space=vmem, size = 0x12000, scoped, tag = 'internal scratch']
  %s0 = inlined_call_operand.vmem [shape: bf16[128,24], index: 0, kind: input, shape index: {}]
  %s1 = inlined_call_operand.vmem [shape: bf16[24,48], index: 1, kind: input, shape index: {}]
  %s2 = inlined_call_operand.vmem [shape: f32[1,48], index: 2, kind: input, shape index: {}]
  %s3 = inlined_call_operand.vmem [shape: bf16[128,48], index: 3, kind: output, shape index: {}]
  %s4 = sld [smem:[#allocation0]]
  $region22: #{deeplabv3plus_forward.15} parent=0
    _
  %s6 = ssub.s32 1, %s4
  %s7 = scalar_select 0, %s6, %s4
  // Predicated region
  $region2: #{deeplabv3plus_forward.15} parent=0 // pred_check
    _
  $region3: #{deeplabv3plus_forward.15} parent=0 // pred_check_branch
    %9 = sbr.rel (0) target = $region5
  $region4: #{deeplabv3plus_forward.15} parent=0 // pred_region
    _
  $region5: #{deeplabv3plus_forward.15} parent=0 // pred_fallthru
    _
  // Predicated region
  $region6: #{deeplabv3plus_forward.15} parent=0 // pred_check
    _
  $region7: #{deeplabv3plus_forward.15} parent=0 // pred_check_branch
    %11 = sbr.rel (0) target = $region9
  $region8: #{deeplabv3plus_forward.15} parent=0 // pred_region
    _
  $region9: #{deeplabv3plus_forward.15} parent=0 // pred_fallthru
    _
  // Predicated region
  $region10: #{deeplabv3plus_forward.15} parent=0 // pred_check
    _
  $region11: #{deeplabv3plus_forward.15} parent=0 // pred_check_branch
    %13 = sbr.rel (0) target = $region13
  $region12: #{deeplabv3plus_forward.15} parent=0 // pred_region
    _
  $region13: #{deeplabv3plus_forward.15} parent=0 // pred_fallthru
    _
  %v15 = vld [vmem:[%s0] sm:$0xf]
  %v16 = vld [vmem:[%s0 + $0x4] sm:$0xf]
  %v17 = vld [vmem:[%s0 + $0x8] sm:$0xf]
  %v18 = vld [vmem:[%s0 + $0xc] sm:$0xf]
  %v19 = vld [vmem:[%s0 + $0x10] sm:$0xf]
  %v20 = vld [vmem:[%s0 + $0x14] sm:$0xf]
  %v21 = vld [vmem:[%s0 + $0x18] sm:$0xf]
  %v22 = vld [vmem:[%s0 + $0x1c] sm:$0xf]
  %v23 = vld [vmem:[%s0 + $0x20] sm:$0xf]
  %v24 = vld [vmem:[%s0 + $0x24] sm:$0xf]
  %v25 = vld [vmem:[%s0 + $0x28] sm:$0xf]
  %v26 = vld [vmem:[%s0 + $0x2c] sm:$0xf]
  %v27 = vld [vmem:[%s0 + $0x30] sm:$0xf]
  %v28 = vld [vmem:[%s0 + $0x34] sm:$0xf]
  %v29 = vld [vmem:[%s0 + $0x38] sm:$0xf]
  %v30 = vld [vmem:[%s0 + $0x3c] sm:$0xf]
  %v31 = vld [vmem:[%s1] sm:$0xf]
  %v32 = vld [vmem:[%s1 + $0x4] sm:$0xf]
  %v33 = vld [vmem:[%s1 + $0x8] sm:$0xf]
  %v34 = vld [vmem:[%s2] sm:$0x1]
  %v36 = vlaneseq
  %v37 = vshrl.u32 %v36, 7
  %v38 = vsub.s32 0, %v37
  %v39 = vrot.slane %v34, %v38
  %v57 = vunpack.c.l.b16 %v15
  %v58 = vunpack.c.l.b16 %v16
  %v59 = vunpack.c.l.b16 %v17
  %v60 = vunpack.c.l.b16 %v18
  %v61 = vunpack.c.l.b16 %v19
  %v62 = vunpack.c.l.b16 %v20
  %v63 = vunpack.c.l.b16 %v21
  %v64 = vunpack.c.l.b16 %v22
  %v65 = vunpack.c.l.b16 %v23
  %v66 = vunpack.c.l.b16 %v24
  %v67 = vunpack.c.l.b16 %v25
  %v68 = vunpack.c.l.b16 %v26
  %v69 = vunpack.c.l.b16 %v27
  %v70 = vunpack.c.l.b16 %v28
  %v71 = vunpack.c.l.b16 %v29
  %v72 = vunpack.c.l.b16 %v30
  %v73 = vpack.c.b16 %v58, %v57
  %v74 = vpack.c.b16 %v60, %v59
  %v75 = vpack.c.b16 %v62, %v61
  %v76 = vpack.c.b16 %v64, %v63
  %v77 = vpack.c.b16 %v66, %v65
  %v78 = vpack.c.b16 %v68, %v67
  %v79 = vpack.c.b16 %v70, %v69
  %v80 = vpack.c.b16 %v72, %v71
  %v84 = vunpack.c.l.b16 %v31
  %v85 = vunpack.c.l.b16 %v32
  %v86 = vunpack.c.l.b16 %v33
  %v87 = vpack.c.b16 %v85, %v84
  %v88 = vpack.c.b16 %v86, %v86
  %vm90 = vcmask 195584
  %v92 = vsel %vm90, %v73, 0
  %v95 = vsel %vm90, %v74, 0
  %v98 = vsel %vm90, %v75, 0
  %v101 = vsel %vm90, %v76, 0
  %v104 = vsel %vm90, %v77, 0
  %v107 = vsel %vm90, %v78, 0
  %v110 = vsel %vm90, %v79, 0
  %v113 = vsel %vm90, %v80, 0
  %vm115 = vcmask 1043456
  %v117 = vsel %vm115, %v88, 0
  %119 = vmatprep.subr.bf16.mxu0 0
  %120 = vmatpush1.bf16.msra.mxu0 %v87
  %121 = vmatprep.subr.bf16.mxu0 0
  %122 = vmatpush1.bf16.msra.mxu0 %v117
  %123 = vmatprep.subr.bf16.mxu0 0
  %124 = vmatpush1.bf16.msra.mxu0 0
  %125 = vmatprep.subr.bf16.mxu0 0
  %126 = vmatpush1.bf16.msra.mxu0 0
  %127 = vmatprep.subr.bf16.mxu0 0
  %128 = vmatpush1.bf16.msra.mxu0 0
  %129 = vmatprep.subr.bf16.mxu0 0
  %130 = vmatpush1.bf16.msra.mxu0 0
  %131 = vmatprep.subr.bf16.mxu0 0
  %132 = vmatpush1.bf16.msra.mxu0 0
  %133 = vmatprep.subr.bf16.mxu0 0
  %134 = vmatpush1.bf16.msra.mxu0 0
  %135 = vmatprep.subr.bf16.mxu0 0
  %136 = vmatpush1.bf16.msra.mxu0 0
  %137 = vmatprep.subr.bf16.mxu0 0
  %138 = vmatpush1.bf16.msra.mxu0 0
  %139 = vmatprep.subr.bf16.mxu0 0
  %140 = vmatpush1.bf16.msra.mxu0 0
  %141 = vmatprep.subr.bf16.mxu0 0
  %142 = vmatpush1.bf16.msra.mxu0 0
  %143 = vmatprep.subr.bf16.mxu0 0
  %144 = vmatpush1.bf16.msra.mxu0 0
  %145 = vmatprep.subr.bf16.mxu0 0
  %146 = vmatpush1.bf16.msra.mxu0 0
  %147 = vmatprep.subr.bf16.mxu0 0
  %148 = vmatpush1.bf16.msra.mxu0 0
  %149 = vmatprep.subr.bf16.mxu0 0
  %150 = vmatpush1.bf16.msra.mxu0 0
  %151 = vmatprep.mubr.bf16.mxu0 0
  %152 = vmatmul.mubr.bf16.gmra.mrb[0].mxu0 %v92
  %v153 = vpop.f32.mrb[0].mxu0
  %v154 = vadd.f32 %v39, %v153
  %v155 = vpop.f32.mrb[0].mxu0
  %v156 = vpop.f32.mrb[0].mxu0
  %v157 = vadd.f32 %v39, %v156
  %v158 = vpop.f32.mrb[0].mxu0
  %159 = vmatprep.mubr.bf16.mxu0 0
  %160 = vmatmul.mubr.bf16.gmra.mrb[0].mxu0 %v95
  %v161 = vpop.f32.mrb[0].mxu0
  %v162 = vadd.f32 %v39, %v161
  %v163 = vpop.f32.mrb[0].mxu0
  %v164 = vpop.f32.mrb[0].mxu0
  %v165 = vadd.f32 %v39, %v164
  %v166 = vpop.f32.mrb[0].mxu0
  %167 = vmatprep.mubr.bf16.mxu0 0
  %168 = vmatmul.mubr.bf16.gmra.mrb[0].mxu0 %v98
  %v169 = vpop.f32.mrb[0].mxu0
  %v170 = vadd.f32 %v39, %v169
  %v171 = vpop.f32.mrb[0].mxu0
  %v172 = vpop.f32.mrb[0].mxu0
  %v173 = vadd.f32 %v39, %v172
  %v174 = vpop.f32.mrb[0].mxu0
  %175 = vmatprep.mubr.bf16.mxu0 0
  %176 = vmatmul.mubr.bf16.gmra.mrb[0].mxu0 %v101
  %v177 = vpop.f32.mrb[0].mxu0
  %v178 = vadd.f32 %v39, %v177
  %v179 = vpop.f32.mrb[0].mxu0
  %v180 = vpop.f32.mrb[0].mxu0
  %v181 = vadd.f32 %v39, %v180
  %v182 = vpop.f32.mrb[0].mxu0
  %183 = vmatprep.mubr.bf16.mxu0 0
  %184 = vmatmul.mubr.bf16.gmra.mrb[0].mxu0 %v104
  %v185 = vpop.f32.mrb[0].mxu0
  %v186 = vadd.f32 %v39, %v185
  %v187 = vpop.f32.mrb[0].mxu0
  %v188 = vpop.f32.mrb[0].mxu0
  %v189 = vadd.f32 %v39, %v188
  %v190 = vpop.f32.mrb[0].mxu0
  %191 = vmatprep.mubr.bf16.mxu0 0
  %192 = vmatmul.mubr.bf16.gmra.mrb[0].mxu0 %v107
  %v193 = vpop.f32.mrb[0].mxu0
  %v194 = vadd.f32 %v39, %v193
  %v195 = vpop.f32.mrb[0].mxu0
  %v196 = vpop.f32.mrb[0].mxu0
  %v197 = vadd.f32 %v39, %v196
  %v198 = vpop.f32.mrb[0].mxu0
  %199 = vmatprep.mubr.bf16.mxu0 0
  %200 = vmatmul.mubr.bf16.gmra.mrb[0].mxu0 %v110
  %v201 = vpop.f32.mrb[0].mxu0
  %v202 = vadd.f32 %v39, %v201
  %v203 = vpop.f32.mrb[0].mxu0
  %v204 = vpop.f32.mrb[0].mxu0
  %v205 = vadd.f32 %v39, %v204
  %v206 = vpop.f32.mrb[0].mxu0
  %207 = vmatprep.mubr.bf16.mxu0 0
  %208 = vmatmul.mubr.bf16.gmra.mrb[0].mxu0 %v113
  %v209 = vpop.f32.mrb[0].mxu0
  %v210 = vadd.f32 %v39, %v209
  %v211 = vpop.f32.mrb[0].mxu0
  %v212 = vpop.f32.mrb[0].mxu0
  %v213 = vadd.f32 %v39, %v212
  %v214 = vpop.f32.mrb[0].mxu0
  %215 = vdwg.mxu0
  %v216 = vmax.f32 %v154, 0.0
  %v217 = vmax.f32 %v157, 0.0
  %v218 = vmax.f32 %v162, 0.0
  %v219 = vmax.f32 %v165, 0.0
  %v220 = vmax.f32 %v170, 0.0
  %v221 = vmax.f32 %v173, 0.0
  %v222 = vmax.f32 %v178, 0.0
  %v223 = vmax.f32 %v181, 0.0
  %v224 = vmax.f32 %v186, 0.0
  %v225 = vmax.f32 %v189, 0.0
  %v226 = vmax.f32 %v194, 0.0
  %v227 = vmax.f32 %v197, 0.0
  %v228 = vmax.f32 %v202, 0.0
  %v229 = vmax.f32 %v205, 0.0
  %v230 = vmax.f32 %v210, 0.0
  %v231 = vmax.f32 %v213, 0.0
  %v232 = vpack.c.bf16 %v217, %v216
  %v233 = vpack.c.bf16 %v219, %v218
  %v234 = vpack.c.bf16 %v221, %v220
  %v235 = vpack.c.bf16 %v223, %v222
  %v236 = vpack.c.bf16 %v225, %v224
  %v237 = vpack.c.bf16 %v227, %v226
  %v238 = vpack.c.bf16 %v229, %v228
  %v239 = vpack.c.bf16 %v231, %v230
  %v248 = vunpack.c.l.b16 %v232
  %v249 = vunpack.c.h.b16 %v232
  %v250 = vunpack.c.l.b16 %v233
  %v251 = vunpack.c.h.b16 %v233
  %v252 = vunpack.c.l.b16 %v234
  %v253 = vunpack.c.h.b16 %v234
  %v254 = vunpack.c.l.b16 %v235
  %v255 = vunpack.c.h.b16 %v235
  %v256 = vunpack.c.l.b16 %v236
  %v257 = vunpack.c.h.b16 %v236
  %v258 = vunpack.c.l.b16 %v237
  %v259 = vunpack.c.h.b16 %v237
  %v260 = vunpack.c.l.b16 %v238
  %v261 = vunpack.c.h.b16 %v238
  %v262 = vunpack.c.l.b16 %v239
  %v263 = vunpack.c.h.b16 %v239
  %v264 = vpack.c.b16 %v248, %v248
  %v265 = vpack.c.b16 %v249, %v249
  %v266 = vpack.c.b16 %v250, %v250
  %v267 = vpack.c.b16 %v251, %v251
  %v268 = vpack.c.b16 %v252, %v252
  %v269 = vpack.c.b16 %v253, %v253
  %v270 = vpack.c.b16 %v254, %v254
  %v271 = vpack.c.b16 %v255, %v255
  %v272 = vpack.c.b16 %v256, %v256
  %v273 = vpack.c.b16 %v257, %v257
  %v274 = vpack.c.b16 %v258, %v258
  %v275 = vpack.c.b16 %v259, %v259
  %v276 = vpack.c.b16 %v260, %v260
  %v277 = vpack.c.b16 %v261, %v261
  %v278 = vpack.c.b16 %v262, %v262
  %v279 = vpack.c.b16 %v263, %v263
  %vm296 = vcmask 388096
  %297 = vst.msk [vmem:[%s3] sm:$0xf] %vm296, %v264
  %298 = vst.msk [vmem:[%s3 + $0x4] sm:$0xf] %vm296, %v265
  %299 = vst.msk [vmem:[%s3 + $0x8] sm:$0xf] %vm296, %v266
  %300 = vst.msk [vmem:[%s3 + $0xc] sm:$0xf] %vm296, %v267
  %301 = vst.msk [vmem:[%s3 + $0x10] sm:$0xf] %vm296, %v268
  %302 = vst.msk [vmem:[%s3 + $0x14] sm:$0xf] %vm296, %v269
  %303 = vst.msk [vmem:[%s3 + $0x18] sm:$0xf] %vm296, %v270
  %304 = vst.msk [vmem:[%s3 + $0x1c] sm:$0xf] %vm296, %v271
  %305 = vst.msk [vmem:[%s3 + $0x20] sm:$0xf] %vm296, %v272
  %306 = vst.msk [vmem:[%s3 + $0x24] sm:$0xf] %vm296, %v273
  %307 = vst.msk [vmem:[%s3 + $0x28] sm:$0xf] %vm296, %v274
  %308 = vst.msk [vmem:[%s3 + $0x2c] sm:$0xf] %vm296, %v275
  %309 = vst.msk [vmem:[%s3 + $0x30] sm:$0xf] %vm296, %v276
  %310 = vst.msk [vmem:[%s3 + $0x34] sm:$0xf] %vm296, %v277
  %311 = vst.msk [vmem:[%s3 + $0x38] sm:$0xf] %vm296, %v278
  %312 = vst.msk [vmem:[%s3 + $0x3c] sm:$0xf] %vm296, %v279
  // Predicated region
  $region14: #{deeplabv3plus_forward.15} parent=0 // pred_check
    _
  $region15: #{deeplabv3plus_forward.15} parent=0 // pred_check_branch
    %314 = sbr.rel (0) target = $region17
  $region16: #{deeplabv3plus_forward.15} parent=0 // pred_region
    _
  $region17: #{deeplabv3plus_forward.15} parent=0 // pred_fallthru
    _
  // Predicated region
  $region18: #{deeplabv3plus_forward.15} parent=0 // pred_check
    _
  $region19: #{deeplabv3plus_forward.15} parent=0 // pred_check_branch
    %316 = sbr.rel (0) target = $region21
  $region20: #{deeplabv3plus_forward.15} parent=0 // pred_region
    _
  $region21: #{deeplabv3plus_forward.15} parent=0 // pred_fallthru
    _

// kernel: deeplabv3plus_forward.14
$region0: #{deeplabv3plus_forward.14}
  #allocation0 [shape = 'u32[]', space=smem, size = 0x4, offset = 0x4, fixed_abs, tag = 'smem constant byte address 0x4 - core index']
  #allocation1 [shape = 'u32[144,128]{1,0:T(1,128)}', space=vmem, size = 0x12000, scoped, tag = 'internal scratch']
  %s0 = inlined_call_operand.vmem [shape: bf16[8,1792], index: 0, kind: input, shape index: {}]
  %s1 = inlined_call_operand.vmem [shape: bf16[1792,128], index: 1, kind: input, shape index: {}]
  %s2 = inlined_call_operand.vmem [shape: f32[1,128], index: 2, kind: input, shape index: {}]
  %s3 = inlined_call_operand.vmem [shape: bf16[128,32], index: 3, kind: input, shape index: {}]
  %s4 = inlined_call_operand.vmem [shape: f32[8,32], index: 4, kind: input, shape index: {}]
  %s5 = inlined_call_operand.vmem [shape: bf16[8,32], index: 5, kind: output, shape index: {}]
  %s6 = sld [smem:[#allocation0]]
  $region30: #{deeplabv3plus_forward.14} parent=0
    _
  %s8 = ssub.s32 1, %s6
  %s9 = scalar_select 0, %s8, %s6
  // Predicated region
  $region2: #{deeplabv3plus_forward.14} parent=0 // pred_check
    _
  $region3: #{deeplabv3plus_forward.14} parent=0 // pred_check_branch
    %11 = sbr.rel (0) target = $region5
  $region4: #{deeplabv3plus_forward.14} parent=0 // pred_region
    _
  $region5: #{deeplabv3plus_forward.14} parent=0 // pred_fallthru
    _
  // Predicated region
  $region6: #{deeplabv3plus_forward.14} parent=0 // pred_check
    _
  $region7: #{deeplabv3plus_forward.14} parent=0 // pred_check_branch
    %13 = sbr.rel (0) target = $region9
  $region8: #{deeplabv3plus_forward.14} parent=0 // pred_region
    _
  $region9: #{deeplabv3plus_forward.14} parent=0 // pred_fallthru
    _
  // Predicated region
  $region10: #{deeplabv3plus_forward.14} parent=0 // pred_check
    _
  $region11: #{deeplabv3plus_forward.14} parent=0 // pred_check_branch
    %15 = sbr.rel (0) target = $region13
  $region12: #{deeplabv3plus_forward.14} parent=0 // pred_region
    _
  $region13: #{deeplabv3plus_forward.14} parent=0 // pred_fallthru
    _
  // Predicated region
  $region14: #{deeplabv3plus_forward.14} parent=0 // pred_check
    _
  $region15: #{deeplabv3plus_forward.14} parent=0 // pred_check_branch
    %17 = sbr.rel (0) target = $region17
  $region16: #{deeplabv3plus_forward.14} parent=0 // pred_region
    _
  $region17: #{deeplabv3plus_forward.14} parent=0 // pred_fallthru
    _
  // Predicated region
  $region18: #{deeplabv3plus_forward.14} parent=0 // pred_check
    _
  $region19: #{deeplabv3plus_forward.14} parent=0 // pred_check_branch
    %19 = sbr.rel (0) target = $region21
  $region20: #{deeplabv3plus_forward.14} parent=0 // pred_region
    _
  $region21: #{deeplabv3plus_forward.14} parent=0 // pred_fallthru
    _
  %v21 = vld [vmem:[%s0] sm:$0xff]
  %v22 = vld [vmem:[%s0 + $0x8] sm:$0xff]
  %v23 = vld [vmem:[%s0 + $0x10] sm:$0xff]
  %v24 = vld [vmem:[%s0 + $0x18] sm:$0xff]
  %v25 = vld [vmem:[%s0 + $0x20] sm:$0xff]
  %v26 = vld [vmem:[%s0 + $0x28] sm:$0xff]
  %v27 = vld [vmem:[%s0 + $0x30] sm:$0xff]
  %v28 = vld [vmem:[%s1] sm:$0xf]
  %v29 = vld [vmem:[%s1 + $0x4] sm:$0xf]
  %v30 = vld [vmem:[%s1 + $0x8] sm:$0xf]
  %v31 = vld [vmem:[%s1 + $0xc] sm:$0xf]
  %v32 = vld [vmem:[%s1 + $0x10] sm:$0xf]
  %v33 = vld [vmem:[%s1 + $0x14] sm:$0xf]
  %v34 = vld [vmem:[%s1 + $0x18] sm:$0xf]
  %v35 = vld [vmem:[%s1 + $0x1c] sm:$0xf]
  %v36 = vld [vmem:[%s1 + $0x20] sm:$0xf]
  %v37 = vld [vmem:[%s1 + $0x24] sm:$0xf]
  %v38 = vld [vmem:[%s1 + $0x28] sm:$0xf]
  %v39 = vld [vmem:[%s1 + $0x2c] sm:$0xf]
  %v40 = vld [vmem:[%s1 + $0x30] sm:$0xf]
  %v41 = vld [vmem:[%s1 + $0x34] sm:$0xf]
  %v42 = vld [vmem:[%s1 + $0x38] sm:$0xf]
  %v43 = vld [vmem:[%s1 + $0x3c] sm:$0xf]
  %v44 = vld [vmem:[%s1 + $0x40] sm:$0xf]
  %v45 = vld [vmem:[%s1 + $0x44] sm:$0xf]
  %v46 = vld [vmem:[%s1 + $0x48] sm:$0xf]
  %v47 = vld [vmem:[%s1 + $0x4c] sm:$0xf]
  %v48 = vld [vmem:[%s1 + $0x50] sm:$0xf]
  %v49 = vld [vmem:[%s1 + $0x54] sm:$0xf]
  %v50 = vld [vmem:[%s1 + $0x58] sm:$0xf]
  %v51 = vld [vmem:[%s1 + $0x5c] sm:$0xf]
  %v52 = vld [vmem:[%s1 + $0x60] sm:$0xf]
  %v53 = vld [vmem:[%s1 + $0x64] sm:$0xf]
  %v54 = vld [vmem:[%s1 + $0x68] sm:$0xf]
  %v55 = vld [vmem:[%s1 + $0x6c] sm:$0xf]
  %v56 = vld [vmem:[%s1 + $0x70] sm:$0xf]
  %v57 = vld [vmem:[%s1 + $0x74] sm:$0xf]
  %v58 = vld [vmem:[%s1 + $0x78] sm:$0xf]
  %v59 = vld [vmem:[%s1 + $0x7c] sm:$0xf]
  %v60 = vld [vmem:[%s1 + $0x80] sm:$0xf]
  %v61 = vld [vmem:[%s1 + $0x84] sm:$0xf]
  %v62 = vld [vmem:[%s1 + $0x88] sm:$0xf]
  %v63 = vld [vmem:[%s1 + $0x8c] sm:$0xf]
  %v64 = vld [vmem:[%s1 + $0x90] sm:$0xf]
  %v65 = vld [vmem:[%s1 + $0x94] sm:$0xf]
  %v66 = vld [vmem:[%s1 + $0x98] sm:$0xf]
  %v67 = vld [vmem:[%s1 + $0x9c] sm:$0xf]
  %v68 = vld [vmem:[%s1 + $0xa0] sm:$0xf]
  %v69 = vld [vmem:[%s1 + $0xa4] sm:$0xf]
  %v70 = vld [vmem:[%s1 + $0xa8] sm:$0xf]
  %v71 = vld [vmem:[%s1 + $0xac] sm:$0xf]
  %v72 = vld [vmem:[%s1 + $0xb0] sm:$0xf]
  %v73 = vld [vmem:[%s1 + $0xb4] sm:$0xf]
  %v74 = vld [vmem:[%s1 + $0xb8] sm:$0xf]
  %v75 = vld [vmem:[%s1 + $0xbc] sm:$0xf]
  %v76 = vld [vmem:[%s1 + $0xc0] sm:$0xf]
  %v77 = vld [vmem:[%s1 + $0xc4] sm:$0xf]
  %v78 = vld [vmem:[%s1 + $0xc8] sm:$0xf]
  %v79 = vld [vmem:[%s1 + $0xcc] sm:$0xf]
  %v80 = vld [vmem:[%s1 + $0xd0] sm:$0xf]
  %v81 = vld [vmem:[%s1 + $0xd4] sm:$0xf]
  %v82 = vld [vmem:[%s1 + $0xd8] sm:$0xf]
  %v83 = vld [vmem:[%s1 + $0xdc] sm:$0xf]
  %v84 = vld [vmem:[%s1 + $0xe0] sm:$0xf]
  %v85 = vld [vmem:[%s1 + $0xe4] sm:$0xf]
  %v86 = vld [vmem:[%s1 + $0xe8] sm:$0xf]
  %v87 = vld [vmem:[%s1 + $0xec] sm:$0xf]
  %v88 = vld [vmem:[%s1 + $0xf0] sm:$0xf]
  %v89 = vld [vmem:[%s1 + $0xf4] sm:$0xf]
  %v90 = vld [vmem:[%s1 + $0xf8] sm:$0xf]
  %v91 = vld [vmem:[%s1 + $0xfc] sm:$0xf]
  %v92 = vld [vmem:[%s1 + $0x100] sm:$0xf]
  %v93 = vld [vmem:[%s1 + $0x104] sm:$0xf]
  %v94 = vld [vmem:[%s1 + $0x108] sm:$0xf]
  %v95 = vld [vmem:[%s1 + $0x10c] sm:$0xf]
  %v96 = vld [vmem:[%s1 + $0x110] sm:$0xf]
  %v97 = vld [vmem:[%s1 + $0x114] sm:$0xf]
  %v98 = vld [vmem:[%s1 + $0x118] sm:$0xf]
  %v99 = vld [vmem:[%s1 + $0x11c] sm:$0xf]
  %v100 = vld [vmem:[%s1 + $0x120] sm:$0xf]
  %v101 = vld [vmem:[%s1 + $0x124] sm:$0xf]
  %v102 = vld [vmem:[%s1 + $0x128] sm:$0xf]
  %v103 = vld [vmem:[%s1 + $0x12c] sm:$0xf]
  %v104 = vld [vmem:[%s1 + $0x130] sm:$0xf]
  %v105 = vld [vmem:[%s1 + $0x134] sm:$0xf]
  %v106 = vld [vmem:[%s1 + $0x138] sm:$0xf]
  %v107 = vld [vmem:[%s1 + $0x13c] sm:$0xf]
  %v108 = vld [vmem:[%s1 + $0x140] sm:$0xf]
  %v109 = vld [vmem:[%s1 + $0x144] sm:$0xf]
  %v110 = vld [vmem:[%s1 + $0x148] sm:$0xf]
  %v111 = vld [vmem:[%s1 + $0x14c] sm:$0xf]
  %v112 = vld [vmem:[%s1 + $0x150] sm:$0xf]
  %v113 = vld [vmem:[%s1 + $0x154] sm:$0xf]
  %v114 = vld [vmem:[%s1 + $0x158] sm:$0xf]
  %v115 = vld [vmem:[%s1 + $0x15c] sm:$0xf]
  %v116 = vld [vmem:[%s1 + $0x160] sm:$0xf]
  %v117 = vld [vmem:[%s1 + $0x164] sm:$0xf]
  %v118 = vld [vmem:[%s1 + $0x168] sm:$0xf]
  %v119 = vld [vmem:[%s1 + $0x16c] sm:$0xf]
  %v120 = vld [vmem:[%s1 + $0x170] sm:$0xf]
  %v121 = vld [vmem:[%s1 + $0x174] sm:$0xf]
  %v122 = vld [vmem:[%s1 + $0x178] sm:$0xf]
  %v123 = vld [vmem:[%s1 + $0x17c] sm:$0xf]
  %v124 = vld [vmem:[%s1 + $0x180] sm:$0xf]
  %v125 = vld [vmem:[%s1 + $0x184] sm:$0xf]
  %v126 = vld [vmem:[%s1 + $0x188] sm:$0xf]
  %v127 = vld [vmem:[%s1 + $0x18c] sm:$0xf]
  %v128 = vld [vmem:[%s1 + $0x190] sm:$0xf]
  %v129 = vld [vmem:[%s1 + $0x194] sm:$0xf]
  %v130 = vld [vmem:[%s1 + $0x198] sm:$0xf]
  %v131 = vld [vmem:[%s1 + $0x19c] sm:$0xf]
  %v132 = vld [vmem:[%s1 + $0x1a0] sm:$0xf]
  %v133 = vld [vmem:[%s1 + $0x1a4] sm:$0xf]
  %v134 = vld [vmem:[%s1 + $0x1a8] sm:$0xf]
  %v135 = vld [vmem:[%s1 + $0x1ac] sm:$0xf]
  %v136 = vld [vmem:[%s1 + $0x1b0] sm:$0xf]
  %v137 = vld [vmem:[%s1 + $0x1b4] sm:$0xf]
  %v138 = vld [vmem:[%s1 + $0x1b8] sm:$0xf]
  %v139 = vld [vmem:[%s1 + $0x1bc] sm:$0xf]
  %v140 = vld [vmem:[%s1 + $0x1c0] sm:$0xf]
  %v141 = vld [vmem:[%s1 + $0x1c4] sm:$0xf]
  %v142 = vld [vmem:[%s1 + $0x1c8] sm:$0xf]
  %v143 = vld [vmem:[%s1 + $0x1cc] sm:$0xf]
  %v144 = vld [vmem:[%s1 + $0x1d0] sm:$0xf]
  %v145 = vld [vmem:[%s1 + $0x1d4] sm:$0xf]
  %v146 = vld [vmem:[%s1 + $0x1d8] sm:$0xf]
  %v147 = vld [vmem:[%s1 + $0x1dc] sm:$0xf]
  %v148 = vld [vmem:[%s1 + $0x1e0] sm:$0xf]
  %v149 = vld [vmem:[%s1 + $0x1e4] sm:$0xf]
  %v150 = vld [vmem:[%s1 + $0x1e8] sm:$0xf]
  %v151 = vld [vmem:[%s1 + $0x1ec] sm:$0xf]
  %v152 = vld [vmem:[%s1 + $0x1f0] sm:$0xf]
  %v153 = vld [vmem:[%s1 + $0x1f4] sm:$0xf]
  %v154 = vld [vmem:[%s1 + $0x1f8] sm:$0xf]
  %v155 = vld [vmem:[%s1 + $0x1fc] sm:$0xf]
  %v156 = vld [vmem:[%s1 + $0x200] sm:$0xf]
  %v157 = vld [vmem:[%s1 + $0x204] sm:$0xf]
  %v158 = vld [vmem:[%s1 + $0x208] sm:$0xf]
  %v159 = vld [vmem:[%s1 + $0x20c] sm:$0xf]
  %v160 = vld [vmem:[%s1 + $0x210] sm:$0xf]
  %v161 = vld [vmem:[%s1 + $0x214] sm:$0xf]
  %v162 = vld [vmem:[%s1 + $0x218] sm:$0xf]
  %v163 = vld [vmem:[%s1 + $0x21c] sm:$0xf]
  %v164 = vld [vmem:[%s1 + $0x220] sm:$0xf]
  %v165 = vld [vmem:[%s1 + $0x224] sm:$0xf]
  %v166 = vld [vmem:[%s1 + $0x228] sm:$0xf]
  %v167 = vld [vmem:[%s1 + $0x22c] sm:$0xf]
  %v168 = vld [vmem:[%s1 + $0x230] sm:$0xf]
  %v169 = vld [vmem:[%s1 + $0x234] sm:$0xf]
  %v170 = vld [vmem:[%s1 + $0x238] sm:$0xf]
  %v171 = vld [vmem:[%s1 + $0x23c] sm:$0xf]
  %v172 = vld [vmem:[%s1 + $0x240] sm:$0xf]
  %v173 = vld [vmem:[%s1 + $0x244] sm:$0xf]
  %v174 = vld [vmem:[%s1 + $0x248] sm:$0xf]
  %v175 = vld [vmem:[%s1 + $0x24c] sm:$0xf]
  %v176 = vld [vmem:[%s1 + $0x250] sm:$0xf]
  %v177 = vld [vmem:[%s1 + $0x254] sm:$0xf]
  %v178 = vld [vmem:[%s1 + $0x258] sm:$0xf]
  %v179 = vld [vmem:[%s1 + $0x25c] sm:$0xf]
  %v180 = vld [vmem:[%s1 + $0x260] sm:$0xf]
  %v181 = vld [vmem:[%s1 + $0x264] sm:$0xf]
  %v182 = vld [vmem:[%s1 + $0x268] sm:$0xf]
  %v183 = vld [vmem:[%s1 + $0x26c] sm:$0xf]
  %v184 = vld [vmem:[%s1 + $0x270] sm:$0xf]
  %v185 = vld [vmem:[%s1 + $0x274] sm:$0xf]
  %v186 = vld [vmem:[%s1 + $0x278] sm:$0xf]
  %v187 = vld [vmem:[%s1 + $0x27c] sm:$0xf]
  %v188 = vld [vmem:[%s1 + $0x280] sm:$0xf]
  %v189 = vld [vmem:[%s1 + $0x284] sm:$0xf]
  %v190 = vld [vmem:[%s1 + $0x288] sm:$0xf]
  %v191 = vld [vmem:[%s1 + $0x28c] sm:$0xf]
  %v192 = vld [vmem:[%s1 + $0x290] sm:$0xf]
  %v193 = vld [vmem:[%s1 + $0x294] sm:$0xf]
  %v194 = vld [vmem:[%s1 + $0x298] sm:$0xf]
  %v195 = vld [vmem:[%s1 + $0x29c] sm:$0xf]
  %v196 = vld [vmem:[%s1 + $0x2a0] sm:$0xf]
  %v197 = vld [vmem:[%s1 + $0x2a4] sm:$0xf]
  %v198 = vld [vmem:[%s1 + $0x2a8] sm:$0xf]
  %v199 = vld [vmem:[%s1 + $0x2ac] sm:$0xf]
  %v200 = vld [vmem:[%s1 + $0x2b0] sm:$0xf]
  %v201 = vld [vmem:[%s1 + $0x2b4] sm:$0xf]
  %v202 = vld [vmem:[%s1 + $0x2b8] sm:$0xf]
  %v203 = vld [vmem:[%s1 + $0x2bc] sm:$0xf]
  %v204 = vld [vmem:[%s1 + $0x2c0] sm:$0xf]
  %v205 = vld [vmem:[%s1 + $0x2c4] sm:$0xf]
  %v206 = vld [vmem:[%s1 + $0x2c8] sm:$0xf]
  %v207 = vld [vmem:[%s1 + $0x2cc] sm:$0xf]
  %v208 = vld [vmem:[%s1 + $0x2d0] sm:$0xf]
  %v209 = vld [vmem:[%s1 + $0x2d4] sm:$0xf]
  %v210 = vld [vmem:[%s1 + $0x2d8] sm:$0xf]
  %v211 = vld [vmem:[%s1 + $0x2dc] sm:$0xf]
  %v212 = vld [vmem:[%s1 + $0x2e0] sm:$0xf]
  %v213 = vld [vmem:[%s1 + $0x2e4] sm:$0xf]
  %v214 = vld [vmem:[%s1 + $0x2e8] sm:$0xf]
  %v215 = vld [vmem:[%s1 + $0x2ec] sm:$0xf]
  %v216 = vld [vmem:[%s1 + $0x2f0] sm:$0xf]
  %v217 = vld [vmem:[%s1 + $0x2f4] sm:$0xf]
  %v218 = vld [vmem:[%s1 + $0x2f8] sm:$0xf]
  %v219 = vld [vmem:[%s1 + $0x2fc] sm:$0xf]
  %v220 = vld [vmem:[%s1 + $0x300] sm:$0xf]
  %v221 = vld [vmem:[%s1 + $0x304] sm:$0xf]
  %v222 = vld [vmem:[%s1 + $0x308] sm:$0xf]
  %v223 = vld [vmem:[%s1 + $0x30c] sm:$0xf]
  %v224 = vld [vmem:[%s1 + $0x310] sm:$0xf]
  %v225 = vld [vmem:[%s1 + $0x314] sm:$0xf]
  %v226 = vld [vmem:[%s1 + $0x318] sm:$0xf]
  %v227 = vld [vmem:[%s1 + $0x31c] sm:$0xf]
  %v228 = vld [vmem:[%s1 + $0x320] sm:$0xf]
  %v229 = vld [vmem:[%s1 + $0x324] sm:$0xf]
  %v230 = vld [vmem:[%s1 + $0x328] sm:$0xf]
  %v231 = vld [vmem:[%s1 + $0x32c] sm:$0xf]
  %v232 = vld [vmem:[%s1 + $0x330] sm:$0xf]
  %v233 = vld [vmem:[%s1 + $0x334] sm:$0xf]
  %v234 = vld [vmem:[%s1 + $0x338] sm:$0xf]
  %v235 = vld [vmem:[%s1 + $0x33c] sm:$0xf]
  %v236 = vld [vmem:[%s1 + $0x340] sm:$0xf]
  %v237 = vld [vmem:[%s1 + $0x344] sm:$0xf]
  %v238 = vld [vmem:[%s1 + $0x348] sm:$0xf]
  %v239 = vld [vmem:[%s1 + $0x34c] sm:$0xf]
  %v240 = vld [vmem:[%s1 + $0x350] sm:$0xf]
  %v241 = vld [vmem:[%s1 + $0x354] sm:$0xf]
  %v242 = vld [vmem:[%s1 + $0x358] sm:$0xf]
  %v243 = vld [vmem:[%s1 + $0x35c] sm:$0xf]
  %v244 = vld [vmem:[%s1 + $0x360] sm:$0xf]
  %v245 = vld [vmem:[%s1 + $0x364] sm:$0xf]
  %v246 = vld [vmem:[%s1 + $0x368] sm:$0xf]
  %v247 = vld [vmem:[%s1 + $0x36c] sm:$0xf]
  %v248 = vld [vmem:[%s1 + $0x370] sm:$0xf]
  %v249 = vld [vmem:[%s1 + $0x374] sm:$0xf]
  %v250 = vld [vmem:[%s1 + $0x378] sm:$0xf]
  %v251 = vld [vmem:[%s1 + $0x37c] sm:$0xf]
  %v252 = vld [vmem:[%s2] sm:$0x1]
  %v254 = vlaneseq
  %v255 = vshrl.u32 %v254, 7
  %v256 = vsub.s32 0, %v255
  %v257 = vrot.slane %v252, %v256
  %v266 = vunpack.c.l.b16 %v21
  %v267 = vunpack.c.h.b16 %v21
  %v268 = vunpack.c.l.b16 %v22
  %v269 = vunpack.c.h.b16 %v22
  %v270 = vunpack.c.l.b16 %v23
  %v271 = vunpack.c.h.b16 %v23
  %v272 = vunpack.c.l.b16 %v24
  %v273 = vunpack.c.h.b16 %v24
  %v274 = vunpack.c.l.b16 %v25
  %v275 = vunpack.c.h.b16 %v25
  %v276 = vunpack.c.l.b16 %v26
  %v277 = vunpack.c.h.b16 %v26
  %v278 = vunpack.c.l.b16 %v27
  %v279 = vunpack.c.h.b16 %v27
  %v280 = vpack.c.b16 %v266, %v266
  %v281 = vpack.c.b16 %v267, %v267
  %v282 = vpack.c.b16 %v268, %v268
  %v283 = vpack.c.b16 %v269, %v269
  %v284 = vpack.c.b16 %v270, %v270
  %v285 = vpack.c.b16 %v271, %v271
  %v286 = vpack.c.b16 %v272, %v272
  %v287 = vpack.c.b16 %v273, %v273
  %v288 = vpack.c.b16 %v274, %v274
  %v289 = vpack.c.b16 %v275, %v275
  %v290 = vpack.c.b16 %v276, %v276
  %v291 = vpack.c.b16 %v277, %v277
  %v292 = vpack.c.b16 %v278, %v278
  %v293 = vpack.c.b16 %v279, %v279
  %v532 = vunpack.c.l.b16 %v28
  %v533 = vunpack.c.l.b16 %v29
  %v534 = vunpack.c.l.b16 %v30
  %v535 = vunpack.c.l.b16 %v31
  %v536 = vunpack.c.l.b16 %v32
  %v537 = vunpack.c.l.b16 %v33
  %v538 = vunpack.c.l.b16 %v34
  %v539 = vunpack.c.l.b16 %v35
  %v540 = vunpack.c.l.b16 %v36
  %v541 = vunpack.c.l.b16 %v37
  %v542 = vunpack.c.l.b16 %v38
  %v543 = vunpack.c.l.b16 %v39
  %v544 = vunpack.c.l.b16 %v40
  %v545 = vunpack.c.l.b16 %v41
  %v546 = vunpack.c.l.b16 %v42
  %v547 = vunpack.c.l.b16 %v43
  %v548 = vunpack.c.l.b16 %v44
  %v549 = vunpack.c.l.b16 %v45
  %v550 = vunpack.c.l.b16 %v46
  %v551 = vunpack.c.l.b16 %v47
  %v552 = vunpack.c.l.b16 %v48
  %v553 = vunpack.c.l.b16 %v49
  %v554 = vunpack.c.l.b16 %v50
  %v555 = vunpack.c.l.b16 %v51
  %v556 = vunpack.c.l.b16 %v52
  %v557 = vunpack.c.l.b16 %v53
  %v558 = vunpack.c.l.b16 %v54
  %v559 = vunpack.c.l.b16 %v55
  %v560 = vunpack.c.l.b16 %v56
  %v561 = vunpack.c.l.b16 %v57
  %v562 = vunpack.c.l.b16 %v58
  %v563 = vunpack.c.l.b16 %v59
  %v564 = vunpack.c.l.b16 %v60
  %v565 = vunpack.c.l.b16 %v61
  %v566 = vunpack.c.l.b16 %v62
  %v567 = vunpack.c.l.b16 %v63
  %v568 = vunpack.c.l.b16 %v64
  %v569 = vunpack.c.l.b16 %v65
  %v570 = vunpack.c.l.b16 %v66
  %v571 = vunpack.c.l.b16 %v67
  %v572 = vunpack.c.l.b16 %v68
  %v573 = vunpack.c.l.b16 %v69
  %v574 = vunpack.c.l.b16 %v70
  %v575 = vunpack.c.l.b16 %v71
  %v576 = vunpack.c.l.b16 %v72
  %v577 = vunpack.c.l.b16 %v73
  %v578 = vunpack.c.l.b16 %v74
  %v579 = vunpack.c.l.b16 %v75
  %v580 = vunpack.c.l.b16 %v76
  %v581 = vunpack.c.l.b16 %v77
  %v582 = vunpack.c.l.b16 %v78
  %v583 = vunpack.c.l.b16 %v79
  %v584 = vunpack.c.l.b16 %v80
  %v585 = vunpack.c.l.b16 %v81
  %v586 = vunpack.c.l.b16 %v82
  %v587 = vunpack.c.l.b16 %v83
  %v588 = vunpack.c.l.b16 %v84
  %v589 = vunpack.c.l.b16 %v85
  %v590 = vunpack.c.l.b16 %v86
  %v591 = vunpack.c.l.b16 %v87
  %v592 = vunpack.c.l.b16 %v88
  %v593 = vunpack.c.l.b16 %v89
  %v594 = vunpack.c.l.b16 %v90
  %v595 = vunpack.c.l.b16 %v91
  %v596 = vunpack.c.l.b16 %v92
  %v597 = vunpack.c.l.b16 %v93
  %v598 = vunpack.c.l.b16 %v94
  %v599 = vunpack.c.l.b16 %v95
  %v600 = vunpack.c.l.b16 %v96
  %v601 = vunpack.c.l.b16 %v97
  %v602 = vunpack.c.l.b16 %v98
  %v603 = vunpack.c.l.b16 %v99
  %v604 = vunpack.c.l.b16 %v100
  %v605 = vunpack.c.l.b16 %v101
  %v606 = vunpack.c.l.b16 %v102
  %v607 = vunpack.c.l.b16 %v103
  %v608 = vunpack.c.l.b16 %v104
  %v609 = vunpack.c.l.b16 %v105
  %v610 = vunpack.c.l.b16 %v106
  %v611 = vunpack.c.l.b16 %v107
  %v612 = vunpack.c.l.b16 %v108
  %v613 = vunpack.c.l.b16 %v109
  %v614 = vunpack.c.l.b16 %v110
  %v615 = vunpack.c.l.b16 %v111
  %v616 = vunpack.c.l.b16 %v112
  %v617 = vunpack.c.l.b16 %v113
  %v618 = vunpack.c.l.b16 %v114
  %v619 = vunpack.c.l.b16 %v115
  %v620 = vunpack.c.l.b16 %v116
  %v621 = vunpack.c.l.b16 %v117
  %v622 = vunpack.c.l.b16 %v118
  %v623 = vunpack.c.l.b16 %v119
  %v624 = vunpack.c.l.b16 %v120
  %v625 = vunpack.c.l.b16 %v121
  %v626 = vunpack.c.l.b16 %v122
  %v627 = vunpack.c.l.b16 %v123
  %v628 = vunpack.c.l.b16 %v124
  %v629 = vunpack.c.l.b16 %v125
  %v630 = vunpack.c.l.b16 %v126
  %v631 = vunpack.c.l.b16 %v127
  %v632 = vunpack.c.l.b16 %v128
  %v633 = vunpack.c.l.b16 %v129
  %v634 = vunpack.c.l.b16 %v130
  %v635 = vunpack.c.l.b16 %v131
  %v636 = vunpack.c.l.b16 %v132
  %v637 = vunpack.c.l.b16 %v133
  %v638 = vunpack.c.l.b16 %v134
  %v639 = vunpack.c.l.b16 %v135
  %v640 = vunpack.c.l.b16 %v136
  %v641 = vunpack.c.l.b16 %v137
  %v642 = vunpack.c.l.b16 %v138
  %v643 = vunpack.c.l.b16 %v139
  %v644 = vunpack.c.l.b16 %v140
  %v645 = vunpack.c.l.b16 %v141
  %v646 = vunpack.c.l.b16 %v142
  %v647 = vunpack.c.l.b16 %v143
  %v648 = vunpack.c.l.b16 %v144
  %v649 = vunpack.c.l.b16 %v145
  %v650 = vunpack.c.l.b16 %v146
  %v651 = vunpack.c.l.b16 %v147
  %v652 = vunpack.c.l.b16 %v148
  %v653 = vunpack.c.l.b16 %v149
  %v654 = vunpack.c.l.b16 %v150
  %v655 = vunpack.c.l.b16 %v151
  %v656 = vunpack.c.l.b16 %v152
  %v657 = vunpack.c.l.b16 %v153
  %v658 = vunpack.c.l.b16 %v154
  %v659 = vunpack.c.l.b16 %v155
  %v660 = vunpack.c.l.b16 %v156
  %v661 = vunpack.c.l.b16 %v157
  %v662 = vunpack.c.l.b16 %v158
  %v663 = vunpack.c.l.b16 %v159
  %v664 = vunpack.c.l.b16 %v160
  %v665 = vunpack.c.l.b16 %v161
  %v666 = vunpack.c.l.b16 %v162
  %v667 = vunpack.c.l.b16 %v163
  %v668 = vunpack.c.l.b16 %v164
  %v669 = vunpack.c.l.b16 %v165
  %v670 = vunpack.c.l.b16 %v166
  %v671 = vunpack.c.l.b16 %v167
  %v672 = vunpack.c.l.b16 %v168
  %v673 = vunpack.c.l.b16 %v169
  %v674 = vunpack.c.l.b16 %v170
  %v675 = vunpack.c.l.b16 %v171
  %v676 = vunpack.c.l.b16 %v172
  %v677 = vunpack.c.l.b16 %v173
  %v678 = vunpack.c.l.b16 %v174
  %v679 = vunpack.c.l.b16 %v175
  %v680 = vunpack.c.l.b16 %v176
  %v681 = vunpack.c.l.b16 %v177
  %v682 = vunpack.c.l.b16 %v178
  %v683 = vunpack.c.l.b16 %v179
  %v684 = vunpack.c.l.b16 %v180
  %v685 = vunpack.c.l.b16 %v181
  %v686 = vunpack.c.l.b16 %v182
  %v687 = vunpack.c.l.b16 %v183
  %v688 = vunpack.c.l.b16 %v184
  %v689 = vunpack.c.l.b16 %v185
  %v690 = vunpack.c.l.b16 %v186
  %v691 = vunpack.c.l.b16 %v187
  %v692 = vunpack.c.l.b16 %v188
  %v693 = vunpack.c.l.b16 %v189
  %v694 = vunpack.c.l.b16 %v190
  %v695 = vunpack.c.l.b16 %v191
  %v696 = vunpack.c.l.b16 %v192
  %v697 = vunpack.c.l.b16 %v193
  %v698 = vunpack.c.l.b16 %v194
  %v699 = vunpack.c.l.b16 %v195
  %v700 = vunpack.c.l.b16 %v196
  %v701 = vunpack.c.l.b16 %v197
  %v702 = vunpack.c.l.b16 %v198
  %v703 = vunpack.c.l.b16 %v199
  %v704 = vunpack.c.l.b16 %v200
  %v705 = vunpack.c.l.b16 %v201
  %v706 = vunpack.c.l.b16 %v202
  %v707 = vunpack.c.l.b16 %v203
  %v708 = vunpack.c.l.b16 %v204
  %v709 = vunpack.c.l.b16 %v205
  %v710 = vunpack.c.l.b16 %v206
  %v711 = vunpack.c.l.b16 %v207
  %v712 = vunpack.c.l.b16 %v208
  %v713 = vunpack.c.l.b16 %v209
  %v714 = vunpack.c.l.b16 %v210
  %v715 = vunpack.c.l.b16 %v211
  %v716 = vunpack.c.l.b16 %v212
  %v717 = vunpack.c.l.b16 %v213
  %v718 = vunpack.c.l.b16 %v214
  %v719 = vunpack.c.l.b16 %v215
  %v720 = vunpack.c.l.b16 %v216
  %v721 = vunpack.c.l.b16 %v217
  %v722 = vunpack.c.l.b16 %v218
  %v723 = vunpack.c.l.b16 %v219
  %v724 = vunpack.c.l.b16 %v220
  %v725 = vunpack.c.l.b16 %v221
  %v726 = vunpack.c.l.b16 %v222
  %v727 = vunpack.c.l.b16 %v223
  %v728 = vunpack.c.l.b16 %v224
  %v729 = vunpack.c.l.b16 %v225
  %v730 = vunpack.c.l.b16 %v226
  %v731 = vunpack.c.l.b16 %v227
  %v732 = vunpack.c.l.b16 %v228
  %v733 = vunpack.c.l.b16 %v229
  %v734 = vunpack.c.l.b16 %v230
  %v735 = vunpack.c.l.b16 %v231
  %v736 = vunpack.c.l.b16 %v232
  %v737 = vunpack.c.l.b16 %v233
  %v738 = vunpack.c.l.b16 %v234
  %v739 = vunpack.c.l.b16 %v235
  %v740 = vunpack.c.l.b16 %v236
  %v741 = vunpack.c.l.b16 %v237
  %v742 = vunpack.c.l.b16 %v238
  %v743 = vunpack.c.l.b16 %v239
  %v744 = vunpack.c.l.b16 %v240
  %v745 = vunpack.c.l.b16 %v241
  %v746 = vunpack.c.l.b16 %v242
  %v747 = vunpack.c.l.b16 %v243
  %v748 = vunpack.c.l.b16 %v244
  %v749 = vunpack.c.l.b16 %v245
  %v750 = vunpack.c.l.b16 %v246
  %v751 = vunpack.c.l.b16 %v247
  %v752 = vunpack.c.l.b16 %v248
  %v753 = vunpack.c.l.b16 %v249
  %v754 = vunpack.c.l.b16 %v250
  %v755 = vunpack.c.l.b16 %v251
  %v756 = vpack.c.b16 %v533, %v532
  %v757 = vpack.c.b16 %v535, %v534
  %v758 = vpack.c.b16 %v537, %v536
  %v759 = vpack.c.b16 %v539, %v538
  %v760 = vpack.c.b16 %v541, %v540
  %v761 = vpack.c.b16 %v543, %v542
  %v762 = vpack.c.b16 %v545, %v544
  %v763 = vpack.c.b16 %v547, %v546
  %v764 = vpack.c.b16 %v549, %v548
  %v765 = vpack.c.b16 %v551, %v550
  %v766 = vpack.c.b16 %v553, %v552
  %v767 = vpack.c.b16 %v555, %v554
  %v768 = vpack.c.b16 %v557, %v556
  %v769 = vpack.c.b16 %v559, %v558
  %v770 = vpack.c.b16 %v561, %v560
  %v771 = vpack.c.b16 %v563, %v562
  %v772 = vpack.c.b16 %v565, %v564
  %v773 = vpack.c.b16 %v567, %v566
  %v774 = vpack.c.b16 %v569, %v568
  %v775 = vpack.c.b16 %v571, %v570
  %v776 = vpack.c.b16 %v573, %v572
  %v777 = vpack.c.b16 %v575, %v574
  %v778 = vpack.c.b16 %v577, %v576
  %v779 = vpack.c.b16 %v579, %v578
  %v780 = vpack.c.b16 %v581, %v580
  %v781 = vpack.c.b16 %v583, %v582
  %v782 = vpack.c.b16 %v585, %v584
  %v783 = vpack.c.b16 %v587, %v586
  %v784 = vpack.c.b16 %v589, %v588
  %v785 = vpack.c.b16 %v591, %v590
  %v786 = vpack.c.b16 %v593, %v592
  %v787 = vpack.c.b16 %v595, %v594
  %v788 = vpack.c.b16 %v597, %v596
  %v789 = vpack.c.b16 %v599, %v598
  %v790 = vpack.c.b16 %v601, %v600
  %v791 = vpack.c.b16 %v603, %v602
  %v792 = vpack.c.b16 %v605, %v604
  %v793 = vpack.c.b16 %v607, %v606
  %v794 = vpack.c.b16 %v609, %v608
  %v795 = vpack.c.b16 %v611, %v610
  %v796 = vpack.c.b16 %v613, %v612
  %v797 = vpack.c.b16 %v615, %v614
  %v798 = vpack.c.b16 %v617, %v616
  %v799 = vpack.c.b16 %v619, %v618
  %v800 = vpack.c.b16 %v621, %v620
  %v801 = vpack.c.b16 %v623, %v622
  %v802 = vpack.c.b16 %v625, %v624
  %v803 = vpack.c.b16 %v627, %v626
  %v804 = vpack.c.b16 %v629, %v628
  %v805 = vpack.c.b16 %v631, %v630
  %v806 = vpack.c.b16 %v633, %v632
  %v807 = vpack.c.b16 %v635, %v634
  %v808 = vpack.c.b16 %v637, %v636
  %v809 = vpack.c.b16 %v639, %v638
  %v810 = vpack.c.b16 %v641, %v640
  %v811 = vpack.c.b16 %v643, %v642
  %v812 = vpack.c.b16 %v645, %v644
  %v813 = vpack.c.b16 %v647, %v646
  %v814 = vpack.c.b16 %v649, %v648
  %v815 = vpack.c.b16 %v651, %v650
  %v816 = vpack.c.b16 %v653, %v652
  %v817 = vpack.c.b16 %v655, %v654
  %v818 = vpack.c.b16 %v657, %v656
  %v819 = vpack.c.b16 %v659, %v658
  %v820 = vpack.c.b16 %v661, %v660
  %v821 = vpack.c.b16 %v663, %v662
  %v822 = vpack.c.b16 %v665, %v664
  %v823 = vpack.c.b16 %v667, %v666
  %v824 = vpack.c.b16 %v669, %v668
  %v825 = vpack.c.b16 %v671, %v670
  %v826 = vpack.c.b16 %v673, %v672
  %v827 = vpack.c.b16 %v675, %v674
  %v828 = vpack.c.b16 %v677, %v676
  %v829 = vpack.c.b16 %v679, %v678
  %v830 = vpack.c.b16 %v681, %v680
  %v831 = vpack.c.b16 %v683, %v682
  %v832 = vpack.c.b16 %v685, %v684
  %v833 = vpack.c.b16 %v687, %v686
  %v834 = vpack.c.b16 %v689, %v688
  %v835 = vpack.c.b16 %v691, %v690
  %v836 = vpack.c.b16 %v693, %v692
  %v837 = vpack.c.b16 %v695, %v694
  %v838 = vpack.c.b16 %v697, %v696
  %v839 = vpack.c.b16 %v699, %v698
  %v840 = vpack.c.b16 %v701, %v700
  %v841 = vpack.c.b16 %v703, %v702
  %v842 = vpack.c.b16 %v705, %v704
  %v843 = vpack.c.b16 %v707, %v706
  %v844 = vpack.c.b16 %v709, %v708
  %v845 = vpack.c.b16 %v711, %v710
  %v846 = vpack.c.b16 %v713, %v712
  %v847 = vpack.c.b16 %v715, %v714
  %v848 = vpack.c.b16 %v717, %v716
  %v849 = vpack.c.b16 %v719, %v718
  %v850 = vpack.c.b16 %v721, %v720
  %v851 = vpack.c.b16 %v723, %v722
  %v852 = vpack.c.b16 %v725, %v724
  %v853 = vpack.c.b16 %v727, %v726
  %v854 = vpack.c.b16 %v729, %v728
  %v855 = vpack.c.b16 %v731, %v730
  %v856 = vpack.c.b16 %v733, %v732
  %v857 = vpack.c.b16 %v735, %v734
  %v858 = vpack.c.b16 %v737, %v736
  %v859 = vpack.c.b16 %v739, %v738
  %v860 = vpack.c.b16 %v741, %v740
  %v861 = vpack.c.b16 %v743, %v742
  %v862 = vpack.c.b16 %v745, %v744
  %v863 = vpack.c.b16 %v747, %v746
  %v864 = vpack.c.b16 %v749, %v748
  %v865 = vpack.c.b16 %v751, %v750
  %v866 = vpack.c.b16 %v753, %v752
  %v867 = vpack.c.b16 %v755, %v754
  %980 = vmatprep.subr.bf16.mxu0 0
  %981 = vmatpush1.bf16.msra.mxu0 %v756
  %982 = vmatprep.subr.bf16.mxu0 0
  %983 = vmatpush1.bf16.msra.mxu0 %v757
  %984 = vmatprep.subr.bf16.mxu0 0
  %985 = vmatpush1.bf16.msra.mxu0 %v758
  %986 = vmatprep.subr.bf16.mxu0 0
  %987 = vmatpush1.bf16.msra.mxu0 %v759
  %988 = vmatprep.subr.bf16.mxu0 0
  %989 = vmatpush1.bf16.msra.mxu0 %v760
  %990 = vmatprep.subr.bf16.mxu0 0
  %991 = vmatpush1.bf16.msra.mxu0 %v761
  %992 = vmatprep.subr.bf16.mxu0 0
  %993 = vmatpush1.bf16.msra.mxu0 %v762
  %994 = vmatprep.subr.bf16.mxu0 0
  %995 = vmatpush1.bf16.msra.mxu0 %v763
  %996 = vmatprep.subr.bf16.mxu0 0
  %997 = vmatpush1.bf16.msra.mxu0 %v764
  %998 = vmatprep.subr.bf16.mxu0 0
  %999 = vmatpush1.bf16.msra.mxu0 %v765
  %1000 = vmatprep.subr.bf16.mxu0 0
  %1001 = vmatpush1.bf16.msra.mxu0 %v766
  %1002 = vmatprep.subr.bf16.mxu0 0
  %1003 = vmatpush1.bf16.msra.mxu0 %v767
  %1004 = vmatprep.subr.bf16.mxu0 0
  %1005 = vmatpush1.bf16.msra.mxu0 %v768
  %1006 = vmatprep.subr.bf16.mxu0 0
  %1007 = vmatpush1.bf16.msra.mxu0 %v769
  %1008 = vmatprep.subr.bf16.mxu0 0
  %1009 = vmatpush1.bf16.msra.mxu0 %v770
  %1010 = vmatprep.subr.bf16.mxu0 0
  %1011 = vmatpush1.bf16.msra.mxu0 %v771
  %1012 = vmatprep.mubr.bf16.mxu0 %v281
  %1013 = vmatmul.mubr.bf16.gmra.mrb[0].mxu0 %v280
  %v1014 = vpop.f32.mrb[0].mxu0
  %v1015 = vadd.f32 %v257, %v1014
  %v1016 = vpop.f32.mrb[0].mxu0
  %v1017 = vpop.f32.mrb[0].mxu0
  %v1018 = vpop.f32.mrb[0].mxu0
  %1019 = vdwg.mxu0
  %1020 = vmatprep.subr.bf16.mxu0 0
  %1021 = vmatpush1.bf16.msra.mxu0 %v772
  %1022 = vmatprep.subr.bf16.mxu0 0
  %1023 = vmatpush1.bf16.msra.mxu0 %v773
  %1024 = vmatprep.subr.bf16.mxu0 0
  %1025 = vmatpush1.bf16.msra.mxu0 %v774
  %1026 = vmatprep.subr.bf16.mxu0 0
  %1027 = vmatpush1.bf16.msra.mxu0 %v775
  %1028 = vmatprep.subr.bf16.mxu0 0
  %1029 = vmatpush1.bf16.msra.mxu0 %v776
  %1030 = vmatprep.subr.bf16.mxu0 0
  %1031 = vmatpush1.bf16.msra.mxu0 %v777
  %1032 = vmatprep.subr.bf16.mxu0 0
  %1033 = vmatpush1.bf16.msra.mxu0 %v778
  %1034 = vmatprep.subr.bf16.mxu0 0
  %1035 = vmatpush1.bf16.msra.mxu0 %v779
  %1036 = vmatprep.subr.bf16.mxu0 0
  %1037 = vmatpush1.bf16.msra.mxu0 %v780
  %1038 = vmatprep.subr.bf16.mxu0 0
  %1039 = vmatpush1.bf16.msra.mxu0 %v781
  %1040 = vmatprep.subr.bf16.mxu0 0
  %1041 = vmatpush1.bf16.msra.mxu0 %v782
  %1042 = vmatprep.subr.bf16.mxu0 0
  %1043 = vmatpush1.bf16.msra.mxu0 %v783
  %1044 = vmatprep.subr.bf16.mxu0 0
  %1045 = vmatpush1.bf16.msra.mxu0 %v784
  %1046 = vmatprep.subr.bf16.mxu0 0
  %1047 = vmatpush1.bf16.msra.mxu0 %v785
  %1048 = vmatprep.subr.bf16.mxu0 0
  %1049 = vmatpush1.bf16.msra.mxu0 %v786
  %1050 = vmatprep.subr.bf16.mxu0 0
  %1051 = vmatpush1.bf16.msra.mxu0 %v787
  %1052 = vmatprep.mubr.bf16.mxu0 %v283
  %1053 = vmatmul.mubr.bf16.gmra.mrb[0].mxu0 %v282
  %v1054 = vpop.f32.mrb[0].mxu0
  %v1055 = vadd.f32 %v1015, %v1054
  %v1056 = vpop.f32.mrb[0].mxu0
  %v1057 = vpop.f32.mrb[0].mxu0
  %v1058 = vpop.f32.mrb[0].mxu0
  %1059 = vdwg.mxu0
  %1060 = vmatprep.subr.bf16.mxu0 0
  %1061 = vmatpush1.bf16.msra.mxu0 %v788
  %1062 = vmatprep.subr.bf16.mxu0 0
  %1063 = vmatpush1.bf16.msra.mxu0 %v789
  %1064 = vmatprep.subr.bf16.mxu0 0
  %1065 = vmatpush1.bf16.msra.mxu0 %v790
  %1066 = vmatprep.subr.bf16.mxu0 0
  %1067 = vmatpush1.bf16.msra.mxu0 %v791
  %1068 = vmatprep.subr.bf16.mxu0 0
  %1069 = vmatpush1.bf16.msra.mxu0 %v792
  %1070 = vmatprep.subr.bf16.mxu0 0
  %1071 = vmatpush1.bf16.msra.mxu0 %v793
  %1072 = vmatprep.subr.bf16.mxu0 0
  %1073 = vmatpush1.bf16.msra.mxu0 %v794
  %1074 = vmatprep.subr.bf16.mxu0 0
  %1075 = vmatpush1.bf16.msra.mxu0 %v795
  %1076 = vmatprep.subr.bf16.mxu0 0
  %1077 = vmatpush1.bf16.msra.mxu0 %v796
  %1078 = vmatprep.subr.bf16.mxu0 0
  %1079 = vmatpush1.bf16.msra.mxu0 %v797
  %1080 = vmatprep.subr.bf16.mxu0 0
  %1081 = vmatpush1.bf16.msra.mxu0 %v798
  %1082 = vmatprep.subr.bf16.mxu0 0
  %1083 = vmatpush1.bf16.msra.mxu0 %v799
  %1084 = vmatprep.subr.bf16.mxu0 0
  %1085 = vmatpush1.bf16.msra.mxu0 %v800
  %1086 = vmatprep.subr.bf16.mxu0 0
  %1087 = vmatpush1.bf16.msra.mxu0 %v801
  %1088 = vmatprep.subr.bf16.mxu0 0
  %1089 = vmatpush1.bf16.msra.mxu0 %v802
  %1090 = vmatprep.subr.bf16.mxu0 0
  %1091 = vmatpush1.bf16.msra.mxu0 %v803
  %1092 = vmatprep.mubr.bf16.mxu0 %v285
  %1093 = vmatmul.mubr.bf16.gmra.mrb[0].mxu0 %v284
  %v1094 = vpop.f32.mrb[0].mxu0
  %v1095 = vadd.f32 %v1055, %v1094
  %v1096 = vpop.f32.mrb[0].mxu0
  %v1097 = vpop.f32.mrb[0].mxu0
  %v1098 = vpop.f32.mrb[0].mxu0
  %1099 = vdwg.mxu0
  %1100 = vmatprep.subr.bf16.mxu0 0
  %1101 = vmatpush1.bf16.msra.mxu0 %v804
  %1102 = vmatprep.subr.bf16.mxu0 0
  %1103 = vmatpush1.bf16.msra.mxu0 %v805
  %1104 = vmatprep.subr.bf16.mxu0 0
  %1105 = vmatpush1.bf16.msra.mxu0 %v806
  %1106 = vmatprep.subr.bf16.mxu0 0
  %1107 = vmatpush1.bf16.msra.mxu0 %v807
  %1108 = vmatprep.subr.bf16.mxu0 0
  %1109 = vmatpush1.bf16.msra.mxu0 %v808
  %1110 = vmatprep.subr.bf16.mxu0 0
  %1111 = vmatpush1.bf16.msra.mxu0 %v809
  %1112 = vmatprep.subr.bf16.mxu0 0
  %1113 = vmatpush1.bf16.msra.mxu0 %v810
  %1114 = vmatprep.subr.bf16.mxu0 0
  %1115 = vmatpush1.bf16.msra.mxu0 %v811
  %1116 = vmatprep.subr.bf16.mxu0 0
  %1117 = vmatpush1.bf16.msra.mxu0 %v812
  %1118 = vmatprep.subr.bf16.mxu0 0
  %1119 = vmatpush1.bf16.msra.mxu0 %v813
  %1120 = vmatprep.subr.bf16.mxu0 0
  %1121 = vmatpush1.bf16.msra.mxu0 %v814
  %1122 = vmatprep.subr.bf16.mxu0 0
  %1123 = vmatpush1.bf16.msra.mxu0 %v815
  %1124 = vmatprep.subr.bf16.mxu0 0
  %1125 = vmatpush1.bf16.msra.mxu0 %v816
  %1126 = vmatprep.subr.bf16.mxu0 0
  %1127 = vmatpush1.bf16.msra.mxu0 %v817
  %1128 = vmatprep.subr.bf16.mxu0 0
  %1129 = vmatpush1.bf16.msra.mxu0 %v818
  %1130 = vmatprep.subr.bf16.mxu0 0
  %1131 = vmatpush1.bf16.msra.mxu0 %v819
  %1132 = vmatprep.mubr.bf16.mxu0 %v287
  %1133 = vmatmul.mubr.bf16.gmra.mrb[0].mxu0 %v286
  %v1134 = vpop.f32.mrb[0].mxu0
  %v1135 = vadd.f32 %v1095, %v1134
  %v1136 = vpop.f32.mrb[0].mxu0
  %v1137 = vpop.f32.mrb[0].mxu0
  %v1138 = vpop.f32.mrb[0].mxu0
  %1139 = vdwg.mxu0
  %1140 = vmatprep.subr.bf16.mxu0 0
  %1141 = vmatpush1.bf16.msra.mxu0 %v820
  %1142 = vmatprep.subr.bf16.mxu0 0
  %1143 = vmatpush1.bf16.msra.mxu0 %v821
  %1144 = vmatprep.subr.bf16.mxu0 0
  %1145 = vmatpush1.bf16.msra.mxu0 %v822
  %1146 = vmatprep.subr.bf16.mxu0 0
  %1147 = vmatpush1.bf16.msra.mxu0 %v823
  %1148 = vmatprep.subr.bf16.mxu0 0
  %1149 = vmatpush1.bf16.msra.mxu0 %v824
  %1150 = vmatprep.subr.bf16.mxu0 0
  %1151 = vmatpush1.bf16.msra.mxu0 %v825
  %1152 = vmatprep.subr.bf16.mxu0 0
  %1153 = vmatpush1.bf16.msra.mxu0 %v826
  %1154 = vmatprep.subr.bf16.mxu0 0
  %1155 = vmatpush1.bf16.msra.mxu0 %v827
  %1156 = vmatprep.subr.bf16.mxu0 0
  %1157 = vmatpush1.bf16.msra.mxu0 %v828
  %1158 = vmatprep.subr.bf16.mxu0 0
  %1159 = vmatpush1.bf16.msra.mxu0 %v829
  %1160 = vmatprep.subr.bf16.mxu0 0
  %1161 = vmatpush1.bf16.msra.mxu0 %v830
  %1162 = vmatprep.subr.bf16.mxu0 0
  %1163 = vmatpush1.bf16.msra.mxu0 %v831
  %1164 = vmatprep.subr.bf16.mxu0 0
  %1165 = vmatpush1.bf16.msra.mxu0 %v832
  %1166 = vmatprep.subr.bf16.mxu0 0
  %1167 = vmatpush1.bf16.msra.mxu0 %v833
  %1168 = vmatprep.subr.bf16.mxu0 0
  %1169 = vmatpush1.bf16.msra.mxu0 %v834
  %1170 = vmatprep.subr.bf16.mxu0 0
  %1171 = vmatpush1.bf16.msra.mxu0 %v835
  %1172 = vmatprep.mubr.bf16.mxu0 %v289
  %1173 = vmatmul.mubr.bf16.gmra.mrb[0].mxu0 %v288
  %v1174 = vpop.f32.mrb[0].mxu0
  %v1175 = vadd.f32 %v1135, %v1174
  %v1176 = vpop.f32.mrb[0].mxu0
  %v1177 = vpop.f32.mrb[0].mxu0
  %v1178 = vpop.f32.mrb[0].mxu0
  %1179 = vdwg.mxu0
  %1180 = vmatprep.subr.bf16.mxu0 0
  %1181 = vmatpush1.bf16.msra.mxu0 %v836
  %1182 = vmatprep.subr.bf16.mxu0 0
  %1183 = vmatpush1.bf16.msra.mxu0 %v837
  %1184 = vmatprep.subr.bf16.mxu0 0
  %1185 = vmatpush1.bf16.msra.mxu0 %v838
  %1186 = vmatprep.subr.bf16.mxu0 0
  %1187 = vmatpush1.bf16.msra.mxu0 %v839
  %1188 = vmatprep.subr.bf16.mxu0 0
  %1189 = vmatpush1.bf16.msra.mxu0 %v840
  %1190 = vmatprep.subr.bf16.mxu0 0
  %1191 = vmatpush1.bf16.msra.mxu0 %v841
  %1192 = vmatprep.subr.bf16.mxu0 0
  %1193 = vmatpush1.bf16.msra.mxu0 %v842
  %1194 = vmatprep.subr.bf16.mxu0 0
  %1195 = vmatpush1.bf16.msra.mxu0 %v843
  %1196 = vmatprep.subr.bf16.mxu0 0
  %1197 = vmatpush1.bf16.msra.mxu0 %v844
  %1198 = vmatprep.subr.bf16.mxu0 0
  %1199 = vmatpush1.bf16.msra.mxu0 %v845
  %1200 = vmatprep.subr.bf16.mxu0 0
  %1201 = vmatpush1.bf16.msra.mxu0 %v846
  %1202 = vmatprep.subr.bf16.mxu0 0
  %1203 = vmatpush1.bf16.msra.mxu0 %v847
  %1204 = vmatprep.subr.bf16.mxu0 0
  %1205 = vmatpush1.bf16.msra.mxu0 %v848
  %1206 = vmatprep.subr.bf16.mxu0 0
  %1207 = vmatpush1.bf16.msra.mxu0 %v849
  %1208 = vmatprep.subr.bf16.mxu0 0
  %1209 = vmatpush1.bf16.msra.mxu0 %v850
  %1210 = vmatprep.subr.bf16.mxu0 0
  %1211 = vmatpush1.bf16.msra.mxu0 %v851
  %1212 = vmatprep.mubr.bf16.mxu0 %v291
  %1213 = vmatmul.mubr.bf16.gmra.mrb[0].mxu0 %v290
  %v1214 = vpop.f32.mrb[0].mxu0
  %v1215 = vadd.f32 %v1175, %v1214
  %v1216 = vpop.f32.mrb[0].mxu0
  %v1217 = vpop.f32.mrb[0].mxu0
  %v1218 = vpop.f32.mrb[0].mxu0
  %1219 = vdwg.mxu0
  %1220 = vmatprep.subr.bf16.mxu0 0
  %1221 = vmatpush1.bf16.msra.mxu0 %v852
  %1222 = vmatprep.subr.bf16.mxu0 0
  %1223 = vmatpush1.bf16.msra.mxu0 %v853
  %1224 = vmatprep.subr.bf16.mxu0 0
  %1225 = vmatpush1.bf16.msra.mxu0 %v854
  %1226 = vmatprep.subr.bf16.mxu0 0
  %1227 = vmatpush1.bf16.msra.mxu0 %v855
  %1228 = vmatprep.subr.bf16.mxu0 0
  %1229 = vmatpush1.bf16.msra.mxu0 %v856
  %1230 = vmatprep.subr.bf16.mxu0 0
  %1231 = vmatpush1.bf16.msra.mxu0 %v857
  %1232 = vmatprep.subr.bf16.mxu0 0
  %1233 = vmatpush1.bf16.msra.mxu0 %v858
  %1234 = vmatprep.subr.bf16.mxu0 0
  %1235 = vmatpush1.bf16.msra.mxu0 %v859
  %1236 = vmatprep.subr.bf16.mxu0 0
  %1237 = vmatpush1.bf16.msra.mxu0 %v860
  %1238 = vmatprep.subr.bf16.mxu0 0
  %1239 = vmatpush1.bf16.msra.mxu0 %v861
  %1240 = vmatprep.subr.bf16.mxu0 0
  %1241 = vmatpush1.bf16.msra.mxu0 %v862
  %1242 = vmatprep.subr.bf16.mxu0 0
  %1243 = vmatpush1.bf16.msra.mxu0 %v863
  %1244 = vmatprep.subr.bf16.mxu0 0
  %1245 = vmatpush1.bf16.msra.mxu0 %v864
  %1246 = vmatprep.subr.bf16.mxu0 0
  %1247 = vmatpush1.bf16.msra.mxu0 %v865
  %1248 = vmatprep.subr.bf16.mxu0 0
  %1249 = vmatpush1.bf16.msra.mxu0 %v866
  %1250 = vmatprep.subr.bf16.mxu0 0
  %1251 = vmatpush1.bf16.msra.mxu0 %v867
  %1252 = vmatprep.mubr.bf16.mxu0 %v293
  %1253 = vmatmul.mubr.bf16.gmra.mrb[0].mxu0 %v292
  %v1254 = vpop.f32.mrb[0].mxu0
  %v1255 = vadd.f32 %v1215, %v1254
  %v1256 = vpop.f32.mrb[0].mxu0
  %v1257 = vpop.f32.mrb[0].mxu0
  %v1258 = vpop.f32.mrb[0].mxu0
  %1259 = vdwg.mxu0
  %v1260 = vmax.f32 %v1255, 0.0
  %v1261 = vpack.c.bf16 %v1260, %v1260
  %v1262 = vld [vmem:[%s3] sm:$0xf]
  %v1263 = vld [vmem:[%s3 + $0x4] sm:$0xf]
  %v1264 = vld [vmem:[%s3 + $0x8] sm:$0xf]
  %v1265 = vld [vmem:[%s3 + $0xc] sm:$0xf]
  %v1266 = vld [vmem:[%s3 + $0x10] sm:$0xf]
  %v1267 = vld [vmem:[%s3 + $0x14] sm:$0xf]
  %v1268 = vld [vmem:[%s3 + $0x18] sm:$0xf]
  %v1269 = vld [vmem:[%s3 + $0x1c] sm:$0xf]
  %v1270 = vld [vmem:[%s3 + $0x20] sm:$0xf]
  %v1271 = vld [vmem:[%s3 + $0x24] sm:$0xf]
  %v1272 = vld [vmem:[%s3 + $0x28] sm:$0xf]
  %v1273 = vld [vmem:[%s3 + $0x2c] sm:$0xf]
  %v1274 = vld [vmem:[%s3 + $0x30] sm:$0xf]
  %v1275 = vld [vmem:[%s3 + $0x34] sm:$0xf]
  %v1276 = vld [vmem:[%s3 + $0x38] sm:$0xf]
  %v1277 = vld [vmem:[%s3 + $0x3c] sm:$0xf]
  %v1278 = vld [vmem:[%s4] sm:$0xff]
  %v1295 = vunpack.c.l.b16 %v1262
  %v1296 = vunpack.c.l.b16 %v1263
  %v1297 = vunpack.c.l.b16 %v1264
  %v1298 = vunpack.c.l.b16 %v1265
  %v1299 = vunpack.c.l.b16 %v1266
  %v1300 = vunpack.c.l.b16 %v1267
  %v1301 = vunpack.c.l.b16 %v1268
  %v1302 = vunpack.c.l.b16 %v1269
  %v1303 = vunpack.c.l.b16 %v1270
  %v1304 = vunpack.c.l.b16 %v1271
  %v1305 = vunpack.c.l.b16 %v1272
  %v1306 = vunpack.c.l.b16 %v1273
  %v1307 = vunpack.c.l.b16 %v1274
  %v1308 = vunpack.c.l.b16 %v1275
  %v1309 = vunpack.c.l.b16 %v1276
  %v1310 = vunpack.c.l.b16 %v1277
  %v1311 = vpack.c.b16 %v1296, %v1295
  %v1312 = vpack.c.b16 %v1298, %v1297
  %v1313 = vpack.c.b16 %v1300, %v1299
  %v1314 = vpack.c.b16 %v1302, %v1301
  %v1315 = vpack.c.b16 %v1304, %v1303
  %v1316 = vpack.c.b16 %v1306, %v1305
  %v1317 = vpack.c.b16 %v1308, %v1307
  %v1318 = vpack.c.b16 %v1310, %v1309
  %1327 = vmatprep.subr.bf16.mxu0 0
  %1328 = vmatpush1.bf16.msra.mxu0 %v1311
  %1329 = vmatprep.subr.bf16.mxu0 0
  %1330 = vmatpush1.bf16.msra.mxu0 %v1312
  %1331 = vmatprep.subr.bf16.mxu0 0
  %1332 = vmatpush1.bf16.msra.mxu0 %v1313
  %1333 = vmatprep.subr.bf16.mxu0 0
  %1334 = vmatpush1.bf16.msra.mxu0 %v1314
  %1335 = vmatprep.subr.bf16.mxu0 0
  %1336 = vmatpush1.bf16.msra.mxu0 %v1315
  %1337 = vmatprep.subr.bf16.mxu0 0
  %1338 = vmatpush1.bf16.msra.mxu0 %v1316
  %1339 = vmatprep.subr.bf16.mxu0 0
  %1340 = vmatpush1.bf16.msra.mxu0 %v1317
  %1341 = vmatprep.subr.bf16.mxu0 0
  %1342 = vmatpush1.bf16.msra.mxu0 %v1318
  %1343 = vmatprep.subr.bf16.mxu0 0
  %1344 = vmatpush1.bf16.msra.mxu0 0
  %1345 = vmatprep.subr.bf16.mxu0 0
  %1346 = vmatpush1.bf16.msra.mxu0 0
  %1347 = vmatprep.subr.bf16.mxu0 0
  %1348 = vmatpush1.bf16.msra.mxu0 0
  %1349 = vmatprep.subr.bf16.mxu0 0
  %1350 = vmatpush1.bf16.msra.mxu0 0
  %1351 = vmatprep.subr.bf16.mxu0 0
  %1352 = vmatpush1.bf16.msra.mxu0 0
  %1353 = vmatprep.subr.bf16.mxu0 0
  %1354 = vmatpush1.bf16.msra.mxu0 0
  %1355 = vmatprep.subr.bf16.mxu0 0
  %1356 = vmatpush1.bf16.msra.mxu0 0
  %1357 = vmatprep.subr.bf16.mxu0 0
  %1358 = vmatpush1.bf16.msra.mxu0 0
  %1359 = vmatprep.mubr.bf16.mxu0 0
  %1360 = vmatmul.mubr.bf16.gmra.mrb[0].mxu0 %v1261
  %v1361 = vpop.f32.mrb[0].mxu0
  %v1362 = vadd.f32 %v1278, %v1361
  %v1363 = vpop.f32.mrb[0].mxu0
  %v1364 = vpop.f32.mrb[0].mxu0
  %v1365 = vpop.f32.mrb[0].mxu0
  %1366 = vdwg.mxu0
  %v1367 = vmax.f32 %v1362, 0.0
  %v1368 = vpack.c.bf16 %v1367, %v1367
  %vm1369 = vcmask 257024
  %1370 = vst.msk [vmem:[%s5] sm:$0xf] %vm1369, %v1368
  // Predicated region
  $region22: #{deeplabv3plus_forward.14} parent=0 // pred_check
    _
  $region23: #{deeplabv3plus_forward.14} parent=0 // pred_check_branch
    %1372 = sbr.rel (0) target = $region25
  $region24: #{deeplabv3plus_forward.14} parent=0 // pred_region
    _
  $region25: #{deeplabv3plus_forward.14} parent=0 // pred_fallthru
    _
  // Predicated region
  $region26: #{deeplabv3plus_forward.14} parent=0 // pred_check
    _
  $region27: #{deeplabv3plus_forward.14} parent=0 // pred_check_branch
    %1374 = sbr.rel (0) target = $region29
  $region28: #{deeplabv3plus_forward.14} parent=0 // pred_region
    _
  $region29: #{deeplabv3plus_forward.14} parent=0 // pred_fallthru
    _

// kernel: deeplabv3plus_forward.16
$region0: #{deeplabv3plus_forward.16}
  #allocation0 [shape = 'u32[]', space=smem, size = 0x4, offset = 0x4, fixed_abs, tag = 'smem constant byte address 0x4 - core index']
  #allocation1 [shape = 'u32[144,128]{1,0:T(1,128)}', space=vmem, size = 0x12000, scoped, tag = 'internal scratch']
  %s0 = inlined_call_operand.vmem [shape: bf16[128,720], index: 0, kind: input, shape index: {}]
  %s1 = inlined_call_operand.vmem [shape: bf16[720,32], index: 1, kind: input, shape index: {}]
  %s2 = inlined_call_operand.vmem [shape: f32[1,32], index: 2, kind: input, shape index: {}]
  %s3 = inlined_call_operand.vmem [shape: bf16[128,32], index: 3, kind: output, shape index: {}]
  %s4 = sld [smem:[#allocation0]]
  $region22: #{deeplabv3plus_forward.16} parent=0
    _
  %s6 = ssub.s32 1, %s4
  %s7 = scalar_select 0, %s6, %s4
  // Predicated region
  $region2: #{deeplabv3plus_forward.16} parent=0 // pred_check
    _
  $region3: #{deeplabv3plus_forward.16} parent=0 // pred_check_branch
    %9 = sbr.rel (0) target = $region5
  $region4: #{deeplabv3plus_forward.16} parent=0 // pred_region
    _
  $region5: #{deeplabv3plus_forward.16} parent=0 // pred_fallthru
    _
  // Predicated region
  $region6: #{deeplabv3plus_forward.16} parent=0 // pred_check
    _
  $region7: #{deeplabv3plus_forward.16} parent=0 // pred_check_branch
    %11 = sbr.rel (0) target = $region9
  $region8: #{deeplabv3plus_forward.16} parent=0 // pred_region
    _
  $region9: #{deeplabv3plus_forward.16} parent=0 // pred_fallthru
    _
  // Predicated region
  $region10: #{deeplabv3plus_forward.16} parent=0 // pred_check
    _
  $region11: #{deeplabv3plus_forward.16} parent=0 // pred_check_branch
    %13 = sbr.rel (0) target = $region13
  $region12: #{deeplabv3plus_forward.16} parent=0 // pred_region
    _
  $region13: #{deeplabv3plus_forward.16} parent=0 // pred_fallthru
    _
  %v15 = vld [vmem:[%s0] sm:$0xff]
  %v16 = vld [vmem:[%s0 + $0x8] sm:$0xff]
  %v17 = vld [vmem:[%s0 + $0x10] sm:$0xff]
  %v18 = vld [vmem:[%s0 + $0x18] sm:$0xff]
  %v19 = vld [vmem:[%s0 + $0x20] sm:$0xff]
  %v20 = vld [vmem:[%s0 + $0x28] sm:$0xff]
  %v21 = vld [vmem:[%s0 + $0x30] sm:$0xff]
  %v22 = vld [vmem:[%s0 + $0x38] sm:$0xff]
  %v23 = vld [vmem:[%s0 + $0x40] sm:$0xff]
  %v24 = vld [vmem:[%s0 + $0x48] sm:$0xff]
  %v25 = vld [vmem:[%s0 + $0x50] sm:$0xff]
  %v26 = vld [vmem:[%s0 + $0x58] sm:$0xff]
  %v27 = vld [vmem:[%s0 + $0x60] sm:$0xff]
  %v28 = vld [vmem:[%s0 + $0x68] sm:$0xff]
  %v29 = vld [vmem:[%s0 + $0x70] sm:$0xff]
  %v30 = vld [vmem:[%s0 + $0x78] sm:$0xff]
  %v31 = vld [vmem:[%s0 + $0x80] sm:$0xff]
  %v32 = vld [vmem:[%s0 + $0x88] sm:$0xff]
  %v33 = vld [vmem:[%s0 + $0x90] sm:$0xff]
  %v34 = vld [vmem:[%s0 + $0x98] sm:$0xff]
  %v35 = vld [vmem:[%s0 + $0xa0] sm:$0xff]
  %v36 = vld [vmem:[%s0 + $0xa8] sm:$0xff]
  %v37 = vld [vmem:[%s0 + $0xb0] sm:$0xff]
  %v38 = vld [vmem:[%s0 + $0xb8] sm:$0xff]
  %v39 = vld [vmem:[%s0 + $0xc0] sm:$0xff]
  %v40 = vld [vmem:[%s0 + $0xc8] sm:$0xff]
  %v41 = vld [vmem:[%s0 + $0xd0] sm:$0xff]
  %v42 = vld [vmem:[%s0 + $0xd8] sm:$0xff]
  %v43 = vld [vmem:[%s0 + $0xe0] sm:$0xff]
  %v44 = vld [vmem:[%s0 + $0xe8] sm:$0xff]
  %v45 = vld [vmem:[%s0 + $0xf0] sm:$0xff]
  %v46 = vld [vmem:[%s0 + $0xf8] sm:$0xff]
  %v47 = vld [vmem:[%s0 + $0x100] sm:$0xff]
  %v48 = vld [vmem:[%s0 + $0x108] sm:$0xff]
  %v49 = vld [vmem:[%s0 + $0x110] sm:$0xff]
  %v50 = vld [vmem:[%s0 + $0x118] sm:$0xff]
  %v51 = vld [vmem:[%s0 + $0x120] sm:$0xff]
  %v52 = vld [vmem:[%s0 + $0x128] sm:$0xff]
  %v53 = vld [vmem:[%s0 + $0x130] sm:$0xff]
  %v54 = vld [vmem:[%s0 + $0x138] sm:$0xff]
  %v55 = vld [vmem:[%s0 + $0x140] sm:$0xff]
  %v56 = vld [vmem:[%s0 + $0x148] sm:$0xff]
  %v57 = vld [vmem:[%s0 + $0x150] sm:$0xff]
  %v58 = vld [vmem:[%s0 + $0x158] sm:$0xff]
  %v59 = vld [vmem:[%s0 + $0x160] sm:$0xff]
  %v60 = vld [vmem:[%s0 + $0x168] sm:$0xff]
  %v61 = vld [vmem:[%s0 + $0x170] sm:$0xff]
  %v62 = vld [vmem:[%s0 + $0x178] sm:$0xff]
  %v63 = vld [vmem:[%s1] sm:$0xf]
  %v64 = vld [vmem:[%s1 + $0x4] sm:$0xf]
  %v65 = vld [vmem:[%s1 + $0x8] sm:$0xf]
  %v66 = vld [vmem:[%s1 + $0xc] sm:$0xf]
  %v67 = vld [vmem:[%s1 + $0x10] sm:$0xf]
  %v68 = vld [vmem:[%s1 + $0x14] sm:$0xf]
  %v69 = vld [vmem:[%s1 + $0x18] sm:$0xf]
  %v70 = vld [vmem:[%s1 + $0x1c] sm:$0xf]
  %v71 = vld [vmem:[%s1 + $0x20] sm:$0xf]
  %v72 = vld [vmem:[%s1 + $0x24] sm:$0xf]
  %v73 = vld [vmem:[%s1 + $0x28] sm:$0xf]
  %v74 = vld [vmem:[%s1 + $0x2c] sm:$0xf]
  %v75 = vld [vmem:[%s1 + $0x30] sm:$0xf]
  %v76 = vld [vmem:[%s1 + $0x34] sm:$0xf]
  %v77 = vld [vmem:[%s1 + $0x38] sm:$0xf]
  %v78 = vld [vmem:[%s1 + $0x3c] sm:$0xf]
  %v79 = vld [vmem:[%s1 + $0x40] sm:$0xf]
  %v80 = vld [vmem:[%s1 + $0x44] sm:$0xf]
  %v81 = vld [vmem:[%s1 + $0x48] sm:$0xf]
  %v82 = vld [vmem:[%s1 + $0x4c] sm:$0xf]
  %v83 = vld [vmem:[%s1 + $0x50] sm:$0xf]
  %v84 = vld [vmem:[%s1 + $0x54] sm:$0xf]
  %v85 = vld [vmem:[%s1 + $0x58] sm:$0xf]
  %v86 = vld [vmem:[%s1 + $0x5c] sm:$0xf]
  %v87 = vld [vmem:[%s1 + $0x60] sm:$0xf]
  %v88 = vld [vmem:[%s1 + $0x64] sm:$0xf]
  %v89 = vld [vmem:[%s1 + $0x68] sm:$0xf]
  %v90 = vld [vmem:[%s1 + $0x6c] sm:$0xf]
  %v91 = vld [vmem:[%s1 + $0x70] sm:$0xf]
  %v92 = vld [vmem:[%s1 + $0x74] sm:$0xf]
  %v93 = vld [vmem:[%s1 + $0x78] sm:$0xf]
  %v94 = vld [vmem:[%s1 + $0x7c] sm:$0xf]
  %v95 = vld [vmem:[%s1 + $0x80] sm:$0xf]
  %v96 = vld [vmem:[%s1 + $0x84] sm:$0xf]
  %v97 = vld [vmem:[%s1 + $0x88] sm:$0xf]
  %v98 = vld [vmem:[%s1 + $0x8c] sm:$0xf]
  %v99 = vld [vmem:[%s1 + $0x90] sm:$0xf]
  %v100 = vld [vmem:[%s1 + $0x94] sm:$0xf]
  %v101 = vld [vmem:[%s1 + $0x98] sm:$0xf]
  %v102 = vld [vmem:[%s1 + $0x9c] sm:$0xf]
  %v103 = vld [vmem:[%s1 + $0xa0] sm:$0xf]
  %v104 = vld [vmem:[%s1 + $0xa4] sm:$0xf]
  %v105 = vld [vmem:[%s1 + $0xa8] sm:$0xf]
  %v106 = vld [vmem:[%s1 + $0xac] sm:$0xf]
  %v107 = vld [vmem:[%s1 + $0xb0] sm:$0xf]
  %v108 = vld [vmem:[%s1 + $0xb4] sm:$0xf]
  %v109 = vld [vmem:[%s1 + $0xb8] sm:$0xf]
  %v110 = vld [vmem:[%s1 + $0xbc] sm:$0xf]
  %v111 = vld [vmem:[%s1 + $0xc0] sm:$0xf]
  %v112 = vld [vmem:[%s1 + $0xc4] sm:$0xf]
  %v113 = vld [vmem:[%s1 + $0xc8] sm:$0xf]
  %v114 = vld [vmem:[%s1 + $0xcc] sm:$0xf]
  %v115 = vld [vmem:[%s1 + $0xd0] sm:$0xf]
  %v116 = vld [vmem:[%s1 + $0xd4] sm:$0xf]
  %v117 = vld [vmem:[%s1 + $0xd8] sm:$0xf]
  %v118 = vld [vmem:[%s1 + $0xdc] sm:$0xf]
  %v119 = vld [vmem:[%s1 + $0xe0] sm:$0xf]
  %v120 = vld [vmem:[%s1 + $0xe4] sm:$0xf]
  %v121 = vld [vmem:[%s1 + $0xe8] sm:$0xf]
  %v122 = vld [vmem:[%s1 + $0xec] sm:$0xf]
  %v123 = vld [vmem:[%s1 + $0xf0] sm:$0xf]
  %v124 = vld [vmem:[%s1 + $0xf4] sm:$0xf]
  %v125 = vld [vmem:[%s1 + $0xf8] sm:$0xf]
  %v126 = vld [vmem:[%s1 + $0xfc] sm:$0xf]
  %v127 = vld [vmem:[%s1 + $0x100] sm:$0xf]
  %v128 = vld [vmem:[%s1 + $0x104] sm:$0xf]
  %v129 = vld [vmem:[%s1 + $0x108] sm:$0xf]
  %v130 = vld [vmem:[%s1 + $0x10c] sm:$0xf]
  %v131 = vld [vmem:[%s1 + $0x110] sm:$0xf]
  %v132 = vld [vmem:[%s1 + $0x114] sm:$0xf]
  %v133 = vld [vmem:[%s1 + $0x118] sm:$0xf]
  %v134 = vld [vmem:[%s1 + $0x11c] sm:$0xf]
  %v135 = vld [vmem:[%s1 + $0x120] sm:$0xf]
  %v136 = vld [vmem:[%s1 + $0x124] sm:$0xf]
  %v137 = vld [vmem:[%s1 + $0x128] sm:$0xf]
  %v138 = vld [vmem:[%s1 + $0x12c] sm:$0xf]
  %v139 = vld [vmem:[%s1 + $0x130] sm:$0xf]
  %v140 = vld [vmem:[%s1 + $0x134] sm:$0xf]
  %v141 = vld [vmem:[%s1 + $0x138] sm:$0xf]
  %v142 = vld [vmem:[%s1 + $0x13c] sm:$0xf]
  %v143 = vld [vmem:[%s1 + $0x140] sm:$0xf]
  %v144 = vld [vmem:[%s1 + $0x144] sm:$0xf]
  %v145 = vld [vmem:[%s1 + $0x148] sm:$0xf]
  %v146 = vld [vmem:[%s1 + $0x14c] sm:$0xf]
  %v147 = vld [vmem:[%s1 + $0x150] sm:$0xf]
  %v148 = vld [vmem:[%s1 + $0x154] sm:$0xf]
  %v149 = vld [vmem:[%s1 + $0x158] sm:$0xf]
  %v150 = vld [vmem:[%s1 + $0x15c] sm:$0xf]
  %v151 = vld [vmem:[%s1 + $0x160] sm:$0xf]
  %v152 = vld [vmem:[%s1 + $0x164] sm:$0xf]
  %v153 = vld [vmem:[%s2] sm:$0x1]
  %v155 = vlaneseq
  %v156 = vshrl.u32 %v155, 7
  %v157 = vsub.s32 0, %v156
  %v158 = vrot.slane %v153, %v157
  %v208 = vunpack.c.l.b16 %v15
  %v209 = vunpack.c.h.b16 %v15
  %v210 = vunpack.c.l.b16 %v16
  %v211 = vunpack.c.h.b16 %v16
  %v212 = vunpack.c.l.b16 %v17
  %v213 = vunpack.c.h.b16 %v17
  %v214 = vunpack.c.l.b16 %v18
  %v215 = vunpack.c.h.b16 %v18
  %v216 = vunpack.c.l.b16 %v19
  %v217 = vunpack.c.h.b16 %v19
  %v218 = vunpack.c.l.b16 %v20
  %v219 = vunpack.c.h.b16 %v20
  %v220 = vunpack.c.l.b16 %v21
  %v221 = vunpack.c.h.b16 %v21
  %v222 = vunpack.c.l.b16 %v22
  %v223 = vunpack.c.h.b16 %v22
  %v224 = vunpack.c.l.b16 %v23
  %v225 = vunpack.c.h.b16 %v23
  %v226 = vunpack.c.l.b16 %v24
  %v227 = vunpack.c.h.b16 %v24
  %v228 = vunpack.c.l.b16 %v25
  %v229 = vunpack.c.h.b16 %v25
  %v230 = vunpack.c.l.b16 %v26
  %v231 = vunpack.c.h.b16 %v26
  %v232 = vunpack.c.l.b16 %v27
  %v233 = vunpack.c.h.b16 %v27
  %v234 = vunpack.c.l.b16 %v28
  %v235 = vunpack.c.h.b16 %v28
  %v236 = vunpack.c.l.b16 %v29
  %v237 = vunpack.c.h.b16 %v29
  %v238 = vunpack.c.l.b16 %v30
  %v239 = vunpack.c.h.b16 %v30
  %v240 = vunpack.c.l.b16 %v31
  %v241 = vunpack.c.h.b16 %v31
  %v242 = vunpack.c.l.b16 %v32
  %v243 = vunpack.c.h.b16 %v32
  %v244 = vunpack.c.l.b16 %v33
  %v245 = vunpack.c.h.b16 %v33
  %v246 = vunpack.c.l.b16 %v34
  %v247 = vunpack.c.h.b16 %v34
  %v248 = vunpack.c.l.b16 %v35
  %v249 = vunpack.c.h.b16 %v35
  %v250 = vunpack.c.l.b16 %v36
  %v251 = vunpack.c.h.b16 %v36
  %v252 = vunpack.c.l.b16 %v37
  %v253 = vunpack.c.h.b16 %v37
  %v254 = vunpack.c.l.b16 %v38
  %v255 = vunpack.c.h.b16 %v38
  %v256 = vunpack.c.l.b16 %v39
  %v257 = vunpack.c.h.b16 %v39
  %v258 = vunpack.c.l.b16 %v40
  %v259 = vunpack.c.h.b16 %v40
  %v260 = vunpack.c.l.b16 %v41
  %v261 = vunpack.c.h.b16 %v41
  %v262 = vunpack.c.l.b16 %v42
  %v263 = vunpack.c.h.b16 %v42
  %v264 = vunpack.c.l.b16 %v43
  %v265 = vunpack.c.h.b16 %v43
  %v266 = vunpack.c.l.b16 %v44
  %v267 = vunpack.c.h.b16 %v44
  %v268 = vunpack.c.l.b16 %v45
  %v269 = vunpack.c.h.b16 %v45
  %v270 = vunpack.c.l.b16 %v46
  %v271 = vunpack.c.h.b16 %v46
  %v272 = vunpack.c.l.b16 %v47
  %v273 = vunpack.c.h.b16 %v47
  %v274 = vunpack.c.l.b16 %v48
  %v275 = vunpack.c.h.b16 %v48
  %v276 = vunpack.c.l.b16 %v49
  %v277 = vunpack.c.h.b16 %v49
  %v278 = vunpack.c.l.b16 %v50
  %v279 = vunpack.c.h.b16 %v50
  %v280 = vunpack.c.l.b16 %v51
  %v281 = vunpack.c.h.b16 %v51
  %v282 = vunpack.c.l.b16 %v52
  %v283 = vunpack.c.h.b16 %v52
  %v284 = vunpack.c.l.b16 %v53
  %v285 = vunpack.c.h.b16 %v53
  %v286 = vunpack.c.l.b16 %v54
  %v287 = vunpack.c.h.b16 %v54
  %v288 = vunpack.c.l.b16 %v55
  %v289 = vunpack.c.h.b16 %v55
  %v290 = vunpack.c.l.b16 %v56
  %v291 = vunpack.c.h.b16 %v56
  %v292 = vunpack.c.l.b16 %v57
  %v293 = vunpack.c.h.b16 %v57
  %v294 = vunpack.c.l.b16 %v58
  %v295 = vunpack.c.h.b16 %v58
  %v296 = vunpack.c.l.b16 %v59
  %v297 = vunpack.c.h.b16 %v59
  %v298 = vunpack.c.l.b16 %v60
  %v299 = vunpack.c.h.b16 %v60
  %v300 = vunpack.c.l.b16 %v61
  %v301 = vunpack.c.h.b16 %v61
  %v302 = vunpack.c.l.b16 %v62
  %v303 = vunpack.c.h.b16 %v62
  %v304 = vpack.c.b16 %v214, %v208
  %v305 = vpack.c.b16 %v215, %v209
  %v306 = vpack.c.b16 %v216, %v210
  %v307 = vpack.c.b16 %v217, %v211
  %v308 = vpack.c.b16 %v218, %v212
  %v309 = vpack.c.b16 %v219, %v213
  %v310 = vpack.c.b16 %v226, %v220
  %v311 = vpack.c.b16 %v227, %v221
  %v312 = vpack.c.b16 %v228, %v222
  %v313 = vpack.c.b16 %v229, %v223
  %v314 = vpack.c.b16 %v230, %v224
  %v315 = vpack.c.b16 %v231, %v225
  %v316 = vpack.c.b16 %v238, %v232
  %v317 = vpack.c.b16 %v239, %v233
  %v318 = vpack.c.b16 %v240, %v234
  %v319 = vpack.c.b16 %v241, %v235
  %v320 = vpack.c.b16 %v242, %v236
  %v321 = vpack.c.b16 %v243, %v237
  %v322 = vpack.c.b16 %v250, %v244
  %v323 = vpack.c.b16 %v251, %v245
  %v324 = vpack.c.b16 %v252, %v246
  %v325 = vpack.c.b16 %v253, %v247
  %v326 = vpack.c.b16 %v254, %v248
  %v327 = vpack.c.b16 %v255, %v249
  %v328 = vpack.c.b16 %v262, %v256
  %v329 = vpack.c.b16 %v263, %v257
  %v330 = vpack.c.b16 %v264, %v258
  %v331 = vpack.c.b16 %v265, %v259
  %v332 = vpack.c.b16 %v266, %v260
  %v333 = vpack.c.b16 %v267, %v261
  %v334 = vpack.c.b16 %v274, %v268
  %v335 = vpack.c.b16 %v275, %v269
  %v336 = vpack.c.b16 %v276, %v270
  %v337 = vpack.c.b16 %v277, %v271
  %v338 = vpack.c.b16 %v278, %v272
  %v339 = vpack.c.b16 %v279, %v273
  %v340 = vpack.c.b16 %v286, %v280
  %v341 = vpack.c.b16 %v287, %v281
  %v342 = vpack.c.b16 %v288, %v282
  %v343 = vpack.c.b16 %v289, %v283
  %v344 = vpack.c.b16 %v290, %v284
  %v345 = vpack.c.b16 %v291, %v285
  %v346 = vpack.c.b16 %v298, %v292
  %v347 = vpack.c.b16 %v299, %v293
  %v348 = vpack.c.b16 %v300, %v294
  %v349 = vpack.c.b16 %v301, %v295
  %v350 = vpack.c.b16 %v302, %v296
  %v351 = vpack.c.b16 %v303, %v297
  %v482 = vunpack.c.l.b16 %v63
  %v483 = vunpack.c.l.b16 %v64
  %v484 = vunpack.c.l.b16 %v65
  %v485 = vunpack.c.l.b16 %v66
  %v486 = vunpack.c.l.b16 %v67
  %v487 = vunpack.c.l.b16 %v68
  %v488 = vunpack.c.l.b16 %v69
  %v489 = vunpack.c.l.b16 %v70
  %v490 = vunpack.c.l.b16 %v71
  %v491 = vunpack.c.l.b16 %v72
  %v492 = vunpack.c.l.b16 %v73
  %v493 = vunpack.c.l.b16 %v74
  %v494 = vunpack.c.l.b16 %v75
  %v495 = vunpack.c.l.b16 %v76
  %v496 = vunpack.c.l.b16 %v77
  %v497 = vunpack.c.l.b16 %v78
  %v498 = vunpack.c.l.b16 %v79
  %v499 = vunpack.c.l.b16 %v80
  %v500 = vunpack.c.l.b16 %v81
  %v501 = vunpack.c.l.b16 %v82
  %v502 = vunpack.c.l.b16 %v83
  %v503 = vunpack.c.l.b16 %v84
  %v504 = vunpack.c.l.b16 %v85
  %v505 = vunpack.c.l.b16 %v86
  %v506 = vunpack.c.l.b16 %v87
  %v507 = vunpack.c.l.b16 %v88
  %v508 = vunpack.c.l.b16 %v89
  %v509 = vunpack.c.l.b16 %v90
  %v510 = vunpack.c.l.b16 %v91
  %v511 = vunpack.c.l.b16 %v92
  %v512 = vunpack.c.l.b16 %v93
  %v513 = vunpack.c.l.b16 %v94
  %v514 = vunpack.c.l.b16 %v95
  %v515 = vunpack.c.l.b16 %v96
  %v516 = vunpack.c.l.b16 %v97
  %v517 = vunpack.c.l.b16 %v98
  %v518 = vunpack.c.l.b16 %v99
  %v519 = vunpack.c.l.b16 %v100
  %v520 = vunpack.c.l.b16 %v101
  %v521 = vunpack.c.l.b16 %v102
  %v522 = vunpack.c.l.b16 %v103
  %v523 = vunpack.c.l.b16 %v104
  %v524 = vunpack.c.l.b16 %v105
  %v525 = vunpack.c.l.b16 %v106
  %v526 = vunpack.c.l.b16 %v107
  %v527 = vunpack.c.l.b16 %v108
  %v528 = vunpack.c.l.b16 %v109
  %v529 = vunpack.c.l.b16 %v110
  %v530 = vunpack.c.l.b16 %v111
  %v531 = vunpack.c.l.b16 %v112
  %v532 = vunpack.c.l.b16 %v113
  %v533 = vunpack.c.l.b16 %v114
  %v534 = vunpack.c.l.b16 %v115
  %v535 = vunpack.c.l.b16 %v116
  %v536 = vunpack.c.l.b16 %v117
  %v537 = vunpack.c.l.b16 %v118
  %v538 = vunpack.c.l.b16 %v119
  %v539 = vunpack.c.l.b16 %v120
  %v540 = vunpack.c.l.b16 %v121
  %v541 = vunpack.c.l.b16 %v122
  %v542 = vunpack.c.l.b16 %v123
  %v543 = vunpack.c.l.b16 %v124
  %v544 = vunpack.c.l.b16 %v125
  %v545 = vunpack.c.l.b16 %v126
  %v546 = vunpack.c.l.b16 %v127
  %v547 = vunpack.c.l.b16 %v128
  %v548 = vunpack.c.l.b16 %v129
  %v549 = vunpack.c.l.b16 %v130
  %v550 = vunpack.c.l.b16 %v131
  %v551 = vunpack.c.l.b16 %v132
  %v552 = vunpack.c.l.b16 %v133
  %v553 = vunpack.c.l.b16 %v134
  %v554 = vunpack.c.l.b16 %v135
  %v555 = vunpack.c.l.b16 %v136
  %v556 = vunpack.c.l.b16 %v137
  %v557 = vunpack.c.l.b16 %v138
  %v558 = vunpack.c.l.b16 %v139
  %v559 = vunpack.c.l.b16 %v140
  %v560 = vunpack.c.l.b16 %v141
  %v561 = vunpack.c.l.b16 %v142
  %v562 = vunpack.c.l.b16 %v143
  %v563 = vunpack.c.l.b16 %v144
  %v564 = vunpack.c.l.b16 %v145
  %v565 = vunpack.c.l.b16 %v146
  %v566 = vunpack.c.l.b16 %v147
  %v567 = vunpack.c.l.b16 %v148
  %v568 = vunpack.c.l.b16 %v149
  %v569 = vunpack.c.l.b16 %v150
  %v570 = vunpack.c.l.b16 %v151
  %v571 = vunpack.c.l.b16 %v152
  %v572 = vpack.c.b16 %v483, %v482
  %v573 = vpack.c.b16 %v485, %v484
  %v574 = vpack.c.b16 %v487, %v486
  %v575 = vpack.c.b16 %v489, %v488
  %v576 = vpack.c.b16 %v491, %v490
  %v577 = vpack.c.b16 %v493, %v492
  %v578 = vpack.c.b16 %v495, %v494
  %v579 = vpack.c.b16 %v497, %v496
  %v580 = vpack.c.b16 %v499, %v498
  %v581 = vpack.c.b16 %v501, %v500
  %v582 = vpack.c.b16 %v503, %v502
  %v583 = vpack.c.b16 %v505, %v504
  %v584 = vpack.c.b16 %v507, %v506
  %v585 = vpack.c.b16 %v509, %v508
  %v586 = vpack.c.b16 %v511, %v510
  %v587 = vpack.c.b16 %v513, %v512
  %v588 = vpack.c.b16 %v515, %v514
  %v589 = vpack.c.b16 %v517, %v516
  %v590 = vpack.c.b16 %v519, %v518
  %v591 = vpack.c.b16 %v521, %v520
  %v592 = vpack.c.b16 %v523, %v522
  %v593 = vpack.c.b16 %v525, %v524
  %v594 = vpack.c.b16 %v527, %v526
  %v595 = vpack.c.b16 %v529, %v528
  %v596 = vpack.c.b16 %v531, %v530
  %v597 = vpack.c.b16 %v533, %v532
  %v598 = vpack.c.b16 %v535, %v534
  %v599 = vpack.c.b16 %v537, %v536
  %v600 = vpack.c.b16 %v539, %v538
  %v601 = vpack.c.b16 %v541, %v540
  %v602 = vpack.c.b16 %v543, %v542
  %v603 = vpack.c.b16 %v545, %v544
  %v604 = vpack.c.b16 %v547, %v546
  %v605 = vpack.c.b16 %v549, %v548
  %v606 = vpack.c.b16 %v551, %v550
  %v607 = vpack.c.b16 %v553, %v552
  %v608 = vpack.c.b16 %v555, %v554
  %v609 = vpack.c.b16 %v557, %v556
  %v610 = vpack.c.b16 %v559, %v558
  %v611 = vpack.c.b16 %v561, %v560
  %v612 = vpack.c.b16 %v563, %v562
  %v613 = vpack.c.b16 %v565, %v564
  %v614 = vpack.c.b16 %v567, %v566
  %v615 = vpack.c.b16 %v569, %v568
  %v616 = vpack.c.b16 %v571, %v570
  %vm662 = vcmask 654336
  %v664 = vsel %vm662, %v309, 0
  %v667 = vsel %vm662, %v315, 0
  %v670 = vsel %vm662, %v321, 0
  %v673 = vsel %vm662, %v327, 0
  %v676 = vsel %vm662, %v333, 0
  %v679 = vsel %vm662, %v339, 0
  %v682 = vsel %vm662, %v345, 0
  %v685 = vsel %vm662, %v351, 0
  %687 = vmatprep.subr.bf16.mxu0 0
  %688 = vmatpush1.bf16.msra.mxu0 %v572
  %689 = vmatprep.subr.bf16.mxu0 0
  %690 = vmatpush1.bf16.msra.mxu0 %v573
  %691 = vmatprep.subr.bf16.mxu0 0
  %692 = vmatpush1.bf16.msra.mxu0 %v574
  %693 = vmatprep.subr.bf16.mxu0 0
  %694 = vmatpush1.bf16.msra.mxu0 %v575
  %695 = vmatprep.subr.bf16.mxu0 0
  %696 = vmatpush1.bf16.msra.mxu0 %v576
  %697 = vmatprep.subr.bf16.mxu0 0
  %698 = vmatpush1.bf16.msra.mxu0 %v577
  %699 = vmatprep.subr.bf16.mxu0 0
  %700 = vmatpush1.bf16.msra.mxu0 %v578
  %701 = vmatprep.subr.bf16.mxu0 0
  %702 = vmatpush1.bf16.msra.mxu0 %v579
  %703 = vmatprep.subr.bf16.mxu0 0
  %704 = vmatpush1.bf16.msra.mxu0 %v580
  %705 = vmatprep.subr.bf16.mxu0 0
  %706 = vmatpush1.bf16.msra.mxu0 %v581
  %707 = vmatprep.subr.bf16.mxu0 0
  %708 = vmatpush1.bf16.msra.mxu0 %v582
  %709 = vmatprep.subr.bf16.mxu0 0
  %710 = vmatpush1.bf16.msra.mxu0 %v583
  %711 = vmatprep.subr.bf16.mxu0 0
  %712 = vmatpush1.bf16.msra.mxu0 %v584
  %713 = vmatprep.subr.bf16.mxu0 0
  %714 = vmatpush1.bf16.msra.mxu0 %v585
  %715 = vmatprep.subr.bf16.mxu0 0
  %716 = vmatpush1.bf16.msra.mxu0 %v586
  %717 = vmatprep.subr.bf16.mxu0 0
  %718 = vmatpush1.bf16.msra.mxu0 %v587
  %719 = vmatprep.mubr.bf16.mxu0 %v305
  %720 = vmatmul.mubr.bf16.gmra.mrb[0].mxu0 %v304
  %v721 = vpop.f32.mrb[0].mxu0
  %v722 = vadd.f32 %v158, %v721
  %v723 = vpop.f32.mrb[0].mxu0
  %v724 = vpop.f32.mrb[0].mxu0
  %v725 = vadd.f32 %v158, %v724
  %v726 = vpop.f32.mrb[0].mxu0
  %727 = vmatprep.mubr.bf16.mxu0 %v311
  %728 = vmatmul.mubr.bf16.gmra.mrb[0].mxu0 %v310
  %v729 = vpop.f32.mrb[0].mxu0
  %v730 = vadd.f32 %v158, %v729
  %v731 = vpop.f32.mrb[0].mxu0
  %v732 = vpop.f32.mrb[0].mxu0
  %v733 = vadd.f32 %v158, %v732
  %v734 = vpop.f32.mrb[0].mxu0
  %735 = vmatprep.mubr.bf16.mxu0 %v317
  %736 = vmatmul.mubr.bf16.gmra.mrb[0].mxu0 %v316
  %v737 = vpop.f32.mrb[0].mxu0
  %v738 = vadd.f32 %v158, %v737
  %v739 = vpop.f32.mrb[0].mxu0
  %v740 = vpop.f32.mrb[0].mxu0
  %v741 = vadd.f32 %v158, %v740
  %v742 = vpop.f32.mrb[0].mxu0
  %743 = vmatprep.mubr.bf16.mxu0 %v323
  %744 = vmatmul.mubr.bf16.gmra.mrb[0].mxu0 %v322
  %v745 = vpop.f32.mrb[0].mxu0
  %v746 = vadd.f32 %v158, %v745
  %v747 = vpop.f32.mrb[0].mxu0
  %v748 = vpop.f32.mrb[0].mxu0
  %v749 = vadd.f32 %v158, %v748
  %v750 = vpop.f32.mrb[0].mxu0
  %751 = vmatprep.mubr.bf16.mxu0 %v329
  %752 = vmatmul.mubr.bf16.gmra.mrb[0].mxu0 %v328
  %v753 = vpop.f32.mrb[0].mxu0
  %v754 = vadd.f32 %v158, %v753
  %v755 = vpop.f32.mrb[0].mxu0
  %v756 = vpop.f32.mrb[0].mxu0
  %v757 = vadd.f32 %v158, %v756
  %v758 = vpop.f32.mrb[0].mxu0
  %759 = vmatprep.mubr.bf16.mxu0 %v335
  %760 = vmatmul.mubr.bf16.gmra.mrb[0].mxu0 %v334
  %v761 = vpop.f32.mrb[0].mxu0
  %v762 = vadd.f32 %v158, %v761
  %v763 = vpop.f32.mrb[0].mxu0
  %v764 = vpop.f32.mrb[0].mxu0
  %v765 = vadd.f32 %v158, %v764
  %v766 = vpop.f32.mrb[0].mxu0
  %767 = vmatprep.mubr.bf16.mxu0 %v341
  %768 = vmatmul.mubr.bf16.gmra.mrb[0].mxu0 %v340
  %v769 = vpop.f32.mrb[0].mxu0
  %v770 = vadd.f32 %v158, %v769
  %v771 = vpop.f32.mrb[0].mxu0
  %v772 = vpop.f32.mrb[0].mxu0
  %v773 = vadd.f32 %v158, %v772
  %v774 = vpop.f32.mrb[0].mxu0
  %775 = vmatprep.mubr.bf16.mxu0 %v347
  %776 = vmatmul.mubr.bf16.gmra.mrb[0].mxu0 %v346
  %v777 = vpop.f32.mrb[0].mxu0
  %v778 = vadd.f32 %v158, %v777
  %v779 = vpop.f32.mrb[0].mxu0
  %v780 = vpop.f32.mrb[0].mxu0
  %v781 = vadd.f32 %v158, %v780
  %v782 = vpop.f32.mrb[0].mxu0
  %783 = vdwg.mxu0
  %784 = vmatprep.subr.bf16.mxu0 0
  %785 = vmatpush1.bf16.msra.mxu0 %v588
  %786 = vmatprep.subr.bf16.mxu0 0
  %787 = vmatpush1.bf16.msra.mxu0 %v589
  %788 = vmatprep.subr.bf16.mxu0 0
  %789 = vmatpush1.bf16.msra.mxu0 %v590
  %790 = vmatprep.subr.bf16.mxu0 0
  %791 = vmatpush1.bf16.msra.mxu0 %v591
  %792 = vmatprep.subr.bf16.mxu0 0
  %793 = vmatpush1.bf16.msra.mxu0 %v592
  %794 = vmatprep.subr.bf16.mxu0 0
  %795 = vmatpush1.bf16.msra.mxu0 %v593
  %796 = vmatprep.subr.bf16.mxu0 0
  %797 = vmatpush1.bf16.msra.mxu0 %v594
  %798 = vmatprep.subr.bf16.mxu0 0
  %799 = vmatpush1.bf16.msra.mxu0 %v595
  %800 = vmatprep.subr.bf16.mxu0 0
  %801 = vmatpush1.bf16.msra.mxu0 %v596
  %802 = vmatprep.subr.bf16.mxu0 0
  %803 = vmatpush1.bf16.msra.mxu0 %v597
  %804 = vmatprep.subr.bf16.mxu0 0
  %805 = vmatpush1.bf16.msra.mxu0 %v598
  %806 = vmatprep.subr.bf16.mxu0 0
  %807 = vmatpush1.bf16.msra.mxu0 %v599
  %808 = vmatprep.subr.bf16.mxu0 0
  %809 = vmatpush1.bf16.msra.mxu0 %v600
  %810 = vmatprep.subr.bf16.mxu0 0
  %811 = vmatpush1.bf16.msra.mxu0 %v601
  %812 = vmatprep.subr.bf16.mxu0 0
  %813 = vmatpush1.bf16.msra.mxu0 %v602
  %814 = vmatprep.subr.bf16.mxu0 0
  %815 = vmatpush1.bf16.msra.mxu0 %v603
  %816 = vmatprep.mubr.bf16.mxu0 %v307
  %817 = vmatmul.mubr.bf16.gmra.mrb[0].mxu0 %v306
  %v818 = vpop.f32.mrb[0].mxu0
  %v819 = vadd.f32 %v722, %v818
  %v820 = vpop.f32.mrb[0].mxu0
  %v821 = vpop.f32.mrb[0].mxu0
  %v822 = vadd.f32 %v725, %v821
  %v823 = vpop.f32.mrb[0].mxu0
  %824 = vmatprep.mubr.bf16.mxu0 %v313
  %825 = vmatmul.mubr.bf16.gmra.mrb[0].mxu0 %v312
  %v826 = vpop.f32.mrb[0].mxu0
  %v827 = vadd.f32 %v730, %v826
  %v828 = vpop.f32.mrb[0].mxu0
  %v829 = vpop.f32.mrb[0].mxu0
  %v830 = vadd.f32 %v733, %v829
  %v831 = vpop.f32.mrb[0].mxu0
  %832 = vmatprep.mubr.bf16.mxu0 %v319
  %833 = vmatmul.mubr.bf16.gmra.mrb[0].mxu0 %v318
  %v834 = vpop.f32.mrb[0].mxu0
  %v835 = vadd.f32 %v738, %v834
  %v836 = vpop.f32.mrb[0].mxu0
  %v837 = vpop.f32.mrb[0].mxu0
  %v838 = vadd.f32 %v741, %v837
  %v839 = vpop.f32.mrb[0].mxu0
  %840 = vmatprep.mubr.bf16.mxu0 %v325
  %841 = vmatmul.mubr.bf16.gmra.mrb[0].mxu0 %v324
  %v842 = vpop.f32.mrb[0].mxu0
  %v843 = vadd.f32 %v746, %v842
  %v844 = vpop.f32.mrb[0].mxu0
  %v845 = vpop.f32.mrb[0].mxu0
  %v846 = vadd.f32 %v749, %v845
  %v847 = vpop.f32.mrb[0].mxu0
  %848 = vmatprep.mubr.bf16.mxu0 %v331
  %849 = vmatmul.mubr.bf16.gmra.mrb[0].mxu0 %v330
  %v850 = vpop.f32.mrb[0].mxu0
  %v851 = vadd.f32 %v754, %v850
  %v852 = vpop.f32.mrb[0].mxu0
  %v853 = vpop.f32.mrb[0].mxu0
  %v854 = vadd.f32 %v757, %v853
  %v855 = vpop.f32.mrb[0].mxu0
  %856 = vmatprep.mubr.bf16.mxu0 %v337
  %857 = vmatmul.mubr.bf16.gmra.mrb[0].mxu0 %v336
  %v858 = vpop.f32.mrb[0].mxu0
  %v859 = vadd.f32 %v762, %v858
  %v860 = vpop.f32.mrb[0].mxu0
  %v861 = vpop.f32.mrb[0].mxu0
  %v862 = vadd.f32 %v765, %v861
  %v863 = vpop.f32.mrb[0].mxu0
  %864 = vmatprep.mubr.bf16.mxu0 %v343
  %865 = vmatmul.mubr.bf16.gmra.mrb[0].mxu0 %v342
  %v866 = vpop.f32.mrb[0].mxu0
  %v867 = vadd.f32 %v770, %v866
  %v868 = vpop.f32.mrb[0].mxu0
  %v869 = vpop.f32.mrb[0].mxu0
  %v870 = vadd.f32 %v773, %v869
  %v871 = vpop.f32.mrb[0].mxu0
  %872 = vmatprep.mubr.bf16.mxu0 %v349
  %873 = vmatmul.mubr.bf16.gmra.mrb[0].mxu0 %v348
  %v874 = vpop.f32.mrb[0].mxu0
  %v875 = vadd.f32 %v778, %v874
  %v876 = vpop.f32.mrb[0].mxu0
  %v877 = vpop.f32.mrb[0].mxu0
  %v878 = vadd.f32 %v781, %v877
  %v879 = vpop.f32.mrb[0].mxu0
  %880 = vdwg.mxu0
  %881 = vmatprep.subr.bf16.mxu0 0
  %882 = vmatpush1.bf16.msra.mxu0 %v604
  %883 = vmatprep.subr.bf16.mxu0 0
  %884 = vmatpush1.bf16.msra.mxu0 %v605
  %885 = vmatprep.subr.bf16.mxu0 0
  %886 = vmatpush1.bf16.msra.mxu0 %v606
  %887 = vmatprep.subr.bf16.mxu0 0
  %888 = vmatpush1.bf16.msra.mxu0 %v607
  %889 = vmatprep.subr.bf16.mxu0 0
  %890 = vmatpush1.bf16.msra.mxu0 %v608
  %891 = vmatprep.subr.bf16.mxu0 0
  %892 = vmatpush1.bf16.msra.mxu0 %v609
  %893 = vmatprep.subr.bf16.mxu0 0
  %894 = vmatpush1.bf16.msra.mxu0 %v610
  %895 = vmatprep.subr.bf16.mxu0 0
  %896 = vmatpush1.bf16.msra.mxu0 %v611
  %897 = vmatprep.subr.bf16.mxu0 0
  %898 = vmatpush1.bf16.msra.mxu0 %v612
  %899 = vmatprep.subr.bf16.mxu0 0
  %900 = vmatpush1.bf16.msra.mxu0 %v613
  %901 = vmatprep.subr.bf16.mxu0 0
  %902 = vmatpush1.bf16.msra.mxu0 %v614
  %903 = vmatprep.subr.bf16.mxu0 0
  %904 = vmatpush1.bf16.msra.mxu0 %v615
  %905 = vmatprep.subr.bf16.mxu0 0
  %906 = vmatpush1.bf16.msra.mxu0 %v616
  %907 = vmatprep.subr.bf16.mxu0 0
  %908 = vmatpush1.bf16.msra.mxu0 0
  %909 = vmatprep.subr.bf16.mxu0 0
  %910 = vmatpush1.bf16.msra.mxu0 0
  %911 = vmatprep.subr.bf16.mxu0 0
  %912 = vmatpush1.bf16.msra.mxu0 0
  %913 = vmatprep.mubr.bf16.mxu0 %v664
  %914 = vmatmul.mubr.bf16.gmra.mrb[0].mxu0 %v308
  %v915 = vpop.f32.mrb[0].mxu0
  %v916 = vadd.f32 %v819, %v915
  %v917 = vpop.f32.mrb[0].mxu0
  %v918 = vpop.f32.mrb[0].mxu0
  %v919 = vadd.f32 %v822, %v918
  %v920 = vpop.f32.mrb[0].mxu0
  %921 = vmatprep.mubr.bf16.mxu0 %v667
  %922 = vmatmul.mubr.bf16.gmra.mrb[0].mxu0 %v314
  %v923 = vpop.f32.mrb[0].mxu0
  %v924 = vadd.f32 %v827, %v923
  %v925 = vpop.f32.mrb[0].mxu0
  %v926 = vpop.f32.mrb[0].mxu0
  %v927 = vadd.f32 %v830, %v926
  %v928 = vpop.f32.mrb[0].mxu0
  %929 = vmatprep.mubr.bf16.mxu0 %v670
  %930 = vmatmul.mubr.bf16.gmra.mrb[0].mxu0 %v320
  %v931 = vpop.f32.mrb[0].mxu0
  %v932 = vadd.f32 %v835, %v931
  %v933 = vpop.f32.mrb[0].mxu0
  %v934 = vpop.f32.mrb[0].mxu0
  %v935 = vadd.f32 %v838, %v934
  %v936 = vpop.f32.mrb[0].mxu0
  %937 = vmatprep.mubr.bf16.mxu0 %v673
  %938 = vmatmul.mubr.bf16.gmra.mrb[0].mxu0 %v326
  %v939 = vpop.f32.mrb[0].mxu0
  %v940 = vadd.f32 %v843, %v939
  %v941 = vpop.f32.mrb[0].mxu0
  %v942 = vpop.f32.mrb[0].mxu0
  %v943 = vadd.f32 %v846, %v942
  %v944 = vpop.f32.mrb[0].mxu0
  %945 = vmatprep.mubr.bf16.mxu0 %v676
  %946 = vmatmul.mubr.bf16.gmra.mrb[0].mxu0 %v332
  %v947 = vpop.f32.mrb[0].mxu0
  %v948 = vadd.f32 %v851, %v947
  %v949 = vpop.f32.mrb[0].mxu0
  %v950 = vpop.f32.mrb[0].mxu0
  %v951 = vadd.f32 %v854, %v950
  %v952 = vpop.f32.mrb[0].mxu0
  %953 = vmatprep.mubr.bf16.mxu0 %v679
  %954 = vmatmul.mubr.bf16.gmra.mrb[0].mxu0 %v338
  %v955 = vpop.f32.mrb[0].mxu0
  %v956 = vadd.f32 %v859, %v955
  %v957 = vpop.f32.mrb[0].mxu0
  %v958 = vpop.f32.mrb[0].mxu0
  %v959 = vadd.f32 %v862, %v958
  %v960 = vpop.f32.mrb[0].mxu0
  %961 = vmatprep.mubr.bf16.mxu0 %v682
  %962 = vmatmul.mubr.bf16.gmra.mrb[0].mxu0 %v344
  %v963 = vpop.f32.mrb[0].mxu0
  %v964 = vadd.f32 %v867, %v963
  %v965 = vpop.f32.mrb[0].mxu0
  %v966 = vpop.f32.mrb[0].mxu0
  %v967 = vadd.f32 %v870, %v966
  %v968 = vpop.f32.mrb[0].mxu0
  %969 = vmatprep.mubr.bf16.mxu0 %v685
  %970 = vmatmul.mubr.bf16.gmra.mrb[0].mxu0 %v350
  %v971 = vpop.f32.mrb[0].mxu0
  %v972 = vadd.f32 %v875, %v971
  %v973 = vpop.f32.mrb[0].mxu0
  %v974 = vpop.f32.mrb[0].mxu0
  %v975 = vadd.f32 %v878, %v974
  %v976 = vpop.f32.mrb[0].mxu0
  %977 = vdwg.mxu0
  %v978 = vmax.f32 %v916, 0.0
  %v979 = vmax.f32 %v919, 0.0
  %v980 = vmax.f32 %v924, 0.0
  %v981 = vmax.f32 %v927, 0.0
  %v982 = vmax.f32 %v932, 0.0
  %v983 = vmax.f32 %v935, 0.0
  %v984 = vmax.f32 %v940, 0.0
  %v985 = vmax.f32 %v943, 0.0
  %v986 = vmax.f32 %v948, 0.0
  %v987 = vmax.f32 %v951, 0.0
  %v988 = vmax.f32 %v956, 0.0
  %v989 = vmax.f32 %v959, 0.0
  %v990 = vmax.f32 %v964, 0.0
  %v991 = vmax.f32 %v967, 0.0
  %v992 = vmax.f32 %v972, 0.0
  %v993 = vmax.f32 %v975, 0.0
  %v994 = vpack.c.bf16 %v979, %v978
  %v995 = vpack.c.bf16 %v981, %v980
  %v996 = vpack.c.bf16 %v983, %v982
  %v997 = vpack.c.bf16 %v985, %v984
  %v998 = vpack.c.bf16 %v987, %v986
  %v999 = vpack.c.bf16 %v989, %v988
  %v1000 = vpack.c.bf16 %v991, %v990
  %v1001 = vpack.c.bf16 %v993, %v992
  %v1010 = vunpack.c.l.b16 %v994
  %v1011 = vunpack.c.h.b16 %v994
  %v1012 = vunpack.c.l.b16 %v995
  %v1013 = vunpack.c.h.b16 %v995
  %v1014 = vunpack.c.l.b16 %v996
  %v1015 = vunpack.c.h.b16 %v996
  %v1016 = vunpack.c.l.b16 %v997
  %v1017 = vunpack.c.h.b16 %v997
  %v1018 = vunpack.c.l.b16 %v998
  %v1019 = vunpack.c.h.b16 %v998
  %v1020 = vunpack.c.l.b16 %v999
  %v1021 = vunpack.c.h.b16 %v999
  %v1022 = vunpack.c.l.b16 %v1000
  %v1023 = vunpack.c.h.b16 %v1000
  %v1024 = vunpack.c.l.b16 %v1001
  %v1025 = vunpack.c.h.b16 %v1001
  %v1026 = vpack.c.b16 %v1010, %v1010
  %v1027 = vpack.c.b16 %v1011, %v1011
  %v1028 = vpack.c.b16 %v1012, %v1012
  %v1029 = vpack.c.b16 %v1013, %v1013
  %v1030 = vpack.c.b16 %v1014, %v1014
  %v1031 = vpack.c.b16 %v1015, %v1015
  %v1032 = vpack.c.b16 %v1016, %v1016
  %v1033 = vpack.c.b16 %v1017, %v1017
  %v1034 = vpack.c.b16 %v1018, %v1018
  %v1035 = vpack.c.b16 %v1019, %v1019
  %v1036 = vpack.c.b16 %v1020, %v1020
  %v1037 = vpack.c.b16 %v1021, %v1021
  %v1038 = vpack.c.b16 %v1022, %v1022
  %v1039 = vpack.c.b16 %v1023, %v1023
  %v1040 = vpack.c.b16 %v1024, %v1024
  %v1041 = vpack.c.b16 %v1025, %v1025
  %vm1058 = vcmask 257024
  %1059 = vst.msk [vmem:[%s3] sm:$0xf] %vm1058, %v1026
  %1060 = vst.msk [vmem:[%s3 + $0x4] sm:$0xf] %vm1058, %v1027
  %1061 = vst.msk [vmem:[%s3 + $0x8] sm:$0xf] %vm1058, %v1028
  %1062 = vst.msk [vmem:[%s3 + $0xc] sm:$0xf] %vm1058, %v1029
  %1063 = vst.msk [vmem:[%s3 + $0x10] sm:$0xf] %vm1058, %v1030
  %1064 = vst.msk [vmem:[%s3 + $0x14] sm:$0xf] %vm1058, %v1031
  %1065 = vst.msk [vmem:[%s3 + $0x18] sm:$0xf] %vm1058, %v1032
  %1066 = vst.msk [vmem:[%s3 + $0x1c] sm:$0xf] %vm1058, %v1033
  %1067 = vst.msk [vmem:[%s3 + $0x20] sm:$0xf] %vm1058, %v1034
  %1068 = vst.msk [vmem:[%s3 + $0x24] sm:$0xf] %vm1058, %v1035
  %1069 = vst.msk [vmem:[%s3 + $0x28] sm:$0xf] %vm1058, %v1036
  %1070 = vst.msk [vmem:[%s3 + $0x2c] sm:$0xf] %vm1058, %v1037
  %1071 = vst.msk [vmem:[%s3 + $0x30] sm:$0xf] %vm1058, %v1038
  %1072 = vst.msk [vmem:[%s3 + $0x34] sm:$0xf] %vm1058, %v1039
  %1073 = vst.msk [vmem:[%s3 + $0x38] sm:$0xf] %vm1058, %v1040
  %1074 = vst.msk [vmem:[%s3 + $0x3c] sm:$0xf] %vm1058, %v1041
  // Predicated region
  $region14: #{deeplabv3plus_forward.16} parent=0 // pred_check
    _
  $region15: #{deeplabv3plus_forward.16} parent=0 // pred_check_branch
    %1076 = sbr.rel (0) target = $region17
  $region16: #{deeplabv3plus_forward.16} parent=0 // pred_region
    _
  $region17: #{deeplabv3plus_forward.16} parent=0 // pred_fallthru
    _
  // Predicated region
  $region18: #{deeplabv3plus_forward.16} parent=0 // pred_check
    _
  $region19: #{deeplabv3plus_forward.16} parent=0 // pred_check_branch
    %1078 = sbr.rel (0) target = $region21
  $region20: #{deeplabv3plus_forward.16} parent=0 // pred_region
    _
  $region21: #{deeplabv3plus_forward.16} parent=0 // pred_fallthru
    _

// kernel: deeplabv3plus_forward.17
$region0: #{deeplabv3plus_forward.17}
  #allocation0 [shape = 'u32[]', space=smem, size = 0x4, offset = 0x4, fixed_abs, tag = 'smem constant byte address 0x4 - core index']
  #allocation1 [shape = 'u32[144,128]{1,0:T(1,128)}', space=vmem, size = 0x12000, scoped, tag = 'internal scratch']
  %s0 = inlined_call_operand.vmem [shape: bf16[128,288], index: 0, kind: input, shape index: {}]
  %s1 = inlined_call_operand.vmem [shape: bf16[288,32], index: 1, kind: input, shape index: {}]
  %s2 = inlined_call_operand.vmem [shape: f32[1,32], index: 2, kind: input, shape index: {}]
  %s3 = inlined_call_operand.vmem [shape: bf16[128,32], index: 3, kind: output, shape index: {}]
  %s4 = sld [smem:[#allocation0]]
  $region22: #{deeplabv3plus_forward.17} parent=0
    _
  %s6 = ssub.s32 1, %s4
  %s7 = scalar_select 0, %s6, %s4
  // Predicated region
  $region2: #{deeplabv3plus_forward.17} parent=0 // pred_check
    _
  $region3: #{deeplabv3plus_forward.17} parent=0 // pred_check_branch
    %9 = sbr.rel (0) target = $region5
  $region4: #{deeplabv3plus_forward.17} parent=0 // pred_region
    _
  $region5: #{deeplabv3plus_forward.17} parent=0 // pred_fallthru
    _
  // Predicated region
  $region6: #{deeplabv3plus_forward.17} parent=0 // pred_check
    _
  $region7: #{deeplabv3plus_forward.17} parent=0 // pred_check_branch
    %11 = sbr.rel (0) target = $region9
  $region8: #{deeplabv3plus_forward.17} parent=0 // pred_region
    _
  $region9: #{deeplabv3plus_forward.17} parent=0 // pred_fallthru
    _
  // Predicated region
  $region10: #{deeplabv3plus_forward.17} parent=0 // pred_check
    _
  $region11: #{deeplabv3plus_forward.17} parent=0 // pred_check_branch
    %13 = sbr.rel (0) target = $region13
  $region12: #{deeplabv3plus_forward.17} parent=0 // pred_region
    _
  $region13: #{deeplabv3plus_forward.17} parent=0 // pred_fallthru
    _
  %v15 = vld [vmem:[%s0] sm:$0xff]
  %v16 = vld [vmem:[%s0 + $0x8] sm:$0xf]
  %v17 = vld [vmem:[%s0 + $0xc] sm:$0xff]
  %v18 = vld [vmem:[%s0 + $0x14] sm:$0xf]
  %v19 = vld [vmem:[%s0 + $0x18] sm:$0xff]
  %v20 = vld [vmem:[%s0 + $0x20] sm:$0xf]
  %v21 = vld [vmem:[%s0 + $0x24] sm:$0xff]
  %v22 = vld [vmem:[%s0 + $0x2c] sm:$0xf]
  %v23 = vld [vmem:[%s0 + $0x30] sm:$0xff]
  %v24 = vld [vmem:[%s0 + $0x38] sm:$0xf]
  %v25 = vld [vmem:[%s0 + $0x3c] sm:$0xff]
  %v26 = vld [vmem:[%s0 + $0x44] sm:$0xf]
  %v27 = vld [vmem:[%s0 + $0x48] sm:$0xff]
  %v28 = vld [vmem:[%s0 + $0x50] sm:$0xf]
  %v29 = vld [vmem:[%s0 + $0x54] sm:$0xff]
  %v30 = vld [vmem:[%s0 + $0x5c] sm:$0xf]
  %v31 = vld [vmem:[%s0 + $0x60] sm:$0xff]
  %v32 = vld [vmem:[%s0 + $0x68] sm:$0xf]
  %v33 = vld [vmem:[%s0 + $0x6c] sm:$0xff]
  %v34 = vld [vmem:[%s0 + $0x74] sm:$0xf]
  %v35 = vld [vmem:[%s0 + $0x78] sm:$0xff]
  %v36 = vld [vmem:[%s0 + $0x80] sm:$0xf]
  %v37 = vld [vmem:[%s0 + $0x84] sm:$0xff]
  %v38 = vld [vmem:[%s0 + $0x8c] sm:$0xf]
  %v39 = vld [vmem:[%s0 + $0x90] sm:$0xff]
  %v40 = vld [vmem:[%s0 + $0x98] sm:$0xf]
  %v41 = vld [vmem:[%s0 + $0x9c] sm:$0xff]
  %v42 = vld [vmem:[%s0 + $0xa4] sm:$0xf]
  %v43 = vld [vmem:[%s0 + $0xa8] sm:$0xff]
  %v44 = vld [vmem:[%s0 + $0xb0] sm:$0xf]
  %v45 = vld [vmem:[%s0 + $0xb4] sm:$0xff]
  %v46 = vld [vmem:[%s0 + $0xbc] sm:$0xf]
  %v47 = vld [vmem:[%s1] sm:$0xf]
  %v48 = vld [vmem:[%s1 + $0x4] sm:$0xf]
  %v49 = vld [vmem:[%s1 + $0x8] sm:$0xf]
  %v50 = vld [vmem:[%s1 + $0xc] sm:$0xf]
  %v51 = vld [vmem:[%s1 + $0x10] sm:$0xf]
  %v52 = vld [vmem:[%s1 + $0x14] sm:$0xf]
  %v53 = vld [vmem:[%s1 + $0x18] sm:$0xf]
  %v54 = vld [vmem:[%s1 + $0x1c] sm:$0xf]
  %v55 = vld [vmem:[%s1 + $0x20] sm:$0xf]
  %v56 = vld [vmem:[%s1 + $0x24] sm:$0xf]
  %v57 = vld [vmem:[%s1 + $0x28] sm:$0xf]
  %v58 = vld [vmem:[%s1 + $0x2c] sm:$0xf]
  %v59 = vld [vmem:[%s1 + $0x30] sm:$0xf]
  %v60 = vld [vmem:[%s1 + $0x34] sm:$0xf]
  %v61 = vld [vmem:[%s1 + $0x38] sm:$0xf]
  %v62 = vld [vmem:[%s1 + $0x3c] sm:$0xf]
  %v63 = vld [vmem:[%s1 + $0x40] sm:$0xf]
  %v64 = vld [vmem:[%s1 + $0x44] sm:$0xf]
  %v65 = vld [vmem:[%s1 + $0x48] sm:$0xf]
  %v66 = vld [vmem:[%s1 + $0x4c] sm:$0xf]
  %v67 = vld [vmem:[%s1 + $0x50] sm:$0xf]
  %v68 = vld [vmem:[%s1 + $0x54] sm:$0xf]
  %v69 = vld [vmem:[%s1 + $0x58] sm:$0xf]
  %v70 = vld [vmem:[%s1 + $0x5c] sm:$0xf]
  %v71 = vld [vmem:[%s1 + $0x60] sm:$0xf]
  %v72 = vld [vmem:[%s1 + $0x64] sm:$0xf]
  %v73 = vld [vmem:[%s1 + $0x68] sm:$0xf]
  %v74 = vld [vmem:[%s1 + $0x6c] sm:$0xf]
  %v75 = vld [vmem:[%s1 + $0x70] sm:$0xf]
  %v76 = vld [vmem:[%s1 + $0x74] sm:$0xf]
  %v77 = vld [vmem:[%s1 + $0x78] sm:$0xf]
  %v78 = vld [vmem:[%s1 + $0x7c] sm:$0xf]
  %v79 = vld [vmem:[%s1 + $0x80] sm:$0xf]
  %v80 = vld [vmem:[%s1 + $0x84] sm:$0xf]
  %v81 = vld [vmem:[%s1 + $0x88] sm:$0xf]
  %v82 = vld [vmem:[%s1 + $0x8c] sm:$0xf]
  %v83 = vld [vmem:[%s2] sm:$0x1]
  %v85 = vlaneseq
  %v86 = vshrl.u32 %v85, 7
  %v87 = vsub.s32 0, %v86
  %v88 = vrot.slane %v83, %v87
  %v122 = vunpack.c.l.b16 %v15
  %v123 = vunpack.c.h.b16 %v15
  %v124 = vunpack.c.l.b16 %v16
  %v125 = vunpack.c.l.b16 %v17
  %v126 = vunpack.c.h.b16 %v17
  %v127 = vunpack.c.l.b16 %v18
  %v128 = vunpack.c.l.b16 %v19
  %v129 = vunpack.c.h.b16 %v19
  %v130 = vunpack.c.l.b16 %v20
  %v131 = vunpack.c.l.b16 %v21
  %v132 = vunpack.c.h.b16 %v21
  %v133 = vunpack.c.l.b16 %v22
  %v134 = vunpack.c.l.b16 %v23
  %v135 = vunpack.c.h.b16 %v23
  %v136 = vunpack.c.l.b16 %v24
  %v137 = vunpack.c.l.b16 %v25
  %v138 = vunpack.c.h.b16 %v25
  %v139 = vunpack.c.l.b16 %v26
  %v140 = vunpack.c.l.b16 %v27
  %v141 = vunpack.c.h.b16 %v27
  %v142 = vunpack.c.l.b16 %v28
  %v143 = vunpack.c.l.b16 %v29
  %v144 = vunpack.c.h.b16 %v29
  %v145 = vunpack.c.l.b16 %v30
  %v146 = vunpack.c.l.b16 %v31
  %v147 = vunpack.c.h.b16 %v31
  %v148 = vunpack.c.l.b16 %v32
  %v149 = vunpack.c.l.b16 %v33
  %v150 = vunpack.c.h.b16 %v33
  %v151 = vunpack.c.l.b16 %v34
  %v152 = vunpack.c.l.b16 %v35
  %v153 = vunpack.c.h.b16 %v35
  %v154 = vunpack.c.l.b16 %v36
  %v155 = vunpack.c.l.b16 %v37
  %v156 = vunpack.c.h.b16 %v37
  %v157 = vunpack.c.l.b16 %v38
  %v158 = vunpack.c.l.b16 %v39
  %v159 = vunpack.c.h.b16 %v39
  %v160 = vunpack.c.l.b16 %v40
  %v161 = vunpack.c.l.b16 %v41
  %v162 = vunpack.c.h.b16 %v41
  %v163 = vunpack.c.l.b16 %v42
  %v164 = vunpack.c.l.b16 %v43
  %v165 = vunpack.c.h.b16 %v43
  %v166 = vunpack.c.l.b16 %v44
  %v167 = vunpack.c.l.b16 %v45
  %v168 = vunpack.c.h.b16 %v45
  %v169 = vunpack.c.l.b16 %v46
  %v170 = vpack.c.b16 %v125, %v122
  %v171 = vpack.c.b16 %v126, %v123
  %v172 = vpack.c.b16 %v127, %v124
  %v173 = vpack.c.b16 %v131, %v128
  %v174 = vpack.c.b16 %v132, %v129
  %v175 = vpack.c.b16 %v133, %v130
  %v176 = vpack.c.b16 %v137, %v134
  %v177 = vpack.c.b16 %v138, %v135
  %v178 = vpack.c.b16 %v139, %v136
  %v179 = vpack.c.b16 %v143, %v140
  %v180 = vpack.c.b16 %v144, %v141
  %v181 = vpack.c.b16 %v145, %v142
  %v182 = vpack.c.b16 %v149, %v146
  %v183 = vpack.c.b16 %v150, %v147
  %v184 = vpack.c.b16 %v151, %v148
  %v185 = vpack.c.b16 %v155, %v152
  %v186 = vpack.c.b16 %v156, %v153
  %v187 = vpack.c.b16 %v157, %v154
  %v188 = vpack.c.b16 %v161, %v158
  %v189 = vpack.c.b16 %v162, %v159
  %v190 = vpack.c.b16 %v163, %v160
  %v191 = vpack.c.b16 %v167, %v164
  %v192 = vpack.c.b16 %v168, %v165
  %v193 = vpack.c.b16 %v169, %v166
  %v246 = vunpack.c.l.b16 %v47
  %v247 = vunpack.c.l.b16 %v48
  %v248 = vunpack.c.l.b16 %v49
  %v249 = vunpack.c.l.b16 %v50
  %v250 = vunpack.c.l.b16 %v51
  %v251 = vunpack.c.l.b16 %v52
  %v252 = vunpack.c.l.b16 %v53
  %v253 = vunpack.c.l.b16 %v54
  %v254 = vunpack.c.l.b16 %v55
  %v255 = vunpack.c.l.b16 %v56
  %v256 = vunpack.c.l.b16 %v57
  %v257 = vunpack.c.l.b16 %v58
  %v258 = vunpack.c.l.b16 %v59
  %v259 = vunpack.c.l.b16 %v60
  %v260 = vunpack.c.l.b16 %v61
  %v261 = vunpack.c.l.b16 %v62
  %v262 = vunpack.c.l.b16 %v63
  %v263 = vunpack.c.l.b16 %v64
  %v264 = vunpack.c.l.b16 %v65
  %v265 = vunpack.c.l.b16 %v66
  %v266 = vunpack.c.l.b16 %v67
  %v267 = vunpack.c.l.b16 %v68
  %v268 = vunpack.c.l.b16 %v69
  %v269 = vunpack.c.l.b16 %v70
  %v270 = vunpack.c.l.b16 %v71
  %v271 = vunpack.c.l.b16 %v72
  %v272 = vunpack.c.l.b16 %v73
  %v273 = vunpack.c.l.b16 %v74
  %v274 = vunpack.c.l.b16 %v75
  %v275 = vunpack.c.l.b16 %v76
  %v276 = vunpack.c.l.b16 %v77
  %v277 = vunpack.c.l.b16 %v78
  %v278 = vunpack.c.l.b16 %v79
  %v279 = vunpack.c.l.b16 %v80
  %v280 = vunpack.c.l.b16 %v81
  %v281 = vunpack.c.l.b16 %v82
  %v282 = vpack.c.b16 %v247, %v246
  %v283 = vpack.c.b16 %v249, %v248
  %v284 = vpack.c.b16 %v251, %v250
  %v285 = vpack.c.b16 %v253, %v252
  %v286 = vpack.c.b16 %v255, %v254
  %v287 = vpack.c.b16 %v257, %v256
  %v288 = vpack.c.b16 %v259, %v258
  %v289 = vpack.c.b16 %v261, %v260
  %v290 = vpack.c.b16 %v263, %v262
  %v291 = vpack.c.b16 %v265, %v264
  %v292 = vpack.c.b16 %v267, %v266
  %v293 = vpack.c.b16 %v269, %v268
  %v294 = vpack.c.b16 %v271, %v270
  %v295 = vpack.c.b16 %v273, %v272
  %v296 = vpack.c.b16 %v275, %v274
  %v297 = vpack.c.b16 %v277, %v276
  %v298 = vpack.c.b16 %v279, %v278
  %v299 = vpack.c.b16 %v281, %v280
  %vm318 = vcmask 261120
  %v320 = vsel %vm318, %v172, 0
  %v323 = vsel %vm318, %v175, 0
  %v326 = vsel %vm318, %v178, 0
  %v329 = vsel %vm318, %v181, 0
  %v332 = vsel %vm318, %v184, 0
  %v335 = vsel %vm318, %v187, 0
  %v338 = vsel %vm318, %v190, 0
  %v341 = vsel %vm318, %v193, 0
  %343 = vmatprep.subr.bf16.mxu0 0
  %344 = vmatpush1.bf16.msra.mxu0 %v282
  %345 = vmatprep.subr.bf16.mxu0 0
  %346 = vmatpush1.bf16.msra.mxu0 %v283
  %347 = vmatprep.subr.bf16.mxu0 0
  %348 = vmatpush1.bf16.msra.mxu0 %v284
  %349 = vmatprep.subr.bf16.mxu0 0
  %350 = vmatpush1.bf16.msra.mxu0 %v285
  %351 = vmatprep.subr.bf16.mxu0 0
  %352 = vmatpush1.bf16.msra.mxu0 %v286
  %353 = vmatprep.subr.bf16.mxu0 0
  %354 = vmatpush1.bf16.msra.mxu0 %v287
  %355 = vmatprep.subr.bf16.mxu0 0
  %356 = vmatpush1.bf16.msra.mxu0 %v288
  %357 = vmatprep.subr.bf16.mxu0 0
  %358 = vmatpush1.bf16.msra.mxu0 %v289
  %359 = vmatprep.subr.bf16.mxu0 0
  %360 = vmatpush1.bf16.msra.mxu0 %v290
  %361 = vmatprep.subr.bf16.mxu0 0
  %362 = vmatpush1.bf16.msra.mxu0 %v291
  %363 = vmatprep.subr.bf16.mxu0 0
  %364 = vmatpush1.bf16.msra.mxu0 %v292
  %365 = vmatprep.subr.bf16.mxu0 0
  %366 = vmatpush1.bf16.msra.mxu0 %v293
  %367 = vmatprep.subr.bf16.mxu0 0
  %368 = vmatpush1.bf16.msra.mxu0 %v294
  %369 = vmatprep.subr.bf16.mxu0 0
  %370 = vmatpush1.bf16.msra.mxu0 %v295
  %371 = vmatprep.subr.bf16.mxu0 0
  %372 = vmatpush1.bf16.msra.mxu0 %v296
  %373 = vmatprep.subr.bf16.mxu0 0
  %374 = vmatpush1.bf16.msra.mxu0 %v297
  %375 = vmatprep.mubr.bf16.mxu0 %v171
  %376 = vmatmul.mubr.bf16.gmra.mrb[0].mxu0 %v170
  %v377 = vpop.f32.mrb[0].mxu0
  %v378 = vadd.f32 %v88, %v377
  %v379 = vpop.f32.mrb[0].mxu0
  %v380 = vpop.f32.mrb[0].mxu0
  %v381 = vadd.f32 %v88, %v380
  %v382 = vpop.f32.mrb[0].mxu0
  %383 = vmatprep.mubr.bf16.mxu0 %v174
  %384 = vmatmul.mubr.bf16.gmra.mrb[0].mxu0 %v173
  %v385 = vpop.f32.mrb[0].mxu0
  %v386 = vadd.f32 %v88, %v385
  %v387 = vpop.f32.mrb[0].mxu0
  %v388 = vpop.f32.mrb[0].mxu0
  %v389 = vadd.f32 %v88, %v388
  %v390 = vpop.f32.mrb[0].mxu0
  %391 = vmatprep.mubr.bf16.mxu0 %v177
  %392 = vmatmul.mubr.bf16.gmra.mrb[0].mxu0 %v176
  %v393 = vpop.f32.mrb[0].mxu0
  %v394 = vadd.f32 %v88, %v393
  %v395 = vpop.f32.mrb[0].mxu0
  %v396 = vpop.f32.mrb[0].mxu0
  %v397 = vadd.f32 %v88, %v396
  %v398 = vpop.f32.mrb[0].mxu0
  %399 = vmatprep.mubr.bf16.mxu0 %v180
  %400 = vmatmul.mubr.bf16.gmra.mrb[0].mxu0 %v179
  %v401 = vpop.f32.mrb[0].mxu0
  %v402 = vadd.f32 %v88, %v401
  %v403 = vpop.f32.mrb[0].mxu0
  %v404 = vpop.f32.mrb[0].mxu0
  %v405 = vadd.f32 %v88, %v404
  %v406 = vpop.f32.mrb[0].mxu0
  %407 = vmatprep.mubr.bf16.mxu0 %v183
  %408 = vmatmul.mubr.bf16.gmra.mrb[0].mxu0 %v182
  %v409 = vpop.f32.mrb[0].mxu0
  %v410 = vadd.f32 %v88, %v409
  %v411 = vpop.f32.mrb[0].mxu0
  %v412 = vpop.f32.mrb[0].mxu0
  %v413 = vadd.f32 %v88, %v412
  %v414 = vpop.f32.mrb[0].mxu0
  %415 = vmatprep.mubr.bf16.mxu0 %v186
  %416 = vmatmul.mubr.bf16.gmra.mrb[0].mxu0 %v185
  %v417 = vpop.f32.mrb[0].mxu0
  %v418 = vadd.f32 %v88, %v417
  %v419 = vpop.f32.mrb[0].mxu0
  %v420 = vpop.f32.mrb[0].mxu0
  %v421 = vadd.f32 %v88, %v420
  %v422 = vpop.f32.mrb[0].mxu0
  %423 = vmatprep.mubr.bf16.mxu0 %v189
  %424 = vmatmul.mubr.bf16.gmra.mrb[0].mxu0 %v188
  %v425 = vpop.f32.mrb[0].mxu0
  %v426 = vadd.f32 %v88, %v425
  %v427 = vpop.f32.mrb[0].mxu0
  %v428 = vpop.f32.mrb[0].mxu0
  %v429 = vadd.f32 %v88, %v428
  %v430 = vpop.f32.mrb[0].mxu0
  %431 = vmatprep.mubr.bf16.mxu0 %v192
  %432 = vmatmul.mubr.bf16.gmra.mrb[0].mxu0 %v191
  %v433 = vpop.f32.mrb[0].mxu0
  %v434 = vadd.f32 %v88, %v433
  %v435 = vpop.f32.mrb[0].mxu0
  %v436 = vpop.f32.mrb[0].mxu0
  %v437 = vadd.f32 %v88, %v436
  %v438 = vpop.f32.mrb[0].mxu0
  %439 = vdwg.mxu0
  %440 = vmatprep.subr.bf16.mxu0 0
  %441 = vmatpush1.bf16.msra.mxu0 %v298
  %442 = vmatprep.subr.bf16.mxu0 0
  %443 = vmatpush1.bf16.msra.mxu0 %v299
  %444 = vmatprep.subr.bf16.mxu0 0
  %445 = vmatpush1.bf16.msra.mxu0 0
  %446 = vmatprep.subr.bf16.mxu0 0
  %447 = vmatpush1.bf16.msra.mxu0 0
  %448 = vmatprep.subr.bf16.mxu0 0
  %449 = vmatpush1.bf16.msra.mxu0 0
  %450 = vmatprep.subr.bf16.mxu0 0
  %451 = vmatpush1.bf16.msra.mxu0 0
  %452 = vmatprep.subr.bf16.mxu0 0
  %453 = vmatpush1.bf16.msra.mxu0 0
  %454 = vmatprep.subr.bf16.mxu0 0
  %455 = vmatpush1.bf16.msra.mxu0 0
  %456 = vmatprep.subr.bf16.mxu0 0
  %457 = vmatpush1.bf16.msra.mxu0 0
  %458 = vmatprep.subr.bf16.mxu0 0
  %459 = vmatpush1.bf16.msra.mxu0 0
  %460 = vmatprep.subr.bf16.mxu0 0
  %461 = vmatpush1.bf16.msra.mxu0 0
  %462 = vmatprep.subr.bf16.mxu0 0
  %463 = vmatpush1.bf16.msra.mxu0 0
  %464 = vmatprep.subr.bf16.mxu0 0
  %465 = vmatpush1.bf16.msra.mxu0 0
  %466 = vmatprep.subr.bf16.mxu0 0
  %467 = vmatpush1.bf16.msra.mxu0 0
  %468 = vmatprep.subr.bf16.mxu0 0
  %469 = vmatpush1.bf16.msra.mxu0 0
  %470 = vmatprep.subr.bf16.mxu0 0
  %471 = vmatpush1.bf16.msra.mxu0 0
  %472 = vmatprep.mubr.bf16.mxu0 0
  %473 = vmatmul.mubr.bf16.gmra.mrb[0].mxu0 %v320
  %v474 = vpop.f32.mrb[0].mxu0
  %v475 = vadd.f32 %v378, %v474
  %v476 = vpop.f32.mrb[0].mxu0
  %v477 = vpop.f32.mrb[0].mxu0
  %v478 = vadd.f32 %v381, %v477
  %v479 = vpop.f32.mrb[0].mxu0
  %480 = vmatprep.mubr.bf16.mxu0 0
  %481 = vmatmul.mubr.bf16.gmra.mrb[0].mxu0 %v323
  %v482 = vpop.f32.mrb[0].mxu0
  %v483 = vadd.f32 %v386, %v482
  %v484 = vpop.f32.mrb[0].mxu0
  %v485 = vpop.f32.mrb[0].mxu0
  %v486 = vadd.f32 %v389, %v485
  %v487 = vpop.f32.mrb[0].mxu0
  %488 = vmatprep.mubr.bf16.mxu0 0
  %489 = vmatmul.mubr.bf16.gmra.mrb[0].mxu0 %v326
  %v490 = vpop.f32.mrb[0].mxu0
  %v491 = vadd.f32 %v394, %v490
  %v492 = vpop.f32.mrb[0].mxu0
  %v493 = vpop.f32.mrb[0].mxu0
  %v494 = vadd.f32 %v397, %v493
  %v495 = vpop.f32.mrb[0].mxu0
  %496 = vmatprep.mubr.bf16.mxu0 0
  %497 = vmatmul.mubr.bf16.gmra.mrb[0].mxu0 %v329
  %v498 = vpop.f32.mrb[0].mxu0
  %v499 = vadd.f32 %v402, %v498
  %v500 = vpop.f32.mrb[0].mxu0
  %v501 = vpop.f32.mrb[0].mxu0
  %v502 = vadd.f32 %v405, %v501
  %v503 = vpop.f32.mrb[0].mxu0
  %504 = vmatprep.mubr.bf16.mxu0 0
  %505 = vmatmul.mubr.bf16.gmra.mrb[0].mxu0 %v332
  %v506 = vpop.f32.mrb[0].mxu0
  %v507 = vadd.f32 %v410, %v506
  %v508 = vpop.f32.mrb[0].mxu0
  %v509 = vpop.f32.mrb[0].mxu0
  %v510 = vadd.f32 %v413, %v509
  %v511 = vpop.f32.mrb[0].mxu0
  %512 = vmatprep.mubr.bf16.mxu0 0
  %513 = vmatmul.mubr.bf16.gmra.mrb[0].mxu0 %v335
  %v514 = vpop.f32.mrb[0].mxu0
  %v515 = vadd.f32 %v418, %v514
  %v516 = vpop.f32.mrb[0].mxu0
  %v517 = vpop.f32.mrb[0].mxu0
  %v518 = vadd.f32 %v421, %v517
  %v519 = vpop.f32.mrb[0].mxu0
  %520 = vmatprep.mubr.bf16.mxu0 0
  %521 = vmatmul.mubr.bf16.gmra.mrb[0].mxu0 %v338
  %v522 = vpop.f32.mrb[0].mxu0
  %v523 = vadd.f32 %v426, %v522
  %v524 = vpop.f32.mrb[0].mxu0
  %v525 = vpop.f32.mrb[0].mxu0
  %v526 = vadd.f32 %v429, %v525
  %v527 = vpop.f32.mrb[0].mxu0
  %528 = vmatprep.mubr.bf16.mxu0 0
  %529 = vmatmul.mubr.bf16.gmra.mrb[0].mxu0 %v341
  %v530 = vpop.f32.mrb[0].mxu0
  %v531 = vadd.f32 %v434, %v530
  %v532 = vpop.f32.mrb[0].mxu0
  %v533 = vpop.f32.mrb[0].mxu0
  %v534 = vadd.f32 %v437, %v533
  %v535 = vpop.f32.mrb[0].mxu0
  %536 = vdwg.mxu0
  %v537 = vmax.f32 %v475, 0.0
  %v538 = vmax.f32 %v478, 0.0
  %v539 = vmax.f32 %v483, 0.0
  %v540 = vmax.f32 %v486, 0.0
  %v541 = vmax.f32 %v491, 0.0
  %v542 = vmax.f32 %v494, 0.0
  %v543 = vmax.f32 %v499, 0.0
  %v544 = vmax.f32 %v502, 0.0
  %v545 = vmax.f32 %v507, 0.0
  %v546 = vmax.f32 %v510, 0.0
  %v547 = vmax.f32 %v515, 0.0
  %v548 = vmax.f32 %v518, 0.0
  %v549 = vmax.f32 %v523, 0.0
  %v550 = vmax.f32 %v526, 0.0
  %v551 = vmax.f32 %v531, 0.0
  %v552 = vmax.f32 %v534, 0.0
  %v553 = vpack.c.bf16 %v538, %v537
  %v554 = vpack.c.bf16 %v540, %v539
  %v555 = vpack.c.bf16 %v542, %v541
  %v556 = vpack.c.bf16 %v544, %v543
  %v557 = vpack.c.bf16 %v546, %v545
  %v558 = vpack.c.bf16 %v548, %v547
  %v559 = vpack.c.bf16 %v550, %v549
  %v560 = vpack.c.bf16 %v552, %v551
  %v569 = vunpack.c.l.b16 %v553
  %v570 = vunpack.c.h.b16 %v553
  %v571 = vunpack.c.l.b16 %v554
  %v572 = vunpack.c.h.b16 %v554
  %v573 = vunpack.c.l.b16 %v555
  %v574 = vunpack.c.h.b16 %v555
  %v575 = vunpack.c.l.b16 %v556
  %v576 = vunpack.c.h.b16 %v556
  %v577 = vunpack.c.l.b16 %v557
  %v578 = vunpack.c.h.b16 %v557
  %v579 = vunpack.c.l.b16 %v558
  %v580 = vunpack.c.h.b16 %v558
  %v581 = vunpack.c.l.b16 %v559
  %v582 = vunpack.c.h.b16 %v559
  %v583 = vunpack.c.l.b16 %v560
  %v584 = vunpack.c.h.b16 %v560
  %v585 = vpack.c.b16 %v569, %v569
  %v586 = vpack.c.b16 %v570, %v570
  %v587 = vpack.c.b16 %v571, %v571
  %v588 = vpack.c.b16 %v572, %v572
  %v589 = vpack.c.b16 %v573, %v573
  %v590 = vpack.c.b16 %v574, %v574
  %v591 = vpack.c.b16 %v575, %v575
  %v592 = vpack.c.b16 %v576, %v576
  %v593 = vpack.c.b16 %v577, %v577
  %v594 = vpack.c.b16 %v578, %v578
  %v595 = vpack.c.b16 %v579, %v579
  %v596 = vpack.c.b16 %v580, %v580
  %v597 = vpack.c.b16 %v581, %v581
  %v598 = vpack.c.b16 %v582, %v582
  %v599 = vpack.c.b16 %v583, %v583
  %v600 = vpack.c.b16 %v584, %v584
  %vm617 = vcmask 257024
  %618 = vst.msk [vmem:[%s3] sm:$0xf] %vm617, %v585
  %619 = vst.msk [vmem:[%s3 + $0x4] sm:$0xf] %vm617, %v586
  %620 = vst.msk [vmem:[%s3 + $0x8] sm:$0xf] %vm617, %v587
  %621 = vst.msk [vmem:[%s3 + $0xc] sm:$0xf] %vm617, %v588
  %622 = vst.msk [vmem:[%s3 + $0x10] sm:$0xf] %vm617, %v589
  %623 = vst.msk [vmem:[%s3 + $0x14] sm:$0xf] %vm617, %v590
  %624 = vst.msk [vmem:[%s3 + $0x18] sm:$0xf] %vm617, %v591
  %625 = vst.msk [vmem:[%s3 + $0x1c] sm:$0xf] %vm617, %v592
  %626 = vst.msk [vmem:[%s3 + $0x20] sm:$0xf] %vm617, %v593
  %627 = vst.msk [vmem:[%s3 + $0x24] sm:$0xf] %vm617, %v594
  %628 = vst.msk [vmem:[%s3 + $0x28] sm:$0xf] %vm617, %v595
  %629 = vst.msk [vmem:[%s3 + $0x2c] sm:$0xf] %vm617, %v596
  %630 = vst.msk [vmem:[%s3 + $0x30] sm:$0xf] %vm617, %v597
  %631 = vst.msk [vmem:[%s3 + $0x34] sm:$0xf] %vm617, %v598
  %632 = vst.msk [vmem:[%s3 + $0x38] sm:$0xf] %vm617, %v599
  %633 = vst.msk [vmem:[%s3 + $0x3c] sm:$0xf] %vm617, %v600
  // Predicated region
  $region14: #{deeplabv3plus_forward.17} parent=0 // pred_check
    _
  $region15: #{deeplabv3plus_forward.17} parent=0 // pred_check_branch
    %635 = sbr.rel (0) target = $region17
  $region16: #{deeplabv3plus_forward.17} parent=0 // pred_region
    _
  $region17: #{deeplabv3plus_forward.17} parent=0 // pred_fallthru
    _
  // Predicated region
  $region18: #{deeplabv3plus_forward.17} parent=0 // pred_check
    _
  $region19: #{deeplabv3plus_forward.17} parent=0 // pred_check_branch
    %637 = sbr.rel (0) target = $region21
  $region20: #{deeplabv3plus_forward.17} parent=0 // pred_region
    _
  $region21: #{deeplabv3plus_forward.17} parent=0 // pred_fallthru
    _

// kernel: deeplabv3plus_forward.18
$region0: #{deeplabv3plus_forward.18}
  #allocation0 [shape = 'u32[]', space=smem, size = 0x4, offset = 0x4, fixed_abs, tag = 'smem constant byte address 0x4 - core index']
  #allocation1 [shape = 'u32[144,128]{1,0:T(1,128)}', space=vmem, size = 0x12000, scoped, tag = 'internal scratch']
  %s0 = inlined_call_operand.vmem [shape: bf16[128,288], index: 0, kind: input, shape index: {}]
  %s1 = inlined_call_operand.vmem [shape: bf16[288,4], index: 1, kind: input, shape index: {}]
  %s2 = inlined_call_operand.vmem [shape: f32[1,4], index: 2, kind: input, shape index: {}]
  %s3 = inlined_call_operand.vmem [shape: f32[128,4], index: 3, kind: output, shape index: {}]
  %s4 = sld [smem:[#allocation0]]
  $region22: #{deeplabv3plus_forward.18} parent=0
    _
  %s6 = ssub.s32 1, %s4
  %s7 = scalar_select 0, %s6, %s4
  // Predicated region
  $region2: #{deeplabv3plus_forward.18} parent=0 // pred_check
    _
  $region3: #{deeplabv3plus_forward.18} parent=0 // pred_check_branch
    %9 = sbr.rel (0) target = $region5
  $region4: #{deeplabv3plus_forward.18} parent=0 // pred_region
    _
  $region5: #{deeplabv3plus_forward.18} parent=0 // pred_fallthru
    _
  // Predicated region
  $region6: #{deeplabv3plus_forward.18} parent=0 // pred_check
    _
  $region7: #{deeplabv3plus_forward.18} parent=0 // pred_check_branch
    %11 = sbr.rel (0) target = $region9
  $region8: #{deeplabv3plus_forward.18} parent=0 // pred_region
    _
  $region9: #{deeplabv3plus_forward.18} parent=0 // pred_fallthru
    _
  // Predicated region
  $region10: #{deeplabv3plus_forward.18} parent=0 // pred_check
    _
  $region11: #{deeplabv3plus_forward.18} parent=0 // pred_check_branch
    %13 = sbr.rel (0) target = $region13
  $region12: #{deeplabv3plus_forward.18} parent=0 // pred_region
    _
  $region13: #{deeplabv3plus_forward.18} parent=0 // pred_fallthru
    _
  %v15 = vld [vmem:[%s0] sm:$0xff]
  %v16 = vld [vmem:[%s0 + $0x8] sm:$0xf]
  %v17 = vld [vmem:[%s0 + $0xc] sm:$0xff]
  %v18 = vld [vmem:[%s0 + $0x14] sm:$0xf]
  %v19 = vld [vmem:[%s0 + $0x18] sm:$0xff]
  %v20 = vld [vmem:[%s0 + $0x20] sm:$0xf]
  %v21 = vld [vmem:[%s0 + $0x24] sm:$0xff]
  %v22 = vld [vmem:[%s0 + $0x2c] sm:$0xf]
  %v23 = vld [vmem:[%s0 + $0x30] sm:$0xff]
  %v24 = vld [vmem:[%s0 + $0x38] sm:$0xf]
  %v25 = vld [vmem:[%s0 + $0x3c] sm:$0xff]
  %v26 = vld [vmem:[%s0 + $0x44] sm:$0xf]
  %v27 = vld [vmem:[%s0 + $0x48] sm:$0xff]
  %v28 = vld [vmem:[%s0 + $0x50] sm:$0xf]
  %v29 = vld [vmem:[%s0 + $0x54] sm:$0xff]
  %v30 = vld [vmem:[%s0 + $0x5c] sm:$0xf]
  %v31 = vld [vmem:[%s0 + $0x60] sm:$0xff]
  %v32 = vld [vmem:[%s0 + $0x68] sm:$0xf]
  %v33 = vld [vmem:[%s0 + $0x6c] sm:$0xff]
  %v34 = vld [vmem:[%s0 + $0x74] sm:$0xf]
  %v35 = vld [vmem:[%s0 + $0x78] sm:$0xff]
  %v36 = vld [vmem:[%s0 + $0x80] sm:$0xf]
  %v37 = vld [vmem:[%s0 + $0x84] sm:$0xff]
  %v38 = vld [vmem:[%s0 + $0x8c] sm:$0xf]
  %v39 = vld [vmem:[%s0 + $0x90] sm:$0xff]
  %v40 = vld [vmem:[%s0 + $0x98] sm:$0xf]
  %v41 = vld [vmem:[%s0 + $0x9c] sm:$0xff]
  %v42 = vld [vmem:[%s0 + $0xa4] sm:$0xf]
  %v43 = vld [vmem:[%s0 + $0xa8] sm:$0xff]
  %v44 = vld [vmem:[%s0 + $0xb0] sm:$0xf]
  %v45 = vld [vmem:[%s0 + $0xb4] sm:$0xff]
  %v46 = vld [vmem:[%s0 + $0xbc] sm:$0xf]
  %v47 = vld [vmem:[%s1] sm:$0xf]
  %v48 = vld [vmem:[%s1 + $0x4] sm:$0xf]
  %v49 = vld [vmem:[%s1 + $0x8] sm:$0xf]
  %v50 = vld [vmem:[%s1 + $0xc] sm:$0xf]
  %v51 = vld [vmem:[%s1 + $0x10] sm:$0xf]
  %v52 = vld [vmem:[%s1 + $0x14] sm:$0xf]
  %v53 = vld [vmem:[%s1 + $0x18] sm:$0xf]
  %v54 = vld [vmem:[%s1 + $0x1c] sm:$0xf]
  %v55 = vld [vmem:[%s1 + $0x20] sm:$0xf]
  %v56 = vld [vmem:[%s1 + $0x24] sm:$0xf]
  %v57 = vld [vmem:[%s1 + $0x28] sm:$0xf]
  %v58 = vld [vmem:[%s1 + $0x2c] sm:$0xf]
  %v59 = vld [vmem:[%s1 + $0x30] sm:$0xf]
  %v60 = vld [vmem:[%s1 + $0x34] sm:$0xf]
  %v61 = vld [vmem:[%s1 + $0x38] sm:$0xf]
  %v62 = vld [vmem:[%s1 + $0x3c] sm:$0xf]
  %v63 = vld [vmem:[%s1 + $0x40] sm:$0xf]
  %v64 = vld [vmem:[%s1 + $0x44] sm:$0xf]
  %v65 = vld [vmem:[%s1 + $0x48] sm:$0xf]
  %v66 = vld [vmem:[%s1 + $0x4c] sm:$0xf]
  %v67 = vld [vmem:[%s1 + $0x50] sm:$0xf]
  %v68 = vld [vmem:[%s1 + $0x54] sm:$0xf]
  %v69 = vld [vmem:[%s1 + $0x58] sm:$0xf]
  %v70 = vld [vmem:[%s1 + $0x5c] sm:$0xf]
  %v71 = vld [vmem:[%s1 + $0x60] sm:$0xf]
  %v72 = vld [vmem:[%s1 + $0x64] sm:$0xf]
  %v73 = vld [vmem:[%s1 + $0x68] sm:$0xf]
  %v74 = vld [vmem:[%s1 + $0x6c] sm:$0xf]
  %v75 = vld [vmem:[%s1 + $0x70] sm:$0xf]
  %v76 = vld [vmem:[%s1 + $0x74] sm:$0xf]
  %v77 = vld [vmem:[%s1 + $0x78] sm:$0xf]
  %v78 = vld [vmem:[%s1 + $0x7c] sm:$0xf]
  %v79 = vld [vmem:[%s1 + $0x80] sm:$0xf]
  %v80 = vld [vmem:[%s1 + $0x84] sm:$0xf]
  %v81 = vld [vmem:[%s1 + $0x88] sm:$0xf]
  %v82 = vld [vmem:[%s1 + $0x8c] sm:$0xf]
  %v83 = vld [vmem:[%s2] sm:$0x1]
  %v85 = vlaneseq
  %v86 = vshrl.u32 %v85, 7
  %v87 = vsub.s32 0, %v86
  %v88 = vrot.slane %v83, %v87
  %v122 = vunpack.c.l.b16 %v15
  %v123 = vunpack.c.h.b16 %v15
  %v124 = vunpack.c.l.b16 %v16
  %v125 = vunpack.c.l.b16 %v17
  %v126 = vunpack.c.h.b16 %v17
  %v127 = vunpack.c.l.b16 %v18
  %v128 = vunpack.c.l.b16 %v19
  %v129 = vunpack.c.h.b16 %v19
  %v130 = vunpack.c.l.b16 %v20
  %v131 = vunpack.c.l.b16 %v21
  %v132 = vunpack.c.h.b16 %v21
  %v133 = vunpack.c.l.b16 %v22
  %v134 = vunpack.c.l.b16 %v23
  %v135 = vunpack.c.h.b16 %v23
  %v136 = vunpack.c.l.b16 %v24
  %v137 = vunpack.c.l.b16 %v25
  %v138 = vunpack.c.h.b16 %v25
  %v139 = vunpack.c.l.b16 %v26
  %v140 = vunpack.c.l.b16 %v27
  %v141 = vunpack.c.h.b16 %v27
  %v142 = vunpack.c.l.b16 %v28
  %v143 = vunpack.c.l.b16 %v29
  %v144 = vunpack.c.h.b16 %v29
  %v145 = vunpack.c.l.b16 %v30
  %v146 = vunpack.c.l.b16 %v31
  %v147 = vunpack.c.h.b16 %v31
  %v148 = vunpack.c.l.b16 %v32
  %v149 = vunpack.c.l.b16 %v33
  %v150 = vunpack.c.h.b16 %v33
  %v151 = vunpack.c.l.b16 %v34
  %v152 = vunpack.c.l.b16 %v35
  %v153 = vunpack.c.h.b16 %v35
  %v154 = vunpack.c.l.b16 %v36
  %v155 = vunpack.c.l.b16 %v37
  %v156 = vunpack.c.h.b16 %v37
  %v157 = vunpack.c.l.b16 %v38
  %v158 = vunpack.c.l.b16 %v39
  %v159 = vunpack.c.h.b16 %v39
  %v160 = vunpack.c.l.b16 %v40
  %v161 = vunpack.c.l.b16 %v41
  %v162 = vunpack.c.h.b16 %v41
  %v163 = vunpack.c.l.b16 %v42
  %v164 = vunpack.c.l.b16 %v43
  %v165 = vunpack.c.h.b16 %v43
  %v166 = vunpack.c.l.b16 %v44
  %v167 = vunpack.c.l.b16 %v45
  %v168 = vunpack.c.h.b16 %v45
  %v169 = vunpack.c.l.b16 %v46
  %v170 = vpack.c.b16 %v125, %v122
  %v171 = vpack.c.b16 %v126, %v123
  %v172 = vpack.c.b16 %v127, %v124
  %v173 = vpack.c.b16 %v131, %v128
  %v174 = vpack.c.b16 %v132, %v129
  %v175 = vpack.c.b16 %v133, %v130
  %v176 = vpack.c.b16 %v137, %v134
  %v177 = vpack.c.b16 %v138, %v135
  %v178 = vpack.c.b16 %v139, %v136
  %v179 = vpack.c.b16 %v143, %v140
  %v180 = vpack.c.b16 %v144, %v141
  %v181 = vpack.c.b16 %v145, %v142
  %v182 = vpack.c.b16 %v149, %v146
  %v183 = vpack.c.b16 %v150, %v147
  %v184 = vpack.c.b16 %v151, %v148
  %v185 = vpack.c.b16 %v155, %v152
  %v186 = vpack.c.b16 %v156, %v153
  %v187 = vpack.c.b16 %v157, %v154
  %v188 = vpack.c.b16 %v161, %v158
  %v189 = vpack.c.b16 %v162, %v159
  %v190 = vpack.c.b16 %v163, %v160
  %v191 = vpack.c.b16 %v167, %v164
  %v192 = vpack.c.b16 %v168, %v165
  %v193 = vpack.c.b16 %v169, %v166
  %v246 = vunpack.c.l.b16 %v47
  %v247 = vunpack.c.l.b16 %v48
  %v248 = vunpack.c.l.b16 %v49
  %v249 = vunpack.c.l.b16 %v50
  %v250 = vunpack.c.l.b16 %v51
  %v251 = vunpack.c.l.b16 %v52
  %v252 = vunpack.c.l.b16 %v53
  %v253 = vunpack.c.l.b16 %v54
  %v254 = vunpack.c.l.b16 %v55
  %v255 = vunpack.c.l.b16 %v56
  %v256 = vunpack.c.l.b16 %v57
  %v257 = vunpack.c.l.b16 %v58
  %v258 = vunpack.c.l.b16 %v59
  %v259 = vunpack.c.l.b16 %v60
  %v260 = vunpack.c.l.b16 %v61
  %v261 = vunpack.c.l.b16 %v62
  %v262 = vunpack.c.l.b16 %v63
  %v263 = vunpack.c.l.b16 %v64
  %v264 = vunpack.c.l.b16 %v65
  %v265 = vunpack.c.l.b16 %v66
  %v266 = vunpack.c.l.b16 %v67
  %v267 = vunpack.c.l.b16 %v68
  %v268 = vunpack.c.l.b16 %v69
  %v269 = vunpack.c.l.b16 %v70
  %v270 = vunpack.c.l.b16 %v71
  %v271 = vunpack.c.l.b16 %v72
  %v272 = vunpack.c.l.b16 %v73
  %v273 = vunpack.c.l.b16 %v74
  %v274 = vunpack.c.l.b16 %v75
  %v275 = vunpack.c.l.b16 %v76
  %v276 = vunpack.c.l.b16 %v77
  %v277 = vunpack.c.l.b16 %v78
  %v278 = vunpack.c.l.b16 %v79
  %v279 = vunpack.c.l.b16 %v80
  %v280 = vunpack.c.l.b16 %v81
  %v281 = vunpack.c.l.b16 %v82
  %v282 = vpack.c.b16 %v247, %v246
  %v283 = vpack.c.b16 %v249, %v248
  %v284 = vpack.c.b16 %v251, %v250
  %v285 = vpack.c.b16 %v253, %v252
  %v286 = vpack.c.b16 %v255, %v254
  %v287 = vpack.c.b16 %v257, %v256
  %v288 = vpack.c.b16 %v259, %v258
  %v289 = vpack.c.b16 %v261, %v260
  %v290 = vpack.c.b16 %v263, %v262
  %v291 = vpack.c.b16 %v265, %v264
  %v292 = vpack.c.b16 %v267, %v266
  %v293 = vpack.c.b16 %v269, %v268
  %v294 = vpack.c.b16 %v271, %v270
  %v295 = vpack.c.b16 %v273, %v272
  %v296 = vpack.c.b16 %v275, %v274
  %v297 = vpack.c.b16 %v277, %v276
  %v298 = vpack.c.b16 %v279, %v278
  %v299 = vpack.c.b16 %v281, %v280
  %vm318 = vcmask 261120
  %v320 = vsel %vm318, %v172, 0
  %v323 = vsel %vm318, %v175, 0
  %v326 = vsel %vm318, %v178, 0
  %v329 = vsel %vm318, %v181, 0
  %v332 = vsel %vm318, %v184, 0
  %v335 = vsel %vm318, %v187, 0
  %v338 = vsel %vm318, %v190, 0
  %v341 = vsel %vm318, %v193, 0
  %343 = vmatprep.subr.bf16.mxu0 0
  %344 = vmatpush1.bf16.msra.mxu0 %v282
  %345 = vmatprep.subr.bf16.mxu0 0
  %346 = vmatpush1.bf16.msra.mxu0 %v283
  %347 = vmatprep.subr.bf16.mxu0 0
  %348 = vmatpush1.bf16.msra.mxu0 %v284
  %349 = vmatprep.subr.bf16.mxu0 0
  %350 = vmatpush1.bf16.msra.mxu0 %v285
  %351 = vmatprep.subr.bf16.mxu0 0
  %352 = vmatpush1.bf16.msra.mxu0 %v286
  %353 = vmatprep.subr.bf16.mxu0 0
  %354 = vmatpush1.bf16.msra.mxu0 %v287
  %355 = vmatprep.subr.bf16.mxu0 0
  %356 = vmatpush1.bf16.msra.mxu0 %v288
  %357 = vmatprep.subr.bf16.mxu0 0
  %358 = vmatpush1.bf16.msra.mxu0 %v289
  %359 = vmatprep.subr.bf16.mxu0 0
  %360 = vmatpush1.bf16.msra.mxu0 %v290
  %361 = vmatprep.subr.bf16.mxu0 0
  %362 = vmatpush1.bf16.msra.mxu0 %v291
  %363 = vmatprep.subr.bf16.mxu0 0
  %364 = vmatpush1.bf16.msra.mxu0 %v292
  %365 = vmatprep.subr.bf16.mxu0 0
  %366 = vmatpush1.bf16.msra.mxu0 %v293
  %367 = vmatprep.subr.bf16.mxu0 0
  %368 = vmatpush1.bf16.msra.mxu0 %v294
  %369 = vmatprep.subr.bf16.mxu0 0
  %370 = vmatpush1.bf16.msra.mxu0 %v295
  %371 = vmatprep.subr.bf16.mxu0 0
  %372 = vmatpush1.bf16.msra.mxu0 %v296
  %373 = vmatprep.subr.bf16.mxu0 0
  %374 = vmatpush1.bf16.msra.mxu0 %v297
  %375 = vmatprep.mubr.bf16.mxu0 %v171
  %376 = vmatmul.mubr.bf16.gmra.mrb[0].mxu0 %v170
  %v377 = vpop.f32.mrb[0].mxu0
  %v378 = vadd.f32 %v88, %v377
  %v379 = vpop.f32.mrb[0].mxu0
  %v380 = vpop.f32.mrb[0].mxu0
  %v381 = vadd.f32 %v88, %v380
  %v382 = vpop.f32.mrb[0].mxu0
  %383 = vmatprep.mubr.bf16.mxu0 %v174
  %384 = vmatmul.mubr.bf16.gmra.mrb[0].mxu0 %v173
  %v385 = vpop.f32.mrb[0].mxu0
  %v386 = vadd.f32 %v88, %v385
  %v387 = vpop.f32.mrb[0].mxu0
  %v388 = vpop.f32.mrb[0].mxu0
  %v389 = vadd.f32 %v88, %v388
  %v390 = vpop.f32.mrb[0].mxu0
  %391 = vmatprep.mubr.bf16.mxu0 %v177
  %392 = vmatmul.mubr.bf16.gmra.mrb[0].mxu0 %v176
  %v393 = vpop.f32.mrb[0].mxu0
  %v394 = vadd.f32 %v88, %v393
  %v395 = vpop.f32.mrb[0].mxu0
  %v396 = vpop.f32.mrb[0].mxu0
  %v397 = vadd.f32 %v88, %v396
  %v398 = vpop.f32.mrb[0].mxu0
  %399 = vmatprep.mubr.bf16.mxu0 %v180
  %400 = vmatmul.mubr.bf16.gmra.mrb[0].mxu0 %v179
  %v401 = vpop.f32.mrb[0].mxu0
  %v402 = vadd.f32 %v88, %v401
  %v403 = vpop.f32.mrb[0].mxu0
  %v404 = vpop.f32.mrb[0].mxu0
  %v405 = vadd.f32 %v88, %v404
  %v406 = vpop.f32.mrb[0].mxu0
  %407 = vmatprep.mubr.bf16.mxu0 %v183
  %408 = vmatmul.mubr.bf16.gmra.mrb[0].mxu0 %v182
  %v409 = vpop.f32.mrb[0].mxu0
  %v410 = vadd.f32 %v88, %v409
  %v411 = vpop.f32.mrb[0].mxu0
  %v412 = vpop.f32.mrb[0].mxu0
  %v413 = vadd.f32 %v88, %v412
  %v414 = vpop.f32.mrb[0].mxu0
  %415 = vmatprep.mubr.bf16.mxu0 %v186
  %416 = vmatmul.mubr.bf16.gmra.mrb[0].mxu0 %v185
  %v417 = vpop.f32.mrb[0].mxu0
  %v418 = vadd.f32 %v88, %v417
  %v419 = vpop.f32.mrb[0].mxu0
  %v420 = vpop.f32.mrb[0].mxu0
  %v421 = vadd.f32 %v88, %v420
  %v422 = vpop.f32.mrb[0].mxu0
  %423 = vmatprep.mubr.bf16.mxu0 %v189
  %424 = vmatmul.mubr.bf16.gmra.mrb[0].mxu0 %v188
  %v425 = vpop.f32.mrb[0].mxu0
  %v426 = vadd.f32 %v88, %v425
  %v427 = vpop.f32.mrb[0].mxu0
  %v428 = vpop.f32.mrb[0].mxu0
  %v429 = vadd.f32 %v88, %v428
  %v430 = vpop.f32.mrb[0].mxu0
  %431 = vmatprep.mubr.bf16.mxu0 %v192
  %432 = vmatmul.mubr.bf16.gmra.mrb[0].mxu0 %v191
  %v433 = vpop.f32.mrb[0].mxu0
  %v434 = vadd.f32 %v88, %v433
  %v435 = vpop.f32.mrb[0].mxu0
  %v436 = vpop.f32.mrb[0].mxu0
  %v437 = vadd.f32 %v88, %v436
  %v438 = vpop.f32.mrb[0].mxu0
  %439 = vdwg.mxu0
  %440 = vmatprep.subr.bf16.mxu0 0
  %441 = vmatpush1.bf16.msra.mxu0 %v298
  %442 = vmatprep.subr.bf16.mxu0 0
  %443 = vmatpush1.bf16.msra.mxu0 %v299
  %444 = vmatprep.subr.bf16.mxu0 0
  %445 = vmatpush1.bf16.msra.mxu0 0
  %446 = vmatprep.subr.bf16.mxu0 0
  %447 = vmatpush1.bf16.msra.mxu0 0
  %448 = vmatprep.subr.bf16.mxu0 0
  %449 = vmatpush1.bf16.msra.mxu0 0
  %450 = vmatprep.subr.bf16.mxu0 0
  %451 = vmatpush1.bf16.msra.mxu0 0
  %452 = vmatprep.subr.bf16.mxu0 0
  %453 = vmatpush1.bf16.msra.mxu0 0
  %454 = vmatprep.subr.bf16.mxu0 0
  %455 = vmatpush1.bf16.msra.mxu0 0
  %456 = vmatprep.subr.bf16.mxu0 0
  %457 = vmatpush1.bf16.msra.mxu0 0
  %458 = vmatprep.subr.bf16.mxu0 0
  %459 = vmatpush1.bf16.msra.mxu0 0
  %460 = vmatprep.subr.bf16.mxu0 0
  %461 = vmatpush1.bf16.msra.mxu0 0
  %462 = vmatprep.subr.bf16.mxu0 0
  %463 = vmatpush1.bf16.msra.mxu0 0
  %464 = vmatprep.subr.bf16.mxu0 0
  %465 = vmatpush1.bf16.msra.mxu0 0
  %466 = vmatprep.subr.bf16.mxu0 0
  %467 = vmatpush1.bf16.msra.mxu0 0
  %468 = vmatprep.subr.bf16.mxu0 0
  %469 = vmatpush1.bf16.msra.mxu0 0
  %470 = vmatprep.subr.bf16.mxu0 0
  %471 = vmatpush1.bf16.msra.mxu0 0
  %472 = vmatprep.mubr.bf16.mxu0 0
  %473 = vmatmul.mubr.bf16.gmra.mrb[0].mxu0 %v320
  %v474 = vpop.f32.mrb[0].mxu0
  %v475 = vadd.f32 %v378, %v474
  %v476 = vpop.f32.mrb[0].mxu0
  %v477 = vpop.f32.mrb[0].mxu0
  %v478 = vadd.f32 %v381, %v477
  %v479 = vpop.f32.mrb[0].mxu0
  %480 = vmatprep.mubr.bf16.mxu0 0
  %481 = vmatmul.mubr.bf16.gmra.mrb[0].mxu0 %v323
  %v482 = vpop.f32.mrb[0].mxu0
  %v483 = vadd.f32 %v386, %v482
  %v484 = vpop.f32.mrb[0].mxu0
  %v485 = vpop.f32.mrb[0].mxu0
  %v486 = vadd.f32 %v389, %v485
  %v487 = vpop.f32.mrb[0].mxu0
  %488 = vmatprep.mubr.bf16.mxu0 0
  %489 = vmatmul.mubr.bf16.gmra.mrb[0].mxu0 %v326
  %v490 = vpop.f32.mrb[0].mxu0
  %v491 = vadd.f32 %v394, %v490
  %v492 = vpop.f32.mrb[0].mxu0
  %v493 = vpop.f32.mrb[0].mxu0
  %v494 = vadd.f32 %v397, %v493
  %v495 = vpop.f32.mrb[0].mxu0
  %496 = vmatprep.mubr.bf16.mxu0 0
  %497 = vmatmul.mubr.bf16.gmra.mrb[0].mxu0 %v329
  %v498 = vpop.f32.mrb[0].mxu0
  %v499 = vadd.f32 %v402, %v498
  %v500 = vpop.f32.mrb[0].mxu0
  %v501 = vpop.f32.mrb[0].mxu0
  %v502 = vadd.f32 %v405, %v501
  %v503 = vpop.f32.mrb[0].mxu0
  %504 = vmatprep.mubr.bf16.mxu0 0
  %505 = vmatmul.mubr.bf16.gmra.mrb[0].mxu0 %v332
  %v506 = vpop.f32.mrb[0].mxu0
  %v507 = vadd.f32 %v410, %v506
  %v508 = vpop.f32.mrb[0].mxu0
  %v509 = vpop.f32.mrb[0].mxu0
  %v510 = vadd.f32 %v413, %v509
  %v511 = vpop.f32.mrb[0].mxu0
  %512 = vmatprep.mubr.bf16.mxu0 0
  %513 = vmatmul.mubr.bf16.gmra.mrb[0].mxu0 %v335
  %v514 = vpop.f32.mrb[0].mxu0
  %v515 = vadd.f32 %v418, %v514
  %v516 = vpop.f32.mrb[0].mxu0
  %v517 = vpop.f32.mrb[0].mxu0
  %v518 = vadd.f32 %v421, %v517
  %v519 = vpop.f32.mrb[0].mxu0
  %520 = vmatprep.mubr.bf16.mxu0 0
  %521 = vmatmul.mubr.bf16.gmra.mrb[0].mxu0 %v338
  %v522 = vpop.f32.mrb[0].mxu0
  %v523 = vadd.f32 %v426, %v522
  %v524 = vpop.f32.mrb[0].mxu0
  %v525 = vpop.f32.mrb[0].mxu0
  %v526 = vadd.f32 %v429, %v525
  %v527 = vpop.f32.mrb[0].mxu0
  %528 = vmatprep.mubr.bf16.mxu0 0
  %529 = vmatmul.mubr.bf16.gmra.mrb[0].mxu0 %v341
  %v530 = vpop.f32.mrb[0].mxu0
  %v531 = vadd.f32 %v434, %v530
  %v532 = vpop.f32.mrb[0].mxu0
  %v533 = vpop.f32.mrb[0].mxu0
  %v534 = vadd.f32 %v437, %v533
  %v535 = vpop.f32.mrb[0].mxu0
  %536 = vdwg.mxu0
  %vm537 = vcmask 31744
  %538 = vst.msk [vmem:[%s3] sm:$0xff] %vm537, %v475
  %539 = vst.msk [vmem:[%s3 + $0x8] sm:$0xff] %vm537, %v478
  %540 = vst.msk [vmem:[%s3 + $0x10] sm:$0xff] %vm537, %v483
  %541 = vst.msk [vmem:[%s3 + $0x18] sm:$0xff] %vm537, %v486
  %542 = vst.msk [vmem:[%s3 + $0x20] sm:$0xff] %vm537, %v491
  %543 = vst.msk [vmem:[%s3 + $0x28] sm:$0xff] %vm537, %v494
  %544 = vst.msk [vmem:[%s3 + $0x30] sm:$0xff] %vm537, %v499
  %545 = vst.msk [vmem:[%s3 + $0x38] sm:$0xff] %vm537, %v502
  %546 = vst.msk [vmem:[%s3 + $0x40] sm:$0xff] %vm537, %v507
  %547 = vst.msk [vmem:[%s3 + $0x48] sm:$0xff] %vm537, %v510
  %548 = vst.msk [vmem:[%s3 + $0x50] sm:$0xff] %vm537, %v515
  %549 = vst.msk [vmem:[%s3 + $0x58] sm:$0xff] %vm537, %v518
  %550 = vst.msk [vmem:[%s3 + $0x60] sm:$0xff] %vm537, %v523
  %551 = vst.msk [vmem:[%s3 + $0x68] sm:$0xff] %vm537, %v526
  %552 = vst.msk [vmem:[%s3 + $0x70] sm:$0xff] %vm537, %v531
  %553 = vst.msk [vmem:[%s3 + $0x78] sm:$0xff] %vm537, %v534
  // Predicated region
  $region14: #{deeplabv3plus_forward.18} parent=0 // pred_check
    _
  $region15: #{deeplabv3plus_forward.18} parent=0 // pred_check_branch
    %555 = sbr.rel (0) target = $region17
  $region16: #{deeplabv3plus_forward.18} parent=0 // pred_region
    _
  $region17: #{deeplabv3plus_forward.18} parent=0 // pred_fallthru
    _
  // Predicated region
  $region18: #{deeplabv3plus_forward.18} parent=0 // pred_check
    _
  $region19: #{deeplabv3plus_forward.18} parent=0 // pred_check_branch
    %557 = sbr.rel (0) target = $region21
  $region20: #{deeplabv3plus_forward.18} parent=0 // pred_region
    _
  $region21: #{deeplabv3plus_forward.18} parent=0 // pred_fallthru
    _

// kernel: deeplabv3plus_forward.19
$region0: #{deeplabv3plus_forward.19}
  #allocation0 [shape = 'u32[]', space=smem, size = 0x4, offset = 0x4, fixed_abs, tag = 'smem constant byte address 0x4 - core index']
  #allocation1 [shape = 'u32[144,128]{1,0:T(1,128)}', space=vmem, size = 0x12000, scoped, tag = 'internal scratch']
  %s0 = inlined_call_operand.vmem [shape: f32[2,4,8,8], index: 0, kind: input, shape index: {}]
  %s1 = inlined_call_operand.vmem [shape: f32[32,8], index: 1, kind: input, shape index: {}]
  %s2 = inlined_call_operand.vmem [shape: f32[8,32], index: 2, kind: input, shape index: {}]
  %s3 = inlined_call_operand.hbm [shape: f32[2,4,32,32], index: 3, kind: output, shape index: {}]
  %s4 = sld [smem:[#allocation0]]
  $region45: #{deeplabv3plus_forward.19} parent=0
    _
  %s6 = ssub.s32 1, %s4
  %s7 = scalar_select 0, %s6, %s4
  $region1: #{deeplabv3plus_forward.19} parent=0
    #allocation2 [shape = 'u8[131072]{0}', space=vmem, size = 0x20000, scoped, tag = 'output window, operand 0']
    #allocation3 [shape = 's32[2]{0}', space=sflag, size = 0x8, scoped, tag = 'scoped memory for deeplabv3plus_forward.19']
    %8 = vsyncpa [#allocation3], 0
    %s9 = scalar_lea.sflag [#allocation3], 1
    %10 = vsyncpa %s9, 0
    loop: start=0, step=1, limit=4
    $region2: #{deeplabv3plus_forward.19} parent=1 // loop_pre_header
      _
    $region3: #{deeplabv3plus_forward.19} parent=1 // loop_header
      %s12 = sphi 0, %s16
      %p13 = scmp.ge.s32.totalorder %s12, 4
      %s22 = sphi 0, %s24
      %s25 = sphi 0, %s22
      %s26 = sphi 0, %s25
      %s42 = sphi 0, %s26
      %s46 = sphi 0, %s46
      %s48 = sphi 0, %s46
      %s49 = sphi 0, %s48
      %s63 = sphi 0, %s49
      %s67 = sphi 0, %s67
      %s69 = sphi 0, %s67
      %s70 = sphi 0, %s69
      %s84 = sphi 0, %s70
      %s90 = sphi 0, %s92
      %s93 = sphi 0, %s90
      %s94 = sphi 0, %s93
      %s110 = sphi 0, %s94
    $region4: #{deeplabv3plus_forward.19} parent=1 // loop_header_branch
      %15 = sbr.rel (%p13) target = $region8
    $region5: #{deeplabv3plus_forward.19} parent=1 // loop_body
      %s17 = ssub.s32 %s12, 1
      %s18 = ssub.s32 %s12, 2
      %s19 = sadd.s32 %s12, 1
      %s20 = ssub.s32 %s12, %s19
      %p21 = scmp.eq.s32.totalorder %s20, 0
      %s23 = sadd.s32 %s22, 1
      %s24 = scalar_select %p21, %s22, %s23
      %p27 = pneg %p21
      %p28 = scmp.eq.s32.totalorder %s12, 1
      %p29 = por %p27, %p28
      %p30 = scmp.ne.s32.totalorder %s22, %s25
      %p31 = scmp.eq.s32.totalorder %s12, 0
      %p32 = por %p30, %p31
      %p33 = scmp.ne.s32.totalorder %s22, %s25
      %p34 = scmp.eq.s32.totalorder %s17, 1
      %p35 = por %p33, %p34
      %p36 = scmp.ne.s32.totalorder %s25, %s26
      %p37 = scmp.eq.s32.totalorder %s17, 0
      %p38 = por %p36, %p37
      %p39 = scmp.ne.s32.totalorder %s25, %s26
      %p40 = scmp.eq.s32.totalorder %s18, 1
      %p41 = por %p39, %p40
      %p43 = scmp.ne.s32.totalorder %s26, %s42
      %p44 = scmp.eq.s32.totalorder %s18, 0
      %p45 = por %p43, %p44
      %s47 = sadd.s32 %s46, 1
      %p50 = scmp.eq.s32.totalorder %s12, 1
      %p51 = scmp.ne.s32.totalorder %s46, %s48
      %p52 = scmp.eq.s32.totalorder %s12, 0
      %p53 = por %p51, %p52
      %p54 = scmp.ne.s32.totalorder %s46, %s48
      %p55 = scmp.eq.s32.totalorder %s17, 1
      %p56 = por %p54, %p55
      %p57 = scmp.ne.s32.totalorder %s48, %s49
      %p58 = scmp.eq.s32.totalorder %s17, 0
      %p59 = por %p57, %p58
      %p60 = scmp.ne.s32.totalorder %s48, %s49
      %p61 = scmp.eq.s32.totalorder %s18, 1
      %p62 = por %p60, %p61
      %p64 = scmp.ne.s32.totalorder %s49, %s63
      %p65 = scmp.eq.s32.totalorder %s18, 0
      %p66 = por %p64, %p65
      %s68 = sadd.s32 %s67, 1
      %p71 = scmp.eq.s32.totalorder %s12, 1
      %p72 = scmp.ne.s32.totalorder %s67, %s69
      %p73 = scmp.eq.s32.totalorder %s12, 0
      %p74 = por %p72, %p73
      %p75 = scmp.ne.s32.totalorder %s67, %s69
      %p76 = scmp.eq.s32.totalorder %s17, 1
      %p77 = por %p75, %p76
      %p78 = scmp.ne.s32.totalorder %s69, %s70
      %p79 = scmp.eq.s32.totalorder %s17, 0
      %p80 = por %p78, %p79
      %p81 = scmp.ne.s32.totalorder %s69, %s70
      %p82 = scmp.eq.s32.totalorder %s18, 1
      %p83 = por %p81, %p82
      %p85 = scmp.ne.s32.totalorder %s70, %s84
      %p86 = scmp.eq.s32.totalorder %s18, 0
      %p87 = por %p85, %p86
      %s88 = ssub.s32 %s12, %s19
      %p89 = scmp.eq.s32.totalorder %s88, 0
      %s91 = sadd.s32 %s90, 1
      %s92 = scalar_select %p89, %s90, %s91
      %p95 = pneg %p89
      %p96 = scmp.eq.s32.totalorder %s12, 1
      %p97 = por %p95, %p96
      %p98 = scmp.ne.s32.totalorder %s90, %s93
      %p99 = scmp.eq.s32.totalorder %s12, 0
      %p100 = por %p98, %p99
      %p101 = scmp.ne.s32.totalorder %s90, %s93
      %p102 = scmp.eq.s32.totalorder %s17, 1
      %p103 = por %p101, %p102
      %p104 = scmp.ne.s32.totalorder %s93, %s94
      %p105 = scmp.eq.s32.totalorder %s17, 0
      %p106 = por %p104, %p105
      %p107 = scmp.ne.s32.totalorder %s93, %s94
      %p108 = scmp.eq.s32.totalorder %s18, 1
      %p109 = por %p107, %p108
      %p111 = scmp.ne.s32.totalorder %s94, %s110
      %p112 = scmp.eq.s32.totalorder %s18, 0
      %p113 = por %p111, %p112
      %p114 = scmp.le.s32.totalorder 1, %s12
      %p115 = scmp.lt.s32.totalorder %s12, 3
      %p116 = pnand %p114, %p115
      %p117 = pneg %p116
      // Predicated region
      $region9: #{deeplabv3plus_forward.19} parent=5 // pred_check
        _
      $region10: #{deeplabv3plus_forward.19} parent=5 // pred_check_branch
        %119 = sbr.rel (%p116) target = $region12
      $region11: #{deeplabv3plus_forward.19} parent=5 // pred_region
        %s120 = ssub.s32 %s12, 1
        // Predicated region
        $region13: #{deeplabv3plus_forward.19} parent=11 // pred_check
          %p121 = pneg %p59
        $region14: #{deeplabv3plus_forward.19} parent=11 // pred_check_branch
          %123 = sbr.rel (%p121) target = $region16
        $region15: #{deeplabv3plus_forward.19} parent=11 // pred_region
          _
        $region16: #{deeplabv3plus_forward.19} parent=11 // pred_fallthru
          _
        // Predicated region
        $region17: #{deeplabv3plus_forward.19} parent=11 // pred_check
          %p124 = pneg %p80
        $region18: #{deeplabv3plus_forward.19} parent=11 // pred_check_branch
          %126 = sbr.rel (%p124) target = $region20
        $region19: #{deeplabv3plus_forward.19} parent=11 // pred_region
          _
        $region20: #{deeplabv3plus_forward.19} parent=11 // pred_fallthru
          _
      $region12: #{deeplabv3plus_forward.19} parent=5 // pred_fallthru
        _
      %p127 = scmp.lt.s32.totalorder %s12, 2
      // Predicated region
      $region21: #{deeplabv3plus_forward.19} parent=5 // pred_check
        %p128 = pneg %p127
      $region22: #{deeplabv3plus_forward.19} parent=5 // pred_check_branch
        %130 = sbr.rel (%p128) target = $region24
      $region23: #{deeplabv3plus_forward.19} parent=5 // pred_region
        // Predicated region
        $region25: #{deeplabv3plus_forward.19} parent=23 // pred_check
          %p131 = pneg %p32
        $region26: #{deeplabv3plus_forward.19} parent=23 // pred_check_branch
          %133 = sbr.rel (%p131) target = $region28
        $region27: #{deeplabv3plus_forward.19} parent=23 // pred_region
          %p134 = scmp.lt.s32.totalorder %s12, 1
          %s135 = scalar_select %p134, %s12, 1
          %s136 = smul.addr %s135, 4
          %s137 = smul.addr %s136, 8
          %s138 = scalar_lea.vmem %s0, %s137
        $region28: #{deeplabv3plus_forward.19} parent=23 // pred_fallthru
          _
      $region24: #{deeplabv3plus_forward.19} parent=5 // pred_fallthru
        _
      %p139 = scmp.le.s32.totalorder 1, %s12
      %p140 = scmp.lt.s32.totalorder %s12, 3
      %p141 = pnand %p139, %p140
      %p142 = pneg %p141
      // Predicated region
      $region29: #{deeplabv3plus_forward.19} parent=5 // pred_check
        _
      $region30: #{deeplabv3plus_forward.19} parent=5 // pred_check_branch
        %144 = sbr.rel (%p141) target = $region32
      $region31: #{deeplabv3plus_forward.19} parent=5 // pred_region
        %s145 = ssub.s32 %s12, 1
        %p146 = scmp.lt.s32.totalorder %s17, 1
        %s147 = scalar_select %p146, %s17, 1
        %s148 = smul.addr %s147, 4
        %s149 = smul.addr %s148, 8
        %s150 = scalar_lea.vmem %s0, %s149
        %p151 = pneg %p38
        %p152 = pneg %p35
        %p153 = pneg %p59
        %p154 = pneg %p56
        %p155 = pneg %p80
        %p156 = pneg %p77
        %p157 = pneg %p106
        %p158 = pneg %p103
        %s159 = sand.u32 %s93, 1
        %s160 = scalar_lea.sflag [#allocation3], %s159
        %s161 = sand.u32 %s93, 1
        %s162 = smul.addr %s161, 128
        %s163 = scalar_lea.vmem [#allocation2], %s162
        %p164 = scmp.lt.s32.totalorder %s17, 1
        %s165 = scalar_select %p164, %s17, 1
        %s166 = smul.addr %s165, 4
        %s167 = smul.addr %s166, 8
        %s168 = scalar_lea.vmem %s0, %s167
        %v169 = vld [vmem:[%s1] sm:$0xff]
        %v170 = vld [vmem:[%s1 + $0x8] sm:$0xff]
        %v171 = vld [vmem:[%s1 + $0x10] sm:$0xff]
        %v172 = vld [vmem:[%s1 + $0x18] sm:$0xff]
        %v173 = vld [vmem:[%s168] sm:$0xff]
        %vm174 = vcmask 64512
        %v176 = vsel %vm174, %v169, 0
        %v179 = vsel %vm174, %v170, 0
        %v182 = vsel %vm174, %v171, 0
        %v185 = vsel %vm174, %v172, 0
        %187 = vmatprep.subr.mxu0 0.0
        %188 = vmatpush1.msra.mxu0 %v173
        %189 = vmatprep.subr.mxu0 0.0
        %190 = vmatpush1.msra.mxu0 0.0
        %191 = vmatprep.subr.mxu0 0.0
        %192 = vmatpush1.msra.mxu0 0.0
        %193 = vmatprep.subr.mxu0 0.0
        %194 = vmatpush1.msra.mxu0 0.0
        %195 = vmatprep.subr.mxu0 0.0
        %196 = vmatpush1.msra.mxu0 0.0
        %197 = vmatprep.subr.mxu0 0.0
        %198 = vmatpush1.msra.mxu0 0.0
        %199 = vmatprep.subr.mxu0 0.0
        %200 = vmatpush1.msra.mxu0 0.0
        %201 = vmatprep.subr.mxu0 0.0
        %202 = vmatpush1.msra.mxu0 0.0
        %203 = vmatprep.subr.mxu0 0.0
        %204 = vmatpush1.msra.mxu0 0.0
        %205 = vmatprep.subr.mxu0 0.0
        %206 = vmatpush1.msra.mxu0 0.0
        %207 = vmatprep.subr.mxu0 0.0
        %208 = vmatpush1.msra.mxu0 0.0
        %209 = vmatprep.subr.mxu0 0.0
        %210 = vmatpush1.msra.mxu0 0.0
        %211 = vmatprep.subr.mxu0 0.0
        %212 = vmatpush1.msra.mxu0 0.0
        %213 = vmatprep.subr.mxu0 0.0
        %214 = vmatpush1.msra.mxu0 0.0
        %215 = vmatprep.subr.mxu0 0.0
        %216 = vmatpush1.msra.mxu0 0.0
        %217 = vmatprep.subr.mxu0 0.0
        %218 = vmatpush1.msra.mxu0 0.0
        %219 = vmatprep.subr.mxu0 0.0
        %220 = vmatpush1.msra.mxu0 0.0
        %221 = vmatprep.subr.mxu0 0.0
        %222 = vmatpush1.msra.mxu0 0.0
        %223 = vmatprep.subr.mxu0 0.0
        %224 = vmatpush1.msra.mxu0 0.0
        %225 = vmatprep.subr.mxu0 0.0
        %226 = vmatpush1.msra.mxu0 0.0
        %227 = vmatprep.subr.mxu0 0.0
        %228 = vmatpush1.msra.mxu0 0.0
        %229 = vmatprep.subr.mxu0 0.0
        %230 = vmatpush1.msra.mxu0 0.0
        %231 = vmatprep.subr.mxu0 0.0
        %232 = vmatpush1.msra.mxu0 0.0
        %233 = vmatprep.subr.mxu0 0.0
        %234 = vmatpush1.msra.mxu0 0.0
        %235 = vmatprep.subr.mxu0 0.0
        %236 = vmatpush1.msra.mxu0 0.0
        %237 = vmatprep.subr.mxu0 0.0
        %238 = vmatpush1.msra.mxu0 0.0
        %239 = vmatprep.subr.mxu0 0.0
        %240 = vmatpush1.msra.mxu0 0.0
        %241 = vmatprep.subr.mxu0 0.0
        %242 = vmatpush1.msra.mxu0 0.0
        %243 = vmatprep.subr.mxu0 0.0
        %244 = vmatpush1.msra.mxu0 0.0
        %245 = vmatprep.subr.mxu0 0.0
        %246 = vmatpush1.msra.mxu0 0.0
        %247 = vmatprep.subr.mxu0 0.0
        %248 = vmatpush1.msra.mxu0 0.0
        %249 = vmatprep.subr.mxu0 0.0
        %250 = vmatpush1.msra.mxu0 0.0
        %251 = vmatprep.mubr.f32.mxu0 0.0
        %252 = vmatmul.mubr.f32.gmra.mrb[0].mxu0 %v176
        %v253 = vpop.f32.mrb[0].mxu0
        %v254 = vadd.f32 0.0, %v253
        %v255 = vpop.f32.mrb[0].mxu0
        %256 = vmatprep.mubr.f32.mxu0 0.0
        %257 = vmatmul.mubr.f32.gmra.mrb[0].mxu0 %v179
        %v258 = vpop.f32.mrb[0].mxu0
        %v259 = vadd.f32 0.0, %v258
        %v260 = vpop.f32.mrb[0].mxu0
        %261 = vmatprep.mubr.f32.mxu0 0.0
        %262 = vmatmul.mubr.f32.gmra.mrb[0].mxu0 %v182
        %v263 = vpop.f32.mrb[0].mxu0
        %v264 = vadd.f32 0.0, %v263
        %v265 = vpop.f32.mrb[0].mxu0
        %266 = vmatprep.mubr.f32.mxu0 0.0
        %267 = vmatmul.mubr.f32.gmra.mrb[0].mxu0 %v185
        %v268 = vpop.f32.mrb[0].mxu0
        %v269 = vadd.f32 0.0, %v268
        %v270 = vpop.f32.mrb[0].mxu0
        %271 = vdwg.mxu0
        %v272 = vld [vmem:[%s2] sm:$0xff]
        %v274 = vsel %vm174, %v254, 0
        %v277 = vsel %vm174, %v259, 0
        %v280 = vsel %vm174, %v264, 0
        %v283 = vsel %vm174, %v269, 0
        %285 = vmatprep.subr.mxu0 0.0
        %286 = vmatpush1.msra.mxu0 %v272
        %287 = vmatprep.subr.mxu0 0.0
        %288 = vmatpush1.msra.mxu0 0.0
        %289 = vmatprep.subr.mxu0 0.0
        %290 = vmatpush1.msra.mxu0 0.0
        %291 = vmatprep.subr.mxu0 0.0
        %292 = vmatpush1.msra.mxu0 0.0
        %293 = vmatprep.subr.mxu0 0.0
        %294 = vmatpush1.msra.mxu0 0.0
        %295 = vmatprep.subr.mxu0 0.0
        %296 = vmatpush1.msra.mxu0 0.0
        %297 = vmatprep.subr.mxu0 0.0
        %298 = vmatpush1.msra.mxu0 0.0
        %299 = vmatprep.subr.mxu0 0.0
        %300 = vmatpush1.msra.mxu0 0.0
        %301 = vmatprep.subr.mxu0 0.0
        %302 = vmatpush1.msra.mxu0 0.0
        %303 = vmatprep.subr.mxu0 0.0
        %304 = vmatpush1.msra.mxu0 0.0
        %305 = vmatprep.subr.mxu0 0.0
        %306 = vmatpush1.msra.mxu0 0.0
        %307 = vmatprep.subr.mxu0 0.0
        %308 = vmatpush1.msra.mxu0 0.0
        %309 = vmatprep.subr.mxu0 0.0
        %310 = vmatpush1.msra.mxu0 0.0
        %311 = vmatprep.subr.mxu0 0.0
        %312 = vmatpush1.msra.mxu0 0.0
        %313 = vmatprep.subr.mxu0 0.0
        %314 = vmatpush1.msra.mxu0 0.0
        %315 = vmatprep.subr.mxu0 0.0
        %316 = vmatpush1.msra.mxu0 0.0
        %317 = vmatprep.subr.mxu0 0.0
        %318 = vmatpush1.msra.mxu0 0.0
        %319 = vmatprep.subr.mxu0 0.0
        %320 = vmatpush1.msra.mxu0 0.0
        %321 = vmatprep.subr.mxu0 0.0
        %322 = vmatpush1.msra.mxu0 0.0
        %323 = vmatprep.subr.mxu0 0.0
        %324 = vmatpush1.msra.mxu0 0.0
        %325 = vmatprep.subr.mxu0 0.0
        %326 = vmatpush1.msra.mxu0 0.0
        %327 = vmatprep.subr.mxu0 0.0
        %328 = vmatpush1.msra.mxu0 0.0
        %329 = vmatprep.subr.mxu0 0.0
        %330 = vmatpush1.msra.mxu0 0.0
        %331 = vmatprep.subr.mxu0 0.0
        %332 = vmatpush1.msra.mxu0 0.0
        %333 = vmatprep.subr.mxu0 0.0
        %334 = vmatpush1.msra.mxu0 0.0
        %335 = vmatprep.subr.mxu0 0.0
        %336 = vmatpush1.msra.mxu0 0.0
        %337 = vmatprep.subr.mxu0 0.0
        %338 = vmatpush1.msra.mxu0 0.0
        %339 = vmatprep.subr.mxu0 0.0
        %340 = vmatpush1.msra.mxu0 0.0
        %341 = vmatprep.subr.mxu0 0.0
        %342 = vmatpush1.msra.mxu0 0.0
        %343 = vmatprep.subr.mxu0 0.0
        %344 = vmatpush1.msra.mxu0 0.0
        %345 = vmatprep.subr.mxu0 0.0
        %346 = vmatpush1.msra.mxu0 0.0
        %347 = vmatprep.subr.mxu0 0.0
        %348 = vmatpush1.msra.mxu0 0.0
        %349 = vmatprep.mubr.f32.mxu0 0.0
        %350 = vmatmul.mubr.f32.gmra.mrb[0].mxu0 %v274
        %v351 = vpop.f32.mrb[0].mxu0
        %v352 = vadd.f32 0.0, %v351
        %v353 = vpop.f32.mrb[0].mxu0
        %354 = vmatprep.mubr.f32.mxu0 0.0
        %355 = vmatmul.mubr.f32.gmra.mrb[0].mxu0 %v277
        %v356 = vpop.f32.mrb[0].mxu0
        %v357 = vadd.f32 0.0, %v356
        %v358 = vpop.f32.mrb[0].mxu0
        %359 = vmatprep.mubr.f32.mxu0 0.0
        %360 = vmatmul.mubr.f32.gmra.mrb[0].mxu0 %v280
        %v361 = vpop.f32.mrb[0].mxu0
        %v362 = vadd.f32 0.0, %v361
        %v363 = vpop.f32.mrb[0].mxu0
        %364 = vmatprep.mubr.f32.mxu0 0.0
        %365 = vmatmul.mubr.f32.gmra.mrb[0].mxu0 %v283
        %v366 = vpop.f32.mrb[0].mxu0
        %v367 = vadd.f32 0.0, %v366
        %v368 = vpop.f32.mrb[0].mxu0
        %369 = vdwg.mxu0
        %s370 = scalar_lea.vmem %s168, 8
        %v371 = vld [vmem:[%s370] sm:$0xff]
        %372 = vmatprep.subr.mxu0 0.0
        %373 = vmatpush1.msra.mxu0 %v371
        %374 = vmatprep.subr.mxu0 0.0
        %375 = vmatpush1.msra.mxu0 0.0
        %376 = vmatprep.subr.mxu0 0.0
        %377 = vmatpush1.msra.mxu0 0.0
        %378 = vmatprep.subr.mxu0 0.0
        %379 = vmatpush1.msra.mxu0 0.0
        %380 = vmatprep.subr.mxu0 0.0
        %381 = vmatpush1.msra.mxu0 0.0
        %382 = vmatprep.subr.mxu0 0.0
        %383 = vmatpush1.msra.mxu0 0.0
        %384 = vmatprep.subr.mxu0 0.0
        %385 = vmatpush1.msra.mxu0 0.0
        %386 = vmatprep.subr.mxu0 0.0
        %387 = vmatpush1.msra.mxu0 0.0
        %388 = vmatprep.subr.mxu0 0.0
        %389 = vmatpush1.msra.mxu0 0.0
        %390 = vmatprep.subr.mxu0 0.0
        %391 = vmatpush1.msra.mxu0 0.0
        %392 = vmatprep.subr.mxu0 0.0
        %393 = vmatpush1.msra.mxu0 0.0
        %394 = vmatprep.subr.mxu0 0.0
        %395 = vmatpush1.msra.mxu0 0.0
        %396 = vmatprep.subr.mxu0 0.0
        %397 = vmatpush1.msra.mxu0 0.0
        %398 = vmatprep.subr.mxu0 0.0
        %399 = vmatpush1.msra.mxu0 0.0
        %400 = vmatprep.subr.mxu0 0.0
        %401 = vmatpush1.msra.mxu0 0.0
        %402 = vmatprep.subr.mxu0 0.0
        %403 = vmatpush1.msra.mxu0 0.0
        %404 = vmatprep.subr.mxu0 0.0
        %405 = vmatpush1.msra.mxu0 0.0
        %406 = vmatprep.subr.mxu0 0.0
        %407 = vmatpush1.msra.mxu0 0.0
        %408 = vmatprep.subr.mxu0 0.0
        %409 = vmatpush1.msra.mxu0 0.0
        %410 = vmatprep.subr.mxu0 0.0
        %411 = vmatpush1.msra.mxu0 0.0
        %412 = vmatprep.subr.mxu0 0.0
        %413 = vmatpush1.msra.mxu0 0.0
        %414 = vmatprep.subr.mxu0 0.0
        %415 = vmatpush1.msra.mxu0 0.0
        %416 = vmatprep.subr.mxu0 0.0
        %417 = vmatpush1.msra.mxu0 0.0
        %418 = vmatprep.subr.mxu0 0.0
        %419 = vmatpush1.msra.mxu0 0.0
        %420 = vmatprep.subr.mxu0 0.0
        %421 = vmatpush1.msra.mxu0 0.0
        %422 = vmatprep.subr.mxu0 0.0
        %423 = vmatpush1.msra.mxu0 0.0
        %424 = vmatprep.subr.mxu0 0.0
        %425 = vmatpush1.msra.mxu0 0.0
        %426 = vmatprep.subr.mxu0 0.0
        %427 = vmatpush1.msra.mxu0 0.0
        %428 = vmatprep.subr.mxu0 0.0
        %429 = vmatpush1.msra.mxu0 0.0
        %430 = vmatprep.subr.mxu0 0.0
        %431 = vmatpush1.msra.mxu0 0.0
        %432 = vmatprep.subr.mxu0 0.0
        %433 = vmatpush1.msra.mxu0 0.0
        %434 = vmatprep.subr.mxu0 0.0
        %435 = vmatpush1.msra.mxu0 0.0
        %436 = vmatprep.mubr.f32.mxu0 0.0
        %437 = vmatmul.mubr.f32.gmra.mrb[0].mxu0 %v176
        %v438 = vpop.f32.mrb[0].mxu0
        %v439 = vadd.f32 0.0, %v438
        %v440 = vpop.f32.mrb[0].mxu0
        %441 = vmatprep.mubr.f32.mxu0 0.0
        %442 = vmatmul.mubr.f32.gmra.mrb[0].mxu0 %v179
        %v443 = vpop.f32.mrb[0].mxu0
        %v444 = vadd.f32 0.0, %v443
        %v445 = vpop.f32.mrb[0].mxu0
        %446 = vmatprep.mubr.f32.mxu0 0.0
        %447 = vmatmul.mubr.f32.gmra.mrb[0].mxu0 %v182
        %v448 = vpop.f32.mrb[0].mxu0
        %v449 = vadd.f32 0.0, %v448
        %v450 = vpop.f32.mrb[0].mxu0
        %451 = vmatprep.mubr.f32.mxu0 0.0
        %452 = vmatmul.mubr.f32.gmra.mrb[0].mxu0 %v185
        %v453 = vpop.f32.mrb[0].mxu0
        %v454 = vadd.f32 0.0, %v453
        %v455 = vpop.f32.mrb[0].mxu0
        %456 = vdwg.mxu0
        %v458 = vsel %vm174, %v439, 0
        %v461 = vsel %vm174, %v444, 0
        %v464 = vsel %vm174, %v449, 0
        %v467 = vsel %vm174, %v454, 0
        %469 = vmatprep.subr.mxu0 0.0
        %470 = vmatpush1.msra.mxu0 %v272
        %471 = vmatprep.subr.mxu0 0.0
        %472 = vmatpush1.msra.mxu0 0.0
        %473 = vmatprep.subr.mxu0 0.0
        %474 = vmatpush1.msra.mxu0 0.0
        %475 = vmatprep.subr.mxu0 0.0
        %476 = vmatpush1.msra.mxu0 0.0
        %477 = vmatprep.subr.mxu0 0.0
        %478 = vmatpush1.msra.mxu0 0.0
        %479 = vmatprep.subr.mxu0 0.0
        %480 = vmatpush1.msra.mxu0 0.0
        %481 = vmatprep.subr.mxu0 0.0
        %482 = vmatpush1.msra.mxu0 0.0
        %483 = vmatprep.subr.mxu0 0.0
        %484 = vmatpush1.msra.mxu0 0.0
        %485 = vmatprep.subr.mxu0 0.0
        %486 = vmatpush1.msra.mxu0 0.0
        %487 = vmatprep.subr.mxu0 0.0
        %488 = vmatpush1.msra.mxu0 0.0
        %489 = vmatprep.subr.mxu0 0.0
        %490 = vmatpush1.msra.mxu0 0.0
        %491 = vmatprep.subr.mxu0 0.0
        %492 = vmatpush1.msra.mxu0 0.0
        %493 = vmatprep.subr.mxu0 0.0
        %494 = vmatpush1.msra.mxu0 0.0
        %495 = vmatprep.subr.mxu0 0.0
        %496 = vmatpush1.msra.mxu0 0.0
        %497 = vmatprep.subr.mxu0 0.0
        %498 = vmatpush1.msra.mxu0 0.0
        %499 = vmatprep.subr.mxu0 0.0
        %500 = vmatpush1.msra.mxu0 0.0
        %501 = vmatprep.subr.mxu0 0.0
        %502 = vmatpush1.msra.mxu0 0.0
        %503 = vmatprep.subr.mxu0 0.0
        %504 = vmatpush1.msra.mxu0 0.0
        %505 = vmatprep.subr.mxu0 0.0
        %506 = vmatpush1.msra.mxu0 0.0
        %507 = vmatprep.subr.mxu0 0.0
        %508 = vmatpush1.msra.mxu0 0.0
        %509 = vmatprep.subr.mxu0 0.0
        %510 = vmatpush1.msra.mxu0 0.0
        %511 = vmatprep.subr.mxu0 0.0
        %512 = vmatpush1.msra.mxu0 0.0
        %513 = vmatprep.subr.mxu0 0.0
        %514 = vmatpush1.msra.mxu0 0.0
        %515 = vmatprep.subr.mxu0 0.0
        %516 = vmatpush1.msra.mxu0 0.0
        %517 = vmatprep.subr.mxu0 0.0
        %518 = vmatpush1.msra.mxu0 0.0
        %519 = vmatprep.subr.mxu0 0.0
        %520 = vmatpush1.msra.mxu0 0.0
        %521 = vmatprep.subr.mxu0 0.0
        %522 = vmatpush1.msra.mxu0 0.0
        %523 = vmatprep.subr.mxu0 0.0
        %524 = vmatpush1.msra.mxu0 0.0
        %525 = vmatprep.subr.mxu0 0.0
        %526 = vmatpush1.msra.mxu0 0.0
        %527 = vmatprep.subr.mxu0 0.0
        %528 = vmatpush1.msra.mxu0 0.0
        %529 = vmatprep.subr.mxu0 0.0
        %530 = vmatpush1.msra.mxu0 0.0
        %531 = vmatprep.subr.mxu0 0.0
        %532 = vmatpush1.msra.mxu0 0.0
        %533 = vmatprep.mubr.f32.mxu0 0.0
        %534 = vmatmul.mubr.f32.gmra.mrb[0].mxu0 %v458
        %v535 = vpop.f32.mrb[0].mxu0
        %v536 = vadd.f32 0.0, %v535
        %v537 = vpop.f32.mrb[0].mxu0
        %538 = vmatprep.mubr.f32.mxu0 0.0
        %539 = vmatmul.mubr.f32.gmra.mrb[0].mxu0 %v461
        %v540 = vpop.f32.mrb[0].mxu0
        %v541 = vadd.f32 0.0, %v540
        %v542 = vpop.f32.mrb[0].mxu0
        %543 = vmatprep.mubr.f32.mxu0 0.0
        %544 = vmatmul.mubr.f32.gmra.mrb[0].mxu0 %v464
        %v545 = vpop.f32.mrb[0].mxu0
        %v546 = vadd.f32 0.0, %v545
        %v547 = vpop.f32.mrb[0].mxu0
        %548 = vmatprep.mubr.f32.mxu0 0.0
        %549 = vmatmul.mubr.f32.gmra.mrb[0].mxu0 %v467
        %v550 = vpop.f32.mrb[0].mxu0
        %v551 = vadd.f32 0.0, %v550
        %v552 = vpop.f32.mrb[0].mxu0
        %553 = vdwg.mxu0
        %s554 = scalar_lea.vmem %s168, 16
        %v555 = vld [vmem:[%s554] sm:$0xff]
        %556 = vmatprep.subr.mxu0 0.0
        %557 = vmatpush1.msra.mxu0 %v555
        %558 = vmatprep.subr.mxu0 0.0
        %559 = vmatpush1.msra.mxu0 0.0
        %560 = vmatprep.subr.mxu0 0.0
        %561 = vmatpush1.msra.mxu0 0.0
        %562 = vmatprep.subr.mxu0 0.0
        %563 = vmatpush1.msra.mxu0 0.0
        %564 = vmatprep.subr.mxu0 0.0
        %565 = vmatpush1.msra.mxu0 0.0
        %566 = vmatprep.subr.mxu0 0.0
        %567 = vmatpush1.msra.mxu0 0.0
        %568 = vmatprep.subr.mxu0 0.0
        %569 = vmatpush1.msra.mxu0 0.0
        %570 = vmatprep.subr.mxu0 0.0
        %571 = vmatpush1.msra.mxu0 0.0
        %572 = vmatprep.subr.mxu0 0.0
        %573 = vmatpush1.msra.mxu0 0.0
        %574 = vmatprep.subr.mxu0 0.0
        %575 = vmatpush1.msra.mxu0 0.0
        %576 = vmatprep.subr.mxu0 0.0
        %577 = vmatpush1.msra.mxu0 0.0
        %578 = vmatprep.subr.mxu0 0.0
        %579 = vmatpush1.msra.mxu0 0.0
        %580 = vmatprep.subr.mxu0 0.0
        %581 = vmatpush1.msra.mxu0 0.0
        %582 = vmatprep.subr.mxu0 0.0
        %583 = vmatpush1.msra.mxu0 0.0
        %584 = vmatprep.subr.mxu0 0.0
        %585 = vmatpush1.msra.mxu0 0.0
        %586 = vmatprep.subr.mxu0 0.0
        %587 = vmatpush1.msra.mxu0 0.0
        %588 = vmatprep.subr.mxu0 0.0
        %589 = vmatpush1.msra.mxu0 0.0
        %590 = vmatprep.subr.mxu0 0.0
        %591 = vmatpush1.msra.mxu0 0.0
        %592 = vmatprep.subr.mxu0 0.0
        %593 = vmatpush1.msra.mxu0 0.0
        %594 = vmatprep.subr.mxu0 0.0
        %595 = vmatpush1.msra.mxu0 0.0
        %596 = vmatprep.subr.mxu0 0.0
        %597 = vmatpush1.msra.mxu0 0.0
        %598 = vmatprep.subr.mxu0 0.0
        %599 = vmatpush1.msra.mxu0 0.0
        %600 = vmatprep.subr.mxu0 0.0
        %601 = vmatpush1.msra.mxu0 0.0
        %602 = vmatprep.subr.mxu0 0.0
        %603 = vmatpush1.msra.mxu0 0.0
        %604 = vmatprep.subr.mxu0 0.0
        %605 = vmatpush1.msra.mxu0 0.0
        %606 = vmatprep.subr.mxu0 0.0
        %607 = vmatpush1.msra.mxu0 0.0
        %608 = vmatprep.subr.mxu0 0.0
        %609 = vmatpush1.msra.mxu0 0.0
        %610 = vmatprep.subr.mxu0 0.0
        %611 = vmatpush1.msra.mxu0 0.0
        %612 = vmatprep.subr.mxu0 0.0
        %613 = vmatpush1.msra.mxu0 0.0
        %614 = vmatprep.subr.mxu0 0.0
        %615 = vmatpush1.msra.mxu0 0.0
        %616 = vmatprep.subr.mxu0 0.0
        %617 = vmatpush1.msra.mxu0 0.0
        %618 = vmatprep.subr.mxu0 0.0
        %619 = vmatpush1.msra.mxu0 0.0
        %620 = vmatprep.mubr.f32.mxu0 0.0
        %621 = vmatmul.mubr.f32.gmra.mrb[0].mxu0 %v176
        %v622 = vpop.f32.mrb[0].mxu0
        %v623 = vadd.f32 0.0, %v622
        %v624 = vpop.f32.mrb[0].mxu0
        %625 = vmatprep.mubr.f32.mxu0 0.0
        %626 = vmatmul.mubr.f32.gmra.mrb[0].mxu0 %v179
        %v627 = vpop.f32.mrb[0].mxu0
        %v628 = vadd.f32 0.0, %v627
        %v629 = vpop.f32.mrb[0].mxu0
        %630 = vmatprep.mubr.f32.mxu0 0.0
        %631 = vmatmul.mubr.f32.gmra.mrb[0].mxu0 %v182
        %v632 = vpop.f32.mrb[0].mxu0
        %v633 = vadd.f32 0.0, %v632
        %v634 = vpop.f32.mrb[0].mxu0
        %635 = vmatprep.mubr.f32.mxu0 0.0
        %636 = vmatmul.mubr.f32.gmra.mrb[0].mxu0 %v185
        %v637 = vpop.f32.mrb[0].mxu0
        %v638 = vadd.f32 0.0, %v637
        %v639 = vpop.f32.mrb[0].mxu0
        %640 = vdwg.mxu0
        %v642 = vsel %vm174, %v623, 0
        %v645 = vsel %vm174, %v628, 0
        %v648 = vsel %vm174, %v633, 0
        %v651 = vsel %vm174, %v638, 0
        %653 = vmatprep.subr.mxu0 0.0
        %654 = vmatpush1.msra.mxu0 %v272
        %655 = vmatprep.subr.mxu0 0.0
        %656 = vmatpush1.msra.mxu0 0.0
        %657 = vmatprep.subr.mxu0 0.0
        %658 = vmatpush1.msra.mxu0 0.0
        %659 = vmatprep.subr.mxu0 0.0
        %660 = vmatpush1.msra.mxu0 0.0
        %661 = vmatprep.subr.mxu0 0.0
        %662 = vmatpush1.msra.mxu0 0.0
        %663 = vmatprep.subr.mxu0 0.0
        %664 = vmatpush1.msra.mxu0 0.0
        %665 = vmatprep.subr.mxu0 0.0
        %666 = vmatpush1.msra.mxu0 0.0
        %667 = vmatprep.subr.mxu0 0.0
        %668 = vmatpush1.msra.mxu0 0.0
        %669 = vmatprep.subr.mxu0 0.0
        %670 = vmatpush1.msra.mxu0 0.0
        %671 = vmatprep.subr.mxu0 0.0
        %672 = vmatpush1.msra.mxu0 0.0
        %673 = vmatprep.subr.mxu0 0.0
        %674 = vmatpush1.msra.mxu0 0.0
        %675 = vmatprep.subr.mxu0 0.0
        %676 = vmatpush1.msra.mxu0 0.0
        %677 = vmatprep.subr.mxu0 0.0
        %678 = vmatpush1.msra.mxu0 0.0
        %679 = vmatprep.subr.mxu0 0.0
        %680 = vmatpush1.msra.mxu0 0.0
        %681 = vmatprep.subr.mxu0 0.0
        %682 = vmatpush1.msra.mxu0 0.0
        %683 = vmatprep.subr.mxu0 0.0
        %684 = vmatpush1.msra.mxu0 0.0
        %685 = vmatprep.subr.mxu0 0.0
        %686 = vmatpush1.msra.mxu0 0.0
        %687 = vmatprep.subr.mxu0 0.0
        %688 = vmatpush1.msra.mxu0 0.0
        %689 = vmatprep.subr.mxu0 0.0
        %690 = vmatpush1.msra.mxu0 0.0
        %691 = vmatprep.subr.mxu0 0.0
        %692 = vmatpush1.msra.mxu0 0.0
        %693 = vmatprep.subr.mxu0 0.0
        %694 = vmatpush1.msra.mxu0 0.0
        %695 = vmatprep.subr.mxu0 0.0
        %696 = vmatpush1.msra.mxu0 0.0
        %697 = vmatprep.subr.mxu0 0.0
        %698 = vmatpush1.msra.mxu0 0.0
        %699 = vmatprep.subr.mxu0 0.0
        %700 = vmatpush1.msra.mxu0 0.0
        %701 = vmatprep.subr.mxu0 0.0
        %702 = vmatpush1.msra.mxu0 0.0
        %703 = vmatprep.subr.mxu0 0.0
        %704 = vmatpush1.msra.mxu0 0.0
        %705 = vmatprep.subr.mxu0 0.0
        %706 = vmatpush1.msra.mxu0 0.0
        %707 = vmatprep.subr.mxu0 0.0
        %708 = vmatpush1.msra.mxu0 0.0
        %709 = vmatprep.subr.mxu0 0.0
        %710 = vmatpush1.msra.mxu0 0.0
        %711 = vmatprep.subr.mxu0 0.0
        %712 = vmatpush1.msra.mxu0 0.0
        %713 = vmatprep.subr.mxu0 0.0
        %714 = vmatpush1.msra.mxu0 0.0
        %715 = vmatprep.subr.mxu0 0.0
        %716 = vmatpush1.msra.mxu0 0.0
        %717 = vmatprep.mubr.f32.mxu0 0.0
        %718 = vmatmul.mubr.f32.gmra.mrb[0].mxu0 %v642
        %v719 = vpop.f32.mrb[0].mxu0
        %v720 = vadd.f32 0.0, %v719
        %v721 = vpop.f32.mrb[0].mxu0
        %722 = vmatprep.mubr.f32.mxu0 0.0
        %723 = vmatmul.mubr.f32.gmra.mrb[0].mxu0 %v645
        %v724 = vpop.f32.mrb[0].mxu0
        %v725 = vadd.f32 0.0, %v724
        %v726 = vpop.f32.mrb[0].mxu0
        %727 = vmatprep.mubr.f32.mxu0 0.0
        %728 = vmatmul.mubr.f32.gmra.mrb[0].mxu0 %v648
        %v729 = vpop.f32.mrb[0].mxu0
        %v730 = vadd.f32 0.0, %v729
        %v731 = vpop.f32.mrb[0].mxu0
        %732 = vmatprep.mubr.f32.mxu0 0.0
        %733 = vmatmul.mubr.f32.gmra.mrb[0].mxu0 %v651
        %v734 = vpop.f32.mrb[0].mxu0
        %v735 = vadd.f32 0.0, %v734
        %v736 = vpop.f32.mrb[0].mxu0
        %737 = vdwg.mxu0
        %s738 = scalar_lea.vmem %s168, 24
        %v739 = vld [vmem:[%s738] sm:$0xff]
        %740 = vmatprep.subr.mxu0 0.0
        %741 = vmatpush1.msra.mxu0 %v739
        %742 = vmatprep.subr.mxu0 0.0
        %743 = vmatpush1.msra.mxu0 0.0
        %744 = vmatprep.subr.mxu0 0.0
        %745 = vmatpush1.msra.mxu0 0.0
        %746 = vmatprep.subr.mxu0 0.0
        %747 = vmatpush1.msra.mxu0 0.0
        %748 = vmatprep.subr.mxu0 0.0
        %749 = vmatpush1.msra.mxu0 0.0
        %750 = vmatprep.subr.mxu0 0.0
        %751 = vmatpush1.msra.mxu0 0.0
        %752 = vmatprep.subr.mxu0 0.0
        %753 = vmatpush1.msra.mxu0 0.0
        %754 = vmatprep.subr.mxu0 0.0
        %755 = vmatpush1.msra.mxu0 0.0
        %756 = vmatprep.subr.mxu0 0.0
        %757 = vmatpush1.msra.mxu0 0.0
        %758 = vmatprep.subr.mxu0 0.0
        %759 = vmatpush1.msra.mxu0 0.0
        %760 = vmatprep.subr.mxu0 0.0
        %761 = vmatpush1.msra.mxu0 0.0
        %762 = vmatprep.subr.mxu0 0.0
        %763 = vmatpush1.msra.mxu0 0.0
        %764 = vmatprep.subr.mxu0 0.0
        %765 = vmatpush1.msra.mxu0 0.0
        %766 = vmatprep.subr.mxu0 0.0
        %767 = vmatpush1.msra.mxu0 0.0
        %768 = vmatprep.subr.mxu0 0.0
        %769 = vmatpush1.msra.mxu0 0.0
        %770 = vmatprep.subr.mxu0 0.0
        %771 = vmatpush1.msra.mxu0 0.0
        %772 = vmatprep.subr.mxu0 0.0
        %773 = vmatpush1.msra.mxu0 0.0
        %774 = vmatprep.subr.mxu0 0.0
        %775 = vmatpush1.msra.mxu0 0.0
        %776 = vmatprep.subr.mxu0 0.0
        %777 = vmatpush1.msra.mxu0 0.0
        %778 = vmatprep.subr.mxu0 0.0
        %779 = vmatpush1.msra.mxu0 0.0
        %780 = vmatprep.subr.mxu0 0.0
        %781 = vmatpush1.msra.mxu0 0.0
        %782 = vmatprep.subr.mxu0 0.0
        %783 = vmatpush1.msra.mxu0 0.0
        %784 = vmatprep.subr.mxu0 0.0
        %785 = vmatpush1.msra.mxu0 0.0
        %786 = vmatprep.subr.mxu0 0.0
        %787 = vmatpush1.msra.mxu0 0.0
        %788 = vmatprep.subr.mxu0 0.0
        %789 = vmatpush1.msra.mxu0 0.0
        %790 = vmatprep.subr.mxu0 0.0
        %791 = vmatpush1.msra.mxu0 0.0
        %792 = vmatprep.subr.mxu0 0.0
        %793 = vmatpush1.msra.mxu0 0.0
        %794 = vmatprep.subr.mxu0 0.0
        %795 = vmatpush1.msra.mxu0 0.0
        %796 = vmatprep.subr.mxu0 0.0
        %797 = vmatpush1.msra.mxu0 0.0
        %798 = vmatprep.subr.mxu0 0.0
        %799 = vmatpush1.msra.mxu0 0.0
        %800 = vmatprep.subr.mxu0 0.0
        %801 = vmatpush1.msra.mxu0 0.0
        %802 = vmatprep.subr.mxu0 0.0
        %803 = vmatpush1.msra.mxu0 0.0
        %804 = vmatprep.mubr.f32.mxu0 0.0
        %805 = vmatmul.mubr.f32.gmra.mrb[0].mxu0 %v176
        %v806 = vpop.f32.mrb[0].mxu0
        %v807 = vadd.f32 0.0, %v806
        %v808 = vpop.f32.mrb[0].mxu0
        %809 = vmatprep.mubr.f32.mxu0 0.0
        %810 = vmatmul.mubr.f32.gmra.mrb[0].mxu0 %v179
        %v811 = vpop.f32.mrb[0].mxu0
        %v812 = vadd.f32 0.0, %v811
        %v813 = vpop.f32.mrb[0].mxu0
        %814 = vmatprep.mubr.f32.mxu0 0.0
        %815 = vmatmul.mubr.f32.gmra.mrb[0].mxu0 %v182
        %v816 = vpop.f32.mrb[0].mxu0
        %v817 = vadd.f32 0.0, %v816
        %v818 = vpop.f32.mrb[0].mxu0
        %819 = vmatprep.mubr.f32.mxu0 0.0
        %820 = vmatmul.mubr.f32.gmra.mrb[0].mxu0 %v185
        %v821 = vpop.f32.mrb[0].mxu0
        %v822 = vadd.f32 0.0, %v821
        %v823 = vpop.f32.mrb[0].mxu0
        %824 = vdwg.mxu0
        %v826 = vsel %vm174, %v807, 0
        %v829 = vsel %vm174, %v812, 0
        %v832 = vsel %vm174, %v817, 0
        %v835 = vsel %vm174, %v822, 0
        %837 = vmatprep.subr.mxu0 0.0
        %838 = vmatpush1.msra.mxu0 %v272
        %839 = vmatprep.subr.mxu0 0.0
        %840 = vmatpush1.msra.mxu0 0.0
        %841 = vmatprep.subr.mxu0 0.0
        %842 = vmatpush1.msra.mxu0 0.0
        %843 = vmatprep.subr.mxu0 0.0
        %844 = vmatpush1.msra.mxu0 0.0
        %845 = vmatprep.subr.mxu0 0.0
        %846 = vmatpush1.msra.mxu0 0.0
        %847 = vmatprep.subr.mxu0 0.0
        %848 = vmatpush1.msra.mxu0 0.0
        %849 = vmatprep.subr.mxu0 0.0
        %850 = vmatpush1.msra.mxu0 0.0
        %851 = vmatprep.subr.mxu0 0.0
        %852 = vmatpush1.msra.mxu0 0.0
        %853 = vmatprep.subr.mxu0 0.0
        %854 = vmatpush1.msra.mxu0 0.0
        %855 = vmatprep.subr.mxu0 0.0
        %856 = vmatpush1.msra.mxu0 0.0
        %857 = vmatprep.subr.mxu0 0.0
        %858 = vmatpush1.msra.mxu0 0.0
        %859 = vmatprep.subr.mxu0 0.0
        %860 = vmatpush1.msra.mxu0 0.0
        %861 = vmatprep.subr.mxu0 0.0
        %862 = vmatpush1.msra.mxu0 0.0
        %863 = vmatprep.subr.mxu0 0.0
        %864 = vmatpush1.msra.mxu0 0.0
        %865 = vmatprep.subr.mxu0 0.0
        %866 = vmatpush1.msra.mxu0 0.0
        %867 = vmatprep.subr.mxu0 0.0
        %868 = vmatpush1.msra.mxu0 0.0
        %869 = vmatprep.subr.mxu0 0.0
        %870 = vmatpush1.msra.mxu0 0.0
        %871 = vmatprep.subr.mxu0 0.0
        %872 = vmatpush1.msra.mxu0 0.0
        %873 = vmatprep.subr.mxu0 0.0
        %874 = vmatpush1.msra.mxu0 0.0
        %875 = vmatprep.subr.mxu0 0.0
        %876 = vmatpush1.msra.mxu0 0.0
        %877 = vmatprep.subr.mxu0 0.0
        %878 = vmatpush1.msra.mxu0 0.0
        %879 = vmatprep.subr.mxu0 0.0
        %880 = vmatpush1.msra.mxu0 0.0
        %881 = vmatprep.subr.mxu0 0.0
        %882 = vmatpush1.msra.mxu0 0.0
        %883 = vmatprep.subr.mxu0 0.0
        %884 = vmatpush1.msra.mxu0 0.0
        %885 = vmatprep.subr.mxu0 0.0
        %886 = vmatpush1.msra.mxu0 0.0
        %887 = vmatprep.subr.mxu0 0.0
        %888 = vmatpush1.msra.mxu0 0.0
        %889 = vmatprep.subr.mxu0 0.0
        %890 = vmatpush1.msra.mxu0 0.0
        %891 = vmatprep.subr.mxu0 0.0
        %892 = vmatpush1.msra.mxu0 0.0
        %893 = vmatprep.subr.mxu0 0.0
        %894 = vmatpush1.msra.mxu0 0.0
        %895 = vmatprep.subr.mxu0 0.0
        %896 = vmatpush1.msra.mxu0 0.0
        %897 = vmatprep.subr.mxu0 0.0
        %898 = vmatpush1.msra.mxu0 0.0
        %899 = vmatprep.subr.mxu0 0.0
        %900 = vmatpush1.msra.mxu0 0.0
        %901 = vmatprep.mubr.f32.mxu0 0.0
        %902 = vmatmul.mubr.f32.gmra.mrb[0].mxu0 %v826
        %v903 = vpop.f32.mrb[0].mxu0
        %v904 = vadd.f32 0.0, %v903
        %v905 = vpop.f32.mrb[0].mxu0
        %906 = vmatprep.mubr.f32.mxu0 0.0
        %907 = vmatmul.mubr.f32.gmra.mrb[0].mxu0 %v829
        %v908 = vpop.f32.mrb[0].mxu0
        %v909 = vadd.f32 0.0, %v908
        %v910 = vpop.f32.mrb[0].mxu0
        %911 = vmatprep.mubr.f32.mxu0 0.0
        %912 = vmatmul.mubr.f32.gmra.mrb[0].mxu0 %v832
        %v913 = vpop.f32.mrb[0].mxu0
        %v914 = vadd.f32 0.0, %v913
        %v915 = vpop.f32.mrb[0].mxu0
        %916 = vmatprep.mubr.f32.mxu0 0.0
        %917 = vmatmul.mubr.f32.gmra.mrb[0].mxu0 %v835
        %v918 = vpop.f32.mrb[0].mxu0
        %v919 = vadd.f32 0.0, %v918
        %v920 = vpop.f32.mrb[0].mxu0
        %921 = vdwg.mxu0
        %v922 = vmax.f32 %v352, %v536
        %v923 = vmax.f32 %v357, %v541
        %v924 = vmax.f32 %v362, %v546
        %v925 = vmax.f32 %v367, %v551
        %v926 = vmax.f32 %v922, %v720
        %v927 = vmax.f32 %v923, %v725
        %v928 = vmax.f32 %v924, %v730
        %v929 = vmax.f32 %v925, %v735
        %v930 = vmax.f32 %v926, %v904
        %v931 = vmax.f32 %v927, %v909
        %v932 = vmax.f32 %v928, %v914
        %v933 = vmax.f32 %v929, %v919
        %v934 = vsub.f32 %v352, %v930
        %v935 = vsub.f32 %v357, %v931
        %v936 = vsub.f32 %v362, %v932
        %v937 = vsub.f32 %v367, %v933
        %v938 = vmul.f32 %v934, 1.442695
        %v939 = vpow.pop %v938
        %v940 = vmul.f32 %v935, 1.442695
        %v941 = vpow.pop %v940
        %v942 = vmul.f32 %v936, 1.442695
        %v943 = vpow.pop %v942
        %v944 = vmul.f32 %v937, 1.442695
        %v945 = vpow.pop %v944
        %v946 = vsub.f32 %v536, %v930
        %v947 = vsub.f32 %v541, %v931
        %v948 = vsub.f32 %v546, %v932
        %v949 = vsub.f32 %v551, %v933
        %v950 = vmul.f32 %v946, 1.442695
        %v951 = vpow.pop %v950
        %v952 = vmul.f32 %v947, 1.442695
        %v953 = vpow.pop %v952
        %v954 = vmul.f32 %v948, 1.442695
        %v955 = vpow.pop %v954
        %v956 = vmul.f32 %v949, 1.442695
        %v957 = vpow.pop %v956
        %v958 = vsub.f32 %v720, %v930
        %v959 = vsub.f32 %v725, %v931
        %v960 = vsub.f32 %v730, %v932
        %v961 = vsub.f32 %v735, %v933
        %v962 = vmul.f32 %v958, 1.442695
        %v963 = vpow.pop %v962
        %v964 = vmul.f32 %v959, 1.442695
        %v965 = vpow.pop %v964
        %v966 = vmul.f32 %v960, 1.442695
        %v967 = vpow.pop %v966
        %v968 = vmul.f32 %v961, 1.442695
        %v969 = vpow.pop %v968
        %v970 = vsub.f32 %v904, %v930
        %v971 = vsub.f32 %v909, %v931
        %v972 = vsub.f32 %v914, %v932
        %v973 = vsub.f32 %v919, %v933
        %v974 = vmul.f32 %v970, 1.442695
        %v975 = vpow.pop %v974
        %v976 = vmul.f32 %v971, 1.442695
        %v977 = vpow.pop %v976
        %v978 = vmul.f32 %v972, 1.442695
        %v979 = vpow.pop %v978
        %v980 = vmul.f32 %v973, 1.442695
        %v981 = vpow.pop %v980
        %v982 = vadd.f32 %v939, %v951
        %v983 = vadd.f32 %v941, %v953
        %v984 = vadd.f32 %v943, %v955
        %v985 = vadd.f32 %v945, %v957
        %v986 = vadd.f32 %v982, %v963
        %v987 = vadd.f32 %v983, %v965
        %v988 = vadd.f32 %v984, %v967
        %v989 = vadd.f32 %v985, %v969
        %v990 = vadd.f32 %v986, %v975
        %v991 = vadd.f32 %v987, %v977
        %v992 = vadd.f32 %v988, %v979
        %v993 = vadd.f32 %v989, %v981
        %v994 = vrcp.pop %v990
        %v995 = vmul.f32 1.0, %v994
        %v996 = vrcp.pop %v991
        %v997 = vmul.f32 1.0, %v996
        %v998 = vrcp.pop %v992
        %v999 = vmul.f32 1.0, %v998
        %v1000 = vrcp.pop %v993
        %v1001 = vmul.f32 1.0, %v1000
        %v1002 = vmul.f32 %v939, %v995
        %v1003 = vmul.f32 %v941, %v997
        %v1004 = vmul.f32 %v943, %v999
        %v1005 = vmul.f32 %v945, %v1001
        %vm1006 = vcmask 261120
        %1007 = vst.msk [vmem:[%s163] sm:$0xff] %vm1006, %v1002
        %1008 = vst.msk [vmem:[%s163 + $0x8] sm:$0xff] %vm1006, %v1003
        %1009 = vst.msk [vmem:[%s163 + $0x10] sm:$0xff] %vm1006, %v1004
        %1010 = vst.msk [vmem:[%s163 + $0x18] sm:$0xff] %vm1006, %v1005
        %v1011 = vmul.f32 %v951, %v995
        %v1012 = vmul.f32 %v953, %v997
        %v1013 = vmul.f32 %v955, %v999
        %v1014 = vmul.f32 %v957, %v1001
        %s1015 = scalar_lea.vmem %s163, 32 [#allocation2]
        %1016 = vst.msk [vmem:[%s1015] sm:$0xff] %vm1006, %v1011
        %1017 = vst.msk [vmem:[%s1015 + $0x8] sm:$0xff] %vm1006, %v1012
        %1018 = vst.msk [vmem:[%s1015 + $0x10] sm:$0xff] %vm1006, %v1013
        %1019 = vst.msk [vmem:[%s1015 + $0x18] sm:$0xff] %vm1006, %v1014
        %v1020 = vmul.f32 %v963, %v995
        %v1021 = vmul.f32 %v965, %v997
        %v1022 = vmul.f32 %v967, %v999
        %v1023 = vmul.f32 %v969, %v1001
        %s1024 = scalar_lea.vmem %s163, 64 [#allocation2]
        %1025 = vst.msk [vmem:[%s1024] sm:$0xff] %vm1006, %v1020
        %1026 = vst.msk [vmem:[%s1024 + $0x8] sm:$0xff] %vm1006, %v1021
        %1027 = vst.msk [vmem:[%s1024 + $0x10] sm:$0xff] %vm1006, %v1022
        %1028 = vst.msk [vmem:[%s1024 + $0x18] sm:$0xff] %vm1006, %v1023
        %v1029 = vmul.f32 %v975, %v995
        %v1030 = vmul.f32 %v977, %v997
        %v1031 = vmul.f32 %v979, %v999
        %v1032 = vmul.f32 %v981, %v1001
        %s1033 = scalar_lea.vmem %s163, 96 [#allocation2]
        %1034 = vst.msk [vmem:[%s1033] sm:$0xff] %vm1006, %v1029
        %1035 = vst.msk [vmem:[%s1033 + $0x8] sm:$0xff] %vm1006, %v1030
        %1036 = vst.msk [vmem:[%s1033 + $0x10] sm:$0xff] %vm1006, %v1031
        %1037 = vst.msk [vmem:[%s1033 + $0x18] sm:$0xff] %vm1006, %v1032
        %s1038 = sand.u32 %s93, 1
        %s1039 = scalar_lea.sflag [#allocation3], %s1038
        %s1040 = sand.u32 %s93, 1
        %s1041 = smul.addr %s1040, 128
        %s1042 = scalar_lea.vmem [#allocation2], %s1041
        // Predicated region
        $region33: #{deeplabv3plus_forward.19} parent=31 // pred_check
          %p1043 = pneg %p103
        $region34: #{deeplabv3plus_forward.19} parent=31 // pred_check_branch
          %1045 = sbr.rel (%p1043) target = $region36
        $region35: #{deeplabv3plus_forward.19} parent=31 // pred_region
          %s1047 = ssub.s32 2048, 2048
          %1048 = vsyncadd %s1039, %s1047
          %s1049 = smul.addr %s17, 16
          %s1050 = smul.addr %s1049, 128
          %s1051 = scalar_lea.hbm %s3, %s1050
          %s1052 = sshll.u32 %s1042, 4
          %s1053 = int_to_ptr.vmem [resolvable:$true] %s1052
          %1058 = dma.vmem_to_hbm [thread:$0]  %s1053, 2048, %s1051, %s1039, 128, 128, 8
        $region36: #{deeplabv3plus_forward.19} parent=31 // pred_fallthru
          _
      $region32: #{deeplabv3plus_forward.19} parent=5 // pred_fallthru
        _
      %p1059 = scmp.le.s32.totalorder 2, %s12
      // Predicated region
      $region37: #{deeplabv3plus_forward.19} parent=5 // pred_check
        %p1060 = pneg %p1059
      $region38: #{deeplabv3plus_forward.19} parent=5 // pred_check_branch
        %1062 = sbr.rel (%p1060) target = $region40
      $region39: #{deeplabv3plus_forward.19} parent=5 // pred_region
        %s1063 = ssub.s32 %s12, 2
        // Predicated region
        $region41: #{deeplabv3plus_forward.19} parent=39 // pred_check
          %p1064 = pneg %p109
        $region42: #{deeplabv3plus_forward.19} parent=39 // pred_check_branch
          %1066 = sbr.rel (%p1064) target = $region44
        $region43: #{deeplabv3plus_forward.19} parent=39 // pred_region
          %s1067 = sand.u32 %s94, 1
          %s1068 = scalar_lea.sflag [#allocation3], %s1067
          %s1069 = sand.u32 %s94, 1
          %s1070 = smul.addr %s1069, 128
          %s1071 = scalar_lea.vmem [#allocation2], %s1070
          %1072 = dma.done %s1068, 2048
        $region44: #{deeplabv3plus_forward.19} parent=39 // pred_fallthru
          _
      $region40: #{deeplabv3plus_forward.19} parent=5 // pred_fallthru
        _
    $region6: #{deeplabv3plus_forward.19} parent=1 // loop_footer
      %s16 = sadd.s32 1, %s12
    $region7: #{deeplabv3plus_forward.19} parent=1 // loop_footer_branch
      %11 = sbr.rel target = $region3
    $region8: #{deeplabv3plus_forward.19} parent=1 // loop_exit
      _
    %1073 = vsyncpa [#allocation3], 1
    %s1074 = scalar_lea.sflag [#allocation3], 1
    %1075 = vsyncpa %s1074, 1

</llo_original>
